<compile_context>
chip_gen: v6e
topology: v6e:2x2x1
jax: 0.10.0
libtpu: 0.0.40
codegen_flags: <defaults>
</compile_context>

<pallas_src>
import jax
import jax.numpy as jnp
from jax.experimental import pallas as pl
from jax.experimental.pallas import tpu as pltpu


def _conv_at_kernel(hs_ref, p_ref, hd_ref, wt_ref, a1_ref, v2_ref, o_ref):
    tn = hd_ref.shape[0]                     # nodes in this tile
    tnd = hs_ref.shape[0]                    # edges in this tile (tn * D)
    d = tnd // tn
    out_dim = wt_ref.shape[1]

    # z1 = fc(h_src * p): single MXU pass over the whole (tile_n*D, IN) slab.
    x = hs_ref[...] * p_ref[...]                                       # (TND, IN)
    z1 = jnp.dot(x, wt_ref[...], preferred_element_type=jnp.float32)   # (TND, OUT)
    z1 = z1.reshape(tn, d, out_dim)                                    # (TN, D, OUT)

    # Attention logits:
    #   e_src = a1 . z1           (per edge)
    #   e_dst = a2 . fc(h_dst) = h_dst . (W^T a2) = h_dst . v2   (per node)
    e_src = jnp.sum(z1 * a1_ref[...][None, :, :], axis=-1)             # (TN, D)
    e_dst = jnp.sum(hd_ref[...] * v2_ref[...], axis=-1, keepdims=True)  # (TN, 1)
    e = e_src + e_dst
    e = jnp.where(e > 0, e, 0.01 * e)                                  # leaky_relu

    # Numerically stable softmax over incoming edges (axis=1).
    e_max = jnp.max(e, axis=1, keepdims=True)
    w_exp = jnp.exp(e - e_max)
    denom = jnp.sum(w_exp, axis=1, keepdims=True)
    alpha = w_exp * pl.reciprocal(denom, approx=True)                  # (TN, D)

    # Weighted message sum.
    h = jnp.sum(alpha[:, :, None] * z1, axis=1)                        # (TN, OUT)
    o_ref[...] = h.astype(o_ref.dtype)


def conv_at_pallas(rel, pattern, src_idx, fc_w, attn_w, *, tile_n=256):
    """rel:(N,IN) f32, pattern:(E,IN) f32 with E=N*D, src_idx:(N,D) i32,
    fc_w:(OUT,IN), attn_w:(1,2*OUT).  Returns (N,OUT) f32."""
    n, in_dim = rel.shape
    d = src_idx.shape[1]
    out_dim = fc_w.shape[0]
    assert pattern.shape == (n * d, in_dim)
    assert tile_n % 8 == 0, "tile_n must be a multiple of 8 (sublane alignment)"

    # Any N: pad the node axis up to a multiple of tile_n, slice the tail off
    # the output.  Padded rows are all-zero -> softmax is uniform over zero
    # messages -> padded outputs are finite garbage-free zeros.
    n_blocks = pl.cdiv(n, tile_n)
    n_pad = n_blocks * tile_n

    # Glue: irregular gather + parameter prep stays in plain JAX.
    hs = rel[src_idx].reshape(n * d, in_dim)         # (N*D, IN)  sublane-dense
    p2 = pattern                                     # (N*D, IN)
    hd = rel                                         # (N, IN)
    if n_pad != n:
        hs = jnp.pad(hs, ((0, (n_pad - n) * d), (0, 0)))
        p2 = jnp.pad(p2, ((0, (n_pad - n) * d), (0, 0)))
        hd = jnp.pad(hd, ((0, n_pad - n), (0, 0)))

    wt = fc_w.T                                      # (IN, OUT)
    a1 = attn_w[:, :out_dim]                         # (1, OUT)  attn weight for z1
    a2 = attn_w[0, out_dim:]                         # (OUT,)    attn weight for dst
    v2 = (wt @ a2)[None, :]                          # (1, IN)   folds the zd matmul

    grid = (n_pad // tile_n,)
    out = pl.pallas_call(
        _conv_at_kernel,
        out_shape=jax.ShapeDtypeStruct((n_pad, out_dim), jnp.float32),
        grid_spec=pltpu.PrefetchScalarGridSpec(
            num_scalar_prefetch=0,
            grid=grid,
            in_specs=[
                pl.BlockSpec((tile_n * d, in_dim), lambda i: (i, 0)),  # hs
                pl.BlockSpec((tile_n * d, in_dim), lambda i: (i, 0)),  # p
                pl.BlockSpec((tile_n, in_dim), lambda i: (i, 0)),      # h_dst
                pl.BlockSpec((in_dim, out_dim), lambda i: (0, 0)),     # W^T
                pl.BlockSpec((1, out_dim), lambda i: (0, 0)),          # a1
                pl.BlockSpec((1, in_dim), lambda i: (0, 0)),           # v2 = W^T a2
            ],
            out_specs=pl.BlockSpec((tile_n, out_dim), lambda i: (i, 0)),
        ),
        compiler_params=pltpu.CompilerParams(
            dimension_semantics=("parallel",)),
    )(hs, p2, hd, wt, a1, v2)
    return out[:n]


def conv_at_ref(rel, pattern, src_idx, fc_w, attn_w):
    """Pure-JAX reference of the PyTorch forward (fixed in-degree graph)."""
    n, in_dim = rel.shape
    d = src_idx.shape[1]
    out_dim = fc_w.shape[0]
    hs = rel[src_idx]
    p3 = pattern.reshape(n, d, in_dim)
    z1 = jnp.einsum("ndi,oi->ndo", hs * p3, fc_w)
    zd = jnp.einsum("ni,oi->no", rel, fc_w)
    a1 = attn_w[0, :out_dim]
    a2 = attn_w[0, out_dim:]
    e = jnp.sum(z1 * a1, axis=-1) + jnp.sum(zd * a2, axis=-1)[:, None]
    e = jnp.where(e > 0, e, 0.01 * e)
    alpha = jax.nn.softmax(e, axis=1)
    return jnp.sum(alpha[..., None] * z1, axis=1)


if __name__ == "__main__":
    # Deterministic problem: N=500 nodes (non-multiple of tile_n to exercise
    # the padded tail), in-degree D=8 (E=4000 edges), in_dim=64, out_dim=128.
    N, D, IN_DIM, OUT_DIM = 500, 8, 64, 128
    key = jax.random.PRNGKey(0)
    k_rel, k_pat, k_idx, k_fc, k_attn = jax.random.split(key, 5)

    rel = jax.random.normal(k_rel, (N, IN_DIM), dtype=jnp.float32)
    pattern = jax.random.normal(k_pat, (N * D, IN_DIM), dtype=jnp.float32)
    src_idx = jax.random.randint(k_idx, (N, D), 0, N, dtype=jnp.int32)

    # Deterministic parameter init (Linear weights, no bias).
    fc_w = jax.random.normal(k_fc, (OUT_DIM, IN_DIM), dtype=jnp.float32) * 0.1
    attn_w = jax.random.normal(k_attn, (1, 2 * OUT_DIM), dtype=jnp.float32) * 0.1

    # tile_n=128 -> 4 grid steps (keeps both v7x TensorCores busy; tiny VMEM
    # footprint per double-buffered block, ~1.3 MiB).
    out = conv_at_pallas(rel, pattern, src_idx, fc_w, attn_w, tile_n=128)
    out = jax.block_until_ready(out)

    ref = conv_at_ref(rel, pattern, src_idx, fc_w, attn_w)
    assert out.shape == (N, OUT_DIM)
    # Tolerance accounts for the EUP approximate reciprocal in the softmax.
    assert jnp.allclose(out, ref, atol=1e-2, rtol=1e-2), "mismatch vs reference"

    print("KERNEL_OK")
</pallas_src>

<mosaic_0001>
module attributes {stable_mosaic.version = 11 : i64} {
  func.func @_conv_at_kernel(%arg0: i32, %arg1: memref<1024x64xf32, #tpu.memory_space<vmem>>, %arg2: memref<1024x64xf32, #tpu.memory_space<vmem>>, %arg3: memref<128x64xf32, #tpu.memory_space<vmem>>, %arg4: memref<64x128xf32, #tpu.memory_space<vmem>>, %arg5: memref<1x128xf32, #tpu.memory_space<vmem>>, %arg6: memref<1x64xf32, #tpu.memory_space<vmem>>, %arg7: memref<128x128xf32, #tpu.memory_space<vmem>>) attributes {dimension_semantics = [#tpu.dimension_semantics<parallel>], iteration_bounds = array<i64: 4>, scalar_prefetch = 0 : i64, scratch_operands = 0 : i64, tpu.core_type = #tpu.core_type<tc>, window_params = [{transform_indices = @transform_0, window_bounds = array<i64: 1024, 64>}, {transform_indices = @transform_1, window_bounds = array<i64: 1024, 64>}, {transform_indices = @transform_2, window_bounds = array<i64: 128, 64>}, {pipeline_mode = #tpu.pipeline_mode<synchronous>, transform_indices = @transform_3, window_bounds = array<i64: 64, 128>}, {pipeline_mode = #tpu.pipeline_mode<synchronous>, transform_indices = @transform_4, window_bounds = array<i64: 1, 128>}, {pipeline_mode = #tpu.pipeline_mode<synchronous>, transform_indices = @transform_5, window_bounds = array<i64: 1, 64>}, {transform_indices = @transform_6, window_bounds = array<i64: 128, 128>}]} {
    %c0 = arith.constant 0 : index
    %c0_0 = arith.constant 0 : index
    %0 = vector.load %arg1[%c0, %c0_0] : memref<1024x64xf32, #tpu.memory_space<vmem>>, vector<1024x64xf32>
    %c0_1 = arith.constant 0 : index
    %c0_2 = arith.constant 0 : index
    %1 = vector.load %arg2[%c0_1, %c0_2] : memref<1024x64xf32, #tpu.memory_space<vmem>>, vector<1024x64xf32>
    %2 = arith.mulf %0, %1 : vector<1024x64xf32>
    %c0_3 = arith.constant 0 : index
    %c0_4 = arith.constant 0 : index
    %3 = vector.load %arg4[%c0_3, %c0_4] : memref<64x128xf32, #tpu.memory_space<vmem>>, vector<64x128xf32>
    %cst = arith.constant dense<0.000000e+00> : vector<1024x128xf32>
    %4 = tpu.matmul %2, %3, %cst {dimension_numbers = #tpu.dot_dimension_numbers<[1], [0], [0], [1], [0, 0, 1, 1], [], []>} : vector<1024x64xf32>, vector<64x128xf32>, vector<1024x128xf32> -> vector<1024x128xf32>
    %5 = vector.shape_cast %4 : vector<1024x128xf32> to vector<128x8x128xf32>
    %c0_5 = arith.constant 0 : index
    %c0_6 = arith.constant 0 : index
    %6 = vector.load %arg5[%c0_5, %c0_6] : memref<1x128xf32, #tpu.memory_space<vmem>>, vector<1x128xf32>
    %7 = vector.shape_cast %6 : vector<1x128xf32> to vector<1x1x128xf32>
    %8 = vector.broadcast %7 : vector<1x1x128xf32> to vector<128x8x128xf32>
    %9 = arith.mulf %5, %8 : vector<128x8x128xf32>
    %cst_7 = arith.constant dense<0.000000e+00> : vector<128x8xf32>
    %10 = vector.multi_reduction <add>, %9, %cst_7 [2] : vector<128x8x128xf32> to vector<128x8xf32>
    %c0_8 = arith.constant 0 : index
    %c0_9 = arith.constant 0 : index
    %11 = vector.load %arg3[%c0_8, %c0_9] : memref<128x64xf32, #tpu.memory_space<vmem>>, vector<128x64xf32>
    %c0_10 = arith.constant 0 : index
    %c0_11 = arith.constant 0 : index
    %12 = vector.load %arg6[%c0_10, %c0_11] : memref<1x64xf32, #tpu.memory_space<vmem>>, vector<1x64xf32>
    %13 = vector.broadcast %12 : vector<1x64xf32> to vector<128x64xf32>
    %14 = arith.mulf %11, %13 : vector<128x64xf32>
    %cst_12 = arith.constant dense<0.000000e+00> : vector<128xf32>
    %15 = vector.multi_reduction <add>, %14, %cst_12 [1] : vector<128x64xf32> to vector<128xf32>
    %16 = vector.shape_cast %15 : vector<128xf32> to vector<128x1xf32>
    %17 = vector.broadcast %16 : vector<128x1xf32> to vector<128x8xf32>
    %18 = arith.addf %10, %17 : vector<128x8xf32>
    %cst_13 = arith.constant 0.000000e+00 : f32
    %19 = vector.broadcast %cst_13 : f32 to vector<128x8xf32>
    %20 = arith.cmpf ogt, %18, %19 : vector<128x8xf32>
    %cst_14 = arith.constant 0.00999999977 : f32
    %21 = vector.broadcast %cst_14 : f32 to vector<128x8xf32>
    %22 = arith.mulf %21, %18 : vector<128x8xf32>
    %23 = arith.select %20, %18, %22 : vector<128x8xi1>, vector<128x8xf32>
    %cst_15 = arith.constant dense<0xFF800000> : vector<128xf32>
    %24 = vector.multi_reduction <maximumf>, %23, %cst_15 [1] : vector<128x8xf32> to vector<128xf32>
    %25 = vector.shape_cast %24 : vector<128xf32> to vector<128x1xf32>
    %26 = vector.broadcast %25 : vector<128x1xf32> to vector<128x8xf32>
    %27 = arith.subf %23, %26 : vector<128x8xf32>
    %28 = math.exp %27 : vector<128x8xf32>
    %cst_16 = arith.constant dense<0.000000e+00> : vector<128xf32>
    %29 = vector.multi_reduction <add>, %28, %cst_16 [1] : vector<128x8xf32> to vector<128xf32>
    %30 = vector.shape_cast %29 : vector<128xf32> to vector<128x1xf32>
    %31 = tpu.reciprocal %30 {approx = true} : vector<128x1xf32> -> vector<128x1xf32>
    %32 = vector.broadcast %31 : vector<128x1xf32> to vector<128x8xf32>
    %33 = arith.mulf %28, %32 : vector<128x8xf32>
    %34 = vector.shape_cast %33 : vector<128x8xf32> to vector<128x8x1xf32>
    %35 = vector.broadcast %34 : vector<128x8x1xf32> to vector<128x8x128xf32>
    %36 = arith.mulf %35, %5 : vector<128x8x128xf32>
    %cst_17 = arith.constant dense<0.000000e+00> : vector<128x128xf32>
    %37 = vector.multi_reduction <add>, %36, %cst_17 [1] : vector<128x8x128xf32> to vector<128x128xf32>
    %c0_18 = arith.constant 0 : index
    %c0_19 = arith.constant 0 : index
    %38 = vector.load %arg7[%c0_18, %c0_19] : memref<128x128xf32, #tpu.memory_space<vmem>>, vector<128x128xf32>
    tpu.vector_store %arg7[%c0_18, %c0_19], %37 {strides = array<i32>} : memref<128x128xf32, #tpu.memory_space<vmem>>, vector<128x128xf32>,
    return
  }
  func.func @transform_0(%arg0: i32) -> (i32, i32) {
    %c0_i32 = arith.constant 0 : i32
    %c0_i32_0 = arith.constant 0 : i32
    return %arg0, %c0_i32 : i32, i32
  }
  func.func @transform_1(%arg0: i32) -> (i32, i32) {
    %c0_i32 = arith.constant 0 : i32
    %c0_i32_0 = arith.constant 0 : i32
    return %arg0, %c0_i32 : i32, i32
  }
  func.func @transform_2(%arg0: i32) -> (i32, i32) {
    %c0_i32 = arith.constant 0 : i32
    %c0_i32_0 = arith.constant 0 : i32
    return %arg0, %c0_i32 : i32, i32
  }
  func.func @transform_3(%arg0: i32) -> (i32, i32) {
    %c0_i32 = arith.constant 0 : i32
    %c0_i32_0 = arith.constant 0 : i32
    %c0_i32_1 = arith.constant 0 : i32
    return %c0_i32, %c0_i32_0 : i32, i32
  }
  func.func @transform_4(%arg0: i32) -> (i32, i32) {
    %c0_i32 = arith.constant 0 : i32
    %c0_i32_0 = arith.constant 0 : i32
    %c0_i32_1 = arith.constant 0 : i32
    return %c0_i32, %c0_i32_0 : i32, i32
  }
  func.func @transform_5(%arg0: i32) -> (i32, i32) {
    %c0_i32 = arith.constant 0 : i32
    %c0_i32_0 = arith.constant 0 : i32
    %c0_i32_1 = arith.constant 0 : i32
    return %c0_i32, %c0_i32_0 : i32, i32
  }
  func.func @transform_6(%arg0: i32) -> (i32, i32) {
    %c0_i32 = arith.constant 0 : i32
    %c0_i32_0 = arith.constant 0 : i32
    return %arg0, %c0_i32 : i32, i32
  }
}

</mosaic_0001>

<llo_original>
// kernel: tpu_custom_call.1
$region0: #{tpu_custom_call.1}
  #allocation0 [shape = 'u32[]', space=smem, size = 0x4, offset = 0x4, fixed_abs, tag = 'smem constant byte address 0x4 - core index']
  #allocation1 [shape = 'u32[144,128]{1,0:T(1,128)}', space=vmem, size = 0x12000, scoped, tag = 'internal scratch']
  %s0 = inlined_call_operand.vmem [shape: f32[4096,64], index: 0, kind: input, shape index: {}]
  %s1 = inlined_call_operand.vmem [shape: f32[4096,64], index: 1, kind: input, shape index: {}]
  %s2 = inlined_call_operand.vmem [shape: f32[512,64], index: 2, kind: input, shape index: {}]
  %s3 = inlined_call_operand.vmem [shape: f32[64,128], index: 3, kind: input, shape index: {}]
  %s4 = inlined_call_operand.vmem [shape: f32[1,128], index: 4, kind: input, shape index: {}]
  %s5 = inlined_call_operand.vmem [shape: f32[1,64], index: 5, kind: input, shape index: {}]
  %s6 = inlined_call_operand.hbm [shape: f32[512,128], index: 6, kind: output, shape index: {}]
  %s7 = sld [smem:[#allocation0]]
  $region57: #{tpu_custom_call.1} parent=0
    _
  %s9 = ssub.s32 1, %s7
  %s10 = scalar_select 0, %s9, %s7
  $region1: #{tpu_custom_call.1} parent=0
    #allocation2 [shape = 'u8[131072]{0}', space=vmem, size = 0x20000, scoped, tag = 'output window, operand 0']
    #allocation3 [shape = 's32[2]{0}', space=sflag, size = 0x8, scoped, tag = 'scoped memory for tpu_custom_call.1']
    %11 = vsyncpa [#allocation3], 0
    %s12 = scalar_lea.sflag [#allocation3], 1
    %13 = vsyncpa %s12, 0
    loop: start=0, step=1, limit=6
    $region2: #{tpu_custom_call.1} parent=1 // loop_pre_header
      _
    $region3: #{tpu_custom_call.1} parent=1 // loop_header
      %s15 = sphi 0, %s19
      %p16 = scmp.ge.s32.totalorder %s15, 6
      %s25 = sphi 0, %s27
      %s28 = sphi 0, %s25
      %s29 = sphi 0, %s28
      %s45 = sphi 0, %s29
      %s51 = sphi 0, %s53
      %s54 = sphi 0, %s51
      %s55 = sphi 0, %s54
      %s71 = sphi 0, %s55
      %s77 = sphi 0, %s79
      %s80 = sphi 0, %s77
      %s81 = sphi 0, %s80
      %s97 = sphi 0, %s81
      %s101 = sphi 0, %s101
      %s103 = sphi 0, %s101
      %s104 = sphi 0, %s103
      %s118 = sphi 0, %s104
      %s122 = sphi 0, %s122
      %s124 = sphi 0, %s122
      %s125 = sphi 0, %s124
      %s139 = sphi 0, %s125
      %s143 = sphi 0, %s143
      %s145 = sphi 0, %s143
      %s146 = sphi 0, %s145
      %s160 = sphi 0, %s146
      %s166 = sphi 0, %s168
      %s169 = sphi 0, %s166
      %s170 = sphi 0, %s169
      %s186 = sphi 0, %s170
    $region4: #{tpu_custom_call.1} parent=1 // loop_header_branch
      %18 = sbr.rel (%p16) target = $region8
    $region5: #{tpu_custom_call.1} parent=1 // loop_body
      %s20 = ssub.s32 %s15, 1
      %s21 = ssub.s32 %s15, 2
      %s22 = sadd.s32 %s15, 1
      %s23 = ssub.s32 %s15, %s22
      %p24 = scmp.eq.s32.totalorder %s23, 0
      %s26 = sadd.s32 %s25, 1
      %s27 = scalar_select %p24, %s25, %s26
      %p30 = pneg %p24
      %p31 = scmp.eq.s32.totalorder %s15, 3
      %p32 = por %p30, %p31
      %p33 = scmp.ne.s32.totalorder %s25, %s28
      %p34 = scmp.eq.s32.totalorder %s15, 0
      %p35 = por %p33, %p34
      %p36 = scmp.ne.s32.totalorder %s25, %s28
      %p37 = scmp.eq.s32.totalorder %s20, 3
      %p38 = por %p36, %p37
      %p39 = scmp.ne.s32.totalorder %s28, %s29
      %p40 = scmp.eq.s32.totalorder %s20, 0
      %p41 = por %p39, %p40
      %p42 = scmp.ne.s32.totalorder %s28, %s29
      %p43 = scmp.eq.s32.totalorder %s21, 3
      %p44 = por %p42, %p43
      %p46 = scmp.ne.s32.totalorder %s29, %s45
      %p47 = scmp.eq.s32.totalorder %s21, 0
      %p48 = por %p46, %p47
      %s49 = ssub.s32 %s15, %s22
      %p50 = scmp.eq.s32.totalorder %s49, 0
      %s52 = sadd.s32 %s51, 1
      %s53 = scalar_select %p50, %s51, %s52
      %p56 = pneg %p50
      %p57 = scmp.eq.s32.totalorder %s15, 3
      %p58 = por %p56, %p57
      %p59 = scmp.ne.s32.totalorder %s51, %s54
      %p60 = scmp.eq.s32.totalorder %s15, 0
      %p61 = por %p59, %p60
      %p62 = scmp.ne.s32.totalorder %s51, %s54
      %p63 = scmp.eq.s32.totalorder %s20, 3
      %p64 = por %p62, %p63
      %p65 = scmp.ne.s32.totalorder %s54, %s55
      %p66 = scmp.eq.s32.totalorder %s20, 0
      %p67 = por %p65, %p66
      %p68 = scmp.ne.s32.totalorder %s54, %s55
      %p69 = scmp.eq.s32.totalorder %s21, 3
      %p70 = por %p68, %p69
      %p72 = scmp.ne.s32.totalorder %s55, %s71
      %p73 = scmp.eq.s32.totalorder %s21, 0
      %p74 = por %p72, %p73
      %s75 = ssub.s32 %s15, %s22
      %p76 = scmp.eq.s32.totalorder %s75, 0
      %s78 = sadd.s32 %s77, 1
      %s79 = scalar_select %p76, %s77, %s78
      %p82 = pneg %p76
      %p83 = scmp.eq.s32.totalorder %s15, 3
      %p84 = por %p82, %p83
      %p85 = scmp.ne.s32.totalorder %s77, %s80
      %p86 = scmp.eq.s32.totalorder %s15, 0
      %p87 = por %p85, %p86
      %p88 = scmp.ne.s32.totalorder %s77, %s80
      %p89 = scmp.eq.s32.totalorder %s20, 3
      %p90 = por %p88, %p89
      %p91 = scmp.ne.s32.totalorder %s80, %s81
      %p92 = scmp.eq.s32.totalorder %s20, 0
      %p93 = por %p91, %p92
      %p94 = scmp.ne.s32.totalorder %s80, %s81
      %p95 = scmp.eq.s32.totalorder %s21, 3
      %p96 = por %p94, %p95
      %p98 = scmp.ne.s32.totalorder %s81, %s97
      %p99 = scmp.eq.s32.totalorder %s21, 0
      %p100 = por %p98, %p99
      %s102 = sadd.s32 %s101, 1
      %p105 = scmp.eq.s32.totalorder %s15, 3
      %p106 = scmp.ne.s32.totalorder %s101, %s103
      %p107 = scmp.eq.s32.totalorder %s15, 0
      %p108 = por %p106, %p107
      %p109 = scmp.ne.s32.totalorder %s101, %s103
      %p110 = scmp.eq.s32.totalorder %s20, 3
      %p111 = por %p109, %p110
      %p112 = scmp.ne.s32.totalorder %s103, %s104
      %p113 = scmp.eq.s32.totalorder %s20, 0
      %p114 = por %p112, %p113
      %p115 = scmp.ne.s32.totalorder %s103, %s104
      %p116 = scmp.eq.s32.totalorder %s21, 3
      %p117 = por %p115, %p116
      %p119 = scmp.ne.s32.totalorder %s104, %s118
      %p120 = scmp.eq.s32.totalorder %s21, 0
      %p121 = por %p119, %p120
      %s123 = sadd.s32 %s122, 1
      %p126 = scmp.eq.s32.totalorder %s15, 3
      %p127 = scmp.ne.s32.totalorder %s122, %s124
      %p128 = scmp.eq.s32.totalorder %s15, 0
      %p129 = por %p127, %p128
      %p130 = scmp.ne.s32.totalorder %s122, %s124
      %p131 = scmp.eq.s32.totalorder %s20, 3
      %p132 = por %p130, %p131
      %p133 = scmp.ne.s32.totalorder %s124, %s125
      %p134 = scmp.eq.s32.totalorder %s20, 0
      %p135 = por %p133, %p134
      %p136 = scmp.ne.s32.totalorder %s124, %s125
      %p137 = scmp.eq.s32.totalorder %s21, 3
      %p138 = por %p136, %p137
      %p140 = scmp.ne.s32.totalorder %s125, %s139
      %p141 = scmp.eq.s32.totalorder %s21, 0
      %p142 = por %p140, %p141
      %s144 = sadd.s32 %s143, 1
      %p147 = scmp.eq.s32.totalorder %s15, 3
      %p148 = scmp.ne.s32.totalorder %s143, %s145
      %p149 = scmp.eq.s32.totalorder %s15, 0
      %p150 = por %p148, %p149
      %p151 = scmp.ne.s32.totalorder %s143, %s145
      %p152 = scmp.eq.s32.totalorder %s20, 3
      %p153 = por %p151, %p152
      %p154 = scmp.ne.s32.totalorder %s145, %s146
      %p155 = scmp.eq.s32.totalorder %s20, 0
      %p156 = por %p154, %p155
      %p157 = scmp.ne.s32.totalorder %s145, %s146
      %p158 = scmp.eq.s32.totalorder %s21, 3
      %p159 = por %p157, %p158
      %p161 = scmp.ne.s32.totalorder %s146, %s160
      %p162 = scmp.eq.s32.totalorder %s21, 0
      %p163 = por %p161, %p162
      %s164 = ssub.s32 %s15, %s22
      %p165 = scmp.eq.s32.totalorder %s164, 0
      %s167 = sadd.s32 %s166, 1
      %s168 = scalar_select %p165, %s166, %s167
      %p171 = pneg %p165
      %p172 = scmp.eq.s32.totalorder %s15, 3
      %p173 = por %p171, %p172
      %p174 = scmp.ne.s32.totalorder %s166, %s169
      %p175 = scmp.eq.s32.totalorder %s15, 0
      %p176 = por %p174, %p175
      %p177 = scmp.ne.s32.totalorder %s166, %s169
      %p178 = scmp.eq.s32.totalorder %s20, 3
      %p179 = por %p177, %p178
      %p180 = scmp.ne.s32.totalorder %s169, %s170
      %p181 = scmp.eq.s32.totalorder %s20, 0
      %p182 = por %p180, %p181
      %p183 = scmp.ne.s32.totalorder %s169, %s170
      %p184 = scmp.eq.s32.totalorder %s21, 3
      %p185 = por %p183, %p184
      %p187 = scmp.ne.s32.totalorder %s170, %s186
      %p188 = scmp.eq.s32.totalorder %s21, 0
      %p189 = por %p187, %p188
      %p190 = scmp.le.s32.totalorder 1, %s15
      %p191 = scmp.lt.s32.totalorder %s15, 5
      %p192 = pnand %p190, %p191
      %p193 = pneg %p192
      // Predicated region
      $region9: #{tpu_custom_call.1} parent=5 // pred_check
        _
      $region10: #{tpu_custom_call.1} parent=5 // pred_check_branch
        %195 = sbr.rel (%p192) target = $region12
      $region11: #{tpu_custom_call.1} parent=5 // pred_region
        %s196 = ssub.s32 %s15, 1
        // Predicated region
        $region13: #{tpu_custom_call.1} parent=11 // pred_check
          %p197 = pneg %p114
        $region14: #{tpu_custom_call.1} parent=11 // pred_check_branch
          %199 = sbr.rel (%p197) target = $region16
        $region15: #{tpu_custom_call.1} parent=11 // pred_region
          _
        $region16: #{tpu_custom_call.1} parent=11 // pred_fallthru
          _
        // Predicated region
        $region17: #{tpu_custom_call.1} parent=11 // pred_check
          %p200 = pneg %p135
        $region18: #{tpu_custom_call.1} parent=11 // pred_check_branch
          %202 = sbr.rel (%p200) target = $region20
        $region19: #{tpu_custom_call.1} parent=11 // pred_region
          _
        $region20: #{tpu_custom_call.1} parent=11 // pred_fallthru
          _
        // Predicated region
        $region21: #{tpu_custom_call.1} parent=11 // pred_check
          %p203 = pneg %p156
        $region22: #{tpu_custom_call.1} parent=11 // pred_check_branch
          %205 = sbr.rel (%p203) target = $region24
        $region23: #{tpu_custom_call.1} parent=11 // pred_region
          _
        $region24: #{tpu_custom_call.1} parent=11 // pred_fallthru
          _
      $region12: #{tpu_custom_call.1} parent=5 // pred_fallthru
        _
      %p206 = scmp.lt.s32.totalorder %s15, 4
      // Predicated region
      $region25: #{tpu_custom_call.1} parent=5 // pred_check
        %p207 = pneg %p206
      $region26: #{tpu_custom_call.1} parent=5 // pred_check_branch
        %209 = sbr.rel (%p207) target = $region28
      $region27: #{tpu_custom_call.1} parent=5 // pred_region
        // Predicated region
        $region29: #{tpu_custom_call.1} parent=27 // pred_check
          %p210 = pneg %p35
        $region30: #{tpu_custom_call.1} parent=27 // pred_check_branch
          %212 = sbr.rel (%p210) target = $region32
        $region31: #{tpu_custom_call.1} parent=27 // pred_region
          %s213 = smul.u32 128, %s15
          %p214 = scmp.lt.s32.totalorder %s213, 511
          %s215 = scalar_select %p214, %s213, 511
          %s216 = smul.addr %s215, 8
          %s217 = scalar_lea.vmem %s0, %s216
          %s218 = smul.u32 128, %s15
        $region32: #{tpu_custom_call.1} parent=27 // pred_fallthru
          _
        // Predicated region
        $region33: #{tpu_custom_call.1} parent=27 // pred_check
          %p219 = pneg %p61
        $region34: #{tpu_custom_call.1} parent=27 // pred_check_branch
          %221 = sbr.rel (%p219) target = $region36
        $region35: #{tpu_custom_call.1} parent=27 // pred_region
          %s222 = smul.u32 128, %s15
          %p223 = scmp.lt.s32.totalorder %s222, 511
          %s224 = scalar_select %p223, %s222, 511
          %s225 = smul.addr %s224, 8
          %s226 = scalar_lea.vmem %s1, %s225
          %s227 = smul.u32 128, %s15
        $region36: #{tpu_custom_call.1} parent=27 // pred_fallthru
          _
        // Predicated region
        $region37: #{tpu_custom_call.1} parent=27 // pred_check
          %p228 = pneg %p87
        $region38: #{tpu_custom_call.1} parent=27 // pred_check_branch
          %230 = sbr.rel (%p228) target = $region40
        $region39: #{tpu_custom_call.1} parent=27 // pred_region
          %s231 = smul.u32 16, %s15
          %p232 = scmp.lt.s32.totalorder %s231, 63
          %s233 = scalar_select %p232, %s231, 63
          %s234 = smul.addr %s233, 8
          %s235 = scalar_lea.vmem %s2, %s234
          %s236 = smul.u32 16, %s15
        $region40: #{tpu_custom_call.1} parent=27 // pred_fallthru
          _
      $region28: #{tpu_custom_call.1} parent=5 // pred_fallthru
        _
      %p237 = scmp.le.s32.totalorder 1, %s15
      %p238 = scmp.lt.s32.totalorder %s15, 5
      %p239 = pnand %p237, %p238
      %p240 = pneg %p239
      // Predicated region
      $region41: #{tpu_custom_call.1} parent=5 // pred_check
        _
      $region42: #{tpu_custom_call.1} parent=5 // pred_check_branch
        %242 = sbr.rel (%p239) target = $region44
      $region43: #{tpu_custom_call.1} parent=5 // pred_region
        %s243 = ssub.s32 %s15, 1
        %s244 = smul.u32 128, %s20
        %p245 = scmp.lt.s32.totalorder %s244, 511
        %s246 = scalar_select %p245, %s244, 511
        %s247 = smul.addr %s246, 8
        %s248 = scalar_lea.vmem %s0, %s247
        %p249 = pneg %p41
        %p250 = pneg %p38
        %s251 = smul.u32 128, %s20
        %p252 = scmp.lt.s32.totalorder %s251, 511
        %s253 = scalar_select %p252, %s251, 511
        %s254 = smul.addr %s253, 8
        %s255 = scalar_lea.vmem %s1, %s254
        %p256 = pneg %p67
        %p257 = pneg %p64
        %s258 = smul.u32 16, %s20
        %p259 = scmp.lt.s32.totalorder %s258, 63
        %s260 = scalar_select %p259, %s258, 63
        %s261 = smul.addr %s260, 8
        %s262 = scalar_lea.vmem %s2, %s261
        %p263 = pneg %p93
        %p264 = pneg %p90
        %p265 = pneg %p114
        %p266 = pneg %p111
        %p267 = pneg %p135
        %p268 = pneg %p132
        %p269 = pneg %p156
        %p270 = pneg %p153
        %p271 = pneg %p182
        %p272 = pneg %p179
        %s273 = sand.u32 %s169, 1
        %s274 = scalar_lea.sflag [#allocation3], %s273
        %s275 = sand.u32 %s169, 1
        %s276 = smul.addr %s275, 128
        %s277 = scalar_lea.vmem [#allocation2], %s276
        %s278 = smul.u32 128, %s20
        %p279 = scmp.lt.s32.totalorder %s278, 511
        %s280 = scalar_select %p279, %s278, 511
        %s281 = smul.addr %s280, 8
        %s282 = scalar_lea.vmem %s0, %s281
        %s283 = smul.u32 128, %s20
        %s284 = smul.u32 128, %s20
        %p285 = scmp.lt.s32.totalorder %s284, 511
        %s286 = scalar_select %p285, %s284, 511
        %s287 = smul.addr %s286, 8
        %s288 = scalar_lea.vmem %s1, %s287
        %s289 = smul.u32 128, %s20
        %s290 = smul.u32 16, %s20
        %p291 = scmp.lt.s32.totalorder %s290, 63
        %s292 = scalar_select %p291, %s290, 63
        %s293 = smul.addr %s292, 8
        %s294 = scalar_lea.vmem %s2, %s293
        %s295 = smul.u32 16, %s20
        %s296 = smul.u32 16, %s20
        %v297 = vld [vmem:[%s282] sm:$0xff]
        %v298 = vld [vmem:[%s282 + $0x8] sm:$0xff]
        %v299 = vld [vmem:[%s282 + $0x10] sm:$0xff]
        %v300 = vld [vmem:[%s282 + $0x18] sm:$0xff]
        %v301 = vld [vmem:[%s282 + $0x20] sm:$0xff]
        %v302 = vld [vmem:[%s282 + $0x28] sm:$0xff]
        %v303 = vld [vmem:[%s282 + $0x30] sm:$0xff]
        %v304 = vld [vmem:[%s282 + $0x38] sm:$0xff]
        %v305 = vld [vmem:[%s282 + $0x40] sm:$0xff]
        %v306 = vld [vmem:[%s282 + $0x48] sm:$0xff]
        %v307 = vld [vmem:[%s282 + $0x50] sm:$0xff]
        %v308 = vld [vmem:[%s282 + $0x58] sm:$0xff]
        %v309 = vld [vmem:[%s282 + $0x60] sm:$0xff]
        %v310 = vld [vmem:[%s282 + $0x68] sm:$0xff]
        %v311 = vld [vmem:[%s282 + $0x70] sm:$0xff]
        %v312 = vld [vmem:[%s282 + $0x78] sm:$0xff]
        %v313 = vld [vmem:[%s282 + $0x80] sm:$0xff]
        %v314 = vld [vmem:[%s282 + $0x88] sm:$0xff]
        %v315 = vld [vmem:[%s282 + $0x90] sm:$0xff]
        %v316 = vld [vmem:[%s282 + $0x98] sm:$0xff]
        %v317 = vld [vmem:[%s282 + $0xa0] sm:$0xff]
        %v318 = vld [vmem:[%s282 + $0xa8] sm:$0xff]
        %v319 = vld [vmem:[%s282 + $0xb0] sm:$0xff]
        %v320 = vld [vmem:[%s282 + $0xb8] sm:$0xff]
        %v321 = vld [vmem:[%s282 + $0xc0] sm:$0xff]
        %v322 = vld [vmem:[%s282 + $0xc8] sm:$0xff]
        %v323 = vld [vmem:[%s282 + $0xd0] sm:$0xff]
        %v324 = vld [vmem:[%s282 + $0xd8] sm:$0xff]
        %v325 = vld [vmem:[%s282 + $0xe0] sm:$0xff]
        %v326 = vld [vmem:[%s282 + $0xe8] sm:$0xff]
        %v327 = vld [vmem:[%s282 + $0xf0] sm:$0xff]
        %v328 = vld [vmem:[%s282 + $0xf8] sm:$0xff]
        %v329 = vld [vmem:[%s282 + $0x100] sm:$0xff]
        %v330 = vld [vmem:[%s282 + $0x108] sm:$0xff]
        %v331 = vld [vmem:[%s282 + $0x110] sm:$0xff]
        %v332 = vld [vmem:[%s282 + $0x118] sm:$0xff]
        %v333 = vld [vmem:[%s282 + $0x120] sm:$0xff]
        %v334 = vld [vmem:[%s282 + $0x128] sm:$0xff]
        %v335 = vld [vmem:[%s282 + $0x130] sm:$0xff]
        %v336 = vld [vmem:[%s282 + $0x138] sm:$0xff]
        %v337 = vld [vmem:[%s282 + $0x140] sm:$0xff]
        %v338 = vld [vmem:[%s282 + $0x148] sm:$0xff]
        %v339 = vld [vmem:[%s282 + $0x150] sm:$0xff]
        %v340 = vld [vmem:[%s282 + $0x158] sm:$0xff]
        %v341 = vld [vmem:[%s282 + $0x160] sm:$0xff]
        %v342 = vld [vmem:[%s282 + $0x168] sm:$0xff]
        %v343 = vld [vmem:[%s282 + $0x170] sm:$0xff]
        %v344 = vld [vmem:[%s282 + $0x178] sm:$0xff]
        %v345 = vld [vmem:[%s282 + $0x180] sm:$0xff]
        %v346 = vld [vmem:[%s282 + $0x188] sm:$0xff]
        %v347 = vld [vmem:[%s282 + $0x190] sm:$0xff]
        %v348 = vld [vmem:[%s282 + $0x198] sm:$0xff]
        %v349 = vld [vmem:[%s282 + $0x1a0] sm:$0xff]
        %v350 = vld [vmem:[%s282 + $0x1a8] sm:$0xff]
        %v351 = vld [vmem:[%s282 + $0x1b0] sm:$0xff]
        %v352 = vld [vmem:[%s282 + $0x1b8] sm:$0xff]
        %v353 = vld [vmem:[%s282 + $0x1c0] sm:$0xff]
        %v354 = vld [vmem:[%s282 + $0x1c8] sm:$0xff]
        %v355 = vld [vmem:[%s282 + $0x1d0] sm:$0xff]
        %v356 = vld [vmem:[%s282 + $0x1d8] sm:$0xff]
        %v357 = vld [vmem:[%s282 + $0x1e0] sm:$0xff]
        %v358 = vld [vmem:[%s282 + $0x1e8] sm:$0xff]
        %v359 = vld [vmem:[%s282 + $0x1f0] sm:$0xff]
        %v360 = vld [vmem:[%s282 + $0x1f8] sm:$0xff]
        %v361 = vld [vmem:[%s282 + $0x200] sm:$0xff]
        %v362 = vld [vmem:[%s282 + $0x208] sm:$0xff]
        %v363 = vld [vmem:[%s282 + $0x210] sm:$0xff]
        %v364 = vld [vmem:[%s282 + $0x218] sm:$0xff]
        %v365 = vld [vmem:[%s282 + $0x220] sm:$0xff]
        %v366 = vld [vmem:[%s282 + $0x228] sm:$0xff]
        %v367 = vld [vmem:[%s282 + $0x230] sm:$0xff]
        %v368 = vld [vmem:[%s282 + $0x238] sm:$0xff]
        %v369 = vld [vmem:[%s282 + $0x240] sm:$0xff]
        %v370 = vld [vmem:[%s282 + $0x248] sm:$0xff]
        %v371 = vld [vmem:[%s282 + $0x250] sm:$0xff]
        %v372 = vld [vmem:[%s282 + $0x258] sm:$0xff]
        %v373 = vld [vmem:[%s282 + $0x260] sm:$0xff]
        %v374 = vld [vmem:[%s282 + $0x268] sm:$0xff]
        %v375 = vld [vmem:[%s282 + $0x270] sm:$0xff]
        %v376 = vld [vmem:[%s282 + $0x278] sm:$0xff]
        %v377 = vld [vmem:[%s282 + $0x280] sm:$0xff]
        %v378 = vld [vmem:[%s282 + $0x288] sm:$0xff]
        %v379 = vld [vmem:[%s282 + $0x290] sm:$0xff]
        %v380 = vld [vmem:[%s282 + $0x298] sm:$0xff]
        %v381 = vld [vmem:[%s282 + $0x2a0] sm:$0xff]
        %v382 = vld [vmem:[%s282 + $0x2a8] sm:$0xff]
        %v383 = vld [vmem:[%s282 + $0x2b0] sm:$0xff]
        %v384 = vld [vmem:[%s282 + $0x2b8] sm:$0xff]
        %v385 = vld [vmem:[%s282 + $0x2c0] sm:$0xff]
        %v386 = vld [vmem:[%s282 + $0x2c8] sm:$0xff]
        %v387 = vld [vmem:[%s282 + $0x2d0] sm:$0xff]
        %v388 = vld [vmem:[%s282 + $0x2d8] sm:$0xff]
        %v389 = vld [vmem:[%s282 + $0x2e0] sm:$0xff]
        %v390 = vld [vmem:[%s282 + $0x2e8] sm:$0xff]
        %v391 = vld [vmem:[%s282 + $0x2f0] sm:$0xff]
        %v392 = vld [vmem:[%s282 + $0x2f8] sm:$0xff]
        %v393 = vld [vmem:[%s282 + $0x300] sm:$0xff]
        %v394 = vld [vmem:[%s282 + $0x308] sm:$0xff]
        %v395 = vld [vmem:[%s282 + $0x310] sm:$0xff]
        %v396 = vld [vmem:[%s282 + $0x318] sm:$0xff]
        %v397 = vld [vmem:[%s282 + $0x320] sm:$0xff]
        %v398 = vld [vmem:[%s282 + $0x328] sm:$0xff]
        %v399 = vld [vmem:[%s282 + $0x330] sm:$0xff]
        %v400 = vld [vmem:[%s282 + $0x338] sm:$0xff]
        %v401 = vld [vmem:[%s282 + $0x340] sm:$0xff]
        %v402 = vld [vmem:[%s282 + $0x348] sm:$0xff]
        %v403 = vld [vmem:[%s282 + $0x350] sm:$0xff]
        %v404 = vld [vmem:[%s282 + $0x358] sm:$0xff]
        %v405 = vld [vmem:[%s282 + $0x360] sm:$0xff]
        %v406 = vld [vmem:[%s282 + $0x368] sm:$0xff]
        %v407 = vld [vmem:[%s282 + $0x370] sm:$0xff]
        %v408 = vld [vmem:[%s282 + $0x378] sm:$0xff]
        %v409 = vld [vmem:[%s282 + $0x380] sm:$0xff]
        %v410 = vld [vmem:[%s282 + $0x388] sm:$0xff]
        %v411 = vld [vmem:[%s282 + $0x390] sm:$0xff]
        %v412 = vld [vmem:[%s282 + $0x398] sm:$0xff]
        %v413 = vld [vmem:[%s282 + $0x3a0] sm:$0xff]
        %v414 = vld [vmem:[%s282 + $0x3a8] sm:$0xff]
        %v415 = vld [vmem:[%s282 + $0x3b0] sm:$0xff]
        %v416 = vld [vmem:[%s282 + $0x3b8] sm:$0xff]
        %v417 = vld [vmem:[%s282 + $0x3c0] sm:$0xff]
        %v418 = vld [vmem:[%s282 + $0x3c8] sm:$0xff]
        %v419 = vld [vmem:[%s282 + $0x3d0] sm:$0xff]
        %v420 = vld [vmem:[%s282 + $0x3d8] sm:$0xff]
        %v421 = vld [vmem:[%s282 + $0x3e0] sm:$0xff]
        %v422 = vld [vmem:[%s282 + $0x3e8] sm:$0xff]
        %v423 = vld [vmem:[%s282 + $0x3f0] sm:$0xff]
        %v424 = vld [vmem:[%s282 + $0x3f8] sm:$0xff]
        %v425 = vld [vmem:[%s288] sm:$0xff]
        %v426 = vld [vmem:[%s288 + $0x8] sm:$0xff]
        %v427 = vld [vmem:[%s288 + $0x10] sm:$0xff]
        %v428 = vld [vmem:[%s288 + $0x18] sm:$0xff]
        %v429 = vld [vmem:[%s288 + $0x20] sm:$0xff]
        %v430 = vld [vmem:[%s288 + $0x28] sm:$0xff]
        %v431 = vld [vmem:[%s288 + $0x30] sm:$0xff]
        %v432 = vld [vmem:[%s288 + $0x38] sm:$0xff]
        %v433 = vld [vmem:[%s288 + $0x40] sm:$0xff]
        %v434 = vld [vmem:[%s288 + $0x48] sm:$0xff]
        %v435 = vld [vmem:[%s288 + $0x50] sm:$0xff]
        %v436 = vld [vmem:[%s288 + $0x58] sm:$0xff]
        %v437 = vld [vmem:[%s288 + $0x60] sm:$0xff]
        %v438 = vld [vmem:[%s288 + $0x68] sm:$0xff]
        %v439 = vld [vmem:[%s288 + $0x70] sm:$0xff]
        %v440 = vld [vmem:[%s288 + $0x78] sm:$0xff]
        %v441 = vld [vmem:[%s288 + $0x80] sm:$0xff]
        %v442 = vld [vmem:[%s288 + $0x88] sm:$0xff]
        %v443 = vld [vmem:[%s288 + $0x90] sm:$0xff]
        %v444 = vld [vmem:[%s288 + $0x98] sm:$0xff]
        %v445 = vld [vmem:[%s288 + $0xa0] sm:$0xff]
        %v446 = vld [vmem:[%s288 + $0xa8] sm:$0xff]
        %v447 = vld [vmem:[%s288 + $0xb0] sm:$0xff]
        %v448 = vld [vmem:[%s288 + $0xb8] sm:$0xff]
        %v449 = vld [vmem:[%s288 + $0xc0] sm:$0xff]
        %v450 = vld [vmem:[%s288 + $0xc8] sm:$0xff]
        %v451 = vld [vmem:[%s288 + $0xd0] sm:$0xff]
        %v452 = vld [vmem:[%s288 + $0xd8] sm:$0xff]
        %v453 = vld [vmem:[%s288 + $0xe0] sm:$0xff]
        %v454 = vld [vmem:[%s288 + $0xe8] sm:$0xff]
        %v455 = vld [vmem:[%s288 + $0xf0] sm:$0xff]
        %v456 = vld [vmem:[%s288 + $0xf8] sm:$0xff]
        %v457 = vld [vmem:[%s288 + $0x100] sm:$0xff]
        %v458 = vld [vmem:[%s288 + $0x108] sm:$0xff]
        %v459 = vld [vmem:[%s288 + $0x110] sm:$0xff]
        %v460 = vld [vmem:[%s288 + $0x118] sm:$0xff]
        %v461 = vld [vmem:[%s288 + $0x120] sm:$0xff]
        %v462 = vld [vmem:[%s288 + $0x128] sm:$0xff]
        %v463 = vld [vmem:[%s288 + $0x130] sm:$0xff]
        %v464 = vld [vmem:[%s288 + $0x138] sm:$0xff]
        %v465 = vld [vmem:[%s288 + $0x140] sm:$0xff]
        %v466 = vld [vmem:[%s288 + $0x148] sm:$0xff]
        %v467 = vld [vmem:[%s288 + $0x150] sm:$0xff]
        %v468 = vld [vmem:[%s288 + $0x158] sm:$0xff]
        %v469 = vld [vmem:[%s288 + $0x160] sm:$0xff]
        %v470 = vld [vmem:[%s288 + $0x168] sm:$0xff]
        %v471 = vld [vmem:[%s288 + $0x170] sm:$0xff]
        %v472 = vld [vmem:[%s288 + $0x178] sm:$0xff]
        %v473 = vld [vmem:[%s288 + $0x180] sm:$0xff]
        %v474 = vld [vmem:[%s288 + $0x188] sm:$0xff]
        %v475 = vld [vmem:[%s288 + $0x190] sm:$0xff]
        %v476 = vld [vmem:[%s288 + $0x198] sm:$0xff]
        %v477 = vld [vmem:[%s288 + $0x1a0] sm:$0xff]
        %v478 = vld [vmem:[%s288 + $0x1a8] sm:$0xff]
        %v479 = vld [vmem:[%s288 + $0x1b0] sm:$0xff]
        %v480 = vld [vmem:[%s288 + $0x1b8] sm:$0xff]
        %v481 = vld [vmem:[%s288 + $0x1c0] sm:$0xff]
        %v482 = vld [vmem:[%s288 + $0x1c8] sm:$0xff]
        %v483 = vld [vmem:[%s288 + $0x1d0] sm:$0xff]
        %v484 = vld [vmem:[%s288 + $0x1d8] sm:$0xff]
        %v485 = vld [vmem:[%s288 + $0x1e0] sm:$0xff]
        %v486 = vld [vmem:[%s288 + $0x1e8] sm:$0xff]
        %v487 = vld [vmem:[%s288 + $0x1f0] sm:$0xff]
        %v488 = vld [vmem:[%s288 + $0x1f8] sm:$0xff]
        %v489 = vld [vmem:[%s288 + $0x200] sm:$0xff]
        %v490 = vld [vmem:[%s288 + $0x208] sm:$0xff]
        %v491 = vld [vmem:[%s288 + $0x210] sm:$0xff]
        %v492 = vld [vmem:[%s288 + $0x218] sm:$0xff]
        %v493 = vld [vmem:[%s288 + $0x220] sm:$0xff]
        %v494 = vld [vmem:[%s288 + $0x228] sm:$0xff]
        %v495 = vld [vmem:[%s288 + $0x230] sm:$0xff]
        %v496 = vld [vmem:[%s288 + $0x238] sm:$0xff]
        %v497 = vld [vmem:[%s288 + $0x240] sm:$0xff]
        %v498 = vld [vmem:[%s288 + $0x248] sm:$0xff]
        %v499 = vld [vmem:[%s288 + $0x250] sm:$0xff]
        %v500 = vld [vmem:[%s288 + $0x258] sm:$0xff]
        %v501 = vld [vmem:[%s288 + $0x260] sm:$0xff]
        %v502 = vld [vmem:[%s288 + $0x268] sm:$0xff]
        %v503 = vld [vmem:[%s288 + $0x270] sm:$0xff]
        %v504 = vld [vmem:[%s288 + $0x278] sm:$0xff]
        %v505 = vld [vmem:[%s288 + $0x280] sm:$0xff]
        %v506 = vld [vmem:[%s288 + $0x288] sm:$0xff]
        %v507 = vld [vmem:[%s288 + $0x290] sm:$0xff]
        %v508 = vld [vmem:[%s288 + $0x298] sm:$0xff]
        %v509 = vld [vmem:[%s288 + $0x2a0] sm:$0xff]
        %v510 = vld [vmem:[%s288 + $0x2a8] sm:$0xff]
        %v511 = vld [vmem:[%s288 + $0x2b0] sm:$0xff]
        %v512 = vld [vmem:[%s288 + $0x2b8] sm:$0xff]
        %v513 = vld [vmem:[%s288 + $0x2c0] sm:$0xff]
        %v514 = vld [vmem:[%s288 + $0x2c8] sm:$0xff]
        %v515 = vld [vmem:[%s288 + $0x2d0] sm:$0xff]
        %v516 = vld [vmem:[%s288 + $0x2d8] sm:$0xff]
        %v517 = vld [vmem:[%s288 + $0x2e0] sm:$0xff]
        %v518 = vld [vmem:[%s288 + $0x2e8] sm:$0xff]
        %v519 = vld [vmem:[%s288 + $0x2f0] sm:$0xff]
        %v520 = vld [vmem:[%s288 + $0x2f8] sm:$0xff]
        %v521 = vld [vmem:[%s288 + $0x300] sm:$0xff]
        %v522 = vld [vmem:[%s288 + $0x308] sm:$0xff]
        %v523 = vld [vmem:[%s288 + $0x310] sm:$0xff]
        %v524 = vld [vmem:[%s288 + $0x318] sm:$0xff]
        %v525 = vld [vmem:[%s288 + $0x320] sm:$0xff]
        %v526 = vld [vmem:[%s288 + $0x328] sm:$0xff]
        %v527 = vld [vmem:[%s288 + $0x330] sm:$0xff]
        %v528 = vld [vmem:[%s288 + $0x338] sm:$0xff]
        %v529 = vld [vmem:[%s288 + $0x340] sm:$0xff]
        %v530 = vld [vmem:[%s288 + $0x348] sm:$0xff]
        %v531 = vld [vmem:[%s288 + $0x350] sm:$0xff]
        %v532 = vld [vmem:[%s288 + $0x358] sm:$0xff]
        %v533 = vld [vmem:[%s288 + $0x360] sm:$0xff]
        %v534 = vld [vmem:[%s288 + $0x368] sm:$0xff]
        %v535 = vld [vmem:[%s288 + $0x370] sm:$0xff]
        %v536 = vld [vmem:[%s288 + $0x378] sm:$0xff]
        %v537 = vld [vmem:[%s288 + $0x380] sm:$0xff]
        %v538 = vld [vmem:[%s288 + $0x388] sm:$0xff]
        %v539 = vld [vmem:[%s288 + $0x390] sm:$0xff]
        %v540 = vld [vmem:[%s288 + $0x398] sm:$0xff]
        %v541 = vld [vmem:[%s288 + $0x3a0] sm:$0xff]
        %v542 = vld [vmem:[%s288 + $0x3a8] sm:$0xff]
        %v543 = vld [vmem:[%s288 + $0x3b0] sm:$0xff]
        %v544 = vld [vmem:[%s288 + $0x3b8] sm:$0xff]
        %v545 = vld [vmem:[%s288 + $0x3c0] sm:$0xff]
        %v546 = vld [vmem:[%s288 + $0x3c8] sm:$0xff]
        %v547 = vld [vmem:[%s288 + $0x3d0] sm:$0xff]
        %v548 = vld [vmem:[%s288 + $0x3d8] sm:$0xff]
        %v549 = vld [vmem:[%s288 + $0x3e0] sm:$0xff]
        %v550 = vld [vmem:[%s288 + $0x3e8] sm:$0xff]
        %v551 = vld [vmem:[%s288 + $0x3f0] sm:$0xff]
        %v552 = vld [vmem:[%s288 + $0x3f8] sm:$0xff]
        %v553 = vmul.f32 %v297, %v425
        %v554 = vmul.f32 %v298, %v426
        %v555 = vmul.f32 %v299, %v427
        %v556 = vmul.f32 %v300, %v428
        %v557 = vmul.f32 %v301, %v429
        %v558 = vmul.f32 %v302, %v430
        %v559 = vmul.f32 %v303, %v431
        %v560 = vmul.f32 %v304, %v432
        %v561 = vmul.f32 %v305, %v433
        %v562 = vmul.f32 %v306, %v434
        %v563 = vmul.f32 %v307, %v435
        %v564 = vmul.f32 %v308, %v436
        %v565 = vmul.f32 %v309, %v437
        %v566 = vmul.f32 %v310, %v438
        %v567 = vmul.f32 %v311, %v439
        %v568 = vmul.f32 %v312, %v440
        %v569 = vmul.f32 %v313, %v441
        %v570 = vmul.f32 %v314, %v442
        %v571 = vmul.f32 %v315, %v443
        %v572 = vmul.f32 %v316, %v444
        %v573 = vmul.f32 %v317, %v445
        %v574 = vmul.f32 %v318, %v446
        %v575 = vmul.f32 %v319, %v447
        %v576 = vmul.f32 %v320, %v448
        %v577 = vmul.f32 %v321, %v449
        %v578 = vmul.f32 %v322, %v450
        %v579 = vmul.f32 %v323, %v451
        %v580 = vmul.f32 %v324, %v452
        %v581 = vmul.f32 %v325, %v453
        %v582 = vmul.f32 %v326, %v454
        %v583 = vmul.f32 %v327, %v455
        %v584 = vmul.f32 %v328, %v456
        %v585 = vmul.f32 %v329, %v457
        %v586 = vmul.f32 %v330, %v458
        %v587 = vmul.f32 %v331, %v459
        %v588 = vmul.f32 %v332, %v460
        %v589 = vmul.f32 %v333, %v461
        %v590 = vmul.f32 %v334, %v462
        %v591 = vmul.f32 %v335, %v463
        %v592 = vmul.f32 %v336, %v464
        %v593 = vmul.f32 %v337, %v465
        %v594 = vmul.f32 %v338, %v466
        %v595 = vmul.f32 %v339, %v467
        %v596 = vmul.f32 %v340, %v468
        %v597 = vmul.f32 %v341, %v469
        %v598 = vmul.f32 %v342, %v470
        %v599 = vmul.f32 %v343, %v471
        %v600 = vmul.f32 %v344, %v472
        %v601 = vmul.f32 %v345, %v473
        %v602 = vmul.f32 %v346, %v474
        %v603 = vmul.f32 %v347, %v475
        %v604 = vmul.f32 %v348, %v476
        %v605 = vmul.f32 %v349, %v477
        %v606 = vmul.f32 %v350, %v478
        %v607 = vmul.f32 %v351, %v479
        %v608 = vmul.f32 %v352, %v480
        %v609 = vmul.f32 %v353, %v481
        %v610 = vmul.f32 %v354, %v482
        %v611 = vmul.f32 %v355, %v483
        %v612 = vmul.f32 %v356, %v484
        %v613 = vmul.f32 %v357, %v485
        %v614 = vmul.f32 %v358, %v486
        %v615 = vmul.f32 %v359, %v487
        %v616 = vmul.f32 %v360, %v488
        %v617 = vmul.f32 %v361, %v489
        %v618 = vmul.f32 %v362, %v490
        %v619 = vmul.f32 %v363, %v491
        %v620 = vmul.f32 %v364, %v492
        %v621 = vmul.f32 %v365, %v493
        %v622 = vmul.f32 %v366, %v494
        %v623 = vmul.f32 %v367, %v495
        %v624 = vmul.f32 %v368, %v496
        %v625 = vmul.f32 %v369, %v497
        %v626 = vmul.f32 %v370, %v498
        %v627 = vmul.f32 %v371, %v499
        %v628 = vmul.f32 %v372, %v500
        %v629 = vmul.f32 %v373, %v501
        %v630 = vmul.f32 %v374, %v502
        %v631 = vmul.f32 %v375, %v503
        %v632 = vmul.f32 %v376, %v504
        %v633 = vmul.f32 %v377, %v505
        %v634 = vmul.f32 %v378, %v506
        %v635 = vmul.f32 %v379, %v507
        %v636 = vmul.f32 %v380, %v508
        %v637 = vmul.f32 %v381, %v509
        %v638 = vmul.f32 %v382, %v510
        %v639 = vmul.f32 %v383, %v511
        %v640 = vmul.f32 %v384, %v512
        %v641 = vmul.f32 %v385, %v513
        %v642 = vmul.f32 %v386, %v514
        %v643 = vmul.f32 %v387, %v515
        %v644 = vmul.f32 %v388, %v516
        %v645 = vmul.f32 %v389, %v517
        %v646 = vmul.f32 %v390, %v518
        %v647 = vmul.f32 %v391, %v519
        %v648 = vmul.f32 %v392, %v520
        %v649 = vmul.f32 %v393, %v521
        %v650 = vmul.f32 %v394, %v522
        %v651 = vmul.f32 %v395, %v523
        %v652 = vmul.f32 %v396, %v524
        %v653 = vmul.f32 %v397, %v525
        %v654 = vmul.f32 %v398, %v526
        %v655 = vmul.f32 %v399, %v527
        %v656 = vmul.f32 %v400, %v528
        %v657 = vmul.f32 %v401, %v529
        %v658 = vmul.f32 %v402, %v530
        %v659 = vmul.f32 %v403, %v531
        %v660 = vmul.f32 %v404, %v532
        %v661 = vmul.f32 %v405, %v533
        %v662 = vmul.f32 %v406, %v534
        %v663 = vmul.f32 %v407, %v535
        %v664 = vmul.f32 %v408, %v536
        %v665 = vmul.f32 %v409, %v537
        %v666 = vmul.f32 %v410, %v538
        %v667 = vmul.f32 %v411, %v539
        %v668 = vmul.f32 %v412, %v540
        %v669 = vmul.f32 %v413, %v541
        %v670 = vmul.f32 %v414, %v542
        %v671 = vmul.f32 %v415, %v543
        %v672 = vmul.f32 %v416, %v544
        %v673 = vmul.f32 %v417, %v545
        %v674 = vmul.f32 %v418, %v546
        %v675 = vmul.f32 %v419, %v547
        %v676 = vmul.f32 %v420, %v548
        %v677 = vmul.f32 %v421, %v549
        %v678 = vmul.f32 %v422, %v550
        %v679 = vmul.f32 %v423, %v551
        %v680 = vmul.f32 %v424, %v552
        %v681 = vld [vmem:[%s3] sm:$0xff]
        %v682 = vld [vmem:[%s3 + $0x8] sm:$0xff]
        %v683 = vld [vmem:[%s3 + $0x10] sm:$0xff]
        %v684 = vld [vmem:[%s3 + $0x18] sm:$0xff]
        %v685 = vld [vmem:[%s3 + $0x20] sm:$0xff]
        %v686 = vld [vmem:[%s3 + $0x28] sm:$0xff]
        %v687 = vld [vmem:[%s3 + $0x30] sm:$0xff]
        %v688 = vld [vmem:[%s3 + $0x38] sm:$0xff]
        %vm689 = vcmask 523264
        %v691 = vsel %vm689, %v553, 0
        %v694 = vsel %vm689, %v554, 0
        %v697 = vsel %vm689, %v555, 0
        %v700 = vsel %vm689, %v556, 0
        %v703 = vsel %vm689, %v557, 0
        %v706 = vsel %vm689, %v558, 0
        %v709 = vsel %vm689, %v559, 0
        %v712 = vsel %vm689, %v560, 0
        %v715 = vsel %vm689, %v561, 0
        %v718 = vsel %vm689, %v562, 0
        %v721 = vsel %vm689, %v563, 0
        %v724 = vsel %vm689, %v564, 0
        %v727 = vsel %vm689, %v565, 0
        %v730 = vsel %vm689, %v566, 0
        %v733 = vsel %vm689, %v567, 0
        %v736 = vsel %vm689, %v568, 0
        %v739 = vsel %vm689, %v569, 0
        %v742 = vsel %vm689, %v570, 0
        %v745 = vsel %vm689, %v571, 0
        %v748 = vsel %vm689, %v572, 0
        %v751 = vsel %vm689, %v573, 0
        %v754 = vsel %vm689, %v574, 0
        %v757 = vsel %vm689, %v575, 0
        %v760 = vsel %vm689, %v576, 0
        %v763 = vsel %vm689, %v577, 0
        %v766 = vsel %vm689, %v578, 0
        %v769 = vsel %vm689, %v579, 0
        %v772 = vsel %vm689, %v580, 0
        %v775 = vsel %vm689, %v581, 0
        %v778 = vsel %vm689, %v582, 0
        %v781 = vsel %vm689, %v583, 0
        %v784 = vsel %vm689, %v584, 0
        %v787 = vsel %vm689, %v585, 0
        %v790 = vsel %vm689, %v586, 0
        %v793 = vsel %vm689, %v587, 0
        %v796 = vsel %vm689, %v588, 0
        %v799 = vsel %vm689, %v589, 0
        %v802 = vsel %vm689, %v590, 0
        %v805 = vsel %vm689, %v591, 0
        %v808 = vsel %vm689, %v592, 0
        %v811 = vsel %vm689, %v593, 0
        %v814 = vsel %vm689, %v594, 0
        %v817 = vsel %vm689, %v595, 0
        %v820 = vsel %vm689, %v596, 0
        %v823 = vsel %vm689, %v597, 0
        %v826 = vsel %vm689, %v598, 0
        %v829 = vsel %vm689, %v599, 0
        %v832 = vsel %vm689, %v600, 0
        %v835 = vsel %vm689, %v601, 0
        %v838 = vsel %vm689, %v602, 0
        %v841 = vsel %vm689, %v603, 0
        %v844 = vsel %vm689, %v604, 0
        %v847 = vsel %vm689, %v605, 0
        %v850 = vsel %vm689, %v606, 0
        %v853 = vsel %vm689, %v607, 0
        %v856 = vsel %vm689, %v608, 0
        %v859 = vsel %vm689, %v609, 0
        %v862 = vsel %vm689, %v610, 0
        %v865 = vsel %vm689, %v611, 0
        %v868 = vsel %vm689, %v612, 0
        %v871 = vsel %vm689, %v613, 0
        %v874 = vsel %vm689, %v614, 0
        %v877 = vsel %vm689, %v615, 0
        %v880 = vsel %vm689, %v616, 0
        %v883 = vsel %vm689, %v617, 0
        %v886 = vsel %vm689, %v618, 0
        %v889 = vsel %vm689, %v619, 0
        %v892 = vsel %vm689, %v620, 0
        %v895 = vsel %vm689, %v621, 0
        %v898 = vsel %vm689, %v622, 0
        %v901 = vsel %vm689, %v623, 0
        %v904 = vsel %vm689, %v624, 0
        %v907 = vsel %vm689, %v625, 0
        %v910 = vsel %vm689, %v626, 0
        %v913 = vsel %vm689, %v627, 0
        %v916 = vsel %vm689, %v628, 0
        %v919 = vsel %vm689, %v629, 0
        %v922 = vsel %vm689, %v630, 0
        %v925 = vsel %vm689, %v631, 0
        %v928 = vsel %vm689, %v632, 0
        %v931 = vsel %vm689, %v633, 0
        %v934 = vsel %vm689, %v634, 0
        %v937 = vsel %vm689, %v635, 0
        %v940 = vsel %vm689, %v636, 0
        %v943 = vsel %vm689, %v637, 0
        %v946 = vsel %vm689, %v638, 0
        %v949 = vsel %vm689, %v639, 0
        %v952 = vsel %vm689, %v640, 0
        %v955 = vsel %vm689, %v641, 0
        %v958 = vsel %vm689, %v642, 0
        %v961 = vsel %vm689, %v643, 0
        %v964 = vsel %vm689, %v644, 0
        %v967 = vsel %vm689, %v645, 0
        %v970 = vsel %vm689, %v646, 0
        %v973 = vsel %vm689, %v647, 0
        %v976 = vsel %vm689, %v648, 0
        %v979 = vsel %vm689, %v649, 0
        %v982 = vsel %vm689, %v650, 0
        %v985 = vsel %vm689, %v651, 0
        %v988 = vsel %vm689, %v652, 0
        %v991 = vsel %vm689, %v653, 0
        %v994 = vsel %vm689, %v654, 0
        %v997 = vsel %vm689, %v655, 0
        %v1000 = vsel %vm689, %v656, 0
        %v1003 = vsel %vm689, %v657, 0
        %v1006 = vsel %vm689, %v658, 0
        %v1009 = vsel %vm689, %v659, 0
        %v1012 = vsel %vm689, %v660, 0
        %v1015 = vsel %vm689, %v661, 0
        %v1018 = vsel %vm689, %v662, 0
        %v1021 = vsel %vm689, %v663, 0
        %v1024 = vsel %vm689, %v664, 0
        %v1027 = vsel %vm689, %v665, 0
        %v1030 = vsel %vm689, %v666, 0
        %v1033 = vsel %vm689, %v667, 0
        %v1036 = vsel %vm689, %v668, 0
        %v1039 = vsel %vm689, %v669, 0
        %v1042 = vsel %vm689, %v670, 0
        %v1045 = vsel %vm689, %v671, 0
        %v1048 = vsel %vm689, %v672, 0
        %v1051 = vsel %vm689, %v673, 0
        %v1054 = vsel %vm689, %v674, 0
        %v1057 = vsel %vm689, %v675, 0
        %v1060 = vsel %vm689, %v676, 0
        %v1063 = vsel %vm689, %v677, 0
        %v1066 = vsel %vm689, %v678, 0
        %v1069 = vsel %vm689, %v679, 0
        %v1072 = vsel %vm689, %v680, 0
        %1074 = vmatprep.subr.mxu0 0.0
        %1075 = vmatpush1.msra.mxu0 0.0
        %1076 = vmatprep.subr.mxu0 0.0
        %1077 = vmatpush1.msra.mxu0 0.0
        %1078 = vmatprep.subr.mxu0 0.0
        %1079 = vmatpush1.msra.mxu0 0.0
        %1080 = vmatprep.subr.mxu0 0.0
        %1081 = vmatpush1.msra.mxu0 0.0
        %1082 = vmatprep.subr.mxu0 0.0
        %1083 = vmatpush1.msra.mxu0 0.0
        %1084 = vmatprep.subr.mxu0 0.0
        %1085 = vmatpush1.msra.mxu0 0.0
        %1086 = vmatprep.subr.mxu0 0.0
        %1087 = vmatpush1.msra.mxu0 0.0
        %1088 = vmatprep.subr.mxu0 0.0
        %1089 = vmatpush1.msra.mxu0 0.0
        %1090 = vmatprep.subr.mxu0 0.0
        %1091 = vmatpush1.msra.mxu0 %v688
        %1092 = vmatprep.subr.mxu0 0.0
        %1093 = vmatpush1.msra.mxu0 %v687
        %1094 = vmatprep.subr.mxu0 0.0
        %1095 = vmatpush1.msra.mxu0 %v686
        %1096 = vmatprep.subr.mxu0 0.0
        %1097 = vmatpush1.msra.mxu0 %v685
        %1098 = vmatprep.subr.mxu0 0.0
        %1099 = vmatpush1.msra.mxu0 %v684
        %1100 = vmatprep.subr.mxu0 0.0
        %1101 = vmatpush1.msra.mxu0 %v683
        %1102 = vmatprep.subr.mxu0 0.0
        %1103 = vmatpush1.msra.mxu0 %v682
        %1104 = vmatprep.subr.mxu0 0.0
        %1105 = vmatpush1.msra.mxu0 %v681
        %1106 = vmatprep.subr.mxu0 0.0
        %1107 = vmatpush2.msra.mxu0 0.0
        %1108 = vmatprep.subr.mxu0 0.0
        %1109 = vmatpush2.msra.mxu0 0.0
        %1110 = vmatprep.subr.mxu0 0.0
        %1111 = vmatpush2.msra.mxu0 0.0
        %1112 = vmatprep.subr.mxu0 0.0
        %1113 = vmatpush2.msra.mxu0 0.0
        %1114 = vmatprep.subr.mxu0 0.0
        %1115 = vmatpush2.msra.mxu0 0.0
        %1116 = vmatprep.subr.mxu0 0.0
        %1117 = vmatpush2.msra.mxu0 0.0
        %1118 = vmatprep.subr.mxu0 0.0
        %1119 = vmatpush2.msra.mxu0 0.0
        %1120 = vmatprep.subr.mxu0 0.0
        %1121 = vmatpush2.msra.mxu0 0.0
        %1122 = vmatprep.subr.mxu0 0.0
        %1123 = vmatpush2.msra.mxu0 0.0
        %1124 = vmatprep.subr.mxu0 0.0
        %1125 = vmatpush2.msra.mxu0 0.0
        %1126 = vmatprep.subr.mxu0 0.0
        %1127 = vmatpush2.msra.mxu0 0.0
        %1128 = vmatprep.subr.mxu0 0.0
        %1129 = vmatpush2.msra.mxu0 0.0
        %1130 = vmatprep.subr.mxu0 0.0
        %1131 = vmatpush2.msra.mxu0 0.0
        %1132 = vmatprep.subr.mxu0 0.0
        %1133 = vmatpush2.msra.mxu0 0.0
        %1134 = vmatprep.subr.mxu0 0.0
        %1135 = vmatpush2.msra.mxu0 0.0
        %1136 = vmatprep.subr.mxu0 0.0
        %1137 = vmatpush2.msra.mxu0 0.0
        %1138 = vmatprep.mubr.f32.mxu0 0.0
        %1139 = vmatmul.mubr.f32.gmra.mxu0 %v691
        %v1140 = vpop.f32.mrf.mxu0
        %v1141 = vadd.f32 0.0, %v1140
        %v1142 = vpop.f32.mrf.mxu0
        %1143 = vmatprep.mubr.f32.mxu0 0.0
        %1144 = vmatmul.mubr.f32.gmra.mxu0 %v694
        %v1145 = vpop.f32.mrf.mxu0
        %v1146 = vadd.f32 0.0, %v1145
        %v1147 = vpop.f32.mrf.mxu0
        %1148 = vmatprep.mubr.f32.mxu0 0.0
        %1149 = vmatmul.mubr.f32.gmra.mxu0 %v697
        %v1150 = vpop.f32.mrf.mxu0
        %v1151 = vadd.f32 0.0, %v1150
        %v1152 = vpop.f32.mrf.mxu0
        %1153 = vmatprep.mubr.f32.mxu0 0.0
        %1154 = vmatmul.mubr.f32.gmra.mxu0 %v700
        %v1155 = vpop.f32.mrf.mxu0
        %v1156 = vadd.f32 0.0, %v1155
        %v1157 = vpop.f32.mrf.mxu0
        %1158 = vmatprep.mubr.f32.mxu0 0.0
        %1159 = vmatmul.mubr.f32.gmra.mxu0 %v703
        %v1160 = vpop.f32.mrf.mxu0
        %v1161 = vadd.f32 0.0, %v1160
        %v1162 = vpop.f32.mrf.mxu0
        %1163 = vmatprep.mubr.f32.mxu0 0.0
        %1164 = vmatmul.mubr.f32.gmra.mxu0 %v706
        %v1165 = vpop.f32.mrf.mxu0
        %v1166 = vadd.f32 0.0, %v1165
        %v1167 = vpop.f32.mrf.mxu0
        %1168 = vmatprep.mubr.f32.mxu0 0.0
        %1169 = vmatmul.mubr.f32.gmra.mxu0 %v709
        %v1170 = vpop.f32.mrf.mxu0
        %v1171 = vadd.f32 0.0, %v1170
        %v1172 = vpop.f32.mrf.mxu0
        %1173 = vmatprep.mubr.f32.mxu0 0.0
        %1174 = vmatmul.mubr.f32.gmra.mxu0 %v712
        %v1175 = vpop.f32.mrf.mxu0
        %v1176 = vadd.f32 0.0, %v1175
        %v1177 = vpop.f32.mrf.mxu0
        %1178 = vmatprep.mubr.f32.mxu0 0.0
        %1179 = vmatmul.mubr.f32.gmra.mxu0 %v715
        %v1180 = vpop.f32.mrf.mxu0
        %v1181 = vadd.f32 0.0, %v1180
        %v1182 = vpop.f32.mrf.mxu0
        %1183 = vmatprep.mubr.f32.mxu0 0.0
        %1184 = vmatmul.mubr.f32.gmra.mxu0 %v718
        %v1185 = vpop.f32.mrf.mxu0
        %v1186 = vadd.f32 0.0, %v1185
        %v1187 = vpop.f32.mrf.mxu0
        %1188 = vmatprep.mubr.f32.mxu0 0.0
        %1189 = vmatmul.mubr.f32.gmra.mxu0 %v721
        %v1190 = vpop.f32.mrf.mxu0
        %v1191 = vadd.f32 0.0, %v1190
        %v1192 = vpop.f32.mrf.mxu0
        %1193 = vmatprep.mubr.f32.mxu0 0.0
        %1194 = vmatmul.mubr.f32.gmra.mxu0 %v724
        %v1195 = vpop.f32.mrf.mxu0
        %v1196 = vadd.f32 0.0, %v1195
        %v1197 = vpop.f32.mrf.mxu0
        %1198 = vmatprep.mubr.f32.mxu0 0.0
        %1199 = vmatmul.mubr.f32.gmra.mxu0 %v727
        %v1200 = vpop.f32.mrf.mxu0
        %v1201 = vadd.f32 0.0, %v1200
        %v1202 = vpop.f32.mrf.mxu0
        %1203 = vmatprep.mubr.f32.mxu0 0.0
        %1204 = vmatmul.mubr.f32.gmra.mxu0 %v730
        %v1205 = vpop.f32.mrf.mxu0
        %v1206 = vadd.f32 0.0, %v1205
        %v1207 = vpop.f32.mrf.mxu0
        %1208 = vmatprep.mubr.f32.mxu0 0.0
        %1209 = vmatmul.mubr.f32.gmra.mxu0 %v733
        %v1210 = vpop.f32.mrf.mxu0
        %v1211 = vadd.f32 0.0, %v1210
        %v1212 = vpop.f32.mrf.mxu0
        %1213 = vmatprep.mubr.f32.mxu0 0.0
        %1214 = vmatmul.mubr.f32.gmra.mxu0 %v736
        %v1215 = vpop.f32.mrf.mxu0
        %v1216 = vadd.f32 0.0, %v1215
        %v1217 = vpop.f32.mrf.mxu0
        %1218 = vmatprep.mubr.f32.mxu0 0.0
        %1219 = vmatmul.mubr.f32.gmra.mxu0 %v739
        %v1220 = vpop.f32.mrf.mxu0
        %v1221 = vadd.f32 0.0, %v1220
        %v1222 = vpop.f32.mrf.mxu0
        %1223 = vmatprep.mubr.f32.mxu0 0.0
        %1224 = vmatmul.mubr.f32.gmra.mxu0 %v742
        %v1225 = vpop.f32.mrf.mxu0
        %v1226 = vadd.f32 0.0, %v1225
        %v1227 = vpop.f32.mrf.mxu0
        %1228 = vmatprep.mubr.f32.mxu0 0.0
        %1229 = vmatmul.mubr.f32.gmra.mxu0 %v745
        %v1230 = vpop.f32.mrf.mxu0
        %v1231 = vadd.f32 0.0, %v1230
        %v1232 = vpop.f32.mrf.mxu0
        %1233 = vmatprep.mubr.f32.mxu0 0.0
        %1234 = vmatmul.mubr.f32.gmra.mxu0 %v748
        %v1235 = vpop.f32.mrf.mxu0
        %v1236 = vadd.f32 0.0, %v1235
        %v1237 = vpop.f32.mrf.mxu0
        %1238 = vmatprep.mubr.f32.mxu0 0.0
        %1239 = vmatmul.mubr.f32.gmra.mxu0 %v751
        %v1240 = vpop.f32.mrf.mxu0
        %v1241 = vadd.f32 0.0, %v1240
        %v1242 = vpop.f32.mrf.mxu0
        %1243 = vmatprep.mubr.f32.mxu0 0.0
        %1244 = vmatmul.mubr.f32.gmra.mxu0 %v754
        %v1245 = vpop.f32.mrf.mxu0
        %v1246 = vadd.f32 0.0, %v1245
        %v1247 = vpop.f32.mrf.mxu0
        %1248 = vmatprep.mubr.f32.mxu0 0.0
        %1249 = vmatmul.mubr.f32.gmra.mxu0 %v757
        %v1250 = vpop.f32.mrf.mxu0
        %v1251 = vadd.f32 0.0, %v1250
        %v1252 = vpop.f32.mrf.mxu0
        %1253 = vmatprep.mubr.f32.mxu0 0.0
        %1254 = vmatmul.mubr.f32.gmra.mxu0 %v760
        %v1255 = vpop.f32.mrf.mxu0
        %v1256 = vadd.f32 0.0, %v1255
        %v1257 = vpop.f32.mrf.mxu0
        %1258 = vmatprep.mubr.f32.mxu0 0.0
        %1259 = vmatmul.mubr.f32.gmra.mxu0 %v763
        %v1260 = vpop.f32.mrf.mxu0
        %v1261 = vadd.f32 0.0, %v1260
        %v1262 = vpop.f32.mrf.mxu0
        %1263 = vmatprep.mubr.f32.mxu0 0.0
        %1264 = vmatmul.mubr.f32.gmra.mxu0 %v766
        %v1265 = vpop.f32.mrf.mxu0
        %v1266 = vadd.f32 0.0, %v1265
        %v1267 = vpop.f32.mrf.mxu0
        %1268 = vmatprep.mubr.f32.mxu0 0.0
        %1269 = vmatmul.mubr.f32.gmra.mxu0 %v769
        %v1270 = vpop.f32.mrf.mxu0
        %v1271 = vadd.f32 0.0, %v1270
        %v1272 = vpop.f32.mrf.mxu0
        %1273 = vmatprep.mubr.f32.mxu0 0.0
        %1274 = vmatmul.mubr.f32.gmra.mxu0 %v772
        %v1275 = vpop.f32.mrf.mxu0
        %v1276 = vadd.f32 0.0, %v1275
        %v1277 = vpop.f32.mrf.mxu0
        %1278 = vmatprep.mubr.f32.mxu0 0.0
        %1279 = vmatmul.mubr.f32.gmra.mxu0 %v775
        %v1280 = vpop.f32.mrf.mxu0
        %v1281 = vadd.f32 0.0, %v1280
        %v1282 = vpop.f32.mrf.mxu0
        %1283 = vmatprep.mubr.f32.mxu0 0.0
        %1284 = vmatmul.mubr.f32.gmra.mxu0 %v778
        %v1285 = vpop.f32.mrf.mxu0
        %v1286 = vadd.f32 0.0, %v1285
        %v1287 = vpop.f32.mrf.mxu0
        %1288 = vmatprep.mubr.f32.mxu0 0.0
        %1289 = vmatmul.mubr.f32.gmra.mxu0 %v781
        %v1290 = vpop.f32.mrf.mxu0
        %v1291 = vadd.f32 0.0, %v1290
        %v1292 = vpop.f32.mrf.mxu0
        %1293 = vmatprep.mubr.f32.mxu0 0.0
        %1294 = vmatmul.mubr.f32.gmra.mxu0 %v784
        %v1295 = vpop.f32.mrf.mxu0
        %v1296 = vadd.f32 0.0, %v1295
        %v1297 = vpop.f32.mrf.mxu0
        %1298 = vmatprep.mubr.f32.mxu0 0.0
        %1299 = vmatmul.mubr.f32.gmra.mxu0 %v787
        %v1300 = vpop.f32.mrf.mxu0
        %v1301 = vadd.f32 0.0, %v1300
        %v1302 = vpop.f32.mrf.mxu0
        %1303 = vmatprep.mubr.f32.mxu0 0.0
        %1304 = vmatmul.mubr.f32.gmra.mxu0 %v790
        %v1305 = vpop.f32.mrf.mxu0
        %v1306 = vadd.f32 0.0, %v1305
        %v1307 = vpop.f32.mrf.mxu0
        %1308 = vmatprep.mubr.f32.mxu0 0.0
        %1309 = vmatmul.mubr.f32.gmra.mxu0 %v793
        %v1310 = vpop.f32.mrf.mxu0
        %v1311 = vadd.f32 0.0, %v1310
        %v1312 = vpop.f32.mrf.mxu0
        %1313 = vmatprep.mubr.f32.mxu0 0.0
        %1314 = vmatmul.mubr.f32.gmra.mxu0 %v796
        %v1315 = vpop.f32.mrf.mxu0
        %v1316 = vadd.f32 0.0, %v1315
        %v1317 = vpop.f32.mrf.mxu0
        %1318 = vmatprep.mubr.f32.mxu0 0.0
        %1319 = vmatmul.mubr.f32.gmra.mxu0 %v799
        %v1320 = vpop.f32.mrf.mxu0
        %v1321 = vadd.f32 0.0, %v1320
        %v1322 = vpop.f32.mrf.mxu0
        %1323 = vmatprep.mubr.f32.mxu0 0.0
        %1324 = vmatmul.mubr.f32.gmra.mxu0 %v802
        %v1325 = vpop.f32.mrf.mxu0
        %v1326 = vadd.f32 0.0, %v1325
        %v1327 = vpop.f32.mrf.mxu0
        %1328 = vmatprep.mubr.f32.mxu0 0.0
        %1329 = vmatmul.mubr.f32.gmra.mxu0 %v805
        %v1330 = vpop.f32.mrf.mxu0
        %v1331 = vadd.f32 0.0, %v1330
        %v1332 = vpop.f32.mrf.mxu0
        %1333 = vmatprep.mubr.f32.mxu0 0.0
        %1334 = vmatmul.mubr.f32.gmra.mxu0 %v808
        %v1335 = vpop.f32.mrf.mxu0
        %v1336 = vadd.f32 0.0, %v1335
        %v1337 = vpop.f32.mrf.mxu0
        %1338 = vmatprep.mubr.f32.mxu0 0.0
        %1339 = vmatmul.mubr.f32.gmra.mxu0 %v811
        %v1340 = vpop.f32.mrf.mxu0
        %v1341 = vadd.f32 0.0, %v1340
        %v1342 = vpop.f32.mrf.mxu0
        %1343 = vmatprep.mubr.f32.mxu0 0.0
        %1344 = vmatmul.mubr.f32.gmra.mxu0 %v814
        %v1345 = vpop.f32.mrf.mxu0
        %v1346 = vadd.f32 0.0, %v1345
        %v1347 = vpop.f32.mrf.mxu0
        %1348 = vmatprep.mubr.f32.mxu0 0.0
        %1349 = vmatmul.mubr.f32.gmra.mxu0 %v817
        %v1350 = vpop.f32.mrf.mxu0
        %v1351 = vadd.f32 0.0, %v1350
        %v1352 = vpop.f32.mrf.mxu0
        %1353 = vmatprep.mubr.f32.mxu0 0.0
        %1354 = vmatmul.mubr.f32.gmra.mxu0 %v820
        %v1355 = vpop.f32.mrf.mxu0
        %v1356 = vadd.f32 0.0, %v1355
        %v1357 = vpop.f32.mrf.mxu0
        %1358 = vmatprep.mubr.f32.mxu0 0.0
        %1359 = vmatmul.mubr.f32.gmra.mxu0 %v823
        %v1360 = vpop.f32.mrf.mxu0
        %v1361 = vadd.f32 0.0, %v1360
        %v1362 = vpop.f32.mrf.mxu0
        %1363 = vmatprep.mubr.f32.mxu0 0.0
        %1364 = vmatmul.mubr.f32.gmra.mxu0 %v826
        %v1365 = vpop.f32.mrf.mxu0
        %v1366 = vadd.f32 0.0, %v1365
        %v1367 = vpop.f32.mrf.mxu0
        %1368 = vmatprep.mubr.f32.mxu0 0.0
        %1369 = vmatmul.mubr.f32.gmra.mxu0 %v829
        %v1370 = vpop.f32.mrf.mxu0
        %v1371 = vadd.f32 0.0, %v1370
        %v1372 = vpop.f32.mrf.mxu0
        %1373 = vmatprep.mubr.f32.mxu0 0.0
        %1374 = vmatmul.mubr.f32.gmra.mxu0 %v832
        %v1375 = vpop.f32.mrf.mxu0
        %v1376 = vadd.f32 0.0, %v1375
        %v1377 = vpop.f32.mrf.mxu0
        %1378 = vmatprep.mubr.f32.mxu0 0.0
        %1379 = vmatmul.mubr.f32.gmra.mxu0 %v835
        %v1380 = vpop.f32.mrf.mxu0
        %v1381 = vadd.f32 0.0, %v1380
        %v1382 = vpop.f32.mrf.mxu0
        %1383 = vmatprep.mubr.f32.mxu0 0.0
        %1384 = vmatmul.mubr.f32.gmra.mxu0 %v838
        %v1385 = vpop.f32.mrf.mxu0
        %v1386 = vadd.f32 0.0, %v1385
        %v1387 = vpop.f32.mrf.mxu0
        %1388 = vmatprep.mubr.f32.mxu0 0.0
        %1389 = vmatmul.mubr.f32.gmra.mxu0 %v841
        %v1390 = vpop.f32.mrf.mxu0
        %v1391 = vadd.f32 0.0, %v1390
        %v1392 = vpop.f32.mrf.mxu0
        %1393 = vmatprep.mubr.f32.mxu0 0.0
        %1394 = vmatmul.mubr.f32.gmra.mxu0 %v844
        %v1395 = vpop.f32.mrf.mxu0
        %v1396 = vadd.f32 0.0, %v1395
        %v1397 = vpop.f32.mrf.mxu0
        %1398 = vmatprep.mubr.f32.mxu0 0.0
        %1399 = vmatmul.mubr.f32.gmra.mxu0 %v847
        %v1400 = vpop.f32.mrf.mxu0
        %v1401 = vadd.f32 0.0, %v1400
        %v1402 = vpop.f32.mrf.mxu0
        %1403 = vmatprep.mubr.f32.mxu0 0.0
        %1404 = vmatmul.mubr.f32.gmra.mxu0 %v850
        %v1405 = vpop.f32.mrf.mxu0
        %v1406 = vadd.f32 0.0, %v1405
        %v1407 = vpop.f32.mrf.mxu0
        %1408 = vmatprep.mubr.f32.mxu0 0.0
        %1409 = vmatmul.mubr.f32.gmra.mxu0 %v853
        %v1410 = vpop.f32.mrf.mxu0
        %v1411 = vadd.f32 0.0, %v1410
        %v1412 = vpop.f32.mrf.mxu0
        %1413 = vmatprep.mubr.f32.mxu0 0.0
        %1414 = vmatmul.mubr.f32.gmra.mxu0 %v856
        %v1415 = vpop.f32.mrf.mxu0
        %v1416 = vadd.f32 0.0, %v1415
        %v1417 = vpop.f32.mrf.mxu0
        %1418 = vmatprep.mubr.f32.mxu0 0.0
        %1419 = vmatmul.mubr.f32.gmra.mxu0 %v859
        %v1420 = vpop.f32.mrf.mxu0
        %v1421 = vadd.f32 0.0, %v1420
        %v1422 = vpop.f32.mrf.mxu0
        %1423 = vmatprep.mubr.f32.mxu0 0.0
        %1424 = vmatmul.mubr.f32.gmra.mxu0 %v862
        %v1425 = vpop.f32.mrf.mxu0
        %v1426 = vadd.f32 0.0, %v1425
        %v1427 = vpop.f32.mrf.mxu0
        %1428 = vmatprep.mubr.f32.mxu0 0.0
        %1429 = vmatmul.mubr.f32.gmra.mxu0 %v865
        %v1430 = vpop.f32.mrf.mxu0
        %v1431 = vadd.f32 0.0, %v1430
        %v1432 = vpop.f32.mrf.mxu0
        %1433 = vmatprep.mubr.f32.mxu0 0.0
        %1434 = vmatmul.mubr.f32.gmra.mxu0 %v868
        %v1435 = vpop.f32.mrf.mxu0
        %v1436 = vadd.f32 0.0, %v1435
        %v1437 = vpop.f32.mrf.mxu0
        %1438 = vmatprep.mubr.f32.mxu0 0.0
        %1439 = vmatmul.mubr.f32.gmra.mxu0 %v871
        %v1440 = vpop.f32.mrf.mxu0
        %v1441 = vadd.f32 0.0, %v1440
        %v1442 = vpop.f32.mrf.mxu0
        %1443 = vmatprep.mubr.f32.mxu0 0.0
        %1444 = vmatmul.mubr.f32.gmra.mxu0 %v874
        %v1445 = vpop.f32.mrf.mxu0
        %v1446 = vadd.f32 0.0, %v1445
        %v1447 = vpop.f32.mrf.mxu0
        %1448 = vmatprep.mubr.f32.mxu0 0.0
        %1449 = vmatmul.mubr.f32.gmra.mxu0 %v877
        %v1450 = vpop.f32.mrf.mxu0
        %v1451 = vadd.f32 0.0, %v1450
        %v1452 = vpop.f32.mrf.mxu0
        %1453 = vmatprep.mubr.f32.mxu0 0.0
        %1454 = vmatmul.mubr.f32.gmra.mxu0 %v880
        %v1455 = vpop.f32.mrf.mxu0
        %v1456 = vadd.f32 0.0, %v1455
        %v1457 = vpop.f32.mrf.mxu0
        %1458 = vmatprep.mubr.f32.mxu0 0.0
        %1459 = vmatmul.mubr.f32.gmra.mxu0 %v883
        %v1460 = vpop.f32.mrf.mxu0
        %v1461 = vadd.f32 0.0, %v1460
        %v1462 = vpop.f32.mrf.mxu0
        %1463 = vmatprep.mubr.f32.mxu0 0.0
        %1464 = vmatmul.mubr.f32.gmra.mxu0 %v886
        %v1465 = vpop.f32.mrf.mxu0
        %v1466 = vadd.f32 0.0, %v1465
        %v1467 = vpop.f32.mrf.mxu0
        %1468 = vmatprep.mubr.f32.mxu0 0.0
        %1469 = vmatmul.mubr.f32.gmra.mxu0 %v889
        %v1470 = vpop.f32.mrf.mxu0
        %v1471 = vadd.f32 0.0, %v1470
        %v1472 = vpop.f32.mrf.mxu0
        %1473 = vmatprep.mubr.f32.mxu0 0.0
        %1474 = vmatmul.mubr.f32.gmra.mxu0 %v892
        %v1475 = vpop.f32.mrf.mxu0
        %v1476 = vadd.f32 0.0, %v1475
        %v1477 = vpop.f32.mrf.mxu0
        %1478 = vmatprep.mubr.f32.mxu0 0.0
        %1479 = vmatmul.mubr.f32.gmra.mxu0 %v895
        %v1480 = vpop.f32.mrf.mxu0
        %v1481 = vadd.f32 0.0, %v1480
        %v1482 = vpop.f32.mrf.mxu0
        %1483 = vmatprep.mubr.f32.mxu0 0.0
        %1484 = vmatmul.mubr.f32.gmra.mxu0 %v898
        %v1485 = vpop.f32.mrf.mxu0
        %v1486 = vadd.f32 0.0, %v1485
        %v1487 = vpop.f32.mrf.mxu0
        %1488 = vmatprep.mubr.f32.mxu0 0.0
        %1489 = vmatmul.mubr.f32.gmra.mxu0 %v901
        %v1490 = vpop.f32.mrf.mxu0
        %v1491 = vadd.f32 0.0, %v1490
        %v1492 = vpop.f32.mrf.mxu0
        %1493 = vmatprep.mubr.f32.mxu0 0.0
        %1494 = vmatmul.mubr.f32.gmra.mxu0 %v904
        %v1495 = vpop.f32.mrf.mxu0
        %v1496 = vadd.f32 0.0, %v1495
        %v1497 = vpop.f32.mrf.mxu0
        %1498 = vmatprep.mubr.f32.mxu0 0.0
        %1499 = vmatmul.mubr.f32.gmra.mxu0 %v907
        %v1500 = vpop.f32.mrf.mxu0
        %v1501 = vadd.f32 0.0, %v1500
        %v1502 = vpop.f32.mrf.mxu0
        %1503 = vmatprep.mubr.f32.mxu0 0.0
        %1504 = vmatmul.mubr.f32.gmra.mxu0 %v910
        %v1505 = vpop.f32.mrf.mxu0
        %v1506 = vadd.f32 0.0, %v1505
        %v1507 = vpop.f32.mrf.mxu0
        %1508 = vmatprep.mubr.f32.mxu0 0.0
        %1509 = vmatmul.mubr.f32.gmra.mxu0 %v913
        %v1510 = vpop.f32.mrf.mxu0
        %v1511 = vadd.f32 0.0, %v1510
        %v1512 = vpop.f32.mrf.mxu0
        %1513 = vmatprep.mubr.f32.mxu0 0.0
        %1514 = vmatmul.mubr.f32.gmra.mxu0 %v916
        %v1515 = vpop.f32.mrf.mxu0
        %v1516 = vadd.f32 0.0, %v1515
        %v1517 = vpop.f32.mrf.mxu0
        %1518 = vmatprep.mubr.f32.mxu0 0.0
        %1519 = vmatmul.mubr.f32.gmra.mxu0 %v919
        %v1520 = vpop.f32.mrf.mxu0
        %v1521 = vadd.f32 0.0, %v1520
        %v1522 = vpop.f32.mrf.mxu0
        %1523 = vmatprep.mubr.f32.mxu0 0.0
        %1524 = vmatmul.mubr.f32.gmra.mxu0 %v922
        %v1525 = vpop.f32.mrf.mxu0
        %v1526 = vadd.f32 0.0, %v1525
        %v1527 = vpop.f32.mrf.mxu0
        %1528 = vmatprep.mubr.f32.mxu0 0.0
        %1529 = vmatmul.mubr.f32.gmra.mxu0 %v925
        %v1530 = vpop.f32.mrf.mxu0
        %v1531 = vadd.f32 0.0, %v1530
        %v1532 = vpop.f32.mrf.mxu0
        %1533 = vmatprep.mubr.f32.mxu0 0.0
        %1534 = vmatmul.mubr.f32.gmra.mxu0 %v928
        %v1535 = vpop.f32.mrf.mxu0
        %v1536 = vadd.f32 0.0, %v1535
        %v1537 = vpop.f32.mrf.mxu0
        %1538 = vmatprep.mubr.f32.mxu0 0.0
        %1539 = vmatmul.mubr.f32.gmra.mxu0 %v931
        %v1540 = vpop.f32.mrf.mxu0
        %v1541 = vadd.f32 0.0, %v1540
        %v1542 = vpop.f32.mrf.mxu0
        %1543 = vmatprep.mubr.f32.mxu0 0.0
        %1544 = vmatmul.mubr.f32.gmra.mxu0 %v934
        %v1545 = vpop.f32.mrf.mxu0
        %v1546 = vadd.f32 0.0, %v1545
        %v1547 = vpop.f32.mrf.mxu0
        %1548 = vmatprep.mubr.f32.mxu0 0.0
        %1549 = vmatmul.mubr.f32.gmra.mxu0 %v937
        %v1550 = vpop.f32.mrf.mxu0
        %v1551 = vadd.f32 0.0, %v1550
        %v1552 = vpop.f32.mrf.mxu0
        %1553 = vmatprep.mubr.f32.mxu0 0.0
        %1554 = vmatmul.mubr.f32.gmra.mxu0 %v940
        %v1555 = vpop.f32.mrf.mxu0
        %v1556 = vadd.f32 0.0, %v1555
        %v1557 = vpop.f32.mrf.mxu0
        %1558 = vmatprep.mubr.f32.mxu0 0.0
        %1559 = vmatmul.mubr.f32.gmra.mxu0 %v943
        %v1560 = vpop.f32.mrf.mxu0
        %v1561 = vadd.f32 0.0, %v1560
        %v1562 = vpop.f32.mrf.mxu0
        %1563 = vmatprep.mubr.f32.mxu0 0.0
        %1564 = vmatmul.mubr.f32.gmra.mxu0 %v946
        %v1565 = vpop.f32.mrf.mxu0
        %v1566 = vadd.f32 0.0, %v1565
        %v1567 = vpop.f32.mrf.mxu0
        %1568 = vmatprep.mubr.f32.mxu0 0.0
        %1569 = vmatmul.mubr.f32.gmra.mxu0 %v949
        %v1570 = vpop.f32.mrf.mxu0
        %v1571 = vadd.f32 0.0, %v1570
        %v1572 = vpop.f32.mrf.mxu0
        %1573 = vmatprep.mubr.f32.mxu0 0.0
        %1574 = vmatmul.mubr.f32.gmra.mxu0 %v952
        %v1575 = vpop.f32.mrf.mxu0
        %v1576 = vadd.f32 0.0, %v1575
        %v1577 = vpop.f32.mrf.mxu0
        %1578 = vmatprep.mubr.f32.mxu0 0.0
        %1579 = vmatmul.mubr.f32.gmra.mxu0 %v955
        %v1580 = vpop.f32.mrf.mxu0
        %v1581 = vadd.f32 0.0, %v1580
        %v1582 = vpop.f32.mrf.mxu0
        %1583 = vmatprep.mubr.f32.mxu0 0.0
        %1584 = vmatmul.mubr.f32.gmra.mxu0 %v958
        %v1585 = vpop.f32.mrf.mxu0
        %v1586 = vadd.f32 0.0, %v1585
        %v1587 = vpop.f32.mrf.mxu0
        %1588 = vmatprep.mubr.f32.mxu0 0.0
        %1589 = vmatmul.mubr.f32.gmra.mxu0 %v961
        %v1590 = vpop.f32.mrf.mxu0
        %v1591 = vadd.f32 0.0, %v1590
        %v1592 = vpop.f32.mrf.mxu0
        %1593 = vmatprep.mubr.f32.mxu0 0.0
        %1594 = vmatmul.mubr.f32.gmra.mxu0 %v964
        %v1595 = vpop.f32.mrf.mxu0
        %v1596 = vadd.f32 0.0, %v1595
        %v1597 = vpop.f32.mrf.mxu0
        %1598 = vmatprep.mubr.f32.mxu0 0.0
        %1599 = vmatmul.mubr.f32.gmra.mxu0 %v967
        %v1600 = vpop.f32.mrf.mxu0
        %v1601 = vadd.f32 0.0, %v1600
        %v1602 = vpop.f32.mrf.mxu0
        %1603 = vmatprep.mubr.f32.mxu0 0.0
        %1604 = vmatmul.mubr.f32.gmra.mxu0 %v970
        %v1605 = vpop.f32.mrf.mxu0
        %v1606 = vadd.f32 0.0, %v1605
        %v1607 = vpop.f32.mrf.mxu0
        %1608 = vmatprep.mubr.f32.mxu0 0.0
        %1609 = vmatmul.mubr.f32.gmra.mxu0 %v973
        %v1610 = vpop.f32.mrf.mxu0
        %v1611 = vadd.f32 0.0, %v1610
        %v1612 = vpop.f32.mrf.mxu0
        %1613 = vmatprep.mubr.f32.mxu0 0.0
        %1614 = vmatmul.mubr.f32.gmra.mxu0 %v976
        %v1615 = vpop.f32.mrf.mxu0
        %v1616 = vadd.f32 0.0, %v1615
        %v1617 = vpop.f32.mrf.mxu0
        %1618 = vmatprep.mubr.f32.mxu0 0.0
        %1619 = vmatmul.mubr.f32.gmra.mxu0 %v979
        %v1620 = vpop.f32.mrf.mxu0
        %v1621 = vadd.f32 0.0, %v1620
        %v1622 = vpop.f32.mrf.mxu0
        %1623 = vmatprep.mubr.f32.mxu0 0.0
        %1624 = vmatmul.mubr.f32.gmra.mxu0 %v982
        %v1625 = vpop.f32.mrf.mxu0
        %v1626 = vadd.f32 0.0, %v1625
        %v1627 = vpop.f32.mrf.mxu0
        %1628 = vmatprep.mubr.f32.mxu0 0.0
        %1629 = vmatmul.mubr.f32.gmra.mxu0 %v985
        %v1630 = vpop.f32.mrf.mxu0
        %v1631 = vadd.f32 0.0, %v1630
        %v1632 = vpop.f32.mrf.mxu0
        %1633 = vmatprep.mubr.f32.mxu0 0.0
        %1634 = vmatmul.mubr.f32.gmra.mxu0 %v988
        %v1635 = vpop.f32.mrf.mxu0
        %v1636 = vadd.f32 0.0, %v1635
        %v1637 = vpop.f32.mrf.mxu0
        %1638 = vmatprep.mubr.f32.mxu0 0.0
        %1639 = vmatmul.mubr.f32.gmra.mxu0 %v991
        %v1640 = vpop.f32.mrf.mxu0
        %v1641 = vadd.f32 0.0, %v1640
        %v1642 = vpop.f32.mrf.mxu0
        %1643 = vmatprep.mubr.f32.mxu0 0.0
        %1644 = vmatmul.mubr.f32.gmra.mxu0 %v994
        %v1645 = vpop.f32.mrf.mxu0
        %v1646 = vadd.f32 0.0, %v1645
        %v1647 = vpop.f32.mrf.mxu0
        %1648 = vmatprep.mubr.f32.mxu0 0.0
        %1649 = vmatmul.mubr.f32.gmra.mxu0 %v997
        %v1650 = vpop.f32.mrf.mxu0
        %v1651 = vadd.f32 0.0, %v1650
        %v1652 = vpop.f32.mrf.mxu0
        %1653 = vmatprep.mubr.f32.mxu0 0.0
        %1654 = vmatmul.mubr.f32.gmra.mxu0 %v1000
        %v1655 = vpop.f32.mrf.mxu0
        %v1656 = vadd.f32 0.0, %v1655
        %v1657 = vpop.f32.mrf.mxu0
        %1658 = vmatprep.mubr.f32.mxu0 0.0
        %1659 = vmatmul.mubr.f32.gmra.mxu0 %v1003
        %v1660 = vpop.f32.mrf.mxu0
        %v1661 = vadd.f32 0.0, %v1660
        %v1662 = vpop.f32.mrf.mxu0
        %1663 = vmatprep.mubr.f32.mxu0 0.0
        %1664 = vmatmul.mubr.f32.gmra.mxu0 %v1006
        %v1665 = vpop.f32.mrf.mxu0
        %v1666 = vadd.f32 0.0, %v1665
        %v1667 = vpop.f32.mrf.mxu0
        %1668 = vmatprep.mubr.f32.mxu0 0.0
        %1669 = vmatmul.mubr.f32.gmra.mxu0 %v1009
        %v1670 = vpop.f32.mrf.mxu0
        %v1671 = vadd.f32 0.0, %v1670
        %v1672 = vpop.f32.mrf.mxu0
        %1673 = vmatprep.mubr.f32.mxu0 0.0
        %1674 = vmatmul.mubr.f32.gmra.mxu0 %v1012
        %v1675 = vpop.f32.mrf.mxu0
        %v1676 = vadd.f32 0.0, %v1675
        %v1677 = vpop.f32.mrf.mxu0
        %1678 = vmatprep.mubr.f32.mxu0 0.0
        %1679 = vmatmul.mubr.f32.gmra.mxu0 %v1015
        %v1680 = vpop.f32.mrf.mxu0
        %v1681 = vadd.f32 0.0, %v1680
        %v1682 = vpop.f32.mrf.mxu0
        %1683 = vmatprep.mubr.f32.mxu0 0.0
        %1684 = vmatmul.mubr.f32.gmra.mxu0 %v1018
        %v1685 = vpop.f32.mrf.mxu0
        %v1686 = vadd.f32 0.0, %v1685
        %v1687 = vpop.f32.mrf.mxu0
        %1688 = vmatprep.mubr.f32.mxu0 0.0
        %1689 = vmatmul.mubr.f32.gmra.mxu0 %v1021
        %v1690 = vpop.f32.mrf.mxu0
        %v1691 = vadd.f32 0.0, %v1690
        %v1692 = vpop.f32.mrf.mxu0
        %1693 = vmatprep.mubr.f32.mxu0 0.0
        %1694 = vmatmul.mubr.f32.gmra.mxu0 %v1024
        %v1695 = vpop.f32.mrf.mxu0
        %v1696 = vadd.f32 0.0, %v1695
        %v1697 = vpop.f32.mrf.mxu0
        %1698 = vmatprep.mubr.f32.mxu0 0.0
        %1699 = vmatmul.mubr.f32.gmra.mxu0 %v1027
        %v1700 = vpop.f32.mrf.mxu0
        %v1701 = vadd.f32 0.0, %v1700
        %v1702 = vpop.f32.mrf.mxu0
        %1703 = vmatprep.mubr.f32.mxu0 0.0
        %1704 = vmatmul.mubr.f32.gmra.mxu0 %v1030
        %v1705 = vpop.f32.mrf.mxu0
        %v1706 = vadd.f32 0.0, %v1705
        %v1707 = vpop.f32.mrf.mxu0
        %1708 = vmatprep.mubr.f32.mxu0 0.0
        %1709 = vmatmul.mubr.f32.gmra.mxu0 %v1033
        %v1710 = vpop.f32.mrf.mxu0
        %v1711 = vadd.f32 0.0, %v1710
        %v1712 = vpop.f32.mrf.mxu0
        %1713 = vmatprep.mubr.f32.mxu0 0.0
        %1714 = vmatmul.mubr.f32.gmra.mxu0 %v1036
        %v1715 = vpop.f32.mrf.mxu0
        %v1716 = vadd.f32 0.0, %v1715
        %v1717 = vpop.f32.mrf.mxu0
        %1718 = vmatprep.mubr.f32.mxu0 0.0
        %1719 = vmatmul.mubr.f32.gmra.mxu0 %v1039
        %v1720 = vpop.f32.mrf.mxu0
        %v1721 = vadd.f32 0.0, %v1720
        %v1722 = vpop.f32.mrf.mxu0
        %1723 = vmatprep.mubr.f32.mxu0 0.0
        %1724 = vmatmul.mubr.f32.gmra.mxu0 %v1042
        %v1725 = vpop.f32.mrf.mxu0
        %v1726 = vadd.f32 0.0, %v1725
        %v1727 = vpop.f32.mrf.mxu0
        %1728 = vmatprep.mubr.f32.mxu0 0.0
        %1729 = vmatmul.mubr.f32.gmra.mxu0 %v1045
        %v1730 = vpop.f32.mrf.mxu0
        %v1731 = vadd.f32 0.0, %v1730
        %v1732 = vpop.f32.mrf.mxu0
        %1733 = vmatprep.mubr.f32.mxu0 0.0
        %1734 = vmatmul.mubr.f32.gmra.mxu0 %v1048
        %v1735 = vpop.f32.mrf.mxu0
        %v1736 = vadd.f32 0.0, %v1735
        %v1737 = vpop.f32.mrf.mxu0
        %1738 = vmatprep.mubr.f32.mxu0 0.0
        %1739 = vmatmul.mubr.f32.gmra.mxu0 %v1051
        %v1740 = vpop.f32.mrf.mxu0
        %v1741 = vadd.f32 0.0, %v1740
        %v1742 = vpop.f32.mrf.mxu0
        %1743 = vmatprep.mubr.f32.mxu0 0.0
        %1744 = vmatmul.mubr.f32.gmra.mxu0 %v1054
        %v1745 = vpop.f32.mrf.mxu0
        %v1746 = vadd.f32 0.0, %v1745
        %v1747 = vpop.f32.mrf.mxu0
        %1748 = vmatprep.mubr.f32.mxu0 0.0
        %1749 = vmatmul.mubr.f32.gmra.mxu0 %v1057
        %v1750 = vpop.f32.mrf.mxu0
        %v1751 = vadd.f32 0.0, %v1750
        %v1752 = vpop.f32.mrf.mxu0
        %1753 = vmatprep.mubr.f32.mxu0 0.0
        %1754 = vmatmul.mubr.f32.gmra.mxu0 %v1060
        %v1755 = vpop.f32.mrf.mxu0
        %v1756 = vadd.f32 0.0, %v1755
        %v1757 = vpop.f32.mrf.mxu0
        %1758 = vmatprep.mubr.f32.mxu0 0.0
        %1759 = vmatmul.mubr.f32.gmra.mxu0 %v1063
        %v1760 = vpop.f32.mrf.mxu0
        %v1761 = vadd.f32 0.0, %v1760
        %v1762 = vpop.f32.mrf.mxu0
        %1763 = vmatprep.mubr.f32.mxu0 0.0
        %1764 = vmatmul.mubr.f32.gmra.mxu0 %v1066
        %v1765 = vpop.f32.mrf.mxu0
        %v1766 = vadd.f32 0.0, %v1765
        %v1767 = vpop.f32.mrf.mxu0
        %1768 = vmatprep.mubr.f32.mxu0 0.0
        %1769 = vmatmul.mubr.f32.gmra.mxu0 %v1069
        %v1770 = vpop.f32.mrf.mxu0
        %v1771 = vadd.f32 0.0, %v1770
        %v1772 = vpop.f32.mrf.mxu0
        %1773 = vmatprep.mubr.f32.mxu0 0.0
        %1774 = vmatmul.mubr.f32.gmra.mxu0 %v1072
        %v1775 = vpop.f32.mrf.mxu0
        %v1776 = vadd.f32 0.0, %v1775
        %v1777 = vpop.f32.mrf.mxu0
        %1778 = vdwg.mxu0
        %v1779 = vld [vmem:[%s4] sm:$0x1]
        %v1781 = vlaneseq
        %v1782 = vshrl.u32 %v1781, 7
        %v1783 = vsub.s32 0, %v1782
        %v1784 = vrot.slane %v1779, %v1783
        %v1786 = vmul.f32 %v1141, %v1784
        %v1787 = vmul.f32 %v1146, %v1784
        %v1788 = vmul.f32 %v1151, %v1784
        %v1789 = vmul.f32 %v1156, %v1784
        %v1790 = vmul.f32 %v1161, %v1784
        %v1791 = vmul.f32 %v1166, %v1784
        %v1792 = vmul.f32 %v1171, %v1784
        %v1793 = vmul.f32 %v1176, %v1784
        %v1794 = vmul.f32 %v1181, %v1784
        %v1795 = vmul.f32 %v1186, %v1784
        %v1796 = vmul.f32 %v1191, %v1784
        %v1797 = vmul.f32 %v1196, %v1784
        %v1798 = vmul.f32 %v1201, %v1784
        %v1799 = vmul.f32 %v1206, %v1784
        %v1800 = vmul.f32 %v1211, %v1784
        %v1801 = vmul.f32 %v1216, %v1784
        %v1802 = vmul.f32 %v1221, %v1784
        %v1803 = vmul.f32 %v1226, %v1784
        %v1804 = vmul.f32 %v1231, %v1784
        %v1805 = vmul.f32 %v1236, %v1784
        %v1806 = vmul.f32 %v1241, %v1784
        %v1807 = vmul.f32 %v1246, %v1784
        %v1808 = vmul.f32 %v1251, %v1784
        %v1809 = vmul.f32 %v1256, %v1784
        %v1810 = vmul.f32 %v1261, %v1784
        %v1811 = vmul.f32 %v1266, %v1784
        %v1812 = vmul.f32 %v1271, %v1784
        %v1813 = vmul.f32 %v1276, %v1784
        %v1814 = vmul.f32 %v1281, %v1784
        %v1815 = vmul.f32 %v1286, %v1784
        %v1816 = vmul.f32 %v1291, %v1784
        %v1817 = vmul.f32 %v1296, %v1784
        %v1818 = vmul.f32 %v1301, %v1784
        %v1819 = vmul.f32 %v1306, %v1784
        %v1820 = vmul.f32 %v1311, %v1784
        %v1821 = vmul.f32 %v1316, %v1784
        %v1822 = vmul.f32 %v1321, %v1784
        %v1823 = vmul.f32 %v1326, %v1784
        %v1824 = vmul.f32 %v1331, %v1784
        %v1825 = vmul.f32 %v1336, %v1784
        %v1826 = vmul.f32 %v1341, %v1784
        %v1827 = vmul.f32 %v1346, %v1784
        %v1828 = vmul.f32 %v1351, %v1784
        %v1829 = vmul.f32 %v1356, %v1784
        %v1830 = vmul.f32 %v1361, %v1784
        %v1831 = vmul.f32 %v1366, %v1784
        %v1832 = vmul.f32 %v1371, %v1784
        %v1833 = vmul.f32 %v1376, %v1784
        %v1834 = vmul.f32 %v1381, %v1784
        %v1835 = vmul.f32 %v1386, %v1784
        %v1836 = vmul.f32 %v1391, %v1784
        %v1837 = vmul.f32 %v1396, %v1784
        %v1838 = vmul.f32 %v1401, %v1784
        %v1839 = vmul.f32 %v1406, %v1784
        %v1840 = vmul.f32 %v1411, %v1784
        %v1841 = vmul.f32 %v1416, %v1784
        %v1842 = vmul.f32 %v1421, %v1784
        %v1843 = vmul.f32 %v1426, %v1784
        %v1844 = vmul.f32 %v1431, %v1784
        %v1845 = vmul.f32 %v1436, %v1784
        %v1846 = vmul.f32 %v1441, %v1784
        %v1847 = vmul.f32 %v1446, %v1784
        %v1848 = vmul.f32 %v1451, %v1784
        %v1849 = vmul.f32 %v1456, %v1784
        %v1850 = vmul.f32 %v1461, %v1784
        %v1851 = vmul.f32 %v1466, %v1784
        %v1852 = vmul.f32 %v1471, %v1784
        %v1853 = vmul.f32 %v1476, %v1784
        %v1854 = vmul.f32 %v1481, %v1784
        %v1855 = vmul.f32 %v1486, %v1784
        %v1856 = vmul.f32 %v1491, %v1784
        %v1857 = vmul.f32 %v1496, %v1784
        %v1858 = vmul.f32 %v1501, %v1784
        %v1859 = vmul.f32 %v1506, %v1784
        %v1860 = vmul.f32 %v1511, %v1784
        %v1861 = vmul.f32 %v1516, %v1784
        %v1862 = vmul.f32 %v1521, %v1784
        %v1863 = vmul.f32 %v1526, %v1784
        %v1864 = vmul.f32 %v1531, %v1784
        %v1865 = vmul.f32 %v1536, %v1784
        %v1866 = vmul.f32 %v1541, %v1784
        %v1867 = vmul.f32 %v1546, %v1784
        %v1868 = vmul.f32 %v1551, %v1784
        %v1869 = vmul.f32 %v1556, %v1784
        %v1870 = vmul.f32 %v1561, %v1784
        %v1871 = vmul.f32 %v1566, %v1784
        %v1872 = vmul.f32 %v1571, %v1784
        %v1873 = vmul.f32 %v1576, %v1784
        %v1874 = vmul.f32 %v1581, %v1784
        %v1875 = vmul.f32 %v1586, %v1784
        %v1876 = vmul.f32 %v1591, %v1784
        %v1877 = vmul.f32 %v1596, %v1784
        %v1878 = vmul.f32 %v1601, %v1784
        %v1879 = vmul.f32 %v1606, %v1784
        %v1880 = vmul.f32 %v1611, %v1784
        %v1881 = vmul.f32 %v1616, %v1784
        %v1882 = vmul.f32 %v1621, %v1784
        %v1883 = vmul.f32 %v1626, %v1784
        %v1884 = vmul.f32 %v1631, %v1784
        %v1885 = vmul.f32 %v1636, %v1784
        %v1886 = vmul.f32 %v1641, %v1784
        %v1887 = vmul.f32 %v1646, %v1784
        %v1888 = vmul.f32 %v1651, %v1784
        %v1889 = vmul.f32 %v1656, %v1784
        %v1890 = vmul.f32 %v1661, %v1784
        %v1891 = vmul.f32 %v1666, %v1784
        %v1892 = vmul.f32 %v1671, %v1784
        %v1893 = vmul.f32 %v1676, %v1784
        %v1894 = vmul.f32 %v1681, %v1784
        %v1895 = vmul.f32 %v1686, %v1784
        %v1896 = vmul.f32 %v1691, %v1784
        %v1897 = vmul.f32 %v1696, %v1784
        %v1898 = vmul.f32 %v1701, %v1784
        %v1899 = vmul.f32 %v1706, %v1784
        %v1900 = vmul.f32 %v1711, %v1784
        %v1901 = vmul.f32 %v1716, %v1784
        %v1902 = vmul.f32 %v1721, %v1784
        %v1903 = vmul.f32 %v1726, %v1784
        %v1904 = vmul.f32 %v1731, %v1784
        %v1905 = vmul.f32 %v1736, %v1784
        %v1906 = vmul.f32 %v1741, %v1784
        %v1907 = vmul.f32 %v1746, %v1784
        %v1908 = vmul.f32 %v1751, %v1784
        %v1909 = vmul.f32 %v1756, %v1784
        %v1910 = vmul.f32 %v1761, %v1784
        %v1911 = vmul.f32 %v1766, %v1784
        %v1912 = vmul.f32 %v1771, %v1784
        %v1913 = vmul.f32 %v1776, %v1784
        %1914 = vadd.xlane.f32.xlu0 %v1786
        %v1915 = vpop.xlane.xlu0 %1914
        %1916 = vadd.xlane.f32.xlu0 %v1787
        %v1917 = vpop.xlane.xlu0 %1916
        %1918 = vadd.xlane.f32.xlu0 %v1788
        %v1919 = vpop.xlane.xlu0 %1918
        %1920 = vadd.xlane.f32.xlu0 %v1789
        %v1921 = vpop.xlane.xlu0 %1920
        %1922 = vadd.xlane.f32.xlu0 %v1790
        %v1923 = vpop.xlane.xlu0 %1922
        %1924 = vadd.xlane.f32.xlu0 %v1791
        %v1925 = vpop.xlane.xlu0 %1924
        %1926 = vadd.xlane.f32.xlu0 %v1792
        %v1927 = vpop.xlane.xlu0 %1926
        %1928 = vadd.xlane.f32.xlu0 %v1793
        %v1929 = vpop.xlane.xlu0 %1928
        %1930 = vadd.xlane.f32.xlu0 %v1794
        %v1931 = vpop.xlane.xlu0 %1930
        %1932 = vadd.xlane.f32.xlu0 %v1795
        %v1933 = vpop.xlane.xlu0 %1932
        %1934 = vadd.xlane.f32.xlu0 %v1796
        %v1935 = vpop.xlane.xlu0 %1934
        %1936 = vadd.xlane.f32.xlu0 %v1797
        %v1937 = vpop.xlane.xlu0 %1936
        %1938 = vadd.xlane.f32.xlu0 %v1798
        %v1939 = vpop.xlane.xlu0 %1938
        %1940 = vadd.xlane.f32.xlu0 %v1799
        %v1941 = vpop.xlane.xlu0 %1940
        %1942 = vadd.xlane.f32.xlu0 %v1800
        %v1943 = vpop.xlane.xlu0 %1942
        %1944 = vadd.xlane.f32.xlu0 %v1801
        %v1945 = vpop.xlane.xlu0 %1944
        %1946 = vadd.xlane.f32.xlu0 %v1802
        %v1947 = vpop.xlane.xlu0 %1946
        %1948 = vadd.xlane.f32.xlu0 %v1803
        %v1949 = vpop.xlane.xlu0 %1948
        %1950 = vadd.xlane.f32.xlu0 %v1804
        %v1951 = vpop.xlane.xlu0 %1950
        %1952 = vadd.xlane.f32.xlu0 %v1805
        %v1953 = vpop.xlane.xlu0 %1952
        %1954 = vadd.xlane.f32.xlu0 %v1806
        %v1955 = vpop.xlane.xlu0 %1954
        %1956 = vadd.xlane.f32.xlu0 %v1807
        %v1957 = vpop.xlane.xlu0 %1956
        %1958 = vadd.xlane.f32.xlu0 %v1808
        %v1959 = vpop.xlane.xlu0 %1958
        %1960 = vadd.xlane.f32.xlu0 %v1809
        %v1961 = vpop.xlane.xlu0 %1960
        %1962 = vadd.xlane.f32.xlu0 %v1810
        %v1963 = vpop.xlane.xlu0 %1962
        %1964 = vadd.xlane.f32.xlu0 %v1811
        %v1965 = vpop.xlane.xlu0 %1964
        %1966 = vadd.xlane.f32.xlu0 %v1812
        %v1967 = vpop.xlane.xlu0 %1966
        %1968 = vadd.xlane.f32.xlu0 %v1813
        %v1969 = vpop.xlane.xlu0 %1968
        %1970 = vadd.xlane.f32.xlu0 %v1814
        %v1971 = vpop.xlane.xlu0 %1970
        %1972 = vadd.xlane.f32.xlu0 %v1815
        %v1973 = vpop.xlane.xlu0 %1972
        %1974 = vadd.xlane.f32.xlu0 %v1816
        %v1975 = vpop.xlane.xlu0 %1974
        %1976 = vadd.xlane.f32.xlu0 %v1817
        %v1977 = vpop.xlane.xlu0 %1976
        %1978 = vadd.xlane.f32.xlu0 %v1818
        %v1979 = vpop.xlane.xlu0 %1978
        %1980 = vadd.xlane.f32.xlu0 %v1819
        %v1981 = vpop.xlane.xlu0 %1980
        %1982 = vadd.xlane.f32.xlu0 %v1820
        %v1983 = vpop.xlane.xlu0 %1982
        %1984 = vadd.xlane.f32.xlu0 %v1821
        %v1985 = vpop.xlane.xlu0 %1984
        %1986 = vadd.xlane.f32.xlu0 %v1822
        %v1987 = vpop.xlane.xlu0 %1986
        %1988 = vadd.xlane.f32.xlu0 %v1823
        %v1989 = vpop.xlane.xlu0 %1988
        %1990 = vadd.xlane.f32.xlu0 %v1824
        %v1991 = vpop.xlane.xlu0 %1990
        %1992 = vadd.xlane.f32.xlu0 %v1825
        %v1993 = vpop.xlane.xlu0 %1992
        %1994 = vadd.xlane.f32.xlu0 %v1826
        %v1995 = vpop.xlane.xlu0 %1994
        %1996 = vadd.xlane.f32.xlu0 %v1827
        %v1997 = vpop.xlane.xlu0 %1996
        %1998 = vadd.xlane.f32.xlu0 %v1828
        %v1999 = vpop.xlane.xlu0 %1998
        %2000 = vadd.xlane.f32.xlu0 %v1829
        %v2001 = vpop.xlane.xlu0 %2000
        %2002 = vadd.xlane.f32.xlu0 %v1830
        %v2003 = vpop.xlane.xlu0 %2002
        %2004 = vadd.xlane.f32.xlu0 %v1831
        %v2005 = vpop.xlane.xlu0 %2004
        %2006 = vadd.xlane.f32.xlu0 %v1832
        %v2007 = vpop.xlane.xlu0 %2006
        %2008 = vadd.xlane.f32.xlu0 %v1833
        %v2009 = vpop.xlane.xlu0 %2008
        %2010 = vadd.xlane.f32.xlu0 %v1834
        %v2011 = vpop.xlane.xlu0 %2010
        %2012 = vadd.xlane.f32.xlu0 %v1835
        %v2013 = vpop.xlane.xlu0 %2012
        %2014 = vadd.xlane.f32.xlu0 %v1836
        %v2015 = vpop.xlane.xlu0 %2014
        %2016 = vadd.xlane.f32.xlu0 %v1837
        %v2017 = vpop.xlane.xlu0 %2016
        %2018 = vadd.xlane.f32.xlu0 %v1838
        %v2019 = vpop.xlane.xlu0 %2018
        %2020 = vadd.xlane.f32.xlu0 %v1839
        %v2021 = vpop.xlane.xlu0 %2020
        %2022 = vadd.xlane.f32.xlu0 %v1840
        %v2023 = vpop.xlane.xlu0 %2022
        %2024 = vadd.xlane.f32.xlu0 %v1841
        %v2025 = vpop.xlane.xlu0 %2024
        %2026 = vadd.xlane.f32.xlu0 %v1842
        %v2027 = vpop.xlane.xlu0 %2026
        %2028 = vadd.xlane.f32.xlu0 %v1843
        %v2029 = vpop.xlane.xlu0 %2028
        %2030 = vadd.xlane.f32.xlu0 %v1844
        %v2031 = vpop.xlane.xlu0 %2030
        %2032 = vadd.xlane.f32.xlu0 %v1845
        %v2033 = vpop.xlane.xlu0 %2032
        %2034 = vadd.xlane.f32.xlu0 %v1846
        %v2035 = vpop.xlane.xlu0 %2034
        %2036 = vadd.xlane.f32.xlu0 %v1847
        %v2037 = vpop.xlane.xlu0 %2036
        %2038 = vadd.xlane.f32.xlu0 %v1848
        %v2039 = vpop.xlane.xlu0 %2038
        %2040 = vadd.xlane.f32.xlu0 %v1849
        %v2041 = vpop.xlane.xlu0 %2040
        %2042 = vadd.xlane.f32.xlu0 %v1850
        %v2043 = vpop.xlane.xlu0 %2042
        %2044 = vadd.xlane.f32.xlu0 %v1851
        %v2045 = vpop.xlane.xlu0 %2044
        %2046 = vadd.xlane.f32.xlu0 %v1852
        %v2047 = vpop.xlane.xlu0 %2046
        %2048 = vadd.xlane.f32.xlu0 %v1853
        %v2049 = vpop.xlane.xlu0 %2048
        %2050 = vadd.xlane.f32.xlu0 %v1854
        %v2051 = vpop.xlane.xlu0 %2050
        %2052 = vadd.xlane.f32.xlu0 %v1855
        %v2053 = vpop.xlane.xlu0 %2052
        %2054 = vadd.xlane.f32.xlu0 %v1856
        %v2055 = vpop.xlane.xlu0 %2054
        %2056 = vadd.xlane.f32.xlu0 %v1857
        %v2057 = vpop.xlane.xlu0 %2056
        %2058 = vadd.xlane.f32.xlu0 %v1858
        %v2059 = vpop.xlane.xlu0 %2058
        %2060 = vadd.xlane.f32.xlu0 %v1859
        %v2061 = vpop.xlane.xlu0 %2060
        %2062 = vadd.xlane.f32.xlu0 %v1860
        %v2063 = vpop.xlane.xlu0 %2062
        %2064 = vadd.xlane.f32.xlu0 %v1861
        %v2065 = vpop.xlane.xlu0 %2064
        %2066 = vadd.xlane.f32.xlu0 %v1862
        %v2067 = vpop.xlane.xlu0 %2066
        %2068 = vadd.xlane.f32.xlu0 %v1863
        %v2069 = vpop.xlane.xlu0 %2068
        %2070 = vadd.xlane.f32.xlu0 %v1864
        %v2071 = vpop.xlane.xlu0 %2070
        %2072 = vadd.xlane.f32.xlu0 %v1865
        %v2073 = vpop.xlane.xlu0 %2072
        %2074 = vadd.xlane.f32.xlu0 %v1866
        %v2075 = vpop.xlane.xlu0 %2074
        %2076 = vadd.xlane.f32.xlu0 %v1867
        %v2077 = vpop.xlane.xlu0 %2076
        %2078 = vadd.xlane.f32.xlu0 %v1868
        %v2079 = vpop.xlane.xlu0 %2078
        %2080 = vadd.xlane.f32.xlu0 %v1869
        %v2081 = vpop.xlane.xlu0 %2080
        %2082 = vadd.xlane.f32.xlu0 %v1870
        %v2083 = vpop.xlane.xlu0 %2082
        %2084 = vadd.xlane.f32.xlu0 %v1871
        %v2085 = vpop.xlane.xlu0 %2084
        %2086 = vadd.xlane.f32.xlu0 %v1872
        %v2087 = vpop.xlane.xlu0 %2086
        %2088 = vadd.xlane.f32.xlu0 %v1873
        %v2089 = vpop.xlane.xlu0 %2088
        %2090 = vadd.xlane.f32.xlu0 %v1874
        %v2091 = vpop.xlane.xlu0 %2090
        %2092 = vadd.xlane.f32.xlu0 %v1875
        %v2093 = vpop.xlane.xlu0 %2092
        %2094 = vadd.xlane.f32.xlu0 %v1876
        %v2095 = vpop.xlane.xlu0 %2094
        %2096 = vadd.xlane.f32.xlu0 %v1877
        %v2097 = vpop.xlane.xlu0 %2096
        %2098 = vadd.xlane.f32.xlu0 %v1878
        %v2099 = vpop.xlane.xlu0 %2098
        %2100 = vadd.xlane.f32.xlu0 %v1879
        %v2101 = vpop.xlane.xlu0 %2100
        %2102 = vadd.xlane.f32.xlu0 %v1880
        %v2103 = vpop.xlane.xlu0 %2102
        %2104 = vadd.xlane.f32.xlu0 %v1881
        %v2105 = vpop.xlane.xlu0 %2104
        %2106 = vadd.xlane.f32.xlu0 %v1882
        %v2107 = vpop.xlane.xlu0 %2106
        %2108 = vadd.xlane.f32.xlu0 %v1883
        %v2109 = vpop.xlane.xlu0 %2108
        %2110 = vadd.xlane.f32.xlu0 %v1884
        %v2111 = vpop.xlane.xlu0 %2110
        %2112 = vadd.xlane.f32.xlu0 %v1885
        %v2113 = vpop.xlane.xlu0 %2112
        %2114 = vadd.xlane.f32.xlu0 %v1886
        %v2115 = vpop.xlane.xlu0 %2114
        %2116 = vadd.xlane.f32.xlu0 %v1887
        %v2117 = vpop.xlane.xlu0 %2116
        %2118 = vadd.xlane.f32.xlu0 %v1888
        %v2119 = vpop.xlane.xlu0 %2118
        %2120 = vadd.xlane.f32.xlu0 %v1889
        %v2121 = vpop.xlane.xlu0 %2120
        %2122 = vadd.xlane.f32.xlu0 %v1890
        %v2123 = vpop.xlane.xlu0 %2122
        %2124 = vadd.xlane.f32.xlu0 %v1891
        %v2125 = vpop.xlane.xlu0 %2124
        %2126 = vadd.xlane.f32.xlu0 %v1892
        %v2127 = vpop.xlane.xlu0 %2126
        %2128 = vadd.xlane.f32.xlu0 %v1893
        %v2129 = vpop.xlane.xlu0 %2128
        %2130 = vadd.xlane.f32.xlu0 %v1894
        %v2131 = vpop.xlane.xlu0 %2130
        %2132 = vadd.xlane.f32.xlu0 %v1895
        %v2133 = vpop.xlane.xlu0 %2132
        %2134 = vadd.xlane.f32.xlu0 %v1896
        %v2135 = vpop.xlane.xlu0 %2134
        %2136 = vadd.xlane.f32.xlu0 %v1897
        %v2137 = vpop.xlane.xlu0 %2136
        %2138 = vadd.xlane.f32.xlu0 %v1898
        %v2139 = vpop.xlane.xlu0 %2138
        %2140 = vadd.xlane.f32.xlu0 %v1899
        %v2141 = vpop.xlane.xlu0 %2140
        %2142 = vadd.xlane.f32.xlu0 %v1900
        %v2143 = vpop.xlane.xlu0 %2142
        %2144 = vadd.xlane.f32.xlu0 %v1901
        %v2145 = vpop.xlane.xlu0 %2144
        %2146 = vadd.xlane.f32.xlu0 %v1902
        %v2147 = vpop.xlane.xlu0 %2146
        %2148 = vadd.xlane.f32.xlu0 %v1903
        %v2149 = vpop.xlane.xlu0 %2148
        %2150 = vadd.xlane.f32.xlu0 %v1904
        %v2151 = vpop.xlane.xlu0 %2150
        %2152 = vadd.xlane.f32.xlu0 %v1905
        %v2153 = vpop.xlane.xlu0 %2152
        %2154 = vadd.xlane.f32.xlu0 %v1906
        %v2155 = vpop.xlane.xlu0 %2154
        %2156 = vadd.xlane.f32.xlu0 %v1907
        %v2157 = vpop.xlane.xlu0 %2156
        %2158 = vadd.xlane.f32.xlu0 %v1908
        %v2159 = vpop.xlane.xlu0 %2158
        %2160 = vadd.xlane.f32.xlu0 %v1909
        %v2161 = vpop.xlane.xlu0 %2160
        %2162 = vadd.xlane.f32.xlu0 %v1910
        %v2163 = vpop.xlane.xlu0 %2162
        %2164 = vadd.xlane.f32.xlu0 %v1911
        %v2165 = vpop.xlane.xlu0 %2164
        %2166 = vadd.xlane.f32.xlu0 %v1912
        %v2167 = vpop.xlane.xlu0 %2166
        %2168 = vadd.xlane.f32.xlu0 %v1913
        %v2169 = vpop.xlane.xlu0 %2168
        %v2170 = vld [vmem:[%s294] sm:$0xff]
        %v2171 = vld [vmem:[%s294 + $0x8] sm:$0xff]
        %v2172 = vld [vmem:[%s294 + $0x10] sm:$0xff]
        %v2173 = vld [vmem:[%s294 + $0x18] sm:$0xff]
        %v2174 = vld [vmem:[%s294 + $0x20] sm:$0xff]
        %v2175 = vld [vmem:[%s294 + $0x28] sm:$0xff]
        %v2176 = vld [vmem:[%s294 + $0x30] sm:$0xff]
        %v2177 = vld [vmem:[%s294 + $0x38] sm:$0xff]
        %v2178 = vld [vmem:[%s294 + $0x40] sm:$0xff]
        %v2179 = vld [vmem:[%s294 + $0x48] sm:$0xff]
        %v2180 = vld [vmem:[%s294 + $0x50] sm:$0xff]
        %v2181 = vld [vmem:[%s294 + $0x58] sm:$0xff]
        %v2182 = vld [vmem:[%s294 + $0x60] sm:$0xff]
        %v2183 = vld [vmem:[%s294 + $0x68] sm:$0xff]
        %v2184 = vld [vmem:[%s294 + $0x70] sm:$0xff]
        %v2185 = vld [vmem:[%s294 + $0x78] sm:$0xff]
        %v2186 = vld [vmem:[%s5] sm:$0x1]
        %v2188 = vlaneseq
        %v2189 = vshrl.u32 %v2188, 7
        %v2190 = vsub.s32 0, %v2189
        %v2191 = vrot.slane %v2186, %v2190
        %v2193 = vmul.f32 %v2170, %v2191
        %v2194 = vmul.f32 %v2171, %v2191
        %v2195 = vmul.f32 %v2172, %v2191
        %v2196 = vmul.f32 %v2173, %v2191
        %v2197 = vmul.f32 %v2174, %v2191
        %v2198 = vmul.f32 %v2175, %v2191
        %v2199 = vmul.f32 %v2176, %v2191
        %v2200 = vmul.f32 %v2177, %v2191
        %v2201 = vmul.f32 %v2178, %v2191
        %v2202 = vmul.f32 %v2179, %v2191
        %v2203 = vmul.f32 %v2180, %v2191
        %v2204 = vmul.f32 %v2181, %v2191
        %v2205 = vmul.f32 %v2182, %v2191
        %v2206 = vmul.f32 %v2183, %v2191
        %v2207 = vmul.f32 %v2184, %v2191
        %v2208 = vmul.f32 %v2185, %v2191
        %v2209 = vsel %vm689, %v2193, 0.0
        %2210 = vadd.xlane.f32.xlu0 %v2209
        %v2211 = vpop.xlane.xlu0 %2210
        %v2212 = vsel %vm689, %v2194, 0.0
        %2213 = vadd.xlane.f32.xlu0 %v2212
        %v2214 = vpop.xlane.xlu0 %2213
        %v2215 = vsel %vm689, %v2195, 0.0
        %2216 = vadd.xlane.f32.xlu0 %v2215
        %v2217 = vpop.xlane.xlu0 %2216
        %v2218 = vsel %vm689, %v2196, 0.0
        %2219 = vadd.xlane.f32.xlu0 %v2218
        %v2220 = vpop.xlane.xlu0 %2219
        %v2221 = vsel %vm689, %v2197, 0.0
        %2222 = vadd.xlane.f32.xlu0 %v2221
        %v2223 = vpop.xlane.xlu0 %2222
        %v2224 = vsel %vm689, %v2198, 0.0
        %2225 = vadd.xlane.f32.xlu0 %v2224
        %v2226 = vpop.xlane.xlu0 %2225
        %v2227 = vsel %vm689, %v2199, 0.0
        %2228 = vadd.xlane.f32.xlu0 %v2227
        %v2229 = vpop.xlane.xlu0 %2228
        %v2230 = vsel %vm689, %v2200, 0.0
        %2231 = vadd.xlane.f32.xlu0 %v2230
        %v2232 = vpop.xlane.xlu0 %2231
        %v2233 = vsel %vm689, %v2201, 0.0
        %2234 = vadd.xlane.f32.xlu0 %v2233
        %v2235 = vpop.xlane.xlu0 %2234
        %v2236 = vsel %vm689, %v2202, 0.0
        %2237 = vadd.xlane.f32.xlu0 %v2236
        %v2238 = vpop.xlane.xlu0 %2237
        %v2239 = vsel %vm689, %v2203, 0.0
        %2240 = vadd.xlane.f32.xlu0 %v2239
        %v2241 = vpop.xlane.xlu0 %2240
        %v2242 = vsel %vm689, %v2204, 0.0
        %2243 = vadd.xlane.f32.xlu0 %v2242
        %v2244 = vpop.xlane.xlu0 %2243
        %v2245 = vsel %vm689, %v2205, 0.0
        %2246 = vadd.xlane.f32.xlu0 %v2245
        %v2247 = vpop.xlane.xlu0 %2246
        %v2248 = vsel %vm689, %v2206, 0.0
        %2249 = vadd.xlane.f32.xlu0 %v2248
        %v2250 = vpop.xlane.xlu0 %2249
        %v2251 = vsel %vm689, %v2207, 0.0
        %2252 = vadd.xlane.f32.xlu0 %v2251
        %v2253 = vpop.xlane.xlu0 %2252
        %v2254 = vsel %vm689, %v2208, 0.0
        %2255 = vadd.xlane.f32.xlu0 %v2254
        %v2256 = vpop.xlane.xlu0 %2255
        %v2273 = vlaneseq
        %v2274 = vshrl.u32 %v2273, 7
        %v2275 = vsub.s32 0, %v2274
        %v2276 = vrot.slane %v2211, %v2275
        %v2277 = vlaneseq
        %v2278 = vshrl.u32 %v2277, 7
        %v2279 = vsub.s32 1, %v2278
        %v2280 = vrot.slane %v2211, %v2279
        %v2281 = vlaneseq
        %v2282 = vshrl.u32 %v2281, 7
        %v2283 = vsub.s32 2, %v2282
        %v2284 = vrot.slane %v2211, %v2283
        %v2285 = vlaneseq
        %v2286 = vshrl.u32 %v2285, 7
        %v2287 = vsub.s32 3, %v2286
        %v2288 = vrot.slane %v2211, %v2287
        %v2289 = vlaneseq
        %v2290 = vshrl.u32 %v2289, 7
        %v2291 = vsub.s32 4, %v2290
        %v2292 = vrot.slane %v2211, %v2291
        %v2293 = vlaneseq
        %v2294 = vshrl.u32 %v2293, 7
        %v2295 = vsub.s32 5, %v2294
        %v2296 = vrot.slane %v2211, %v2295
        %v2297 = vlaneseq
        %v2298 = vshrl.u32 %v2297, 7
        %v2299 = vsub.s32 6, %v2298
        %v2300 = vrot.slane %v2211, %v2299
        %v2301 = vlaneseq
        %v2302 = vshrl.u32 %v2301, 7
        %v2303 = vsub.s32 7, %v2302
        %v2304 = vrot.slane %v2211, %v2303
        %v2305 = vlaneseq
        %v2306 = vshrl.u32 %v2305, 7
        %v2307 = vsub.s32 0, %v2306
        %v2308 = vrot.slane %v2214, %v2307
        %v2309 = vlaneseq
        %v2310 = vshrl.u32 %v2309, 7
        %v2311 = vsub.s32 1, %v2310
        %v2312 = vrot.slane %v2214, %v2311
        %v2313 = vlaneseq
        %v2314 = vshrl.u32 %v2313, 7
        %v2315 = vsub.s32 2, %v2314
        %v2316 = vrot.slane %v2214, %v2315
        %v2317 = vlaneseq
        %v2318 = vshrl.u32 %v2317, 7
        %v2319 = vsub.s32 3, %v2318
        %v2320 = vrot.slane %v2214, %v2319
        %v2321 = vlaneseq
        %v2322 = vshrl.u32 %v2321, 7
        %v2323 = vsub.s32 4, %v2322
        %v2324 = vrot.slane %v2214, %v2323
        %v2325 = vlaneseq
        %v2326 = vshrl.u32 %v2325, 7
        %v2327 = vsub.s32 5, %v2326
        %v2328 = vrot.slane %v2214, %v2327
        %v2329 = vlaneseq
        %v2330 = vshrl.u32 %v2329, 7
        %v2331 = vsub.s32 6, %v2330
        %v2332 = vrot.slane %v2214, %v2331
        %v2333 = vlaneseq
        %v2334 = vshrl.u32 %v2333, 7
        %v2335 = vsub.s32 7, %v2334
        %v2336 = vrot.slane %v2214, %v2335
        %v2337 = vlaneseq
        %v2338 = vshrl.u32 %v2337, 7
        %v2339 = vsub.s32 0, %v2338
        %v2340 = vrot.slane %v2217, %v2339
        %v2341 = vlaneseq
        %v2342 = vshrl.u32 %v2341, 7
        %v2343 = vsub.s32 1, %v2342
        %v2344 = vrot.slane %v2217, %v2343
        %v2345 = vlaneseq
        %v2346 = vshrl.u32 %v2345, 7
        %v2347 = vsub.s32 2, %v2346
        %v2348 = vrot.slane %v2217, %v2347
        %v2349 = vlaneseq
        %v2350 = vshrl.u32 %v2349, 7
        %v2351 = vsub.s32 3, %v2350
        %v2352 = vrot.slane %v2217, %v2351
        %v2353 = vlaneseq
        %v2354 = vshrl.u32 %v2353, 7
        %v2355 = vsub.s32 4, %v2354
        %v2356 = vrot.slane %v2217, %v2355
        %v2357 = vlaneseq
        %v2358 = vshrl.u32 %v2357, 7
        %v2359 = vsub.s32 5, %v2358
        %v2360 = vrot.slane %v2217, %v2359
        %v2361 = vlaneseq
        %v2362 = vshrl.u32 %v2361, 7
        %v2363 = vsub.s32 6, %v2362
        %v2364 = vrot.slane %v2217, %v2363
        %v2365 = vlaneseq
        %v2366 = vshrl.u32 %v2365, 7
        %v2367 = vsub.s32 7, %v2366
        %v2368 = vrot.slane %v2217, %v2367
        %v2369 = vlaneseq
        %v2370 = vshrl.u32 %v2369, 7
        %v2371 = vsub.s32 0, %v2370
        %v2372 = vrot.slane %v2220, %v2371
        %v2373 = vlaneseq
        %v2374 = vshrl.u32 %v2373, 7
        %v2375 = vsub.s32 1, %v2374
        %v2376 = vrot.slane %v2220, %v2375
        %v2377 = vlaneseq
        %v2378 = vshrl.u32 %v2377, 7
        %v2379 = vsub.s32 2, %v2378
        %v2380 = vrot.slane %v2220, %v2379
        %v2381 = vlaneseq
        %v2382 = vshrl.u32 %v2381, 7
        %v2383 = vsub.s32 3, %v2382
        %v2384 = vrot.slane %v2220, %v2383
        %v2385 = vlaneseq
        %v2386 = vshrl.u32 %v2385, 7
        %v2387 = vsub.s32 4, %v2386
        %v2388 = vrot.slane %v2220, %v2387
        %v2389 = vlaneseq
        %v2390 = vshrl.u32 %v2389, 7
        %v2391 = vsub.s32 5, %v2390
        %v2392 = vrot.slane %v2220, %v2391
        %v2393 = vlaneseq
        %v2394 = vshrl.u32 %v2393, 7
        %v2395 = vsub.s32 6, %v2394
        %v2396 = vrot.slane %v2220, %v2395
        %v2397 = vlaneseq
        %v2398 = vshrl.u32 %v2397, 7
        %v2399 = vsub.s32 7, %v2398
        %v2400 = vrot.slane %v2220, %v2399
        %v2401 = vlaneseq
        %v2402 = vshrl.u32 %v2401, 7
        %v2403 = vsub.s32 0, %v2402
        %v2404 = vrot.slane %v2223, %v2403
        %v2405 = vlaneseq
        %v2406 = vshrl.u32 %v2405, 7
        %v2407 = vsub.s32 1, %v2406
        %v2408 = vrot.slane %v2223, %v2407
        %v2409 = vlaneseq
        %v2410 = vshrl.u32 %v2409, 7
        %v2411 = vsub.s32 2, %v2410
        %v2412 = vrot.slane %v2223, %v2411
        %v2413 = vlaneseq
        %v2414 = vshrl.u32 %v2413, 7
        %v2415 = vsub.s32 3, %v2414
        %v2416 = vrot.slane %v2223, %v2415
        %v2417 = vlaneseq
        %v2418 = vshrl.u32 %v2417, 7
        %v2419 = vsub.s32 4, %v2418
        %v2420 = vrot.slane %v2223, %v2419
        %v2421 = vlaneseq
        %v2422 = vshrl.u32 %v2421, 7
        %v2423 = vsub.s32 5, %v2422
        %v2424 = vrot.slane %v2223, %v2423
        %v2425 = vlaneseq
        %v2426 = vshrl.u32 %v2425, 7
        %v2427 = vsub.s32 6, %v2426
        %v2428 = vrot.slane %v2223, %v2427
        %v2429 = vlaneseq
        %v2430 = vshrl.u32 %v2429, 7
        %v2431 = vsub.s32 7, %v2430
        %v2432 = vrot.slane %v2223, %v2431
        %v2433 = vlaneseq
        %v2434 = vshrl.u32 %v2433, 7
        %v2435 = vsub.s32 0, %v2434
        %v2436 = vrot.slane %v2226, %v2435
        %v2437 = vlaneseq
        %v2438 = vshrl.u32 %v2437, 7
        %v2439 = vsub.s32 1, %v2438
        %v2440 = vrot.slane %v2226, %v2439
        %v2441 = vlaneseq
        %v2442 = vshrl.u32 %v2441, 7
        %v2443 = vsub.s32 2, %v2442
        %v2444 = vrot.slane %v2226, %v2443
        %v2445 = vlaneseq
        %v2446 = vshrl.u32 %v2445, 7
        %v2447 = vsub.s32 3, %v2446
        %v2448 = vrot.slane %v2226, %v2447
        %v2449 = vlaneseq
        %v2450 = vshrl.u32 %v2449, 7
        %v2451 = vsub.s32 4, %v2450
        %v2452 = vrot.slane %v2226, %v2451
        %v2453 = vlaneseq
        %v2454 = vshrl.u32 %v2453, 7
        %v2455 = vsub.s32 5, %v2454
        %v2456 = vrot.slane %v2226, %v2455
        %v2457 = vlaneseq
        %v2458 = vshrl.u32 %v2457, 7
        %v2459 = vsub.s32 6, %v2458
        %v2460 = vrot.slane %v2226, %v2459
        %v2461 = vlaneseq
        %v2462 = vshrl.u32 %v2461, 7
        %v2463 = vsub.s32 7, %v2462
        %v2464 = vrot.slane %v2226, %v2463
        %v2465 = vlaneseq
        %v2466 = vshrl.u32 %v2465, 7
        %v2467 = vsub.s32 0, %v2466
        %v2468 = vrot.slane %v2229, %v2467
        %v2469 = vlaneseq
        %v2470 = vshrl.u32 %v2469, 7
        %v2471 = vsub.s32 1, %v2470
        %v2472 = vrot.slane %v2229, %v2471
        %v2473 = vlaneseq
        %v2474 = vshrl.u32 %v2473, 7
        %v2475 = vsub.s32 2, %v2474
        %v2476 = vrot.slane %v2229, %v2475
        %v2477 = vlaneseq
        %v2478 = vshrl.u32 %v2477, 7
        %v2479 = vsub.s32 3, %v2478
        %v2480 = vrot.slane %v2229, %v2479
        %v2481 = vlaneseq
        %v2482 = vshrl.u32 %v2481, 7
        %v2483 = vsub.s32 4, %v2482
        %v2484 = vrot.slane %v2229, %v2483
        %v2485 = vlaneseq
        %v2486 = vshrl.u32 %v2485, 7
        %v2487 = vsub.s32 5, %v2486
        %v2488 = vrot.slane %v2229, %v2487
        %v2489 = vlaneseq
        %v2490 = vshrl.u32 %v2489, 7
        %v2491 = vsub.s32 6, %v2490
        %v2492 = vrot.slane %v2229, %v2491
        %v2493 = vlaneseq
        %v2494 = vshrl.u32 %v2493, 7
        %v2495 = vsub.s32 7, %v2494
        %v2496 = vrot.slane %v2229, %v2495
        %v2497 = vlaneseq
        %v2498 = vshrl.u32 %v2497, 7
        %v2499 = vsub.s32 0, %v2498
        %v2500 = vrot.slane %v2232, %v2499
        %v2501 = vlaneseq
        %v2502 = vshrl.u32 %v2501, 7
        %v2503 = vsub.s32 1, %v2502
        %v2504 = vrot.slane %v2232, %v2503
        %v2505 = vlaneseq
        %v2506 = vshrl.u32 %v2505, 7
        %v2507 = vsub.s32 2, %v2506
        %v2508 = vrot.slane %v2232, %v2507
        %v2509 = vlaneseq
        %v2510 = vshrl.u32 %v2509, 7
        %v2511 = vsub.s32 3, %v2510
        %v2512 = vrot.slane %v2232, %v2511
        %v2513 = vlaneseq
        %v2514 = vshrl.u32 %v2513, 7
        %v2515 = vsub.s32 4, %v2514
        %v2516 = vrot.slane %v2232, %v2515
        %v2517 = vlaneseq
        %v2518 = vshrl.u32 %v2517, 7
        %v2519 = vsub.s32 5, %v2518
        %v2520 = vrot.slane %v2232, %v2519
        %v2521 = vlaneseq
        %v2522 = vshrl.u32 %v2521, 7
        %v2523 = vsub.s32 6, %v2522
        %v2524 = vrot.slane %v2232, %v2523
        %v2525 = vlaneseq
        %v2526 = vshrl.u32 %v2525, 7
        %v2527 = vsub.s32 7, %v2526
        %v2528 = vrot.slane %v2232, %v2527
        %v2529 = vlaneseq
        %v2530 = vshrl.u32 %v2529, 7
        %v2531 = vsub.s32 0, %v2530
        %v2532 = vrot.slane %v2235, %v2531
        %v2533 = vlaneseq
        %v2534 = vshrl.u32 %v2533, 7
        %v2535 = vsub.s32 1, %v2534
        %v2536 = vrot.slane %v2235, %v2535
        %v2537 = vlaneseq
        %v2538 = vshrl.u32 %v2537, 7
        %v2539 = vsub.s32 2, %v2538
        %v2540 = vrot.slane %v2235, %v2539
        %v2541 = vlaneseq
        %v2542 = vshrl.u32 %v2541, 7
        %v2543 = vsub.s32 3, %v2542
        %v2544 = vrot.slane %v2235, %v2543
        %v2545 = vlaneseq
        %v2546 = vshrl.u32 %v2545, 7
        %v2547 = vsub.s32 4, %v2546
        %v2548 = vrot.slane %v2235, %v2547
        %v2549 = vlaneseq
        %v2550 = vshrl.u32 %v2549, 7
        %v2551 = vsub.s32 5, %v2550
        %v2552 = vrot.slane %v2235, %v2551
        %v2553 = vlaneseq
        %v2554 = vshrl.u32 %v2553, 7
        %v2555 = vsub.s32 6, %v2554
        %v2556 = vrot.slane %v2235, %v2555
        %v2557 = vlaneseq
        %v2558 = vshrl.u32 %v2557, 7
        %v2559 = vsub.s32 7, %v2558
        %v2560 = vrot.slane %v2235, %v2559
        %v2561 = vlaneseq
        %v2562 = vshrl.u32 %v2561, 7
        %v2563 = vsub.s32 0, %v2562
        %v2564 = vrot.slane %v2238, %v2563
        %v2565 = vlaneseq
        %v2566 = vshrl.u32 %v2565, 7
        %v2567 = vsub.s32 1, %v2566
        %v2568 = vrot.slane %v2238, %v2567
        %v2569 = vlaneseq
        %v2570 = vshrl.u32 %v2569, 7
        %v2571 = vsub.s32 2, %v2570
        %v2572 = vrot.slane %v2238, %v2571
        %v2573 = vlaneseq
        %v2574 = vshrl.u32 %v2573, 7
        %v2575 = vsub.s32 3, %v2574
        %v2576 = vrot.slane %v2238, %v2575
        %v2577 = vlaneseq
        %v2578 = vshrl.u32 %v2577, 7
        %v2579 = vsub.s32 4, %v2578
        %v2580 = vrot.slane %v2238, %v2579
        %v2581 = vlaneseq
        %v2582 = vshrl.u32 %v2581, 7
        %v2583 = vsub.s32 5, %v2582
        %v2584 = vrot.slane %v2238, %v2583
        %v2585 = vlaneseq
        %v2586 = vshrl.u32 %v2585, 7
        %v2587 = vsub.s32 6, %v2586
        %v2588 = vrot.slane %v2238, %v2587
        %v2589 = vlaneseq
        %v2590 = vshrl.u32 %v2589, 7
        %v2591 = vsub.s32 7, %v2590
        %v2592 = vrot.slane %v2238, %v2591
        %v2593 = vlaneseq
        %v2594 = vshrl.u32 %v2593, 7
        %v2595 = vsub.s32 0, %v2594
        %v2596 = vrot.slane %v2241, %v2595
        %v2597 = vlaneseq
        %v2598 = vshrl.u32 %v2597, 7
        %v2599 = vsub.s32 1, %v2598
        %v2600 = vrot.slane %v2241, %v2599
        %v2601 = vlaneseq
        %v2602 = vshrl.u32 %v2601, 7
        %v2603 = vsub.s32 2, %v2602
        %v2604 = vrot.slane %v2241, %v2603
        %v2605 = vlaneseq
        %v2606 = vshrl.u32 %v2605, 7
        %v2607 = vsub.s32 3, %v2606
        %v2608 = vrot.slane %v2241, %v2607
        %v2609 = vlaneseq
        %v2610 = vshrl.u32 %v2609, 7
        %v2611 = vsub.s32 4, %v2610
        %v2612 = vrot.slane %v2241, %v2611
        %v2613 = vlaneseq
        %v2614 = vshrl.u32 %v2613, 7
        %v2615 = vsub.s32 5, %v2614
        %v2616 = vrot.slane %v2241, %v2615
        %v2617 = vlaneseq
        %v2618 = vshrl.u32 %v2617, 7
        %v2619 = vsub.s32 6, %v2618
        %v2620 = vrot.slane %v2241, %v2619
        %v2621 = vlaneseq
        %v2622 = vshrl.u32 %v2621, 7
        %v2623 = vsub.s32 7, %v2622
        %v2624 = vrot.slane %v2241, %v2623
        %v2625 = vlaneseq
        %v2626 = vshrl.u32 %v2625, 7
        %v2627 = vsub.s32 0, %v2626
        %v2628 = vrot.slane %v2244, %v2627
        %v2629 = vlaneseq
        %v2630 = vshrl.u32 %v2629, 7
        %v2631 = vsub.s32 1, %v2630
        %v2632 = vrot.slane %v2244, %v2631
        %v2633 = vlaneseq
        %v2634 = vshrl.u32 %v2633, 7
        %v2635 = vsub.s32 2, %v2634
        %v2636 = vrot.slane %v2244, %v2635
        %v2637 = vlaneseq
        %v2638 = vshrl.u32 %v2637, 7
        %v2639 = vsub.s32 3, %v2638
        %v2640 = vrot.slane %v2244, %v2639
        %v2641 = vlaneseq
        %v2642 = vshrl.u32 %v2641, 7
        %v2643 = vsub.s32 4, %v2642
        %v2644 = vrot.slane %v2244, %v2643
        %v2645 = vlaneseq
        %v2646 = vshrl.u32 %v2645, 7
        %v2647 = vsub.s32 5, %v2646
        %v2648 = vrot.slane %v2244, %v2647
        %v2649 = vlaneseq
        %v2650 = vshrl.u32 %v2649, 7
        %v2651 = vsub.s32 6, %v2650
        %v2652 = vrot.slane %v2244, %v2651
        %v2653 = vlaneseq
        %v2654 = vshrl.u32 %v2653, 7
        %v2655 = vsub.s32 7, %v2654
        %v2656 = vrot.slane %v2244, %v2655
        %v2657 = vlaneseq
        %v2658 = vshrl.u32 %v2657, 7
        %v2659 = vsub.s32 0, %v2658
        %v2660 = vrot.slane %v2247, %v2659
        %v2661 = vlaneseq
        %v2662 = vshrl.u32 %v2661, 7
        %v2663 = vsub.s32 1, %v2662
        %v2664 = vrot.slane %v2247, %v2663
        %v2665 = vlaneseq
        %v2666 = vshrl.u32 %v2665, 7
        %v2667 = vsub.s32 2, %v2666
        %v2668 = vrot.slane %v2247, %v2667
        %v2669 = vlaneseq
        %v2670 = vshrl.u32 %v2669, 7
        %v2671 = vsub.s32 3, %v2670
        %v2672 = vrot.slane %v2247, %v2671
        %v2673 = vlaneseq
        %v2674 = vshrl.u32 %v2673, 7
        %v2675 = vsub.s32 4, %v2674
        %v2676 = vrot.slane %v2247, %v2675
        %v2677 = vlaneseq
        %v2678 = vshrl.u32 %v2677, 7
        %v2679 = vsub.s32 5, %v2678
        %v2680 = vrot.slane %v2247, %v2679
        %v2681 = vlaneseq
        %v2682 = vshrl.u32 %v2681, 7
        %v2683 = vsub.s32 6, %v2682
        %v2684 = vrot.slane %v2247, %v2683
        %v2685 = vlaneseq
        %v2686 = vshrl.u32 %v2685, 7
        %v2687 = vsub.s32 7, %v2686
        %v2688 = vrot.slane %v2247, %v2687
        %v2689 = vlaneseq
        %v2690 = vshrl.u32 %v2689, 7
        %v2691 = vsub.s32 0, %v2690
        %v2692 = vrot.slane %v2250, %v2691
        %v2693 = vlaneseq
        %v2694 = vshrl.u32 %v2693, 7
        %v2695 = vsub.s32 1, %v2694
        %v2696 = vrot.slane %v2250, %v2695
        %v2697 = vlaneseq
        %v2698 = vshrl.u32 %v2697, 7
        %v2699 = vsub.s32 2, %v2698
        %v2700 = vrot.slane %v2250, %v2699
        %v2701 = vlaneseq
        %v2702 = vshrl.u32 %v2701, 7
        %v2703 = vsub.s32 3, %v2702
        %v2704 = vrot.slane %v2250, %v2703
        %v2705 = vlaneseq
        %v2706 = vshrl.u32 %v2705, 7
        %v2707 = vsub.s32 4, %v2706
        %v2708 = vrot.slane %v2250, %v2707
        %v2709 = vlaneseq
        %v2710 = vshrl.u32 %v2709, 7
        %v2711 = vsub.s32 5, %v2710
        %v2712 = vrot.slane %v2250, %v2711
        %v2713 = vlaneseq
        %v2714 = vshrl.u32 %v2713, 7
        %v2715 = vsub.s32 6, %v2714
        %v2716 = vrot.slane %v2250, %v2715
        %v2717 = vlaneseq
        %v2718 = vshrl.u32 %v2717, 7
        %v2719 = vsub.s32 7, %v2718
        %v2720 = vrot.slane %v2250, %v2719
        %v2721 = vlaneseq
        %v2722 = vshrl.u32 %v2721, 7
        %v2723 = vsub.s32 0, %v2722
        %v2724 = vrot.slane %v2253, %v2723
        %v2725 = vlaneseq
        %v2726 = vshrl.u32 %v2725, 7
        %v2727 = vsub.s32 1, %v2726
        %v2728 = vrot.slane %v2253, %v2727
        %v2729 = vlaneseq
        %v2730 = vshrl.u32 %v2729, 7
        %v2731 = vsub.s32 2, %v2730
        %v2732 = vrot.slane %v2253, %v2731
        %v2733 = vlaneseq
        %v2734 = vshrl.u32 %v2733, 7
        %v2735 = vsub.s32 3, %v2734
        %v2736 = vrot.slane %v2253, %v2735
        %v2737 = vlaneseq
        %v2738 = vshrl.u32 %v2737, 7
        %v2739 = vsub.s32 4, %v2738
        %v2740 = vrot.slane %v2253, %v2739
        %v2741 = vlaneseq
        %v2742 = vshrl.u32 %v2741, 7
        %v2743 = vsub.s32 5, %v2742
        %v2744 = vrot.slane %v2253, %v2743
        %v2745 = vlaneseq
        %v2746 = vshrl.u32 %v2745, 7
        %v2747 = vsub.s32 6, %v2746
        %v2748 = vrot.slane %v2253, %v2747
        %v2749 = vlaneseq
        %v2750 = vshrl.u32 %v2749, 7
        %v2751 = vsub.s32 7, %v2750
        %v2752 = vrot.slane %v2253, %v2751
        %v2753 = vlaneseq
        %v2754 = vshrl.u32 %v2753, 7
        %v2755 = vsub.s32 0, %v2754
        %v2756 = vrot.slane %v2256, %v2755
        %v2757 = vlaneseq
        %v2758 = vshrl.u32 %v2757, 7
        %v2759 = vsub.s32 1, %v2758
        %v2760 = vrot.slane %v2256, %v2759
        %v2761 = vlaneseq
        %v2762 = vshrl.u32 %v2761, 7
        %v2763 = vsub.s32 2, %v2762
        %v2764 = vrot.slane %v2256, %v2763
        %v2765 = vlaneseq
        %v2766 = vshrl.u32 %v2765, 7
        %v2767 = vsub.s32 3, %v2766
        %v2768 = vrot.slane %v2256, %v2767
        %v2769 = vlaneseq
        %v2770 = vshrl.u32 %v2769, 7
        %v2771 = vsub.s32 4, %v2770
        %v2772 = vrot.slane %v2256, %v2771
        %v2773 = vlaneseq
        %v2774 = vshrl.u32 %v2773, 7
        %v2775 = vsub.s32 5, %v2774
        %v2776 = vrot.slane %v2256, %v2775
        %v2777 = vlaneseq
        %v2778 = vshrl.u32 %v2777, 7
        %v2779 = vsub.s32 6, %v2778
        %v2780 = vrot.slane %v2256, %v2779
        %v2781 = vlaneseq
        %v2782 = vshrl.u32 %v2781, 7
        %v2783 = vsub.s32 7, %v2782
        %v2784 = vrot.slane %v2256, %v2783
        %v2913 = vadd.f32 %v1915, %v2276
        %v2914 = vadd.f32 %v1917, %v2280
        %v2915 = vadd.f32 %v1919, %v2284
        %v2916 = vadd.f32 %v1921, %v2288
        %v2917 = vadd.f32 %v1923, %v2292
        %v2918 = vadd.f32 %v1925, %v2296
        %v2919 = vadd.f32 %v1927, %v2300
        %v2920 = vadd.f32 %v1929, %v2304
        %v2921 = vadd.f32 %v1931, %v2308
        %v2922 = vadd.f32 %v1933, %v2312
        %v2923 = vadd.f32 %v1935, %v2316
        %v2924 = vadd.f32 %v1937, %v2320
        %v2925 = vadd.f32 %v1939, %v2324
        %v2926 = vadd.f32 %v1941, %v2328
        %v2927 = vadd.f32 %v1943, %v2332
        %v2928 = vadd.f32 %v1945, %v2336
        %v2929 = vadd.f32 %v1947, %v2340
        %v2930 = vadd.f32 %v1949, %v2344
        %v2931 = vadd.f32 %v1951, %v2348
        %v2932 = vadd.f32 %v1953, %v2352
        %v2933 = vadd.f32 %v1955, %v2356
        %v2934 = vadd.f32 %v1957, %v2360
        %v2935 = vadd.f32 %v1959, %v2364
        %v2936 = vadd.f32 %v1961, %v2368
        %v2937 = vadd.f32 %v1963, %v2372
        %v2938 = vadd.f32 %v1965, %v2376
        %v2939 = vadd.f32 %v1967, %v2380
        %v2940 = vadd.f32 %v1969, %v2384
        %v2941 = vadd.f32 %v1971, %v2388
        %v2942 = vadd.f32 %v1973, %v2392
        %v2943 = vadd.f32 %v1975, %v2396
        %v2944 = vadd.f32 %v1977, %v2400
        %v2945 = vadd.f32 %v1979, %v2404
        %v2946 = vadd.f32 %v1981, %v2408
        %v2947 = vadd.f32 %v1983, %v2412
        %v2948 = vadd.f32 %v1985, %v2416
        %v2949 = vadd.f32 %v1987, %v2420
        %v2950 = vadd.f32 %v1989, %v2424
        %v2951 = vadd.f32 %v1991, %v2428
        %v2952 = vadd.f32 %v1993, %v2432
        %v2953 = vadd.f32 %v1995, %v2436
        %v2954 = vadd.f32 %v1997, %v2440
        %v2955 = vadd.f32 %v1999, %v2444
        %v2956 = vadd.f32 %v2001, %v2448
        %v2957 = vadd.f32 %v2003, %v2452
        %v2958 = vadd.f32 %v2005, %v2456
        %v2959 = vadd.f32 %v2007, %v2460
        %v2960 = vadd.f32 %v2009, %v2464
        %v2961 = vadd.f32 %v2011, %v2468
        %v2962 = vadd.f32 %v2013, %v2472
        %v2963 = vadd.f32 %v2015, %v2476
        %v2964 = vadd.f32 %v2017, %v2480
        %v2965 = vadd.f32 %v2019, %v2484
        %v2966 = vadd.f32 %v2021, %v2488
        %v2967 = vadd.f32 %v2023, %v2492
        %v2968 = vadd.f32 %v2025, %v2496
        %v2969 = vadd.f32 %v2027, %v2500
        %v2970 = vadd.f32 %v2029, %v2504
        %v2971 = vadd.f32 %v2031, %v2508
        %v2972 = vadd.f32 %v2033, %v2512
        %v2973 = vadd.f32 %v2035, %v2516
        %v2974 = vadd.f32 %v2037, %v2520
        %v2975 = vadd.f32 %v2039, %v2524
        %v2976 = vadd.f32 %v2041, %v2528
        %v2977 = vadd.f32 %v2043, %v2532
        %v2978 = vadd.f32 %v2045, %v2536
        %v2979 = vadd.f32 %v2047, %v2540
        %v2980 = vadd.f32 %v2049, %v2544
        %v2981 = vadd.f32 %v2051, %v2548
        %v2982 = vadd.f32 %v2053, %v2552
        %v2983 = vadd.f32 %v2055, %v2556
        %v2984 = vadd.f32 %v2057, %v2560
        %v2985 = vadd.f32 %v2059, %v2564
        %v2986 = vadd.f32 %v2061, %v2568
        %v2987 = vadd.f32 %v2063, %v2572
        %v2988 = vadd.f32 %v2065, %v2576
        %v2989 = vadd.f32 %v2067, %v2580
        %v2990 = vadd.f32 %v2069, %v2584
        %v2991 = vadd.f32 %v2071, %v2588
        %v2992 = vadd.f32 %v2073, %v2592
        %v2993 = vadd.f32 %v2075, %v2596
        %v2994 = vadd.f32 %v2077, %v2600
        %v2995 = vadd.f32 %v2079, %v2604
        %v2996 = vadd.f32 %v2081, %v2608
        %v2997 = vadd.f32 %v2083, %v2612
        %v2998 = vadd.f32 %v2085, %v2616
        %v2999 = vadd.f32 %v2087, %v2620
        %v3000 = vadd.f32 %v2089, %v2624
        %v3001 = vadd.f32 %v2091, %v2628
        %v3002 = vadd.f32 %v2093, %v2632
        %v3003 = vadd.f32 %v2095, %v2636
        %v3004 = vadd.f32 %v2097, %v2640
        %v3005 = vadd.f32 %v2099, %v2644
        %v3006 = vadd.f32 %v2101, %v2648
        %v3007 = vadd.f32 %v2103, %v2652
        %v3008 = vadd.f32 %v2105, %v2656
        %v3009 = vadd.f32 %v2107, %v2660
        %v3010 = vadd.f32 %v2109, %v2664
        %v3011 = vadd.f32 %v2111, %v2668
        %v3012 = vadd.f32 %v2113, %v2672
        %v3013 = vadd.f32 %v2115, %v2676
        %v3014 = vadd.f32 %v2117, %v2680
        %v3015 = vadd.f32 %v2119, %v2684
        %v3016 = vadd.f32 %v2121, %v2688
        %v3017 = vadd.f32 %v2123, %v2692
        %v3018 = vadd.f32 %v2125, %v2696
        %v3019 = vadd.f32 %v2127, %v2700
        %v3020 = vadd.f32 %v2129, %v2704
        %v3021 = vadd.f32 %v2131, %v2708
        %v3022 = vadd.f32 %v2133, %v2712
        %v3023 = vadd.f32 %v2135, %v2716
        %v3024 = vadd.f32 %v2137, %v2720
        %v3025 = vadd.f32 %v2139, %v2724
        %v3026 = vadd.f32 %v2141, %v2728
        %v3027 = vadd.f32 %v2143, %v2732
        %v3028 = vadd.f32 %v2145, %v2736
        %v3029 = vadd.f32 %v2147, %v2740
        %v3030 = vadd.f32 %v2149, %v2744
        %v3031 = vadd.f32 %v2151, %v2748
        %v3032 = vadd.f32 %v2153, %v2752
        %v3033 = vadd.f32 %v2155, %v2756
        %v3034 = vadd.f32 %v2157, %v2760
        %v3035 = vadd.f32 %v2159, %v2764
        %v3036 = vadd.f32 %v2161, %v2768
        %v3037 = vadd.f32 %v2163, %v2772
        %v3038 = vadd.f32 %v2165, %v2776
        %v3039 = vadd.f32 %v2167, %v2780
        %v3040 = vadd.f32 %v2169, %v2784
        %vm3041 = vcmp.gt.f32.partialorder %v2913, 0.0
        %vm3042 = vcmp.gt.f32.partialorder %v2914, 0.0
        %vm3043 = vcmp.gt.f32.partialorder %v2915, 0.0
        %vm3044 = vcmp.gt.f32.partialorder %v2916, 0.0
        %vm3045 = vcmp.gt.f32.partialorder %v2917, 0.0
        %vm3046 = vcmp.gt.f32.partialorder %v2918, 0.0
        %vm3047 = vcmp.gt.f32.partialorder %v2919, 0.0
        %vm3048 = vcmp.gt.f32.partialorder %v2920, 0.0
        %vm3049 = vcmp.gt.f32.partialorder %v2921, 0.0
        %vm3050 = vcmp.gt.f32.partialorder %v2922, 0.0
        %vm3051 = vcmp.gt.f32.partialorder %v2923, 0.0
        %vm3052 = vcmp.gt.f32.partialorder %v2924, 0.0
        %vm3053 = vcmp.gt.f32.partialorder %v2925, 0.0
        %vm3054 = vcmp.gt.f32.partialorder %v2926, 0.0
        %vm3055 = vcmp.gt.f32.partialorder %v2927, 0.0
        %vm3056 = vcmp.gt.f32.partialorder %v2928, 0.0
        %vm3057 = vcmp.gt.f32.partialorder %v2929, 0.0
        %vm3058 = vcmp.gt.f32.partialorder %v2930, 0.0
        %vm3059 = vcmp.gt.f32.partialorder %v2931, 0.0
        %vm3060 = vcmp.gt.f32.partialorder %v2932, 0.0
        %vm3061 = vcmp.gt.f32.partialorder %v2933, 0.0
        %vm3062 = vcmp.gt.f32.partialorder %v2934, 0.0
        %vm3063 = vcmp.gt.f32.partialorder %v2935, 0.0
        %vm3064 = vcmp.gt.f32.partialorder %v2936, 0.0
        %vm3065 = vcmp.gt.f32.partialorder %v2937, 0.0
        %vm3066 = vcmp.gt.f32.partialorder %v2938, 0.0
        %vm3067 = vcmp.gt.f32.partialorder %v2939, 0.0
        %vm3068 = vcmp.gt.f32.partialorder %v2940, 0.0
        %vm3069 = vcmp.gt.f32.partialorder %v2941, 0.0
        %vm3070 = vcmp.gt.f32.partialorder %v2942, 0.0
        %vm3071 = vcmp.gt.f32.partialorder %v2943, 0.0
        %vm3072 = vcmp.gt.f32.partialorder %v2944, 0.0
        %vm3073 = vcmp.gt.f32.partialorder %v2945, 0.0
        %vm3074 = vcmp.gt.f32.partialorder %v2946, 0.0
        %vm3075 = vcmp.gt.f32.partialorder %v2947, 0.0
        %vm3076 = vcmp.gt.f32.partialorder %v2948, 0.0
        %vm3077 = vcmp.gt.f32.partialorder %v2949, 0.0
        %vm3078 = vcmp.gt.f32.partialorder %v2950, 0.0
        %vm3079 = vcmp.gt.f32.partialorder %v2951, 0.0
        %vm3080 = vcmp.gt.f32.partialorder %v2952, 0.0
        %vm3081 = vcmp.gt.f32.partialorder %v2953, 0.0
        %vm3082 = vcmp.gt.f32.partialorder %v2954, 0.0
        %vm3083 = vcmp.gt.f32.partialorder %v2955, 0.0
        %vm3084 = vcmp.gt.f32.partialorder %v2956, 0.0
        %vm3085 = vcmp.gt.f32.partialorder %v2957, 0.0
        %vm3086 = vcmp.gt.f32.partialorder %v2958, 0.0
        %vm3087 = vcmp.gt.f32.partialorder %v2959, 0.0
        %vm3088 = vcmp.gt.f32.partialorder %v2960, 0.0
        %vm3089 = vcmp.gt.f32.partialorder %v2961, 0.0
        %vm3090 = vcmp.gt.f32.partialorder %v2962, 0.0
        %vm3091 = vcmp.gt.f32.partialorder %v2963, 0.0
        %vm3092 = vcmp.gt.f32.partialorder %v2964, 0.0
        %vm3093 = vcmp.gt.f32.partialorder %v2965, 0.0
        %vm3094 = vcmp.gt.f32.partialorder %v2966, 0.0
        %vm3095 = vcmp.gt.f32.partialorder %v2967, 0.0
        %vm3096 = vcmp.gt.f32.partialorder %v2968, 0.0
        %vm3097 = vcmp.gt.f32.partialorder %v2969, 0.0
        %vm3098 = vcmp.gt.f32.partialorder %v2970, 0.0
        %vm3099 = vcmp.gt.f32.partialorder %v2971, 0.0
        %vm3100 = vcmp.gt.f32.partialorder %v2972, 0.0
        %vm3101 = vcmp.gt.f32.partialorder %v2973, 0.0
        %vm3102 = vcmp.gt.f32.partialorder %v2974, 0.0
        %vm3103 = vcmp.gt.f32.partialorder %v2975, 0.0
        %vm3104 = vcmp.gt.f32.partialorder %v2976, 0.0
        %vm3105 = vcmp.gt.f32.partialorder %v2977, 0.0
        %vm3106 = vcmp.gt.f32.partialorder %v2978, 0.0
        %vm3107 = vcmp.gt.f32.partialorder %v2979, 0.0
        %vm3108 = vcmp.gt.f32.partialorder %v2980, 0.0
        %vm3109 = vcmp.gt.f32.partialorder %v2981, 0.0
        %vm3110 = vcmp.gt.f32.partialorder %v2982, 0.0
        %vm3111 = vcmp.gt.f32.partialorder %v2983, 0.0
        %vm3112 = vcmp.gt.f32.partialorder %v2984, 0.0
        %vm3113 = vcmp.gt.f32.partialorder %v2985, 0.0
        %vm3114 = vcmp.gt.f32.partialorder %v2986, 0.0
        %vm3115 = vcmp.gt.f32.partialorder %v2987, 0.0
        %vm3116 = vcmp.gt.f32.partialorder %v2988, 0.0
        %vm3117 = vcmp.gt.f32.partialorder %v2989, 0.0
        %vm3118 = vcmp.gt.f32.partialorder %v2990, 0.0
        %vm3119 = vcmp.gt.f32.partialorder %v2991, 0.0
        %vm3120 = vcmp.gt.f32.partialorder %v2992, 0.0
        %vm3121 = vcmp.gt.f32.partialorder %v2993, 0.0
        %vm3122 = vcmp.gt.f32.partialorder %v2994, 0.0
        %vm3123 = vcmp.gt.f32.partialorder %v2995, 0.0
        %vm3124 = vcmp.gt.f32.partialorder %v2996, 0.0
        %vm3125 = vcmp.gt.f32.partialorder %v2997, 0.0
        %vm3126 = vcmp.gt.f32.partialorder %v2998, 0.0
        %vm3127 = vcmp.gt.f32.partialorder %v2999, 0.0
        %vm3128 = vcmp.gt.f32.partialorder %v3000, 0.0
        %vm3129 = vcmp.gt.f32.partialorder %v3001, 0.0
        %vm3130 = vcmp.gt.f32.partialorder %v3002, 0.0
        %vm3131 = vcmp.gt.f32.partialorder %v3003, 0.0
        %vm3132 = vcmp.gt.f32.partialorder %v3004, 0.0
        %vm3133 = vcmp.gt.f32.partialorder %v3005, 0.0
        %vm3134 = vcmp.gt.f32.partialorder %v3006, 0.0
        %vm3135 = vcmp.gt.f32.partialorder %v3007, 0.0
        %vm3136 = vcmp.gt.f32.partialorder %v3008, 0.0
        %vm3137 = vcmp.gt.f32.partialorder %v3009, 0.0
        %vm3138 = vcmp.gt.f32.partialorder %v3010, 0.0
        %vm3139 = vcmp.gt.f32.partialorder %v3011, 0.0
        %vm3140 = vcmp.gt.f32.partialorder %v3012, 0.0
        %vm3141 = vcmp.gt.f32.partialorder %v3013, 0.0
        %vm3142 = vcmp.gt.f32.partialorder %v3014, 0.0
        %vm3143 = vcmp.gt.f32.partialorder %v3015, 0.0
        %vm3144 = vcmp.gt.f32.partialorder %v3016, 0.0
        %vm3145 = vcmp.gt.f32.partialorder %v3017, 0.0
        %vm3146 = vcmp.gt.f32.partialorder %v3018, 0.0
        %vm3147 = vcmp.gt.f32.partialorder %v3019, 0.0
        %vm3148 = vcmp.gt.f32.partialorder %v3020, 0.0
        %vm3149 = vcmp.gt.f32.partialorder %v3021, 0.0
        %vm3150 = vcmp.gt.f32.partialorder %v3022, 0.0
        %vm3151 = vcmp.gt.f32.partialorder %v3023, 0.0
        %vm3152 = vcmp.gt.f32.partialorder %v3024, 0.0
        %vm3153 = vcmp.gt.f32.partialorder %v3025, 0.0
        %vm3154 = vcmp.gt.f32.partialorder %v3026, 0.0
        %vm3155 = vcmp.gt.f32.partialorder %v3027, 0.0
        %vm3156 = vcmp.gt.f32.partialorder %v3028, 0.0
        %vm3157 = vcmp.gt.f32.partialorder %v3029, 0.0
        %vm3158 = vcmp.gt.f32.partialorder %v3030, 0.0
        %vm3159 = vcmp.gt.f32.partialorder %v3031, 0.0
        %vm3160 = vcmp.gt.f32.partialorder %v3032, 0.0
        %vm3161 = vcmp.gt.f32.partialorder %v3033, 0.0
        %vm3162 = vcmp.gt.f32.partialorder %v3034, 0.0
        %vm3163 = vcmp.gt.f32.partialorder %v3035, 0.0
        %vm3164 = vcmp.gt.f32.partialorder %v3036, 0.0
        %vm3165 = vcmp.gt.f32.partialorder %v3037, 0.0
        %vm3166 = vcmp.gt.f32.partialorder %v3038, 0.0
        %vm3167 = vcmp.gt.f32.partialorder %v3039, 0.0
        %vm3168 = vcmp.gt.f32.partialorder %v3040, 0.0
        %v3169 = vmul.f32 %v2913, 0.01
        %v3170 = vmul.f32 %v2914, 0.01
        %v3171 = vmul.f32 %v2915, 0.01
        %v3172 = vmul.f32 %v2916, 0.01
        %v3173 = vmul.f32 %v2917, 0.01
        %v3174 = vmul.f32 %v2918, 0.01
        %v3175 = vmul.f32 %v2919, 0.01
        %v3176 = vmul.f32 %v2920, 0.01
        %v3177 = vmul.f32 %v2921, 0.01
        %v3178 = vmul.f32 %v2922, 0.01
        %v3179 = vmul.f32 %v2923, 0.01
        %v3180 = vmul.f32 %v2924, 0.01
        %v3181 = vmul.f32 %v2925, 0.01
        %v3182 = vmul.f32 %v2926, 0.01
        %v3183 = vmul.f32 %v2927, 0.01
        %v3184 = vmul.f32 %v2928, 0.01
        %v3185 = vmul.f32 %v2929, 0.01
        %v3186 = vmul.f32 %v2930, 0.01
        %v3187 = vmul.f32 %v2931, 0.01
        %v3188 = vmul.f32 %v2932, 0.01
        %v3189 = vmul.f32 %v2933, 0.01
        %v3190 = vmul.f32 %v2934, 0.01
        %v3191 = vmul.f32 %v2935, 0.01
        %v3192 = vmul.f32 %v2936, 0.01
        %v3193 = vmul.f32 %v2937, 0.01
        %v3194 = vmul.f32 %v2938, 0.01
        %v3195 = vmul.f32 %v2939, 0.01
        %v3196 = vmul.f32 %v2940, 0.01
        %v3197 = vmul.f32 %v2941, 0.01
        %v3198 = vmul.f32 %v2942, 0.01
        %v3199 = vmul.f32 %v2943, 0.01
        %v3200 = vmul.f32 %v2944, 0.01
        %v3201 = vmul.f32 %v2945, 0.01
        %v3202 = vmul.f32 %v2946, 0.01
        %v3203 = vmul.f32 %v2947, 0.01
        %v3204 = vmul.f32 %v2948, 0.01
        %v3205 = vmul.f32 %v2949, 0.01
        %v3206 = vmul.f32 %v2950, 0.01
        %v3207 = vmul.f32 %v2951, 0.01
        %v3208 = vmul.f32 %v2952, 0.01
        %v3209 = vmul.f32 %v2953, 0.01
        %v3210 = vmul.f32 %v2954, 0.01
        %v3211 = vmul.f32 %v2955, 0.01
        %v3212 = vmul.f32 %v2956, 0.01
        %v3213 = vmul.f32 %v2957, 0.01
        %v3214 = vmul.f32 %v2958, 0.01
        %v3215 = vmul.f32 %v2959, 0.01
        %v3216 = vmul.f32 %v2960, 0.01
        %v3217 = vmul.f32 %v2961, 0.01
        %v3218 = vmul.f32 %v2962, 0.01
        %v3219 = vmul.f32 %v2963, 0.01
        %v3220 = vmul.f32 %v2964, 0.01
        %v3221 = vmul.f32 %v2965, 0.01
        %v3222 = vmul.f32 %v2966, 0.01
        %v3223 = vmul.f32 %v2967, 0.01
        %v3224 = vmul.f32 %v2968, 0.01
        %v3225 = vmul.f32 %v2969, 0.01
        %v3226 = vmul.f32 %v2970, 0.01
        %v3227 = vmul.f32 %v2971, 0.01
        %v3228 = vmul.f32 %v2972, 0.01
        %v3229 = vmul.f32 %v2973, 0.01
        %v3230 = vmul.f32 %v2974, 0.01
        %v3231 = vmul.f32 %v2975, 0.01
        %v3232 = vmul.f32 %v2976, 0.01
        %v3233 = vmul.f32 %v2977, 0.01
        %v3234 = vmul.f32 %v2978, 0.01
        %v3235 = vmul.f32 %v2979, 0.01
        %v3236 = vmul.f32 %v2980, 0.01
        %v3237 = vmul.f32 %v2981, 0.01
        %v3238 = vmul.f32 %v2982, 0.01
        %v3239 = vmul.f32 %v2983, 0.01
        %v3240 = vmul.f32 %v2984, 0.01
        %v3241 = vmul.f32 %v2985, 0.01
        %v3242 = vmul.f32 %v2986, 0.01
        %v3243 = vmul.f32 %v2987, 0.01
        %v3244 = vmul.f32 %v2988, 0.01
        %v3245 = vmul.f32 %v2989, 0.01
        %v3246 = vmul.f32 %v2990, 0.01
        %v3247 = vmul.f32 %v2991, 0.01
        %v3248 = vmul.f32 %v2992, 0.01
        %v3249 = vmul.f32 %v2993, 0.01
        %v3250 = vmul.f32 %v2994, 0.01
        %v3251 = vmul.f32 %v2995, 0.01
        %v3252 = vmul.f32 %v2996, 0.01
        %v3253 = vmul.f32 %v2997, 0.01
        %v3254 = vmul.f32 %v2998, 0.01
        %v3255 = vmul.f32 %v2999, 0.01
        %v3256 = vmul.f32 %v3000, 0.01
        %v3257 = vmul.f32 %v3001, 0.01
        %v3258 = vmul.f32 %v3002, 0.01
        %v3259 = vmul.f32 %v3003, 0.01
        %v3260 = vmul.f32 %v3004, 0.01
        %v3261 = vmul.f32 %v3005, 0.01
        %v3262 = vmul.f32 %v3006, 0.01
        %v3263 = vmul.f32 %v3007, 0.01
        %v3264 = vmul.f32 %v3008, 0.01
        %v3265 = vmul.f32 %v3009, 0.01
        %v3266 = vmul.f32 %v3010, 0.01
        %v3267 = vmul.f32 %v3011, 0.01
        %v3268 = vmul.f32 %v3012, 0.01
        %v3269 = vmul.f32 %v3013, 0.01
        %v3270 = vmul.f32 %v3014, 0.01
        %v3271 = vmul.f32 %v3015, 0.01
        %v3272 = vmul.f32 %v3016, 0.01
        %v3273 = vmul.f32 %v3017, 0.01
        %v3274 = vmul.f32 %v3018, 0.01
        %v3275 = vmul.f32 %v3019, 0.01
        %v3276 = vmul.f32 %v3020, 0.01
        %v3277 = vmul.f32 %v3021, 0.01
        %v3278 = vmul.f32 %v3022, 0.01
        %v3279 = vmul.f32 %v3023, 0.01
        %v3280 = vmul.f32 %v3024, 0.01
        %v3281 = vmul.f32 %v3025, 0.01
        %v3282 = vmul.f32 %v3026, 0.01
        %v3283 = vmul.f32 %v3027, 0.01
        %v3284 = vmul.f32 %v3028, 0.01
        %v3285 = vmul.f32 %v3029, 0.01
        %v3286 = vmul.f32 %v3030, 0.01
        %v3287 = vmul.f32 %v3031, 0.01
        %v3288 = vmul.f32 %v3032, 0.01
        %v3289 = vmul.f32 %v3033, 0.01
        %v3290 = vmul.f32 %v3034, 0.01
        %v3291 = vmul.f32 %v3035, 0.01
        %v3292 = vmul.f32 %v3036, 0.01
        %v3293 = vmul.f32 %v3037, 0.01
        %v3294 = vmul.f32 %v3038, 0.01
        %v3295 = vmul.f32 %v3039, 0.01
        %v3296 = vmul.f32 %v3040, 0.01
        %v3297 = vsel %vm3041, %v2913, %v3169
        %v3298 = vsel %vm3042, %v2914, %v3170
        %v3299 = vsel %vm3043, %v2915, %v3171
        %v3300 = vsel %vm3044, %v2916, %v3172
        %v3301 = vsel %vm3045, %v2917, %v3173
        %v3302 = vsel %vm3046, %v2918, %v3174
        %v3303 = vsel %vm3047, %v2919, %v3175
        %v3304 = vsel %vm3048, %v2920, %v3176
        %v3305 = vsel %vm3049, %v2921, %v3177
        %v3306 = vsel %vm3050, %v2922, %v3178
        %v3307 = vsel %vm3051, %v2923, %v3179
        %v3308 = vsel %vm3052, %v2924, %v3180
        %v3309 = vsel %vm3053, %v2925, %v3181
        %v3310 = vsel %vm3054, %v2926, %v3182
        %v3311 = vsel %vm3055, %v2927, %v3183
        %v3312 = vsel %vm3056, %v2928, %v3184
        %v3313 = vsel %vm3057, %v2929, %v3185
        %v3314 = vsel %vm3058, %v2930, %v3186
        %v3315 = vsel %vm3059, %v2931, %v3187
        %v3316 = vsel %vm3060, %v2932, %v3188
        %v3317 = vsel %vm3061, %v2933, %v3189
        %v3318 = vsel %vm3062, %v2934, %v3190
        %v3319 = vsel %vm3063, %v2935, %v3191
        %v3320 = vsel %vm3064, %v2936, %v3192
        %v3321 = vsel %vm3065, %v2937, %v3193
        %v3322 = vsel %vm3066, %v2938, %v3194
        %v3323 = vsel %vm3067, %v2939, %v3195
        %v3324 = vsel %vm3068, %v2940, %v3196
        %v3325 = vsel %vm3069, %v2941, %v3197
        %v3326 = vsel %vm3070, %v2942, %v3198
        %v3327 = vsel %vm3071, %v2943, %v3199
        %v3328 = vsel %vm3072, %v2944, %v3200
        %v3329 = vsel %vm3073, %v2945, %v3201
        %v3330 = vsel %vm3074, %v2946, %v3202
        %v3331 = vsel %vm3075, %v2947, %v3203
        %v3332 = vsel %vm3076, %v2948, %v3204
        %v3333 = vsel %vm3077, %v2949, %v3205
        %v3334 = vsel %vm3078, %v2950, %v3206
        %v3335 = vsel %vm3079, %v2951, %v3207
        %v3336 = vsel %vm3080, %v2952, %v3208
        %v3337 = vsel %vm3081, %v2953, %v3209
        %v3338 = vsel %vm3082, %v2954, %v3210
        %v3339 = vsel %vm3083, %v2955, %v3211
        %v3340 = vsel %vm3084, %v2956, %v3212
        %v3341 = vsel %vm3085, %v2957, %v3213
        %v3342 = vsel %vm3086, %v2958, %v3214
        %v3343 = vsel %vm3087, %v2959, %v3215
        %v3344 = vsel %vm3088, %v2960, %v3216
        %v3345 = vsel %vm3089, %v2961, %v3217
        %v3346 = vsel %vm3090, %v2962, %v3218
        %v3347 = vsel %vm3091, %v2963, %v3219
        %v3348 = vsel %vm3092, %v2964, %v3220
        %v3349 = vsel %vm3093, %v2965, %v3221
        %v3350 = vsel %vm3094, %v2966, %v3222
        %v3351 = vsel %vm3095, %v2967, %v3223
        %v3352 = vsel %vm3096, %v2968, %v3224
        %v3353 = vsel %vm3097, %v2969, %v3225
        %v3354 = vsel %vm3098, %v2970, %v3226
        %v3355 = vsel %vm3099, %v2971, %v3227
        %v3356 = vsel %vm3100, %v2972, %v3228
        %v3357 = vsel %vm3101, %v2973, %v3229
        %v3358 = vsel %vm3102, %v2974, %v3230
        %v3359 = vsel %vm3103, %v2975, %v3231
        %v3360 = vsel %vm3104, %v2976, %v3232
        %v3361 = vsel %vm3105, %v2977, %v3233
        %v3362 = vsel %vm3106, %v2978, %v3234
        %v3363 = vsel %vm3107, %v2979, %v3235
        %v3364 = vsel %vm3108, %v2980, %v3236
        %v3365 = vsel %vm3109, %v2981, %v3237
        %v3366 = vsel %vm3110, %v2982, %v3238
        %v3367 = vsel %vm3111, %v2983, %v3239
        %v3368 = vsel %vm3112, %v2984, %v3240
        %v3369 = vsel %vm3113, %v2985, %v3241
        %v3370 = vsel %vm3114, %v2986, %v3242
        %v3371 = vsel %vm3115, %v2987, %v3243
        %v3372 = vsel %vm3116, %v2988, %v3244
        %v3373 = vsel %vm3117, %v2989, %v3245
        %v3374 = vsel %vm3118, %v2990, %v3246
        %v3375 = vsel %vm3119, %v2991, %v3247
        %v3376 = vsel %vm3120, %v2992, %v3248
        %v3377 = vsel %vm3121, %v2993, %v3249
        %v3378 = vsel %vm3122, %v2994, %v3250
        %v3379 = vsel %vm3123, %v2995, %v3251
        %v3380 = vsel %vm3124, %v2996, %v3252
        %v3381 = vsel %vm3125, %v2997, %v3253
        %v3382 = vsel %vm3126, %v2998, %v3254
        %v3383 = vsel %vm3127, %v2999, %v3255
        %v3384 = vsel %vm3128, %v3000, %v3256
        %v3385 = vsel %vm3129, %v3001, %v3257
        %v3386 = vsel %vm3130, %v3002, %v3258
        %v3387 = vsel %vm3131, %v3003, %v3259
        %v3388 = vsel %vm3132, %v3004, %v3260
        %v3389 = vsel %vm3133, %v3005, %v3261
        %v3390 = vsel %vm3134, %v3006, %v3262
        %v3391 = vsel %vm3135, %v3007, %v3263
        %v3392 = vsel %vm3136, %v3008, %v3264
        %v3393 = vsel %vm3137, %v3009, %v3265
        %v3394 = vsel %vm3138, %v3010, %v3266
        %v3395 = vsel %vm3139, %v3011, %v3267
        %v3396 = vsel %vm3140, %v3012, %v3268
        %v3397 = vsel %vm3141, %v3013, %v3269
        %v3398 = vsel %vm3142, %v3014, %v3270
        %v3399 = vsel %vm3143, %v3015, %v3271
        %v3400 = vsel %vm3144, %v3016, %v3272
        %v3401 = vsel %vm3145, %v3017, %v3273
        %v3402 = vsel %vm3146, %v3018, %v3274
        %v3403 = vsel %vm3147, %v3019, %v3275
        %v3404 = vsel %vm3148, %v3020, %v3276
        %v3405 = vsel %vm3149, %v3021, %v3277
        %v3406 = vsel %vm3150, %v3022, %v3278
        %v3407 = vsel %vm3151, %v3023, %v3279
        %v3408 = vsel %vm3152, %v3024, %v3280
        %v3409 = vsel %vm3153, %v3025, %v3281
        %v3410 = vsel %vm3154, %v3026, %v3282
        %v3411 = vsel %vm3155, %v3027, %v3283
        %v3412 = vsel %vm3156, %v3028, %v3284
        %v3413 = vsel %vm3157, %v3029, %v3285
        %v3414 = vsel %vm3158, %v3030, %v3286
        %v3415 = vsel %vm3159, %v3031, %v3287
        %v3416 = vsel %vm3160, %v3032, %v3288
        %v3417 = vsel %vm3161, %v3033, %v3289
        %v3418 = vsel %vm3162, %v3034, %v3290
        %v3419 = vsel %vm3163, %v3035, %v3291
        %v3420 = vsel %vm3164, %v3036, %v3292
        %v3421 = vsel %vm3165, %v3037, %v3293
        %v3422 = vsel %vm3166, %v3038, %v3294
        %v3423 = vsel %vm3167, %v3039, %v3295
        %v3424 = vsel %vm3168, %v3040, %v3296
        %3553 = vset.pattern.permute.xlu0 0
        %3554 = vperm.xlu0 %3553, %v3297
        %v3555 = vpop.permute.xlu0 %3554
        %3556 = vset.pattern.permute.xlu0 0
        %3557 = vperm.xlu0 %3556, %v3298
        %v3558 = vpop.permute.xlu0 %3557
        %3559 = vset.pattern.permute.xlu0 0
        %3560 = vperm.xlu0 %3559, %v3299
        %v3561 = vpop.permute.xlu0 %3560
        %3562 = vset.pattern.permute.xlu0 0
        %3563 = vperm.xlu0 %3562, %v3300
        %v3564 = vpop.permute.xlu0 %3563
        %3565 = vset.pattern.permute.xlu0 0
        %3566 = vperm.xlu0 %3565, %v3301
        %v3567 = vpop.permute.xlu0 %3566
        %3568 = vset.pattern.permute.xlu0 0
        %3569 = vperm.xlu0 %3568, %v3302
        %v3570 = vpop.permute.xlu0 %3569
        %3571 = vset.pattern.permute.xlu0 0
        %3572 = vperm.xlu0 %3571, %v3303
        %v3573 = vpop.permute.xlu0 %3572
        %3574 = vset.pattern.permute.xlu0 0
        %3575 = vperm.xlu0 %3574, %v3304
        %v3576 = vpop.permute.xlu0 %3575
        %3577 = vset.pattern.permute.xlu0 0
        %3578 = vperm.xlu0 %3577, %v3305
        %v3579 = vpop.permute.xlu0 %3578
        %3580 = vset.pattern.permute.xlu0 0
        %3581 = vperm.xlu0 %3580, %v3306
        %v3582 = vpop.permute.xlu0 %3581
        %3583 = vset.pattern.permute.xlu0 0
        %3584 = vperm.xlu0 %3583, %v3307
        %v3585 = vpop.permute.xlu0 %3584
        %3586 = vset.pattern.permute.xlu0 0
        %3587 = vperm.xlu0 %3586, %v3308
        %v3588 = vpop.permute.xlu0 %3587
        %3589 = vset.pattern.permute.xlu0 0
        %3590 = vperm.xlu0 %3589, %v3309
        %v3591 = vpop.permute.xlu0 %3590
        %3592 = vset.pattern.permute.xlu0 0
        %3593 = vperm.xlu0 %3592, %v3310
        %v3594 = vpop.permute.xlu0 %3593
        %3595 = vset.pattern.permute.xlu0 0
        %3596 = vperm.xlu0 %3595, %v3311
        %v3597 = vpop.permute.xlu0 %3596
        %3598 = vset.pattern.permute.xlu0 0
        %3599 = vperm.xlu0 %3598, %v3312
        %v3600 = vpop.permute.xlu0 %3599
        %3601 = vset.pattern.permute.xlu0 0
        %3602 = vperm.xlu0 %3601, %v3313
        %v3603 = vpop.permute.xlu0 %3602
        %3604 = vset.pattern.permute.xlu0 0
        %3605 = vperm.xlu0 %3604, %v3314
        %v3606 = vpop.permute.xlu0 %3605
        %3607 = vset.pattern.permute.xlu0 0
        %3608 = vperm.xlu0 %3607, %v3315
        %v3609 = vpop.permute.xlu0 %3608
        %3610 = vset.pattern.permute.xlu0 0
        %3611 = vperm.xlu0 %3610, %v3316
        %v3612 = vpop.permute.xlu0 %3611
        %3613 = vset.pattern.permute.xlu0 0
        %3614 = vperm.xlu0 %3613, %v3317
        %v3615 = vpop.permute.xlu0 %3614
        %3616 = vset.pattern.permute.xlu0 0
        %3617 = vperm.xlu0 %3616, %v3318
        %v3618 = vpop.permute.xlu0 %3617
        %3619 = vset.pattern.permute.xlu0 0
        %3620 = vperm.xlu0 %3619, %v3319
        %v3621 = vpop.permute.xlu0 %3620
        %3622 = vset.pattern.permute.xlu0 0
        %3623 = vperm.xlu0 %3622, %v3320
        %v3624 = vpop.permute.xlu0 %3623
        %3625 = vset.pattern.permute.xlu0 0
        %3626 = vperm.xlu0 %3625, %v3321
        %v3627 = vpop.permute.xlu0 %3626
        %3628 = vset.pattern.permute.xlu0 0
        %3629 = vperm.xlu0 %3628, %v3322
        %v3630 = vpop.permute.xlu0 %3629
        %3631 = vset.pattern.permute.xlu0 0
        %3632 = vperm.xlu0 %3631, %v3323
        %v3633 = vpop.permute.xlu0 %3632
        %3634 = vset.pattern.permute.xlu0 0
        %3635 = vperm.xlu0 %3634, %v3324
        %v3636 = vpop.permute.xlu0 %3635
        %3637 = vset.pattern.permute.xlu0 0
        %3638 = vperm.xlu0 %3637, %v3325
        %v3639 = vpop.permute.xlu0 %3638
        %3640 = vset.pattern.permute.xlu0 0
        %3641 = vperm.xlu0 %3640, %v3326
        %v3642 = vpop.permute.xlu0 %3641
        %3643 = vset.pattern.permute.xlu0 0
        %3644 = vperm.xlu0 %3643, %v3327
        %v3645 = vpop.permute.xlu0 %3644
        %3646 = vset.pattern.permute.xlu0 0
        %3647 = vperm.xlu0 %3646, %v3328
        %v3648 = vpop.permute.xlu0 %3647
        %3649 = vset.pattern.permute.xlu0 0
        %3650 = vperm.xlu0 %3649, %v3329
        %v3651 = vpop.permute.xlu0 %3650
        %3652 = vset.pattern.permute.xlu0 0
        %3653 = vperm.xlu0 %3652, %v3330
        %v3654 = vpop.permute.xlu0 %3653
        %3655 = vset.pattern.permute.xlu0 0
        %3656 = vperm.xlu0 %3655, %v3331
        %v3657 = vpop.permute.xlu0 %3656
        %3658 = vset.pattern.permute.xlu0 0
        %3659 = vperm.xlu0 %3658, %v3332
        %v3660 = vpop.permute.xlu0 %3659
        %3661 = vset.pattern.permute.xlu0 0
        %3662 = vperm.xlu0 %3661, %v3333
        %v3663 = vpop.permute.xlu0 %3662
        %3664 = vset.pattern.permute.xlu0 0
        %3665 = vperm.xlu0 %3664, %v3334
        %v3666 = vpop.permute.xlu0 %3665
        %3667 = vset.pattern.permute.xlu0 0
        %3668 = vperm.xlu0 %3667, %v3335
        %v3669 = vpop.permute.xlu0 %3668
        %3670 = vset.pattern.permute.xlu0 0
        %3671 = vperm.xlu0 %3670, %v3336
        %v3672 = vpop.permute.xlu0 %3671
        %3673 = vset.pattern.permute.xlu0 0
        %3674 = vperm.xlu0 %3673, %v3337
        %v3675 = vpop.permute.xlu0 %3674
        %3676 = vset.pattern.permute.xlu0 0
        %3677 = vperm.xlu0 %3676, %v3338
        %v3678 = vpop.permute.xlu0 %3677
        %3679 = vset.pattern.permute.xlu0 0
        %3680 = vperm.xlu0 %3679, %v3339
        %v3681 = vpop.permute.xlu0 %3680
        %3682 = vset.pattern.permute.xlu0 0
        %3683 = vperm.xlu0 %3682, %v3340
        %v3684 = vpop.permute.xlu0 %3683
        %3685 = vset.pattern.permute.xlu0 0
        %3686 = vperm.xlu0 %3685, %v3341
        %v3687 = vpop.permute.xlu0 %3686
        %3688 = vset.pattern.permute.xlu0 0
        %3689 = vperm.xlu0 %3688, %v3342
        %v3690 = vpop.permute.xlu0 %3689
        %3691 = vset.pattern.permute.xlu0 0
        %3692 = vperm.xlu0 %3691, %v3343
        %v3693 = vpop.permute.xlu0 %3692
        %3694 = vset.pattern.permute.xlu0 0
        %3695 = vperm.xlu0 %3694, %v3344
        %v3696 = vpop.permute.xlu0 %3695
        %3697 = vset.pattern.permute.xlu0 0
        %3698 = vperm.xlu0 %3697, %v3345
        %v3699 = vpop.permute.xlu0 %3698
        %3700 = vset.pattern.permute.xlu0 0
        %3701 = vperm.xlu0 %3700, %v3346
        %v3702 = vpop.permute.xlu0 %3701
        %3703 = vset.pattern.permute.xlu0 0
        %3704 = vperm.xlu0 %3703, %v3347
        %v3705 = vpop.permute.xlu0 %3704
        %3706 = vset.pattern.permute.xlu0 0
        %3707 = vperm.xlu0 %3706, %v3348
        %v3708 = vpop.permute.xlu0 %3707
        %3709 = vset.pattern.permute.xlu0 0
        %3710 = vperm.xlu0 %3709, %v3349
        %v3711 = vpop.permute.xlu0 %3710
        %3712 = vset.pattern.permute.xlu0 0
        %3713 = vperm.xlu0 %3712, %v3350
        %v3714 = vpop.permute.xlu0 %3713
        %3715 = vset.pattern.permute.xlu0 0
        %3716 = vperm.xlu0 %3715, %v3351
        %v3717 = vpop.permute.xlu0 %3716
        %3718 = vset.pattern.permute.xlu0 0
        %3719 = vperm.xlu0 %3718, %v3352
        %v3720 = vpop.permute.xlu0 %3719
        %3721 = vset.pattern.permute.xlu0 0
        %3722 = vperm.xlu0 %3721, %v3353
        %v3723 = vpop.permute.xlu0 %3722
        %3724 = vset.pattern.permute.xlu0 0
        %3725 = vperm.xlu0 %3724, %v3354
        %v3726 = vpop.permute.xlu0 %3725
        %3727 = vset.pattern.permute.xlu0 0
        %3728 = vperm.xlu0 %3727, %v3355
        %v3729 = vpop.permute.xlu0 %3728
        %3730 = vset.pattern.permute.xlu0 0
        %3731 = vperm.xlu0 %3730, %v3356
        %v3732 = vpop.permute.xlu0 %3731
        %3733 = vset.pattern.permute.xlu0 0
        %3734 = vperm.xlu0 %3733, %v3357
        %v3735 = vpop.permute.xlu0 %3734
        %3736 = vset.pattern.permute.xlu0 0
        %3737 = vperm.xlu0 %3736, %v3358
        %v3738 = vpop.permute.xlu0 %3737
        %3739 = vset.pattern.permute.xlu0 0
        %3740 = vperm.xlu0 %3739, %v3359
        %v3741 = vpop.permute.xlu0 %3740
        %3742 = vset.pattern.permute.xlu0 0
        %3743 = vperm.xlu0 %3742, %v3360
        %v3744 = vpop.permute.xlu0 %3743
        %3745 = vset.pattern.permute.xlu0 0
        %3746 = vperm.xlu0 %3745, %v3361
        %v3747 = vpop.permute.xlu0 %3746
        %3748 = vset.pattern.permute.xlu0 0
        %3749 = vperm.xlu0 %3748, %v3362
        %v3750 = vpop.permute.xlu0 %3749
        %3751 = vset.pattern.permute.xlu0 0
        %3752 = vperm.xlu0 %3751, %v3363
        %v3753 = vpop.permute.xlu0 %3752
        %3754 = vset.pattern.permute.xlu0 0
        %3755 = vperm.xlu0 %3754, %v3364
        %v3756 = vpop.permute.xlu0 %3755
        %3757 = vset.pattern.permute.xlu0 0
        %3758 = vperm.xlu0 %3757, %v3365
        %v3759 = vpop.permute.xlu0 %3758
        %3760 = vset.pattern.permute.xlu0 0
        %3761 = vperm.xlu0 %3760, %v3366
        %v3762 = vpop.permute.xlu0 %3761
        %3763 = vset.pattern.permute.xlu0 0
        %3764 = vperm.xlu0 %3763, %v3367
        %v3765 = vpop.permute.xlu0 %3764
        %3766 = vset.pattern.permute.xlu0 0
        %3767 = vperm.xlu0 %3766, %v3368
        %v3768 = vpop.permute.xlu0 %3767
        %3769 = vset.pattern.permute.xlu0 0
        %3770 = vperm.xlu0 %3769, %v3369
        %v3771 = vpop.permute.xlu0 %3770
        %3772 = vset.pattern.permute.xlu0 0
        %3773 = vperm.xlu0 %3772, %v3370
        %v3774 = vpop.permute.xlu0 %3773
        %3775 = vset.pattern.permute.xlu0 0
        %3776 = vperm.xlu0 %3775, %v3371
        %v3777 = vpop.permute.xlu0 %3776
        %3778 = vset.pattern.permute.xlu0 0
        %3779 = vperm.xlu0 %3778, %v3372
        %v3780 = vpop.permute.xlu0 %3779
        %3781 = vset.pattern.permute.xlu0 0
        %3782 = vperm.xlu0 %3781, %v3373
        %v3783 = vpop.permute.xlu0 %3782
        %3784 = vset.pattern.permute.xlu0 0
        %3785 = vperm.xlu0 %3784, %v3374
        %v3786 = vpop.permute.xlu0 %3785
        %3787 = vset.pattern.permute.xlu0 0
        %3788 = vperm.xlu0 %3787, %v3375
        %v3789 = vpop.permute.xlu0 %3788
        %3790 = vset.pattern.permute.xlu0 0
        %3791 = vperm.xlu0 %3790, %v3376
        %v3792 = vpop.permute.xlu0 %3791
        %3793 = vset.pattern.permute.xlu0 0
        %3794 = vperm.xlu0 %3793, %v3377
        %v3795 = vpop.permute.xlu0 %3794
        %3796 = vset.pattern.permute.xlu0 0
        %3797 = vperm.xlu0 %3796, %v3378
        %v3798 = vpop.permute.xlu0 %3797
        %3799 = vset.pattern.permute.xlu0 0
        %3800 = vperm.xlu0 %3799, %v3379
        %v3801 = vpop.permute.xlu0 %3800
        %3802 = vset.pattern.permute.xlu0 0
        %3803 = vperm.xlu0 %3802, %v3380
        %v3804 = vpop.permute.xlu0 %3803
        %3805 = vset.pattern.permute.xlu0 0
        %3806 = vperm.xlu0 %3805, %v3381
        %v3807 = vpop.permute.xlu0 %3806
        %3808 = vset.pattern.permute.xlu0 0
        %3809 = vperm.xlu0 %3808, %v3382
        %v3810 = vpop.permute.xlu0 %3809
        %3811 = vset.pattern.permute.xlu0 0
        %3812 = vperm.xlu0 %3811, %v3383
        %v3813 = vpop.permute.xlu0 %3812
        %3814 = vset.pattern.permute.xlu0 0
        %3815 = vperm.xlu0 %3814, %v3384
        %v3816 = vpop.permute.xlu0 %3815
        %3817 = vset.pattern.permute.xlu0 0
        %3818 = vperm.xlu0 %3817, %v3385
        %v3819 = vpop.permute.xlu0 %3818
        %3820 = vset.pattern.permute.xlu0 0
        %3821 = vperm.xlu0 %3820, %v3386
        %v3822 = vpop.permute.xlu0 %3821
        %3823 = vset.pattern.permute.xlu0 0
        %3824 = vperm.xlu0 %3823, %v3387
        %v3825 = vpop.permute.xlu0 %3824
        %3826 = vset.pattern.permute.xlu0 0
        %3827 = vperm.xlu0 %3826, %v3388
        %v3828 = vpop.permute.xlu0 %3827
        %3829 = vset.pattern.permute.xlu0 0
        %3830 = vperm.xlu0 %3829, %v3389
        %v3831 = vpop.permute.xlu0 %3830
        %3832 = vset.pattern.permute.xlu0 0
        %3833 = vperm.xlu0 %3832, %v3390
        %v3834 = vpop.permute.xlu0 %3833
        %3835 = vset.pattern.permute.xlu0 0
        %3836 = vperm.xlu0 %3835, %v3391
        %v3837 = vpop.permute.xlu0 %3836
        %3838 = vset.pattern.permute.xlu0 0
        %3839 = vperm.xlu0 %3838, %v3392
        %v3840 = vpop.permute.xlu0 %3839
        %3841 = vset.pattern.permute.xlu0 0
        %3842 = vperm.xlu0 %3841, %v3393
        %v3843 = vpop.permute.xlu0 %3842
        %3844 = vset.pattern.permute.xlu0 0
        %3845 = vperm.xlu0 %3844, %v3394
        %v3846 = vpop.permute.xlu0 %3845
        %3847 = vset.pattern.permute.xlu0 0
        %3848 = vperm.xlu0 %3847, %v3395
        %v3849 = vpop.permute.xlu0 %3848
        %3850 = vset.pattern.permute.xlu0 0
        %3851 = vperm.xlu0 %3850, %v3396
        %v3852 = vpop.permute.xlu0 %3851
        %3853 = vset.pattern.permute.xlu0 0
        %3854 = vperm.xlu0 %3853, %v3397
        %v3855 = vpop.permute.xlu0 %3854
        %3856 = vset.pattern.permute.xlu0 0
        %3857 = vperm.xlu0 %3856, %v3398
        %v3858 = vpop.permute.xlu0 %3857
        %3859 = vset.pattern.permute.xlu0 0
        %3860 = vperm.xlu0 %3859, %v3399
        %v3861 = vpop.permute.xlu0 %3860
        %3862 = vset.pattern.permute.xlu0 0
        %3863 = vperm.xlu0 %3862, %v3400
        %v3864 = vpop.permute.xlu0 %3863
        %3865 = vset.pattern.permute.xlu0 0
        %3866 = vperm.xlu0 %3865, %v3401
        %v3867 = vpop.permute.xlu0 %3866
        %3868 = vset.pattern.permute.xlu0 0
        %3869 = vperm.xlu0 %3868, %v3402
        %v3870 = vpop.permute.xlu0 %3869
        %3871 = vset.pattern.permute.xlu0 0
        %3872 = vperm.xlu0 %3871, %v3403
        %v3873 = vpop.permute.xlu0 %3872
        %3874 = vset.pattern.permute.xlu0 0
        %3875 = vperm.xlu0 %3874, %v3404
        %v3876 = vpop.permute.xlu0 %3875
        %3877 = vset.pattern.permute.xlu0 0
        %3878 = vperm.xlu0 %3877, %v3405
        %v3879 = vpop.permute.xlu0 %3878
        %3880 = vset.pattern.permute.xlu0 0
        %3881 = vperm.xlu0 %3880, %v3406
        %v3882 = vpop.permute.xlu0 %3881
        %3883 = vset.pattern.permute.xlu0 0
        %3884 = vperm.xlu0 %3883, %v3407
        %v3885 = vpop.permute.xlu0 %3884
        %3886 = vset.pattern.permute.xlu0 0
        %3887 = vperm.xlu0 %3886, %v3408
        %v3888 = vpop.permute.xlu0 %3887
        %3889 = vset.pattern.permute.xlu0 0
        %3890 = vperm.xlu0 %3889, %v3409
        %v3891 = vpop.permute.xlu0 %3890
        %3892 = vset.pattern.permute.xlu0 0
        %3893 = vperm.xlu0 %3892, %v3410
        %v3894 = vpop.permute.xlu0 %3893
        %3895 = vset.pattern.permute.xlu0 0
        %3896 = vperm.xlu0 %3895, %v3411
        %v3897 = vpop.permute.xlu0 %3896
        %3898 = vset.pattern.permute.xlu0 0
        %3899 = vperm.xlu0 %3898, %v3412
        %v3900 = vpop.permute.xlu0 %3899
        %3901 = vset.pattern.permute.xlu0 0
        %3902 = vperm.xlu0 %3901, %v3413
        %v3903 = vpop.permute.xlu0 %3902
        %3904 = vset.pattern.permute.xlu0 0
        %3905 = vperm.xlu0 %3904, %v3414
        %v3906 = vpop.permute.xlu0 %3905
        %3907 = vset.pattern.permute.xlu0 0
        %3908 = vperm.xlu0 %3907, %v3415
        %v3909 = vpop.permute.xlu0 %3908
        %3910 = vset.pattern.permute.xlu0 0
        %3911 = vperm.xlu0 %3910, %v3416
        %v3912 = vpop.permute.xlu0 %3911
        %3913 = vset.pattern.permute.xlu0 0
        %3914 = vperm.xlu0 %3913, %v3417
        %v3915 = vpop.permute.xlu0 %3914
        %3916 = vset.pattern.permute.xlu0 0
        %3917 = vperm.xlu0 %3916, %v3418
        %v3918 = vpop.permute.xlu0 %3917
        %3919 = vset.pattern.permute.xlu0 0
        %3920 = vperm.xlu0 %3919, %v3419
        %v3921 = vpop.permute.xlu0 %3920
        %3922 = vset.pattern.permute.xlu0 0
        %3923 = vperm.xlu0 %3922, %v3420
        %v3924 = vpop.permute.xlu0 %3923
        %3925 = vset.pattern.permute.xlu0 0
        %3926 = vperm.xlu0 %3925, %v3421
        %v3927 = vpop.permute.xlu0 %3926
        %3928 = vset.pattern.permute.xlu0 0
        %3929 = vperm.xlu0 %3928, %v3422
        %v3930 = vpop.permute.xlu0 %3929
        %3931 = vset.pattern.permute.xlu0 0
        %3932 = vperm.xlu0 %3931, %v3423
        %v3933 = vpop.permute.xlu0 %3932
        %3934 = vset.pattern.permute.xlu0 0
        %3935 = vperm.xlu0 %3934, %v3424
        %v3936 = vpop.permute.xlu0 %3935
        %v3937 = vlaneseq
        %v3938 = vand.u32 %v3937, 127
        %v3939 = vlaneseq
        %v3940 = vshrl.u32 %v3939, 7
        %v3941 = vsub.s32 %v3938, %v3940
        %v3942 = vrot.slane %v3555, %v3941
        %v3943 = vlaneseq
        %v3944 = vshrl.u32 %v3943, 7
        %v3945 = vsub.s32 %v3938, %v3944
        %v3946 = vrot.slane %v3558, %v3945
        %v3947 = vlaneseq
        %v3948 = vshrl.u32 %v3947, 7
        %v3949 = vsub.s32 %v3938, %v3948
        %v3950 = vrot.slane %v3561, %v3949
        %v3951 = vlaneseq
        %v3952 = vshrl.u32 %v3951, 7
        %v3953 = vsub.s32 %v3938, %v3952
        %v3954 = vrot.slane %v3564, %v3953
        %v3955 = vlaneseq
        %v3956 = vshrl.u32 %v3955, 7
        %v3957 = vsub.s32 %v3938, %v3956
        %v3958 = vrot.slane %v3567, %v3957
        %v3959 = vlaneseq
        %v3960 = vshrl.u32 %v3959, 7
        %v3961 = vsub.s32 %v3938, %v3960
        %v3962 = vrot.slane %v3570, %v3961
        %v3963 = vlaneseq
        %v3964 = vshrl.u32 %v3963, 7
        %v3965 = vsub.s32 %v3938, %v3964
        %v3966 = vrot.slane %v3573, %v3965
        %v3967 = vlaneseq
        %v3968 = vshrl.u32 %v3967, 7
        %v3969 = vsub.s32 %v3938, %v3968
        %v3970 = vrot.slane %v3576, %v3969
        %v3971 = vlaneseq
        %v3972 = vshrl.u32 %v3971, 7
        %v3973 = vsub.s32 %v3938, %v3972
        %v3974 = vrot.slane %v3579, %v3973
        %v3975 = vlaneseq
        %v3976 = vshrl.u32 %v3975, 7
        %v3977 = vsub.s32 %v3938, %v3976
        %v3978 = vrot.slane %v3582, %v3977
        %v3979 = vlaneseq
        %v3980 = vshrl.u32 %v3979, 7
        %v3981 = vsub.s32 %v3938, %v3980
        %v3982 = vrot.slane %v3585, %v3981
        %v3983 = vlaneseq
        %v3984 = vshrl.u32 %v3983, 7
        %v3985 = vsub.s32 %v3938, %v3984
        %v3986 = vrot.slane %v3588, %v3985
        %v3987 = vlaneseq
        %v3988 = vshrl.u32 %v3987, 7
        %v3989 = vsub.s32 %v3938, %v3988
        %v3990 = vrot.slane %v3591, %v3989
        %v3991 = vlaneseq
        %v3992 = vshrl.u32 %v3991, 7
        %v3993 = vsub.s32 %v3938, %v3992
        %v3994 = vrot.slane %v3594, %v3993
        %v3995 = vlaneseq
        %v3996 = vshrl.u32 %v3995, 7
        %v3997 = vsub.s32 %v3938, %v3996
        %v3998 = vrot.slane %v3597, %v3997
        %v3999 = vlaneseq
        %v4000 = vshrl.u32 %v3999, 7
        %v4001 = vsub.s32 %v3938, %v4000
        %v4002 = vrot.slane %v3600, %v4001
        %v4003 = vlaneseq
        %v4004 = vshrl.u32 %v4003, 7
        %v4005 = vsub.s32 %v3938, %v4004
        %v4006 = vrot.slane %v3603, %v4005
        %v4007 = vlaneseq
        %v4008 = vshrl.u32 %v4007, 7
        %v4009 = vsub.s32 %v3938, %v4008
        %v4010 = vrot.slane %v3606, %v4009
        %v4011 = vlaneseq
        %v4012 = vshrl.u32 %v4011, 7
        %v4013 = vsub.s32 %v3938, %v4012
        %v4014 = vrot.slane %v3609, %v4013
        %v4015 = vlaneseq
        %v4016 = vshrl.u32 %v4015, 7
        %v4017 = vsub.s32 %v3938, %v4016
        %v4018 = vrot.slane %v3612, %v4017
        %v4019 = vlaneseq
        %v4020 = vshrl.u32 %v4019, 7
        %v4021 = vsub.s32 %v3938, %v4020
        %v4022 = vrot.slane %v3615, %v4021
        %v4023 = vlaneseq
        %v4024 = vshrl.u32 %v4023, 7
        %v4025 = vsub.s32 %v3938, %v4024
        %v4026 = vrot.slane %v3618, %v4025
        %v4027 = vlaneseq
        %v4028 = vshrl.u32 %v4027, 7
        %v4029 = vsub.s32 %v3938, %v4028
        %v4030 = vrot.slane %v3621, %v4029
        %v4031 = vlaneseq
        %v4032 = vshrl.u32 %v4031, 7
        %v4033 = vsub.s32 %v3938, %v4032
        %v4034 = vrot.slane %v3624, %v4033
        %v4035 = vlaneseq
        %v4036 = vshrl.u32 %v4035, 7
        %v4037 = vsub.s32 %v3938, %v4036
        %v4038 = vrot.slane %v3627, %v4037
        %v4039 = vlaneseq
        %v4040 = vshrl.u32 %v4039, 7
        %v4041 = vsub.s32 %v3938, %v4040
        %v4042 = vrot.slane %v3630, %v4041
        %v4043 = vlaneseq
        %v4044 = vshrl.u32 %v4043, 7
        %v4045 = vsub.s32 %v3938, %v4044
        %v4046 = vrot.slane %v3633, %v4045
        %v4047 = vlaneseq
        %v4048 = vshrl.u32 %v4047, 7
        %v4049 = vsub.s32 %v3938, %v4048
        %v4050 = vrot.slane %v3636, %v4049
        %v4051 = vlaneseq
        %v4052 = vshrl.u32 %v4051, 7
        %v4053 = vsub.s32 %v3938, %v4052
        %v4054 = vrot.slane %v3639, %v4053
        %v4055 = vlaneseq
        %v4056 = vshrl.u32 %v4055, 7
        %v4057 = vsub.s32 %v3938, %v4056
        %v4058 = vrot.slane %v3642, %v4057
        %v4059 = vlaneseq
        %v4060 = vshrl.u32 %v4059, 7
        %v4061 = vsub.s32 %v3938, %v4060
        %v4062 = vrot.slane %v3645, %v4061
        %v4063 = vlaneseq
        %v4064 = vshrl.u32 %v4063, 7
        %v4065 = vsub.s32 %v3938, %v4064
        %v4066 = vrot.slane %v3648, %v4065
        %v4067 = vlaneseq
        %v4068 = vshrl.u32 %v4067, 7
        %v4069 = vsub.s32 %v3938, %v4068
        %v4070 = vrot.slane %v3651, %v4069
        %v4071 = vlaneseq
        %v4072 = vshrl.u32 %v4071, 7
        %v4073 = vsub.s32 %v3938, %v4072
        %v4074 = vrot.slane %v3654, %v4073
        %v4075 = vlaneseq
        %v4076 = vshrl.u32 %v4075, 7
        %v4077 = vsub.s32 %v3938, %v4076
        %v4078 = vrot.slane %v3657, %v4077
        %v4079 = vlaneseq
        %v4080 = vshrl.u32 %v4079, 7
        %v4081 = vsub.s32 %v3938, %v4080
        %v4082 = vrot.slane %v3660, %v4081
        %v4083 = vlaneseq
        %v4084 = vshrl.u32 %v4083, 7
        %v4085 = vsub.s32 %v3938, %v4084
        %v4086 = vrot.slane %v3663, %v4085
        %v4087 = vlaneseq
        %v4088 = vshrl.u32 %v4087, 7
        %v4089 = vsub.s32 %v3938, %v4088
        %v4090 = vrot.slane %v3666, %v4089
        %v4091 = vlaneseq
        %v4092 = vshrl.u32 %v4091, 7
        %v4093 = vsub.s32 %v3938, %v4092
        %v4094 = vrot.slane %v3669, %v4093
        %v4095 = vlaneseq
        %v4096 = vshrl.u32 %v4095, 7
        %v4097 = vsub.s32 %v3938, %v4096
        %v4098 = vrot.slane %v3672, %v4097
        %v4099 = vlaneseq
        %v4100 = vshrl.u32 %v4099, 7
        %v4101 = vsub.s32 %v3938, %v4100
        %v4102 = vrot.slane %v3675, %v4101
        %v4103 = vlaneseq
        %v4104 = vshrl.u32 %v4103, 7
        %v4105 = vsub.s32 %v3938, %v4104
        %v4106 = vrot.slane %v3678, %v4105
        %v4107 = vlaneseq
        %v4108 = vshrl.u32 %v4107, 7
        %v4109 = vsub.s32 %v3938, %v4108
        %v4110 = vrot.slane %v3681, %v4109
        %v4111 = vlaneseq
        %v4112 = vshrl.u32 %v4111, 7
        %v4113 = vsub.s32 %v3938, %v4112
        %v4114 = vrot.slane %v3684, %v4113
        %v4115 = vlaneseq
        %v4116 = vshrl.u32 %v4115, 7
        %v4117 = vsub.s32 %v3938, %v4116
        %v4118 = vrot.slane %v3687, %v4117
        %v4119 = vlaneseq
        %v4120 = vshrl.u32 %v4119, 7
        %v4121 = vsub.s32 %v3938, %v4120
        %v4122 = vrot.slane %v3690, %v4121
        %v4123 = vlaneseq
        %v4124 = vshrl.u32 %v4123, 7
        %v4125 = vsub.s32 %v3938, %v4124
        %v4126 = vrot.slane %v3693, %v4125
        %v4127 = vlaneseq
        %v4128 = vshrl.u32 %v4127, 7
        %v4129 = vsub.s32 %v3938, %v4128
        %v4130 = vrot.slane %v3696, %v4129
        %v4131 = vlaneseq
        %v4132 = vshrl.u32 %v4131, 7
        %v4133 = vsub.s32 %v3938, %v4132
        %v4134 = vrot.slane %v3699, %v4133
        %v4135 = vlaneseq
        %v4136 = vshrl.u32 %v4135, 7
        %v4137 = vsub.s32 %v3938, %v4136
        %v4138 = vrot.slane %v3702, %v4137
        %v4139 = vlaneseq
        %v4140 = vshrl.u32 %v4139, 7
        %v4141 = vsub.s32 %v3938, %v4140
        %v4142 = vrot.slane %v3705, %v4141
        %v4143 = vlaneseq
        %v4144 = vshrl.u32 %v4143, 7
        %v4145 = vsub.s32 %v3938, %v4144
        %v4146 = vrot.slane %v3708, %v4145
        %v4147 = vlaneseq
        %v4148 = vshrl.u32 %v4147, 7
        %v4149 = vsub.s32 %v3938, %v4148
        %v4150 = vrot.slane %v3711, %v4149
        %v4151 = vlaneseq
        %v4152 = vshrl.u32 %v4151, 7
        %v4153 = vsub.s32 %v3938, %v4152
        %v4154 = vrot.slane %v3714, %v4153
        %v4155 = vlaneseq
        %v4156 = vshrl.u32 %v4155, 7
        %v4157 = vsub.s32 %v3938, %v4156
        %v4158 = vrot.slane %v3717, %v4157
        %v4159 = vlaneseq
        %v4160 = vshrl.u32 %v4159, 7
        %v4161 = vsub.s32 %v3938, %v4160
        %v4162 = vrot.slane %v3720, %v4161
        %v4163 = vlaneseq
        %v4164 = vshrl.u32 %v4163, 7
        %v4165 = vsub.s32 %v3938, %v4164
        %v4166 = vrot.slane %v3723, %v4165
        %v4167 = vlaneseq
        %v4168 = vshrl.u32 %v4167, 7
        %v4169 = vsub.s32 %v3938, %v4168
        %v4170 = vrot.slane %v3726, %v4169
        %v4171 = vlaneseq
        %v4172 = vshrl.u32 %v4171, 7
        %v4173 = vsub.s32 %v3938, %v4172
        %v4174 = vrot.slane %v3729, %v4173
        %v4175 = vlaneseq
        %v4176 = vshrl.u32 %v4175, 7
        %v4177 = vsub.s32 %v3938, %v4176
        %v4178 = vrot.slane %v3732, %v4177
        %v4179 = vlaneseq
        %v4180 = vshrl.u32 %v4179, 7
        %v4181 = vsub.s32 %v3938, %v4180
        %v4182 = vrot.slane %v3735, %v4181
        %v4183 = vlaneseq
        %v4184 = vshrl.u32 %v4183, 7
        %v4185 = vsub.s32 %v3938, %v4184
        %v4186 = vrot.slane %v3738, %v4185
        %v4187 = vlaneseq
        %v4188 = vshrl.u32 %v4187, 7
        %v4189 = vsub.s32 %v3938, %v4188
        %v4190 = vrot.slane %v3741, %v4189
        %v4191 = vlaneseq
        %v4192 = vshrl.u32 %v4191, 7
        %v4193 = vsub.s32 %v3938, %v4192
        %v4194 = vrot.slane %v3744, %v4193
        %v4195 = vlaneseq
        %v4196 = vshrl.u32 %v4195, 7
        %v4197 = vsub.s32 %v3938, %v4196
        %v4198 = vrot.slane %v3747, %v4197
        %v4199 = vlaneseq
        %v4200 = vshrl.u32 %v4199, 7
        %v4201 = vsub.s32 %v3938, %v4200
        %v4202 = vrot.slane %v3750, %v4201
        %v4203 = vlaneseq
        %v4204 = vshrl.u32 %v4203, 7
        %v4205 = vsub.s32 %v3938, %v4204
        %v4206 = vrot.slane %v3753, %v4205
        %v4207 = vlaneseq
        %v4208 = vshrl.u32 %v4207, 7
        %v4209 = vsub.s32 %v3938, %v4208
        %v4210 = vrot.slane %v3756, %v4209
        %v4211 = vlaneseq
        %v4212 = vshrl.u32 %v4211, 7
        %v4213 = vsub.s32 %v3938, %v4212
        %v4214 = vrot.slane %v3759, %v4213
        %v4215 = vlaneseq
        %v4216 = vshrl.u32 %v4215, 7
        %v4217 = vsub.s32 %v3938, %v4216
        %v4218 = vrot.slane %v3762, %v4217
        %v4219 = vlaneseq
        %v4220 = vshrl.u32 %v4219, 7
        %v4221 = vsub.s32 %v3938, %v4220
        %v4222 = vrot.slane %v3765, %v4221
        %v4223 = vlaneseq
        %v4224 = vshrl.u32 %v4223, 7
        %v4225 = vsub.s32 %v3938, %v4224
        %v4226 = vrot.slane %v3768, %v4225
        %v4227 = vlaneseq
        %v4228 = vshrl.u32 %v4227, 7
        %v4229 = vsub.s32 %v3938, %v4228
        %v4230 = vrot.slane %v3771, %v4229
        %v4231 = vlaneseq
        %v4232 = vshrl.u32 %v4231, 7
        %v4233 = vsub.s32 %v3938, %v4232
        %v4234 = vrot.slane %v3774, %v4233
        %v4235 = vlaneseq
        %v4236 = vshrl.u32 %v4235, 7
        %v4237 = vsub.s32 %v3938, %v4236
        %v4238 = vrot.slane %v3777, %v4237
        %v4239 = vlaneseq
        %v4240 = vshrl.u32 %v4239, 7
        %v4241 = vsub.s32 %v3938, %v4240
        %v4242 = vrot.slane %v3780, %v4241
        %v4243 = vlaneseq
        %v4244 = vshrl.u32 %v4243, 7
        %v4245 = vsub.s32 %v3938, %v4244
        %v4246 = vrot.slane %v3783, %v4245
        %v4247 = vlaneseq
        %v4248 = vshrl.u32 %v4247, 7
        %v4249 = vsub.s32 %v3938, %v4248
        %v4250 = vrot.slane %v3786, %v4249
        %v4251 = vlaneseq
        %v4252 = vshrl.u32 %v4251, 7
        %v4253 = vsub.s32 %v3938, %v4252
        %v4254 = vrot.slane %v3789, %v4253
        %v4255 = vlaneseq
        %v4256 = vshrl.u32 %v4255, 7
        %v4257 = vsub.s32 %v3938, %v4256
        %v4258 = vrot.slane %v3792, %v4257
        %v4259 = vlaneseq
        %v4260 = vshrl.u32 %v4259, 7
        %v4261 = vsub.s32 %v3938, %v4260
        %v4262 = vrot.slane %v3795, %v4261
        %v4263 = vlaneseq
        %v4264 = vshrl.u32 %v4263, 7
        %v4265 = vsub.s32 %v3938, %v4264
        %v4266 = vrot.slane %v3798, %v4265
        %v4267 = vlaneseq
        %v4268 = vshrl.u32 %v4267, 7
        %v4269 = vsub.s32 %v3938, %v4268
        %v4270 = vrot.slane %v3801, %v4269
        %v4271 = vlaneseq
        %v4272 = vshrl.u32 %v4271, 7
        %v4273 = vsub.s32 %v3938, %v4272
        %v4274 = vrot.slane %v3804, %v4273
        %v4275 = vlaneseq
        %v4276 = vshrl.u32 %v4275, 7
        %v4277 = vsub.s32 %v3938, %v4276
        %v4278 = vrot.slane %v3807, %v4277
        %v4279 = vlaneseq
        %v4280 = vshrl.u32 %v4279, 7
        %v4281 = vsub.s32 %v3938, %v4280
        %v4282 = vrot.slane %v3810, %v4281
        %v4283 = vlaneseq
        %v4284 = vshrl.u32 %v4283, 7
        %v4285 = vsub.s32 %v3938, %v4284
        %v4286 = vrot.slane %v3813, %v4285
        %v4287 = vlaneseq
        %v4288 = vshrl.u32 %v4287, 7
        %v4289 = vsub.s32 %v3938, %v4288
        %v4290 = vrot.slane %v3816, %v4289
        %v4291 = vlaneseq
        %v4292 = vshrl.u32 %v4291, 7
        %v4293 = vsub.s32 %v3938, %v4292
        %v4294 = vrot.slane %v3819, %v4293
        %v4295 = vlaneseq
        %v4296 = vshrl.u32 %v4295, 7
        %v4297 = vsub.s32 %v3938, %v4296
        %v4298 = vrot.slane %v3822, %v4297
        %v4299 = vlaneseq
        %v4300 = vshrl.u32 %v4299, 7
        %v4301 = vsub.s32 %v3938, %v4300
        %v4302 = vrot.slane %v3825, %v4301
        %v4303 = vlaneseq
        %v4304 = vshrl.u32 %v4303, 7
        %v4305 = vsub.s32 %v3938, %v4304
        %v4306 = vrot.slane %v3828, %v4305
        %v4307 = vlaneseq
        %v4308 = vshrl.u32 %v4307, 7
        %v4309 = vsub.s32 %v3938, %v4308
        %v4310 = vrot.slane %v3831, %v4309
        %v4311 = vlaneseq
        %v4312 = vshrl.u32 %v4311, 7
        %v4313 = vsub.s32 %v3938, %v4312
        %v4314 = vrot.slane %v3834, %v4313
        %v4315 = vlaneseq
        %v4316 = vshrl.u32 %v4315, 7
        %v4317 = vsub.s32 %v3938, %v4316
        %v4318 = vrot.slane %v3837, %v4317
        %v4319 = vlaneseq
        %v4320 = vshrl.u32 %v4319, 7
        %v4321 = vsub.s32 %v3938, %v4320
        %v4322 = vrot.slane %v3840, %v4321
        %v4323 = vlaneseq
        %v4324 = vshrl.u32 %v4323, 7
        %v4325 = vsub.s32 %v3938, %v4324
        %v4326 = vrot.slane %v3843, %v4325
        %v4327 = vlaneseq
        %v4328 = vshrl.u32 %v4327, 7
        %v4329 = vsub.s32 %v3938, %v4328
        %v4330 = vrot.slane %v3846, %v4329
        %v4331 = vlaneseq
        %v4332 = vshrl.u32 %v4331, 7
        %v4333 = vsub.s32 %v3938, %v4332
        %v4334 = vrot.slane %v3849, %v4333
        %v4335 = vlaneseq
        %v4336 = vshrl.u32 %v4335, 7
        %v4337 = vsub.s32 %v3938, %v4336
        %v4338 = vrot.slane %v3852, %v4337
        %v4339 = vlaneseq
        %v4340 = vshrl.u32 %v4339, 7
        %v4341 = vsub.s32 %v3938, %v4340
        %v4342 = vrot.slane %v3855, %v4341
        %v4343 = vlaneseq
        %v4344 = vshrl.u32 %v4343, 7
        %v4345 = vsub.s32 %v3938, %v4344
        %v4346 = vrot.slane %v3858, %v4345
        %v4347 = vlaneseq
        %v4348 = vshrl.u32 %v4347, 7
        %v4349 = vsub.s32 %v3938, %v4348
        %v4350 = vrot.slane %v3861, %v4349
        %v4351 = vlaneseq
        %v4352 = vshrl.u32 %v4351, 7
        %v4353 = vsub.s32 %v3938, %v4352
        %v4354 = vrot.slane %v3864, %v4353
        %v4355 = vlaneseq
        %v4356 = vshrl.u32 %v4355, 7
        %v4357 = vsub.s32 %v3938, %v4356
        %v4358 = vrot.slane %v3867, %v4357
        %v4359 = vlaneseq
        %v4360 = vshrl.u32 %v4359, 7
        %v4361 = vsub.s32 %v3938, %v4360
        %v4362 = vrot.slane %v3870, %v4361
        %v4363 = vlaneseq
        %v4364 = vshrl.u32 %v4363, 7
        %v4365 = vsub.s32 %v3938, %v4364
        %v4366 = vrot.slane %v3873, %v4365
        %v4367 = vlaneseq
        %v4368 = vshrl.u32 %v4367, 7
        %v4369 = vsub.s32 %v3938, %v4368
        %v4370 = vrot.slane %v3876, %v4369
        %v4371 = vlaneseq
        %v4372 = vshrl.u32 %v4371, 7
        %v4373 = vsub.s32 %v3938, %v4372
        %v4374 = vrot.slane %v3879, %v4373
        %v4375 = vlaneseq
        %v4376 = vshrl.u32 %v4375, 7
        %v4377 = vsub.s32 %v3938, %v4376
        %v4378 = vrot.slane %v3882, %v4377
        %v4379 = vlaneseq
        %v4380 = vshrl.u32 %v4379, 7
        %v4381 = vsub.s32 %v3938, %v4380
        %v4382 = vrot.slane %v3885, %v4381
        %v4383 = vlaneseq
        %v4384 = vshrl.u32 %v4383, 7
        %v4385 = vsub.s32 %v3938, %v4384
        %v4386 = vrot.slane %v3888, %v4385
        %v4387 = vlaneseq
        %v4388 = vshrl.u32 %v4387, 7
        %v4389 = vsub.s32 %v3938, %v4388
        %v4390 = vrot.slane %v3891, %v4389
        %v4391 = vlaneseq
        %v4392 = vshrl.u32 %v4391, 7
        %v4393 = vsub.s32 %v3938, %v4392
        %v4394 = vrot.slane %v3894, %v4393
        %v4395 = vlaneseq
        %v4396 = vshrl.u32 %v4395, 7
        %v4397 = vsub.s32 %v3938, %v4396
        %v4398 = vrot.slane %v3897, %v4397
        %v4399 = vlaneseq
        %v4400 = vshrl.u32 %v4399, 7
        %v4401 = vsub.s32 %v3938, %v4400
        %v4402 = vrot.slane %v3900, %v4401
        %v4403 = vlaneseq
        %v4404 = vshrl.u32 %v4403, 7
        %v4405 = vsub.s32 %v3938, %v4404
        %v4406 = vrot.slane %v3903, %v4405
        %v4407 = vlaneseq
        %v4408 = vshrl.u32 %v4407, 7
        %v4409 = vsub.s32 %v3938, %v4408
        %v4410 = vrot.slane %v3906, %v4409
        %v4411 = vlaneseq
        %v4412 = vshrl.u32 %v4411, 7
        %v4413 = vsub.s32 %v3938, %v4412
        %v4414 = vrot.slane %v3909, %v4413
        %v4415 = vlaneseq
        %v4416 = vshrl.u32 %v4415, 7
        %v4417 = vsub.s32 %v3938, %v4416
        %v4418 = vrot.slane %v3912, %v4417
        %v4419 = vlaneseq
        %v4420 = vshrl.u32 %v4419, 7
        %v4421 = vsub.s32 %v3938, %v4420
        %v4422 = vrot.slane %v3915, %v4421
        %v4423 = vlaneseq
        %v4424 = vshrl.u32 %v4423, 7
        %v4425 = vsub.s32 %v3938, %v4424
        %v4426 = vrot.slane %v3918, %v4425
        %v4427 = vlaneseq
        %v4428 = vshrl.u32 %v4427, 7
        %v4429 = vsub.s32 %v3938, %v4428
        %v4430 = vrot.slane %v3921, %v4429
        %v4431 = vlaneseq
        %v4432 = vshrl.u32 %v4431, 7
        %v4433 = vsub.s32 %v3938, %v4432
        %v4434 = vrot.slane %v3924, %v4433
        %v4435 = vlaneseq
        %v4436 = vshrl.u32 %v4435, 7
        %v4437 = vsub.s32 %v3938, %v4436
        %v4438 = vrot.slane %v3927, %v4437
        %v4439 = vlaneseq
        %v4440 = vshrl.u32 %v4439, 7
        %v4441 = vsub.s32 %v3938, %v4440
        %v4442 = vrot.slane %v3930, %v4441
        %v4443 = vlaneseq
        %v4444 = vshrl.u32 %v4443, 7
        %v4445 = vsub.s32 %v3938, %v4444
        %v4446 = vrot.slane %v3933, %v4445
        %v4447 = vlaneseq
        %v4448 = vshrl.u32 %v4447, 7
        %v4449 = vsub.s32 %v3938, %v4448
        %v4450 = vrot.slane %v3936, %v4449
        %vm4451 = vcmask 1041409
        %v4452 = vsel %vm4451, %v3946, %v3942
        %vm4453 = vcmask 1042434
        %v4454 = vsel %vm4453, %v3950, %v4452
        %vm4455 = vcmask 1043459
        %v4456 = vsel %vm4455, %v3954, %v4454
        %vm4457 = vcmask 1044484
        %v4458 = vsel %vm4457, %v3958, %v4456
        %vm4459 = vcmask 1045509
        %v4460 = vsel %vm4459, %v3962, %v4458
        %vm4461 = vcmask 1046534
        %v4462 = vsel %vm4461, %v3966, %v4460
        %vm4463 = vcmask 1047559
        %v4464 = vsel %vm4463, %v3970, %v4462
        %v4465 = vsel %vm4451, %v3978, %v3974
        %v4466 = vsel %vm4453, %v3982, %v4465
        %v4467 = vsel %vm4455, %v3986, %v4466
        %v4468 = vsel %vm4457, %v3990, %v4467
        %v4469 = vsel %vm4459, %v3994, %v4468
        %v4470 = vsel %vm4461, %v3998, %v4469
        %v4471 = vsel %vm4463, %v4002, %v4470
        %v4472 = vsel %vm4451, %v4010, %v4006
        %v4473 = vsel %vm4453, %v4014, %v4472
        %v4474 = vsel %vm4455, %v4018, %v4473
        %v4475 = vsel %vm4457, %v4022, %v4474
        %v4476 = vsel %vm4459, %v4026, %v4475
        %v4477 = vsel %vm4461, %v4030, %v4476
        %v4478 = vsel %vm4463, %v4034, %v4477
        %v4479 = vsel %vm4451, %v4042, %v4038
        %v4480 = vsel %vm4453, %v4046, %v4479
        %v4481 = vsel %vm4455, %v4050, %v4480
        %v4482 = vsel %vm4457, %v4054, %v4481
        %v4483 = vsel %vm4459, %v4058, %v4482
        %v4484 = vsel %vm4461, %v4062, %v4483
        %v4485 = vsel %vm4463, %v4066, %v4484
        %v4486 = vsel %vm4451, %v4074, %v4070
        %v4487 = vsel %vm4453, %v4078, %v4486
        %v4488 = vsel %vm4455, %v4082, %v4487
        %v4489 = vsel %vm4457, %v4086, %v4488
        %v4490 = vsel %vm4459, %v4090, %v4489
        %v4491 = vsel %vm4461, %v4094, %v4490
        %v4492 = vsel %vm4463, %v4098, %v4491
        %v4493 = vsel %vm4451, %v4106, %v4102
        %v4494 = vsel %vm4453, %v4110, %v4493
        %v4495 = vsel %vm4455, %v4114, %v4494
        %v4496 = vsel %vm4457, %v4118, %v4495
        %v4497 = vsel %vm4459, %v4122, %v4496
        %v4498 = vsel %vm4461, %v4126, %v4497
        %v4499 = vsel %vm4463, %v4130, %v4498
        %v4500 = vsel %vm4451, %v4138, %v4134
        %v4501 = vsel %vm4453, %v4142, %v4500
        %v4502 = vsel %vm4455, %v4146, %v4501
        %v4503 = vsel %vm4457, %v4150, %v4502
        %v4504 = vsel %vm4459, %v4154, %v4503
        %v4505 = vsel %vm4461, %v4158, %v4504
        %v4506 = vsel %vm4463, %v4162, %v4505
        %v4507 = vsel %vm4451, %v4170, %v4166
        %v4508 = vsel %vm4453, %v4174, %v4507
        %v4509 = vsel %vm4455, %v4178, %v4508
        %v4510 = vsel %vm4457, %v4182, %v4509
        %v4511 = vsel %vm4459, %v4186, %v4510
        %v4512 = vsel %vm4461, %v4190, %v4511
        %v4513 = vsel %vm4463, %v4194, %v4512
        %v4514 = vsel %vm4451, %v4202, %v4198
        %v4515 = vsel %vm4453, %v4206, %v4514
        %v4516 = vsel %vm4455, %v4210, %v4515
        %v4517 = vsel %vm4457, %v4214, %v4516
        %v4518 = vsel %vm4459, %v4218, %v4517
        %v4519 = vsel %vm4461, %v4222, %v4518
        %v4520 = vsel %vm4463, %v4226, %v4519
        %v4521 = vsel %vm4451, %v4234, %v4230
        %v4522 = vsel %vm4453, %v4238, %v4521
        %v4523 = vsel %vm4455, %v4242, %v4522
        %v4524 = vsel %vm4457, %v4246, %v4523
        %v4525 = vsel %vm4459, %v4250, %v4524
        %v4526 = vsel %vm4461, %v4254, %v4525
        %v4527 = vsel %vm4463, %v4258, %v4526
        %v4528 = vsel %vm4451, %v4266, %v4262
        %v4529 = vsel %vm4453, %v4270, %v4528
        %v4530 = vsel %vm4455, %v4274, %v4529
        %v4531 = vsel %vm4457, %v4278, %v4530
        %v4532 = vsel %vm4459, %v4282, %v4531
        %v4533 = vsel %vm4461, %v4286, %v4532
        %v4534 = vsel %vm4463, %v4290, %v4533
        %v4535 = vsel %vm4451, %v4298, %v4294
        %v4536 = vsel %vm4453, %v4302, %v4535
        %v4537 = vsel %vm4455, %v4306, %v4536
        %v4538 = vsel %vm4457, %v4310, %v4537
        %v4539 = vsel %vm4459, %v4314, %v4538
        %v4540 = vsel %vm4461, %v4318, %v4539
        %v4541 = vsel %vm4463, %v4322, %v4540
        %v4542 = vsel %vm4451, %v4330, %v4326
        %v4543 = vsel %vm4453, %v4334, %v4542
        %v4544 = vsel %vm4455, %v4338, %v4543
        %v4545 = vsel %vm4457, %v4342, %v4544
        %v4546 = vsel %vm4459, %v4346, %v4545
        %v4547 = vsel %vm4461, %v4350, %v4546
        %v4548 = vsel %vm4463, %v4354, %v4547
        %v4549 = vsel %vm4451, %v4362, %v4358
        %v4550 = vsel %vm4453, %v4366, %v4549
        %v4551 = vsel %vm4455, %v4370, %v4550
        %v4552 = vsel %vm4457, %v4374, %v4551
        %v4553 = vsel %vm4459, %v4378, %v4552
        %v4554 = vsel %vm4461, %v4382, %v4553
        %v4555 = vsel %vm4463, %v4386, %v4554
        %v4556 = vsel %vm4451, %v4394, %v4390
        %v4557 = vsel %vm4453, %v4398, %v4556
        %v4558 = vsel %vm4455, %v4402, %v4557
        %v4559 = vsel %vm4457, %v4406, %v4558
        %v4560 = vsel %vm4459, %v4410, %v4559
        %v4561 = vsel %vm4461, %v4414, %v4560
        %v4562 = vsel %vm4463, %v4418, %v4561
        %v4563 = vsel %vm4451, %v4426, %v4422
        %v4564 = vsel %vm4453, %v4430, %v4563
        %v4565 = vsel %vm4455, %v4434, %v4564
        %v4566 = vsel %vm4457, %v4438, %v4565
        %v4567 = vsel %vm4459, %v4442, %v4566
        %v4568 = vsel %vm4461, %v4446, %v4567
        %v4569 = vsel %vm4463, %v4450, %v4568
        %vm4586 = vcmask 64512
        %v4587 = vsel %vm4586, %v4464, -inf
        %4588 = vmax.xlane.f32.xlu0 %v4587
        %v4589 = vpop.xlane.xlu0 %4588
        %v4590 = vsel %vm4586, %v4471, -inf
        %4591 = vmax.xlane.f32.xlu0 %v4590
        %v4592 = vpop.xlane.xlu0 %4591
        %v4593 = vsel %vm4586, %v4478, -inf
        %4594 = vmax.xlane.f32.xlu0 %v4593
        %v4595 = vpop.xlane.xlu0 %4594
        %v4596 = vsel %vm4586, %v4485, -inf
        %4597 = vmax.xlane.f32.xlu0 %v4596
        %v4598 = vpop.xlane.xlu0 %4597
        %v4599 = vsel %vm4586, %v4492, -inf
        %4600 = vmax.xlane.f32.xlu0 %v4599
        %v4601 = vpop.xlane.xlu0 %4600
        %v4602 = vsel %vm4586, %v4499, -inf
        %4603 = vmax.xlane.f32.xlu0 %v4602
        %v4604 = vpop.xlane.xlu0 %4603
        %v4605 = vsel %vm4586, %v4506, -inf
        %4606 = vmax.xlane.f32.xlu0 %v4605
        %v4607 = vpop.xlane.xlu0 %4606
        %v4608 = vsel %vm4586, %v4513, -inf
        %4609 = vmax.xlane.f32.xlu0 %v4608
        %v4610 = vpop.xlane.xlu0 %4609
        %v4611 = vsel %vm4586, %v4520, -inf
        %4612 = vmax.xlane.f32.xlu0 %v4611
        %v4613 = vpop.xlane.xlu0 %4612
        %v4614 = vsel %vm4586, %v4527, -inf
        %4615 = vmax.xlane.f32.xlu0 %v4614
        %v4616 = vpop.xlane.xlu0 %4615
        %v4617 = vsel %vm4586, %v4534, -inf
        %4618 = vmax.xlane.f32.xlu0 %v4617
        %v4619 = vpop.xlane.xlu0 %4618
        %v4620 = vsel %vm4586, %v4541, -inf
        %4621 = vmax.xlane.f32.xlu0 %v4620
        %v4622 = vpop.xlane.xlu0 %4621
        %v4623 = vsel %vm4586, %v4548, -inf
        %4624 = vmax.xlane.f32.xlu0 %v4623
        %v4625 = vpop.xlane.xlu0 %4624
        %v4626 = vsel %vm4586, %v4555, -inf
        %4627 = vmax.xlane.f32.xlu0 %v4626
        %v4628 = vpop.xlane.xlu0 %4627
        %v4629 = vsel %vm4586, %v4562, -inf
        %4630 = vmax.xlane.f32.xlu0 %v4629
        %v4631 = vpop.xlane.xlu0 %4630
        %v4632 = vsel %vm4586, %v4569, -inf
        %4633 = vmax.xlane.f32.xlu0 %v4632
        %v4634 = vpop.xlane.xlu0 %4633
        %v4651 = vlaneseq
        %v4652 = vshrl.u32 %v4651, 7
        %v4653 = vsub.s32 0, %v4652
        %v4654 = vrot.slane %v4589, %v4653
        %v4655 = vlaneseq
        %v4656 = vshrl.u32 %v4655, 7
        %v4657 = vsub.s32 1, %v4656
        %v4658 = vrot.slane %v4589, %v4657
        %v4659 = vlaneseq
        %v4660 = vshrl.u32 %v4659, 7
        %v4661 = vsub.s32 2, %v4660
        %v4662 = vrot.slane %v4589, %v4661
        %v4663 = vlaneseq
        %v4664 = vshrl.u32 %v4663, 7
        %v4665 = vsub.s32 3, %v4664
        %v4666 = vrot.slane %v4589, %v4665
        %v4667 = vlaneseq
        %v4668 = vshrl.u32 %v4667, 7
        %v4669 = vsub.s32 4, %v4668
        %v4670 = vrot.slane %v4589, %v4669
        %v4671 = vlaneseq
        %v4672 = vshrl.u32 %v4671, 7
        %v4673 = vsub.s32 5, %v4672
        %v4674 = vrot.slane %v4589, %v4673
        %v4675 = vlaneseq
        %v4676 = vshrl.u32 %v4675, 7
        %v4677 = vsub.s32 6, %v4676
        %v4678 = vrot.slane %v4589, %v4677
        %v4679 = vlaneseq
        %v4680 = vshrl.u32 %v4679, 7
        %v4681 = vsub.s32 7, %v4680
        %v4682 = vrot.slane %v4589, %v4681
        %v4683 = vlaneseq
        %v4684 = vshrl.u32 %v4683, 7
        %v4685 = vsub.s32 0, %v4684
        %v4686 = vrot.slane %v4592, %v4685
        %v4687 = vlaneseq
        %v4688 = vshrl.u32 %v4687, 7
        %v4689 = vsub.s32 1, %v4688
        %v4690 = vrot.slane %v4592, %v4689
        %v4691 = vlaneseq
        %v4692 = vshrl.u32 %v4691, 7
        %v4693 = vsub.s32 2, %v4692
        %v4694 = vrot.slane %v4592, %v4693
        %v4695 = vlaneseq
        %v4696 = vshrl.u32 %v4695, 7
        %v4697 = vsub.s32 3, %v4696
        %v4698 = vrot.slane %v4592, %v4697
        %v4699 = vlaneseq
        %v4700 = vshrl.u32 %v4699, 7
        %v4701 = vsub.s32 4, %v4700
        %v4702 = vrot.slane %v4592, %v4701
        %v4703 = vlaneseq
        %v4704 = vshrl.u32 %v4703, 7
        %v4705 = vsub.s32 5, %v4704
        %v4706 = vrot.slane %v4592, %v4705
        %v4707 = vlaneseq
        %v4708 = vshrl.u32 %v4707, 7
        %v4709 = vsub.s32 6, %v4708
        %v4710 = vrot.slane %v4592, %v4709
        %v4711 = vlaneseq
        %v4712 = vshrl.u32 %v4711, 7
        %v4713 = vsub.s32 7, %v4712
        %v4714 = vrot.slane %v4592, %v4713
        %v4715 = vlaneseq
        %v4716 = vshrl.u32 %v4715, 7
        %v4717 = vsub.s32 0, %v4716
        %v4718 = vrot.slane %v4595, %v4717
        %v4719 = vlaneseq
        %v4720 = vshrl.u32 %v4719, 7
        %v4721 = vsub.s32 1, %v4720
        %v4722 = vrot.slane %v4595, %v4721
        %v4723 = vlaneseq
        %v4724 = vshrl.u32 %v4723, 7
        %v4725 = vsub.s32 2, %v4724
        %v4726 = vrot.slane %v4595, %v4725
        %v4727 = vlaneseq
        %v4728 = vshrl.u32 %v4727, 7
        %v4729 = vsub.s32 3, %v4728
        %v4730 = vrot.slane %v4595, %v4729
        %v4731 = vlaneseq
        %v4732 = vshrl.u32 %v4731, 7
        %v4733 = vsub.s32 4, %v4732
        %v4734 = vrot.slane %v4595, %v4733
        %v4735 = vlaneseq
        %v4736 = vshrl.u32 %v4735, 7
        %v4737 = vsub.s32 5, %v4736
        %v4738 = vrot.slane %v4595, %v4737
        %v4739 = vlaneseq
        %v4740 = vshrl.u32 %v4739, 7
        %v4741 = vsub.s32 6, %v4740
        %v4742 = vrot.slane %v4595, %v4741
        %v4743 = vlaneseq
        %v4744 = vshrl.u32 %v4743, 7
        %v4745 = vsub.s32 7, %v4744
        %v4746 = vrot.slane %v4595, %v4745
        %v4747 = vlaneseq
        %v4748 = vshrl.u32 %v4747, 7
        %v4749 = vsub.s32 0, %v4748
        %v4750 = vrot.slane %v4598, %v4749
        %v4751 = vlaneseq
        %v4752 = vshrl.u32 %v4751, 7
        %v4753 = vsub.s32 1, %v4752
        %v4754 = vrot.slane %v4598, %v4753
        %v4755 = vlaneseq
        %v4756 = vshrl.u32 %v4755, 7
        %v4757 = vsub.s32 2, %v4756
        %v4758 = vrot.slane %v4598, %v4757
        %v4759 = vlaneseq
        %v4760 = vshrl.u32 %v4759, 7
        %v4761 = vsub.s32 3, %v4760
        %v4762 = vrot.slane %v4598, %v4761
        %v4763 = vlaneseq
        %v4764 = vshrl.u32 %v4763, 7
        %v4765 = vsub.s32 4, %v4764
        %v4766 = vrot.slane %v4598, %v4765
        %v4767 = vlaneseq
        %v4768 = vshrl.u32 %v4767, 7
        %v4769 = vsub.s32 5, %v4768
        %v4770 = vrot.slane %v4598, %v4769
        %v4771 = vlaneseq
        %v4772 = vshrl.u32 %v4771, 7
        %v4773 = vsub.s32 6, %v4772
        %v4774 = vrot.slane %v4598, %v4773
        %v4775 = vlaneseq
        %v4776 = vshrl.u32 %v4775, 7
        %v4777 = vsub.s32 7, %v4776
        %v4778 = vrot.slane %v4598, %v4777
        %v4779 = vlaneseq
        %v4780 = vshrl.u32 %v4779, 7
        %v4781 = vsub.s32 0, %v4780
        %v4782 = vrot.slane %v4601, %v4781
        %v4783 = vlaneseq
        %v4784 = vshrl.u32 %v4783, 7
        %v4785 = vsub.s32 1, %v4784
        %v4786 = vrot.slane %v4601, %v4785
        %v4787 = vlaneseq
        %v4788 = vshrl.u32 %v4787, 7
        %v4789 = vsub.s32 2, %v4788
        %v4790 = vrot.slane %v4601, %v4789
        %v4791 = vlaneseq
        %v4792 = vshrl.u32 %v4791, 7
        %v4793 = vsub.s32 3, %v4792
        %v4794 = vrot.slane %v4601, %v4793
        %v4795 = vlaneseq
        %v4796 = vshrl.u32 %v4795, 7
        %v4797 = vsub.s32 4, %v4796
        %v4798 = vrot.slane %v4601, %v4797
        %v4799 = vlaneseq
        %v4800 = vshrl.u32 %v4799, 7
        %v4801 = vsub.s32 5, %v4800
        %v4802 = vrot.slane %v4601, %v4801
        %v4803 = vlaneseq
        %v4804 = vshrl.u32 %v4803, 7
        %v4805 = vsub.s32 6, %v4804
        %v4806 = vrot.slane %v4601, %v4805
        %v4807 = vlaneseq
        %v4808 = vshrl.u32 %v4807, 7
        %v4809 = vsub.s32 7, %v4808
        %v4810 = vrot.slane %v4601, %v4809
        %v4811 = vlaneseq
        %v4812 = vshrl.u32 %v4811, 7
        %v4813 = vsub.s32 0, %v4812
        %v4814 = vrot.slane %v4604, %v4813
        %v4815 = vlaneseq
        %v4816 = vshrl.u32 %v4815, 7
        %v4817 = vsub.s32 1, %v4816
        %v4818 = vrot.slane %v4604, %v4817
        %v4819 = vlaneseq
        %v4820 = vshrl.u32 %v4819, 7
        %v4821 = vsub.s32 2, %v4820
        %v4822 = vrot.slane %v4604, %v4821
        %v4823 = vlaneseq
        %v4824 = vshrl.u32 %v4823, 7
        %v4825 = vsub.s32 3, %v4824
        %v4826 = vrot.slane %v4604, %v4825
        %v4827 = vlaneseq
        %v4828 = vshrl.u32 %v4827, 7
        %v4829 = vsub.s32 4, %v4828
        %v4830 = vrot.slane %v4604, %v4829
        %v4831 = vlaneseq
        %v4832 = vshrl.u32 %v4831, 7
        %v4833 = vsub.s32 5, %v4832
        %v4834 = vrot.slane %v4604, %v4833
        %v4835 = vlaneseq
        %v4836 = vshrl.u32 %v4835, 7
        %v4837 = vsub.s32 6, %v4836
        %v4838 = vrot.slane %v4604, %v4837
        %v4839 = vlaneseq
        %v4840 = vshrl.u32 %v4839, 7
        %v4841 = vsub.s32 7, %v4840
        %v4842 = vrot.slane %v4604, %v4841
        %v4843 = vlaneseq
        %v4844 = vshrl.u32 %v4843, 7
        %v4845 = vsub.s32 0, %v4844
        %v4846 = vrot.slane %v4607, %v4845
        %v4847 = vlaneseq
        %v4848 = vshrl.u32 %v4847, 7
        %v4849 = vsub.s32 1, %v4848
        %v4850 = vrot.slane %v4607, %v4849
        %v4851 = vlaneseq
        %v4852 = vshrl.u32 %v4851, 7
        %v4853 = vsub.s32 2, %v4852
        %v4854 = vrot.slane %v4607, %v4853
        %v4855 = vlaneseq
        %v4856 = vshrl.u32 %v4855, 7
        %v4857 = vsub.s32 3, %v4856
        %v4858 = vrot.slane %v4607, %v4857
        %v4859 = vlaneseq
        %v4860 = vshrl.u32 %v4859, 7
        %v4861 = vsub.s32 4, %v4860
        %v4862 = vrot.slane %v4607, %v4861
        %v4863 = vlaneseq
        %v4864 = vshrl.u32 %v4863, 7
        %v4865 = vsub.s32 5, %v4864
        %v4866 = vrot.slane %v4607, %v4865
        %v4867 = vlaneseq
        %v4868 = vshrl.u32 %v4867, 7
        %v4869 = vsub.s32 6, %v4868
        %v4870 = vrot.slane %v4607, %v4869
        %v4871 = vlaneseq
        %v4872 = vshrl.u32 %v4871, 7
        %v4873 = vsub.s32 7, %v4872
        %v4874 = vrot.slane %v4607, %v4873
        %v4875 = vlaneseq
        %v4876 = vshrl.u32 %v4875, 7
        %v4877 = vsub.s32 0, %v4876
        %v4878 = vrot.slane %v4610, %v4877
        %v4879 = vlaneseq
        %v4880 = vshrl.u32 %v4879, 7
        %v4881 = vsub.s32 1, %v4880
        %v4882 = vrot.slane %v4610, %v4881
        %v4883 = vlaneseq
        %v4884 = vshrl.u32 %v4883, 7
        %v4885 = vsub.s32 2, %v4884
        %v4886 = vrot.slane %v4610, %v4885
        %v4887 = vlaneseq
        %v4888 = vshrl.u32 %v4887, 7
        %v4889 = vsub.s32 3, %v4888
        %v4890 = vrot.slane %v4610, %v4889
        %v4891 = vlaneseq
        %v4892 = vshrl.u32 %v4891, 7
        %v4893 = vsub.s32 4, %v4892
        %v4894 = vrot.slane %v4610, %v4893
        %v4895 = vlaneseq
        %v4896 = vshrl.u32 %v4895, 7
        %v4897 = vsub.s32 5, %v4896
        %v4898 = vrot.slane %v4610, %v4897
        %v4899 = vlaneseq
        %v4900 = vshrl.u32 %v4899, 7
        %v4901 = vsub.s32 6, %v4900
        %v4902 = vrot.slane %v4610, %v4901
        %v4903 = vlaneseq
        %v4904 = vshrl.u32 %v4903, 7
        %v4905 = vsub.s32 7, %v4904
        %v4906 = vrot.slane %v4610, %v4905
        %v4907 = vlaneseq
        %v4908 = vshrl.u32 %v4907, 7
        %v4909 = vsub.s32 0, %v4908
        %v4910 = vrot.slane %v4613, %v4909
        %v4911 = vlaneseq
        %v4912 = vshrl.u32 %v4911, 7
        %v4913 = vsub.s32 1, %v4912
        %v4914 = vrot.slane %v4613, %v4913
        %v4915 = vlaneseq
        %v4916 = vshrl.u32 %v4915, 7
        %v4917 = vsub.s32 2, %v4916
        %v4918 = vrot.slane %v4613, %v4917
        %v4919 = vlaneseq
        %v4920 = vshrl.u32 %v4919, 7
        %v4921 = vsub.s32 3, %v4920
        %v4922 = vrot.slane %v4613, %v4921
        %v4923 = vlaneseq
        %v4924 = vshrl.u32 %v4923, 7
        %v4925 = vsub.s32 4, %v4924
        %v4926 = vrot.slane %v4613, %v4925
        %v4927 = vlaneseq
        %v4928 = vshrl.u32 %v4927, 7
        %v4929 = vsub.s32 5, %v4928
        %v4930 = vrot.slane %v4613, %v4929
        %v4931 = vlaneseq
        %v4932 = vshrl.u32 %v4931, 7
        %v4933 = vsub.s32 6, %v4932
        %v4934 = vrot.slane %v4613, %v4933
        %v4935 = vlaneseq
        %v4936 = vshrl.u32 %v4935, 7
        %v4937 = vsub.s32 7, %v4936
        %v4938 = vrot.slane %v4613, %v4937
        %v4939 = vlaneseq
        %v4940 = vshrl.u32 %v4939, 7
        %v4941 = vsub.s32 0, %v4940
        %v4942 = vrot.slane %v4616, %v4941
        %v4943 = vlaneseq
        %v4944 = vshrl.u32 %v4943, 7
        %v4945 = vsub.s32 1, %v4944
        %v4946 = vrot.slane %v4616, %v4945
        %v4947 = vlaneseq
        %v4948 = vshrl.u32 %v4947, 7
        %v4949 = vsub.s32 2, %v4948
        %v4950 = vrot.slane %v4616, %v4949
        %v4951 = vlaneseq
        %v4952 = vshrl.u32 %v4951, 7
        %v4953 = vsub.s32 3, %v4952
        %v4954 = vrot.slane %v4616, %v4953
        %v4955 = vlaneseq
        %v4956 = vshrl.u32 %v4955, 7
        %v4957 = vsub.s32 4, %v4956
        %v4958 = vrot.slane %v4616, %v4957
        %v4959 = vlaneseq
        %v4960 = vshrl.u32 %v4959, 7
        %v4961 = vsub.s32 5, %v4960
        %v4962 = vrot.slane %v4616, %v4961
        %v4963 = vlaneseq
        %v4964 = vshrl.u32 %v4963, 7
        %v4965 = vsub.s32 6, %v4964
        %v4966 = vrot.slane %v4616, %v4965
        %v4967 = vlaneseq
        %v4968 = vshrl.u32 %v4967, 7
        %v4969 = vsub.s32 7, %v4968
        %v4970 = vrot.slane %v4616, %v4969
        %v4971 = vlaneseq
        %v4972 = vshrl.u32 %v4971, 7
        %v4973 = vsub.s32 0, %v4972
        %v4974 = vrot.slane %v4619, %v4973
        %v4975 = vlaneseq
        %v4976 = vshrl.u32 %v4975, 7
        %v4977 = vsub.s32 1, %v4976
        %v4978 = vrot.slane %v4619, %v4977
        %v4979 = vlaneseq
        %v4980 = vshrl.u32 %v4979, 7
        %v4981 = vsub.s32 2, %v4980
        %v4982 = vrot.slane %v4619, %v4981
        %v4983 = vlaneseq
        %v4984 = vshrl.u32 %v4983, 7
        %v4985 = vsub.s32 3, %v4984
        %v4986 = vrot.slane %v4619, %v4985
        %v4987 = vlaneseq
        %v4988 = vshrl.u32 %v4987, 7
        %v4989 = vsub.s32 4, %v4988
        %v4990 = vrot.slane %v4619, %v4989
        %v4991 = vlaneseq
        %v4992 = vshrl.u32 %v4991, 7
        %v4993 = vsub.s32 5, %v4992
        %v4994 = vrot.slane %v4619, %v4993
        %v4995 = vlaneseq
        %v4996 = vshrl.u32 %v4995, 7
        %v4997 = vsub.s32 6, %v4996
        %v4998 = vrot.slane %v4619, %v4997
        %v4999 = vlaneseq
        %v5000 = vshrl.u32 %v4999, 7
        %v5001 = vsub.s32 7, %v5000
        %v5002 = vrot.slane %v4619, %v5001
        %v5003 = vlaneseq
        %v5004 = vshrl.u32 %v5003, 7
        %v5005 = vsub.s32 0, %v5004
        %v5006 = vrot.slane %v4622, %v5005
        %v5007 = vlaneseq
        %v5008 = vshrl.u32 %v5007, 7
        %v5009 = vsub.s32 1, %v5008
        %v5010 = vrot.slane %v4622, %v5009
        %v5011 = vlaneseq
        %v5012 = vshrl.u32 %v5011, 7
        %v5013 = vsub.s32 2, %v5012
        %v5014 = vrot.slane %v4622, %v5013
        %v5015 = vlaneseq
        %v5016 = vshrl.u32 %v5015, 7
        %v5017 = vsub.s32 3, %v5016
        %v5018 = vrot.slane %v4622, %v5017
        %v5019 = vlaneseq
        %v5020 = vshrl.u32 %v5019, 7
        %v5021 = vsub.s32 4, %v5020
        %v5022 = vrot.slane %v4622, %v5021
        %v5023 = vlaneseq
        %v5024 = vshrl.u32 %v5023, 7
        %v5025 = vsub.s32 5, %v5024
        %v5026 = vrot.slane %v4622, %v5025
        %v5027 = vlaneseq
        %v5028 = vshrl.u32 %v5027, 7
        %v5029 = vsub.s32 6, %v5028
        %v5030 = vrot.slane %v4622, %v5029
        %v5031 = vlaneseq
        %v5032 = vshrl.u32 %v5031, 7
        %v5033 = vsub.s32 7, %v5032
        %v5034 = vrot.slane %v4622, %v5033
        %v5035 = vlaneseq
        %v5036 = vshrl.u32 %v5035, 7
        %v5037 = vsub.s32 0, %v5036
        %v5038 = vrot.slane %v4625, %v5037
        %v5039 = vlaneseq
        %v5040 = vshrl.u32 %v5039, 7
        %v5041 = vsub.s32 1, %v5040
        %v5042 = vrot.slane %v4625, %v5041
        %v5043 = vlaneseq
        %v5044 = vshrl.u32 %v5043, 7
        %v5045 = vsub.s32 2, %v5044
        %v5046 = vrot.slane %v4625, %v5045
        %v5047 = vlaneseq
        %v5048 = vshrl.u32 %v5047, 7
        %v5049 = vsub.s32 3, %v5048
        %v5050 = vrot.slane %v4625, %v5049
        %v5051 = vlaneseq
        %v5052 = vshrl.u32 %v5051, 7
        %v5053 = vsub.s32 4, %v5052
        %v5054 = vrot.slane %v4625, %v5053
        %v5055 = vlaneseq
        %v5056 = vshrl.u32 %v5055, 7
        %v5057 = vsub.s32 5, %v5056
        %v5058 = vrot.slane %v4625, %v5057
        %v5059 = vlaneseq
        %v5060 = vshrl.u32 %v5059, 7
        %v5061 = vsub.s32 6, %v5060
        %v5062 = vrot.slane %v4625, %v5061
        %v5063 = vlaneseq
        %v5064 = vshrl.u32 %v5063, 7
        %v5065 = vsub.s32 7, %v5064
        %v5066 = vrot.slane %v4625, %v5065
        %v5067 = vlaneseq
        %v5068 = vshrl.u32 %v5067, 7
        %v5069 = vsub.s32 0, %v5068
        %v5070 = vrot.slane %v4628, %v5069
        %v5071 = vlaneseq
        %v5072 = vshrl.u32 %v5071, 7
        %v5073 = vsub.s32 1, %v5072
        %v5074 = vrot.slane %v4628, %v5073
        %v5075 = vlaneseq
        %v5076 = vshrl.u32 %v5075, 7
        %v5077 = vsub.s32 2, %v5076
        %v5078 = vrot.slane %v4628, %v5077
        %v5079 = vlaneseq
        %v5080 = vshrl.u32 %v5079, 7
        %v5081 = vsub.s32 3, %v5080
        %v5082 = vrot.slane %v4628, %v5081
        %v5083 = vlaneseq
        %v5084 = vshrl.u32 %v5083, 7
        %v5085 = vsub.s32 4, %v5084
        %v5086 = vrot.slane %v4628, %v5085
        %v5087 = vlaneseq
        %v5088 = vshrl.u32 %v5087, 7
        %v5089 = vsub.s32 5, %v5088
        %v5090 = vrot.slane %v4628, %v5089
        %v5091 = vlaneseq
        %v5092 = vshrl.u32 %v5091, 7
        %v5093 = vsub.s32 6, %v5092
        %v5094 = vrot.slane %v4628, %v5093
        %v5095 = vlaneseq
        %v5096 = vshrl.u32 %v5095, 7
        %v5097 = vsub.s32 7, %v5096
        %v5098 = vrot.slane %v4628, %v5097
        %v5099 = vlaneseq
        %v5100 = vshrl.u32 %v5099, 7
        %v5101 = vsub.s32 0, %v5100
        %v5102 = vrot.slane %v4631, %v5101
        %v5103 = vlaneseq
        %v5104 = vshrl.u32 %v5103, 7
        %v5105 = vsub.s32 1, %v5104
        %v5106 = vrot.slane %v4631, %v5105
        %v5107 = vlaneseq
        %v5108 = vshrl.u32 %v5107, 7
        %v5109 = vsub.s32 2, %v5108
        %v5110 = vrot.slane %v4631, %v5109
        %v5111 = vlaneseq
        %v5112 = vshrl.u32 %v5111, 7
        %v5113 = vsub.s32 3, %v5112
        %v5114 = vrot.slane %v4631, %v5113
        %v5115 = vlaneseq
        %v5116 = vshrl.u32 %v5115, 7
        %v5117 = vsub.s32 4, %v5116
        %v5118 = vrot.slane %v4631, %v5117
        %v5119 = vlaneseq
        %v5120 = vshrl.u32 %v5119, 7
        %v5121 = vsub.s32 5, %v5120
        %v5122 = vrot.slane %v4631, %v5121
        %v5123 = vlaneseq
        %v5124 = vshrl.u32 %v5123, 7
        %v5125 = vsub.s32 6, %v5124
        %v5126 = vrot.slane %v4631, %v5125
        %v5127 = vlaneseq
        %v5128 = vshrl.u32 %v5127, 7
        %v5129 = vsub.s32 7, %v5128
        %v5130 = vrot.slane %v4631, %v5129
        %v5131 = vlaneseq
        %v5132 = vshrl.u32 %v5131, 7
        %v5133 = vsub.s32 0, %v5132
        %v5134 = vrot.slane %v4634, %v5133
        %v5135 = vlaneseq
        %v5136 = vshrl.u32 %v5135, 7
        %v5137 = vsub.s32 1, %v5136
        %v5138 = vrot.slane %v4634, %v5137
        %v5139 = vlaneseq
        %v5140 = vshrl.u32 %v5139, 7
        %v5141 = vsub.s32 2, %v5140
        %v5142 = vrot.slane %v4634, %v5141
        %v5143 = vlaneseq
        %v5144 = vshrl.u32 %v5143, 7
        %v5145 = vsub.s32 3, %v5144
        %v5146 = vrot.slane %v4634, %v5145
        %v5147 = vlaneseq
        %v5148 = vshrl.u32 %v5147, 7
        %v5149 = vsub.s32 4, %v5148
        %v5150 = vrot.slane %v4634, %v5149
        %v5151 = vlaneseq
        %v5152 = vshrl.u32 %v5151, 7
        %v5153 = vsub.s32 5, %v5152
        %v5154 = vrot.slane %v4634, %v5153
        %v5155 = vlaneseq
        %v5156 = vshrl.u32 %v5155, 7
        %v5157 = vsub.s32 6, %v5156
        %v5158 = vrot.slane %v4634, %v5157
        %v5159 = vlaneseq
        %v5160 = vshrl.u32 %v5159, 7
        %v5161 = vsub.s32 7, %v5160
        %v5162 = vrot.slane %v4634, %v5161
        %v5291 = vsub.f32 %v3297, %v4654
        %v5292 = vsub.f32 %v3298, %v4658
        %v5293 = vsub.f32 %v3299, %v4662
        %v5294 = vsub.f32 %v3300, %v4666
        %v5295 = vsub.f32 %v3301, %v4670
        %v5296 = vsub.f32 %v3302, %v4674
        %v5297 = vsub.f32 %v3303, %v4678
        %v5298 = vsub.f32 %v3304, %v4682
        %v5299 = vsub.f32 %v3305, %v4686
        %v5300 = vsub.f32 %v3306, %v4690
        %v5301 = vsub.f32 %v3307, %v4694
        %v5302 = vsub.f32 %v3308, %v4698
        %v5303 = vsub.f32 %v3309, %v4702
        %v5304 = vsub.f32 %v3310, %v4706
        %v5305 = vsub.f32 %v3311, %v4710
        %v5306 = vsub.f32 %v3312, %v4714
        %v5307 = vsub.f32 %v3313, %v4718
        %v5308 = vsub.f32 %v3314, %v4722
        %v5309 = vsub.f32 %v3315, %v4726
        %v5310 = vsub.f32 %v3316, %v4730
        %v5311 = vsub.f32 %v3317, %v4734
        %v5312 = vsub.f32 %v3318, %v4738
        %v5313 = vsub.f32 %v3319, %v4742
        %v5314 = vsub.f32 %v3320, %v4746
        %v5315 = vsub.f32 %v3321, %v4750
        %v5316 = vsub.f32 %v3322, %v4754
        %v5317 = vsub.f32 %v3323, %v4758
        %v5318 = vsub.f32 %v3324, %v4762
        %v5319 = vsub.f32 %v3325, %v4766
        %v5320 = vsub.f32 %v3326, %v4770
        %v5321 = vsub.f32 %v3327, %v4774
        %v5322 = vsub.f32 %v3328, %v4778
        %v5323 = vsub.f32 %v3329, %v4782
        %v5324 = vsub.f32 %v3330, %v4786
        %v5325 = vsub.f32 %v3331, %v4790
        %v5326 = vsub.f32 %v3332, %v4794
        %v5327 = vsub.f32 %v3333, %v4798
        %v5328 = vsub.f32 %v3334, %v4802
        %v5329 = vsub.f32 %v3335, %v4806
        %v5330 = vsub.f32 %v3336, %v4810
        %v5331 = vsub.f32 %v3337, %v4814
        %v5332 = vsub.f32 %v3338, %v4818
        %v5333 = vsub.f32 %v3339, %v4822
        %v5334 = vsub.f32 %v3340, %v4826
        %v5335 = vsub.f32 %v3341, %v4830
        %v5336 = vsub.f32 %v3342, %v4834
        %v5337 = vsub.f32 %v3343, %v4838
        %v5338 = vsub.f32 %v3344, %v4842
        %v5339 = vsub.f32 %v3345, %v4846
        %v5340 = vsub.f32 %v3346, %v4850
        %v5341 = vsub.f32 %v3347, %v4854
        %v5342 = vsub.f32 %v3348, %v4858
        %v5343 = vsub.f32 %v3349, %v4862
        %v5344 = vsub.f32 %v3350, %v4866
        %v5345 = vsub.f32 %v3351, %v4870
        %v5346 = vsub.f32 %v3352, %v4874
        %v5347 = vsub.f32 %v3353, %v4878
        %v5348 = vsub.f32 %v3354, %v4882
        %v5349 = vsub.f32 %v3355, %v4886
        %v5350 = vsub.f32 %v3356, %v4890
        %v5351 = vsub.f32 %v3357, %v4894
        %v5352 = vsub.f32 %v3358, %v4898
        %v5353 = vsub.f32 %v3359, %v4902
        %v5354 = vsub.f32 %v3360, %v4906
        %v5355 = vsub.f32 %v3361, %v4910
        %v5356 = vsub.f32 %v3362, %v4914
        %v5357 = vsub.f32 %v3363, %v4918
        %v5358 = vsub.f32 %v3364, %v4922
        %v5359 = vsub.f32 %v3365, %v4926
        %v5360 = vsub.f32 %v3366, %v4930
        %v5361 = vsub.f32 %v3367, %v4934
        %v5362 = vsub.f32 %v3368, %v4938
        %v5363 = vsub.f32 %v3369, %v4942
        %v5364 = vsub.f32 %v3370, %v4946
        %v5365 = vsub.f32 %v3371, %v4950
        %v5366 = vsub.f32 %v3372, %v4954
        %v5367 = vsub.f32 %v3373, %v4958
        %v5368 = vsub.f32 %v3374, %v4962
        %v5369 = vsub.f32 %v3375, %v4966
        %v5370 = vsub.f32 %v3376, %v4970
        %v5371 = vsub.f32 %v3377, %v4974
        %v5372 = vsub.f32 %v3378, %v4978
        %v5373 = vsub.f32 %v3379, %v4982
        %v5374 = vsub.f32 %v3380, %v4986
        %v5375 = vsub.f32 %v3381, %v4990
        %v5376 = vsub.f32 %v3382, %v4994
        %v5377 = vsub.f32 %v3383, %v4998
        %v5378 = vsub.f32 %v3384, %v5002
        %v5379 = vsub.f32 %v3385, %v5006
        %v5380 = vsub.f32 %v3386, %v5010
        %v5381 = vsub.f32 %v3387, %v5014
        %v5382 = vsub.f32 %v3388, %v5018
        %v5383 = vsub.f32 %v3389, %v5022
        %v5384 = vsub.f32 %v3390, %v5026
        %v5385 = vsub.f32 %v3391, %v5030
        %v5386 = vsub.f32 %v3392, %v5034
        %v5387 = vsub.f32 %v3393, %v5038
        %v5388 = vsub.f32 %v3394, %v5042
        %v5389 = vsub.f32 %v3395, %v5046
        %v5390 = vsub.f32 %v3396, %v5050
        %v5391 = vsub.f32 %v3397, %v5054
        %v5392 = vsub.f32 %v3398, %v5058
        %v5393 = vsub.f32 %v3399, %v5062
        %v5394 = vsub.f32 %v3400, %v5066
        %v5395 = vsub.f32 %v3401, %v5070
        %v5396 = vsub.f32 %v3402, %v5074
        %v5397 = vsub.f32 %v3403, %v5078
        %v5398 = vsub.f32 %v3404, %v5082
        %v5399 = vsub.f32 %v3405, %v5086
        %v5400 = vsub.f32 %v3406, %v5090
        %v5401 = vsub.f32 %v3407, %v5094
        %v5402 = vsub.f32 %v3408, %v5098
        %v5403 = vsub.f32 %v3409, %v5102
        %v5404 = vsub.f32 %v3410, %v5106
        %v5405 = vsub.f32 %v3411, %v5110
        %v5406 = vsub.f32 %v3412, %v5114
        %v5407 = vsub.f32 %v3413, %v5118
        %v5408 = vsub.f32 %v3414, %v5122
        %v5409 = vsub.f32 %v3415, %v5126
        %v5410 = vsub.f32 %v3416, %v5130
        %v5411 = vsub.f32 %v3417, %v5134
        %v5412 = vsub.f32 %v3418, %v5138
        %v5413 = vsub.f32 %v3419, %v5142
        %v5414 = vsub.f32 %v3420, %v5146
        %v5415 = vsub.f32 %v3421, %v5150
        %v5416 = vsub.f32 %v3422, %v5154
        %v5417 = vsub.f32 %v3423, %v5158
        %v5418 = vsub.f32 %v3424, %v5162
        %v5419 = vmul.f32 %v5291, 1.442695
        %v5420 = vpow.pop %v5419
        %v5421 = vmul.f32 %v5292, 1.442695
        %v5422 = vpow.pop %v5421
        %v5423 = vmul.f32 %v5293, 1.442695
        %v5424 = vpow.pop %v5423
        %v5425 = vmul.f32 %v5294, 1.442695
        %v5426 = vpow.pop %v5425
        %v5427 = vmul.f32 %v5295, 1.442695
        %v5428 = vpow.pop %v5427
        %v5429 = vmul.f32 %v5296, 1.442695
        %v5430 = vpow.pop %v5429
        %v5431 = vmul.f32 %v5297, 1.442695
        %v5432 = vpow.pop %v5431
        %v5433 = vmul.f32 %v5298, 1.442695
        %v5434 = vpow.pop %v5433
        %v5435 = vmul.f32 %v5299, 1.442695
        %v5436 = vpow.pop %v5435
        %v5437 = vmul.f32 %v5300, 1.442695
        %v5438 = vpow.pop %v5437
        %v5439 = vmul.f32 %v5301, 1.442695
        %v5440 = vpow.pop %v5439
        %v5441 = vmul.f32 %v5302, 1.442695
        %v5442 = vpow.pop %v5441
        %v5443 = vmul.f32 %v5303, 1.442695
        %v5444 = vpow.pop %v5443
        %v5445 = vmul.f32 %v5304, 1.442695
        %v5446 = vpow.pop %v5445
        %v5447 = vmul.f32 %v5305, 1.442695
        %v5448 = vpow.pop %v5447
        %v5449 = vmul.f32 %v5306, 1.442695
        %v5450 = vpow.pop %v5449
        %v5451 = vmul.f32 %v5307, 1.442695
        %v5452 = vpow.pop %v5451
        %v5453 = vmul.f32 %v5308, 1.442695
        %v5454 = vpow.pop %v5453
        %v5455 = vmul.f32 %v5309, 1.442695
        %v5456 = vpow.pop %v5455
        %v5457 = vmul.f32 %v5310, 1.442695
        %v5458 = vpow.pop %v5457
        %v5459 = vmul.f32 %v5311, 1.442695
        %v5460 = vpow.pop %v5459
        %v5461 = vmul.f32 %v5312, 1.442695
        %v5462 = vpow.pop %v5461
        %v5463 = vmul.f32 %v5313, 1.442695
        %v5464 = vpow.pop %v5463
        %v5465 = vmul.f32 %v5314, 1.442695
        %v5466 = vpow.pop %v5465
        %v5467 = vmul.f32 %v5315, 1.442695
        %v5468 = vpow.pop %v5467
        %v5469 = vmul.f32 %v5316, 1.442695
        %v5470 = vpow.pop %v5469
        %v5471 = vmul.f32 %v5317, 1.442695
        %v5472 = vpow.pop %v5471
        %v5473 = vmul.f32 %v5318, 1.442695
        %v5474 = vpow.pop %v5473
        %v5475 = vmul.f32 %v5319, 1.442695
        %v5476 = vpow.pop %v5475
        %v5477 = vmul.f32 %v5320, 1.442695
        %v5478 = vpow.pop %v5477
        %v5479 = vmul.f32 %v5321, 1.442695
        %v5480 = vpow.pop %v5479
        %v5481 = vmul.f32 %v5322, 1.442695
        %v5482 = vpow.pop %v5481
        %v5483 = vmul.f32 %v5323, 1.442695
        %v5484 = vpow.pop %v5483
        %v5485 = vmul.f32 %v5324, 1.442695
        %v5486 = vpow.pop %v5485
        %v5487 = vmul.f32 %v5325, 1.442695
        %v5488 = vpow.pop %v5487
        %v5489 = vmul.f32 %v5326, 1.442695
        %v5490 = vpow.pop %v5489
        %v5491 = vmul.f32 %v5327, 1.442695
        %v5492 = vpow.pop %v5491
        %v5493 = vmul.f32 %v5328, 1.442695
        %v5494 = vpow.pop %v5493
        %v5495 = vmul.f32 %v5329, 1.442695
        %v5496 = vpow.pop %v5495
        %v5497 = vmul.f32 %v5330, 1.442695
        %v5498 = vpow.pop %v5497
        %v5499 = vmul.f32 %v5331, 1.442695
        %v5500 = vpow.pop %v5499
        %v5501 = vmul.f32 %v5332, 1.442695
        %v5502 = vpow.pop %v5501
        %v5503 = vmul.f32 %v5333, 1.442695
        %v5504 = vpow.pop %v5503
        %v5505 = vmul.f32 %v5334, 1.442695
        %v5506 = vpow.pop %v5505
        %v5507 = vmul.f32 %v5335, 1.442695
        %v5508 = vpow.pop %v5507
        %v5509 = vmul.f32 %v5336, 1.442695
        %v5510 = vpow.pop %v5509
        %v5511 = vmul.f32 %v5337, 1.442695
        %v5512 = vpow.pop %v5511
        %v5513 = vmul.f32 %v5338, 1.442695
        %v5514 = vpow.pop %v5513
        %v5515 = vmul.f32 %v5339, 1.442695
        %v5516 = vpow.pop %v5515
        %v5517 = vmul.f32 %v5340, 1.442695
        %v5518 = vpow.pop %v5517
        %v5519 = vmul.f32 %v5341, 1.442695
        %v5520 = vpow.pop %v5519
        %v5521 = vmul.f32 %v5342, 1.442695
        %v5522 = vpow.pop %v5521
        %v5523 = vmul.f32 %v5343, 1.442695
        %v5524 = vpow.pop %v5523
        %v5525 = vmul.f32 %v5344, 1.442695
        %v5526 = vpow.pop %v5525
        %v5527 = vmul.f32 %v5345, 1.442695
        %v5528 = vpow.pop %v5527
        %v5529 = vmul.f32 %v5346, 1.442695
        %v5530 = vpow.pop %v5529
        %v5531 = vmul.f32 %v5347, 1.442695
        %v5532 = vpow.pop %v5531
        %v5533 = vmul.f32 %v5348, 1.442695
        %v5534 = vpow.pop %v5533
        %v5535 = vmul.f32 %v5349, 1.442695
        %v5536 = vpow.pop %v5535
        %v5537 = vmul.f32 %v5350, 1.442695
        %v5538 = vpow.pop %v5537
        %v5539 = vmul.f32 %v5351, 1.442695
        %v5540 = vpow.pop %v5539
        %v5541 = vmul.f32 %v5352, 1.442695
        %v5542 = vpow.pop %v5541
        %v5543 = vmul.f32 %v5353, 1.442695
        %v5544 = vpow.pop %v5543
        %v5545 = vmul.f32 %v5354, 1.442695
        %v5546 = vpow.pop %v5545
        %v5547 = vmul.f32 %v5355, 1.442695
        %v5548 = vpow.pop %v5547
        %v5549 = vmul.f32 %v5356, 1.442695
        %v5550 = vpow.pop %v5549
        %v5551 = vmul.f32 %v5357, 1.442695
        %v5552 = vpow.pop %v5551
        %v5553 = vmul.f32 %v5358, 1.442695
        %v5554 = vpow.pop %v5553
        %v5555 = vmul.f32 %v5359, 1.442695
        %v5556 = vpow.pop %v5555
        %v5557 = vmul.f32 %v5360, 1.442695
        %v5558 = vpow.pop %v5557
        %v5559 = vmul.f32 %v5361, 1.442695
        %v5560 = vpow.pop %v5559
        %v5561 = vmul.f32 %v5362, 1.442695
        %v5562 = vpow.pop %v5561
        %v5563 = vmul.f32 %v5363, 1.442695
        %v5564 = vpow.pop %v5563
        %v5565 = vmul.f32 %v5364, 1.442695
        %v5566 = vpow.pop %v5565
        %v5567 = vmul.f32 %v5365, 1.442695
        %v5568 = vpow.pop %v5567
        %v5569 = vmul.f32 %v5366, 1.442695
        %v5570 = vpow.pop %v5569
        %v5571 = vmul.f32 %v5367, 1.442695
        %v5572 = vpow.pop %v5571
        %v5573 = vmul.f32 %v5368, 1.442695
        %v5574 = vpow.pop %v5573
        %v5575 = vmul.f32 %v5369, 1.442695
        %v5576 = vpow.pop %v5575
        %v5577 = vmul.f32 %v5370, 1.442695
        %v5578 = vpow.pop %v5577
        %v5579 = vmul.f32 %v5371, 1.442695
        %v5580 = vpow.pop %v5579
        %v5581 = vmul.f32 %v5372, 1.442695
        %v5582 = vpow.pop %v5581
        %v5583 = vmul.f32 %v5373, 1.442695
        %v5584 = vpow.pop %v5583
        %v5585 = vmul.f32 %v5374, 1.442695
        %v5586 = vpow.pop %v5585
        %v5587 = vmul.f32 %v5375, 1.442695
        %v5588 = vpow.pop %v5587
        %v5589 = vmul.f32 %v5376, 1.442695
        %v5590 = vpow.pop %v5589
        %v5591 = vmul.f32 %v5377, 1.442695
        %v5592 = vpow.pop %v5591
        %v5593 = vmul.f32 %v5378, 1.442695
        %v5594 = vpow.pop %v5593
        %v5595 = vmul.f32 %v5379, 1.442695
        %v5596 = vpow.pop %v5595
        %v5597 = vmul.f32 %v5380, 1.442695
        %v5598 = vpow.pop %v5597
        %v5599 = vmul.f32 %v5381, 1.442695
        %v5600 = vpow.pop %v5599
        %v5601 = vmul.f32 %v5382, 1.442695
        %v5602 = vpow.pop %v5601
        %v5603 = vmul.f32 %v5383, 1.442695
        %v5604 = vpow.pop %v5603
        %v5605 = vmul.f32 %v5384, 1.442695
        %v5606 = vpow.pop %v5605
        %v5607 = vmul.f32 %v5385, 1.442695
        %v5608 = vpow.pop %v5607
        %v5609 = vmul.f32 %v5386, 1.442695
        %v5610 = vpow.pop %v5609
        %v5611 = vmul.f32 %v5387, 1.442695
        %v5612 = vpow.pop %v5611
        %v5613 = vmul.f32 %v5388, 1.442695
        %v5614 = vpow.pop %v5613
        %v5615 = vmul.f32 %v5389, 1.442695
        %v5616 = vpow.pop %v5615
        %v5617 = vmul.f32 %v5390, 1.442695
        %v5618 = vpow.pop %v5617
        %v5619 = vmul.f32 %v5391, 1.442695
        %v5620 = vpow.pop %v5619
        %v5621 = vmul.f32 %v5392, 1.442695
        %v5622 = vpow.pop %v5621
        %v5623 = vmul.f32 %v5393, 1.442695
        %v5624 = vpow.pop %v5623
        %v5625 = vmul.f32 %v5394, 1.442695
        %v5626 = vpow.pop %v5625
        %v5627 = vmul.f32 %v5395, 1.442695
        %v5628 = vpow.pop %v5627
        %v5629 = vmul.f32 %v5396, 1.442695
        %v5630 = vpow.pop %v5629
        %v5631 = vmul.f32 %v5397, 1.442695
        %v5632 = vpow.pop %v5631
        %v5633 = vmul.f32 %v5398, 1.442695
        %v5634 = vpow.pop %v5633
        %v5635 = vmul.f32 %v5399, 1.442695
        %v5636 = vpow.pop %v5635
        %v5637 = vmul.f32 %v5400, 1.442695
        %v5638 = vpow.pop %v5637
        %v5639 = vmul.f32 %v5401, 1.442695
        %v5640 = vpow.pop %v5639
        %v5641 = vmul.f32 %v5402, 1.442695
        %v5642 = vpow.pop %v5641
        %v5643 = vmul.f32 %v5403, 1.442695
        %v5644 = vpow.pop %v5643
        %v5645 = vmul.f32 %v5404, 1.442695
        %v5646 = vpow.pop %v5645
        %v5647 = vmul.f32 %v5405, 1.442695
        %v5648 = vpow.pop %v5647
        %v5649 = vmul.f32 %v5406, 1.442695
        %v5650 = vpow.pop %v5649
        %v5651 = vmul.f32 %v5407, 1.442695
        %v5652 = vpow.pop %v5651
        %v5653 = vmul.f32 %v5408, 1.442695
        %v5654 = vpow.pop %v5653
        %v5655 = vmul.f32 %v5409, 1.442695
        %v5656 = vpow.pop %v5655
        %v5657 = vmul.f32 %v5410, 1.442695
        %v5658 = vpow.pop %v5657
        %v5659 = vmul.f32 %v5411, 1.442695
        %v5660 = vpow.pop %v5659
        %v5661 = vmul.f32 %v5412, 1.442695
        %v5662 = vpow.pop %v5661
        %v5663 = vmul.f32 %v5413, 1.442695
        %v5664 = vpow.pop %v5663
        %v5665 = vmul.f32 %v5414, 1.442695
        %v5666 = vpow.pop %v5665
        %v5667 = vmul.f32 %v5415, 1.442695
        %v5668 = vpow.pop %v5667
        %v5669 = vmul.f32 %v5416, 1.442695
        %v5670 = vpow.pop %v5669
        %v5671 = vmul.f32 %v5417, 1.442695
        %v5672 = vpow.pop %v5671
        %v5673 = vmul.f32 %v5418, 1.442695
        %v5674 = vpow.pop %v5673
        %5803 = vset.pattern.permute.xlu0 0
        %5804 = vperm.xlu0 %5803, %v5420
        %v5805 = vpop.permute.xlu0 %5804
        %5806 = vset.pattern.permute.xlu0 0
        %5807 = vperm.xlu0 %5806, %v5422
        %v5808 = vpop.permute.xlu0 %5807
        %5809 = vset.pattern.permute.xlu0 0
        %5810 = vperm.xlu0 %5809, %v5424
        %v5811 = vpop.permute.xlu0 %5810
        %5812 = vset.pattern.permute.xlu0 0
        %5813 = vperm.xlu0 %5812, %v5426
        %v5814 = vpop.permute.xlu0 %5813
        %5815 = vset.pattern.permute.xlu0 0
        %5816 = vperm.xlu0 %5815, %v5428
        %v5817 = vpop.permute.xlu0 %5816
        %5818 = vset.pattern.permute.xlu0 0
        %5819 = vperm.xlu0 %5818, %v5430
        %v5820 = vpop.permute.xlu0 %5819
        %5821 = vset.pattern.permute.xlu0 0
        %5822 = vperm.xlu0 %5821, %v5432
        %v5823 = vpop.permute.xlu0 %5822
        %5824 = vset.pattern.permute.xlu0 0
        %5825 = vperm.xlu0 %5824, %v5434
        %v5826 = vpop.permute.xlu0 %5825
        %5827 = vset.pattern.permute.xlu0 0
        %5828 = vperm.xlu0 %5827, %v5436
        %v5829 = vpop.permute.xlu0 %5828
        %5830 = vset.pattern.permute.xlu0 0
        %5831 = vperm.xlu0 %5830, %v5438
        %v5832 = vpop.permute.xlu0 %5831
        %5833 = vset.pattern.permute.xlu0 0
        %5834 = vperm.xlu0 %5833, %v5440
        %v5835 = vpop.permute.xlu0 %5834
        %5836 = vset.pattern.permute.xlu0 0
        %5837 = vperm.xlu0 %5836, %v5442
        %v5838 = vpop.permute.xlu0 %5837
        %5839 = vset.pattern.permute.xlu0 0
        %5840 = vperm.xlu0 %5839, %v5444
        %v5841 = vpop.permute.xlu0 %5840
        %5842 = vset.pattern.permute.xlu0 0
        %5843 = vperm.xlu0 %5842, %v5446
        %v5844 = vpop.permute.xlu0 %5843
        %5845 = vset.pattern.permute.xlu0 0
        %5846 = vperm.xlu0 %5845, %v5448
        %v5847 = vpop.permute.xlu0 %5846
        %5848 = vset.pattern.permute.xlu0 0
        %5849 = vperm.xlu0 %5848, %v5450
        %v5850 = vpop.permute.xlu0 %5849
        %5851 = vset.pattern.permute.xlu0 0
        %5852 = vperm.xlu0 %5851, %v5452
        %v5853 = vpop.permute.xlu0 %5852
        %5854 = vset.pattern.permute.xlu0 0
        %5855 = vperm.xlu0 %5854, %v5454
        %v5856 = vpop.permute.xlu0 %5855
        %5857 = vset.pattern.permute.xlu0 0
        %5858 = vperm.xlu0 %5857, %v5456
        %v5859 = vpop.permute.xlu0 %5858
        %5860 = vset.pattern.permute.xlu0 0
        %5861 = vperm.xlu0 %5860, %v5458
        %v5862 = vpop.permute.xlu0 %5861
        %5863 = vset.pattern.permute.xlu0 0
        %5864 = vperm.xlu0 %5863, %v5460
        %v5865 = vpop.permute.xlu0 %5864
        %5866 = vset.pattern.permute.xlu0 0
        %5867 = vperm.xlu0 %5866, %v5462
        %v5868 = vpop.permute.xlu0 %5867
        %5869 = vset.pattern.permute.xlu0 0
        %5870 = vperm.xlu0 %5869, %v5464
        %v5871 = vpop.permute.xlu0 %5870
        %5872 = vset.pattern.permute.xlu0 0
        %5873 = vperm.xlu0 %5872, %v5466
        %v5874 = vpop.permute.xlu0 %5873
        %5875 = vset.pattern.permute.xlu0 0
        %5876 = vperm.xlu0 %5875, %v5468
        %v5877 = vpop.permute.xlu0 %5876
        %5878 = vset.pattern.permute.xlu0 0
        %5879 = vperm.xlu0 %5878, %v5470
        %v5880 = vpop.permute.xlu0 %5879
        %5881 = vset.pattern.permute.xlu0 0
        %5882 = vperm.xlu0 %5881, %v5472
        %v5883 = vpop.permute.xlu0 %5882
        %5884 = vset.pattern.permute.xlu0 0
        %5885 = vperm.xlu0 %5884, %v5474
        %v5886 = vpop.permute.xlu0 %5885
        %5887 = vset.pattern.permute.xlu0 0
        %5888 = vperm.xlu0 %5887, %v5476
        %v5889 = vpop.permute.xlu0 %5888
        %5890 = vset.pattern.permute.xlu0 0
        %5891 = vperm.xlu0 %5890, %v5478
        %v5892 = vpop.permute.xlu0 %5891
        %5893 = vset.pattern.permute.xlu0 0
        %5894 = vperm.xlu0 %5893, %v5480
        %v5895 = vpop.permute.xlu0 %5894
        %5896 = vset.pattern.permute.xlu0 0
        %5897 = vperm.xlu0 %5896, %v5482
        %v5898 = vpop.permute.xlu0 %5897
        %5899 = vset.pattern.permute.xlu0 0
        %5900 = vperm.xlu0 %5899, %v5484
        %v5901 = vpop.permute.xlu0 %5900
        %5902 = vset.pattern.permute.xlu0 0
        %5903 = vperm.xlu0 %5902, %v5486
        %v5904 = vpop.permute.xlu0 %5903
        %5905 = vset.pattern.permute.xlu0 0
        %5906 = vperm.xlu0 %5905, %v5488
        %v5907 = vpop.permute.xlu0 %5906
        %5908 = vset.pattern.permute.xlu0 0
        %5909 = vperm.xlu0 %5908, %v5490
        %v5910 = vpop.permute.xlu0 %5909
        %5911 = vset.pattern.permute.xlu0 0
        %5912 = vperm.xlu0 %5911, %v5492
        %v5913 = vpop.permute.xlu0 %5912
        %5914 = vset.pattern.permute.xlu0 0
        %5915 = vperm.xlu0 %5914, %v5494
        %v5916 = vpop.permute.xlu0 %5915
        %5917 = vset.pattern.permute.xlu0 0
        %5918 = vperm.xlu0 %5917, %v5496
        %v5919 = vpop.permute.xlu0 %5918
        %5920 = vset.pattern.permute.xlu0 0
        %5921 = vperm.xlu0 %5920, %v5498
        %v5922 = vpop.permute.xlu0 %5921
        %5923 = vset.pattern.permute.xlu0 0
        %5924 = vperm.xlu0 %5923, %v5500
        %v5925 = vpop.permute.xlu0 %5924
        %5926 = vset.pattern.permute.xlu0 0
        %5927 = vperm.xlu0 %5926, %v5502
        %v5928 = vpop.permute.xlu0 %5927
        %5929 = vset.pattern.permute.xlu0 0
        %5930 = vperm.xlu0 %5929, %v5504
        %v5931 = vpop.permute.xlu0 %5930
        %5932 = vset.pattern.permute.xlu0 0
        %5933 = vperm.xlu0 %5932, %v5506
        %v5934 = vpop.permute.xlu0 %5933
        %5935 = vset.pattern.permute.xlu0 0
        %5936 = vperm.xlu0 %5935, %v5508
        %v5937 = vpop.permute.xlu0 %5936
        %5938 = vset.pattern.permute.xlu0 0
        %5939 = vperm.xlu0 %5938, %v5510
        %v5940 = vpop.permute.xlu0 %5939
        %5941 = vset.pattern.permute.xlu0 0
        %5942 = vperm.xlu0 %5941, %v5512
        %v5943 = vpop.permute.xlu0 %5942
        %5944 = vset.pattern.permute.xlu0 0
        %5945 = vperm.xlu0 %5944, %v5514
        %v5946 = vpop.permute.xlu0 %5945
        %5947 = vset.pattern.permute.xlu0 0
        %5948 = vperm.xlu0 %5947, %v5516
        %v5949 = vpop.permute.xlu0 %5948
        %5950 = vset.pattern.permute.xlu0 0
        %5951 = vperm.xlu0 %5950, %v5518
        %v5952 = vpop.permute.xlu0 %5951
        %5953 = vset.pattern.permute.xlu0 0
        %5954 = vperm.xlu0 %5953, %v5520
        %v5955 = vpop.permute.xlu0 %5954
        %5956 = vset.pattern.permute.xlu0 0
        %5957 = vperm.xlu0 %5956, %v5522
        %v5958 = vpop.permute.xlu0 %5957
        %5959 = vset.pattern.permute.xlu0 0
        %5960 = vperm.xlu0 %5959, %v5524
        %v5961 = vpop.permute.xlu0 %5960
        %5962 = vset.pattern.permute.xlu0 0
        %5963 = vperm.xlu0 %5962, %v5526
        %v5964 = vpop.permute.xlu0 %5963
        %5965 = vset.pattern.permute.xlu0 0
        %5966 = vperm.xlu0 %5965, %v5528
        %v5967 = vpop.permute.xlu0 %5966
        %5968 = vset.pattern.permute.xlu0 0
        %5969 = vperm.xlu0 %5968, %v5530
        %v5970 = vpop.permute.xlu0 %5969
        %5971 = vset.pattern.permute.xlu0 0
        %5972 = vperm.xlu0 %5971, %v5532
        %v5973 = vpop.permute.xlu0 %5972
        %5974 = vset.pattern.permute.xlu0 0
        %5975 = vperm.xlu0 %5974, %v5534
        %v5976 = vpop.permute.xlu0 %5975
        %5977 = vset.pattern.permute.xlu0 0
        %5978 = vperm.xlu0 %5977, %v5536
        %v5979 = vpop.permute.xlu0 %5978
        %5980 = vset.pattern.permute.xlu0 0
        %5981 = vperm.xlu0 %5980, %v5538
        %v5982 = vpop.permute.xlu0 %5981
        %5983 = vset.pattern.permute.xlu0 0
        %5984 = vperm.xlu0 %5983, %v5540
        %v5985 = vpop.permute.xlu0 %5984
        %5986 = vset.pattern.permute.xlu0 0
        %5987 = vperm.xlu0 %5986, %v5542
        %v5988 = vpop.permute.xlu0 %5987
        %5989 = vset.pattern.permute.xlu0 0
        %5990 = vperm.xlu0 %5989, %v5544
        %v5991 = vpop.permute.xlu0 %5990
        %5992 = vset.pattern.permute.xlu0 0
        %5993 = vperm.xlu0 %5992, %v5546
        %v5994 = vpop.permute.xlu0 %5993
        %5995 = vset.pattern.permute.xlu0 0
        %5996 = vperm.xlu0 %5995, %v5548
        %v5997 = vpop.permute.xlu0 %5996
        %5998 = vset.pattern.permute.xlu0 0
        %5999 = vperm.xlu0 %5998, %v5550
        %v6000 = vpop.permute.xlu0 %5999
        %6001 = vset.pattern.permute.xlu0 0
        %6002 = vperm.xlu0 %6001, %v5552
        %v6003 = vpop.permute.xlu0 %6002
        %6004 = vset.pattern.permute.xlu0 0
        %6005 = vperm.xlu0 %6004, %v5554
        %v6006 = vpop.permute.xlu0 %6005
        %6007 = vset.pattern.permute.xlu0 0
        %6008 = vperm.xlu0 %6007, %v5556
        %v6009 = vpop.permute.xlu0 %6008
        %6010 = vset.pattern.permute.xlu0 0
        %6011 = vperm.xlu0 %6010, %v5558
        %v6012 = vpop.permute.xlu0 %6011
        %6013 = vset.pattern.permute.xlu0 0
        %6014 = vperm.xlu0 %6013, %v5560
        %v6015 = vpop.permute.xlu0 %6014
        %6016 = vset.pattern.permute.xlu0 0
        %6017 = vperm.xlu0 %6016, %v5562
        %v6018 = vpop.permute.xlu0 %6017
        %6019 = vset.pattern.permute.xlu0 0
        %6020 = vperm.xlu0 %6019, %v5564
        %v6021 = vpop.permute.xlu0 %6020
        %6022 = vset.pattern.permute.xlu0 0
        %6023 = vperm.xlu0 %6022, %v5566
        %v6024 = vpop.permute.xlu0 %6023
        %6025 = vset.pattern.permute.xlu0 0
        %6026 = vperm.xlu0 %6025, %v5568
        %v6027 = vpop.permute.xlu0 %6026
        %6028 = vset.pattern.permute.xlu0 0
        %6029 = vperm.xlu0 %6028, %v5570
        %v6030 = vpop.permute.xlu0 %6029
        %6031 = vset.pattern.permute.xlu0 0
        %6032 = vperm.xlu0 %6031, %v5572
        %v6033 = vpop.permute.xlu0 %6032
        %6034 = vset.pattern.permute.xlu0 0
        %6035 = vperm.xlu0 %6034, %v5574
        %v6036 = vpop.permute.xlu0 %6035
        %6037 = vset.pattern.permute.xlu0 0
        %6038 = vperm.xlu0 %6037, %v5576
        %v6039 = vpop.permute.xlu0 %6038
        %6040 = vset.pattern.permute.xlu0 0
        %6041 = vperm.xlu0 %6040, %v5578
        %v6042 = vpop.permute.xlu0 %6041
        %6043 = vset.pattern.permute.xlu0 0
        %6044 = vperm.xlu0 %6043, %v5580
        %v6045 = vpop.permute.xlu0 %6044
        %6046 = vset.pattern.permute.xlu0 0
        %6047 = vperm.xlu0 %6046, %v5582
        %v6048 = vpop.permute.xlu0 %6047
        %6049 = vset.pattern.permute.xlu0 0
        %6050 = vperm.xlu0 %6049, %v5584
        %v6051 = vpop.permute.xlu0 %6050
        %6052 = vset.pattern.permute.xlu0 0
        %6053 = vperm.xlu0 %6052, %v5586
        %v6054 = vpop.permute.xlu0 %6053
        %6055 = vset.pattern.permute.xlu0 0
        %6056 = vperm.xlu0 %6055, %v5588
        %v6057 = vpop.permute.xlu0 %6056
        %6058 = vset.pattern.permute.xlu0 0
        %6059 = vperm.xlu0 %6058, %v5590
        %v6060 = vpop.permute.xlu0 %6059
        %6061 = vset.pattern.permute.xlu0 0
        %6062 = vperm.xlu0 %6061, %v5592
        %v6063 = vpop.permute.xlu0 %6062
        %6064 = vset.pattern.permute.xlu0 0
        %6065 = vperm.xlu0 %6064, %v5594
        %v6066 = vpop.permute.xlu0 %6065
        %6067 = vset.pattern.permute.xlu0 0
        %6068 = vperm.xlu0 %6067, %v5596
        %v6069 = vpop.permute.xlu0 %6068
        %6070 = vset.pattern.permute.xlu0 0
        %6071 = vperm.xlu0 %6070, %v5598
        %v6072 = vpop.permute.xlu0 %6071
        %6073 = vset.pattern.permute.xlu0 0
        %6074 = vperm.xlu0 %6073, %v5600
        %v6075 = vpop.permute.xlu0 %6074
        %6076 = vset.pattern.permute.xlu0 0
        %6077 = vperm.xlu0 %6076, %v5602
        %v6078 = vpop.permute.xlu0 %6077
        %6079 = vset.pattern.permute.xlu0 0
        %6080 = vperm.xlu0 %6079, %v5604
        %v6081 = vpop.permute.xlu0 %6080
        %6082 = vset.pattern.permute.xlu0 0
        %6083 = vperm.xlu0 %6082, %v5606
        %v6084 = vpop.permute.xlu0 %6083
        %6085 = vset.pattern.permute.xlu0 0
        %6086 = vperm.xlu0 %6085, %v5608
        %v6087 = vpop.permute.xlu0 %6086
        %6088 = vset.pattern.permute.xlu0 0
        %6089 = vperm.xlu0 %6088, %v5610
        %v6090 = vpop.permute.xlu0 %6089
        %6091 = vset.pattern.permute.xlu0 0
        %6092 = vperm.xlu0 %6091, %v5612
        %v6093 = vpop.permute.xlu0 %6092
        %6094 = vset.pattern.permute.xlu0 0
        %6095 = vperm.xlu0 %6094, %v5614
        %v6096 = vpop.permute.xlu0 %6095
        %6097 = vset.pattern.permute.xlu0 0
        %6098 = vperm.xlu0 %6097, %v5616
        %v6099 = vpop.permute.xlu0 %6098
        %6100 = vset.pattern.permute.xlu0 0
        %6101 = vperm.xlu0 %6100, %v5618
        %v6102 = vpop.permute.xlu0 %6101
        %6103 = vset.pattern.permute.xlu0 0
        %6104 = vperm.xlu0 %6103, %v5620
        %v6105 = vpop.permute.xlu0 %6104
        %6106 = vset.pattern.permute.xlu0 0
        %6107 = vperm.xlu0 %6106, %v5622
        %v6108 = vpop.permute.xlu0 %6107
        %6109 = vset.pattern.permute.xlu0 0
        %6110 = vperm.xlu0 %6109, %v5624
        %v6111 = vpop.permute.xlu0 %6110
        %6112 = vset.pattern.permute.xlu0 0
        %6113 = vperm.xlu0 %6112, %v5626
        %v6114 = vpop.permute.xlu0 %6113
        %6115 = vset.pattern.permute.xlu0 0
        %6116 = vperm.xlu0 %6115, %v5628
        %v6117 = vpop.permute.xlu0 %6116
        %6118 = vset.pattern.permute.xlu0 0
        %6119 = vperm.xlu0 %6118, %v5630
        %v6120 = vpop.permute.xlu0 %6119
        %6121 = vset.pattern.permute.xlu0 0
        %6122 = vperm.xlu0 %6121, %v5632
        %v6123 = vpop.permute.xlu0 %6122
        %6124 = vset.pattern.permute.xlu0 0
        %6125 = vperm.xlu0 %6124, %v5634
        %v6126 = vpop.permute.xlu0 %6125
        %6127 = vset.pattern.permute.xlu0 0
        %6128 = vperm.xlu0 %6127, %v5636
        %v6129 = vpop.permute.xlu0 %6128
        %6130 = vset.pattern.permute.xlu0 0
        %6131 = vperm.xlu0 %6130, %v5638
        %v6132 = vpop.permute.xlu0 %6131
        %6133 = vset.pattern.permute.xlu0 0
        %6134 = vperm.xlu0 %6133, %v5640
        %v6135 = vpop.permute.xlu0 %6134
        %6136 = vset.pattern.permute.xlu0 0
        %6137 = vperm.xlu0 %6136, %v5642
        %v6138 = vpop.permute.xlu0 %6137
        %6139 = vset.pattern.permute.xlu0 0
        %6140 = vperm.xlu0 %6139, %v5644
        %v6141 = vpop.permute.xlu0 %6140
        %6142 = vset.pattern.permute.xlu0 0
        %6143 = vperm.xlu0 %6142, %v5646
        %v6144 = vpop.permute.xlu0 %6143
        %6145 = vset.pattern.permute.xlu0 0
        %6146 = vperm.xlu0 %6145, %v5648
        %v6147 = vpop.permute.xlu0 %6146
        %6148 = vset.pattern.permute.xlu0 0
        %6149 = vperm.xlu0 %6148, %v5650
        %v6150 = vpop.permute.xlu0 %6149
        %6151 = vset.pattern.permute.xlu0 0
        %6152 = vperm.xlu0 %6151, %v5652
        %v6153 = vpop.permute.xlu0 %6152
        %6154 = vset.pattern.permute.xlu0 0
        %6155 = vperm.xlu0 %6154, %v5654
        %v6156 = vpop.permute.xlu0 %6155
        %6157 = vset.pattern.permute.xlu0 0
        %6158 = vperm.xlu0 %6157, %v5656
        %v6159 = vpop.permute.xlu0 %6158
        %6160 = vset.pattern.permute.xlu0 0
        %6161 = vperm.xlu0 %6160, %v5658
        %v6162 = vpop.permute.xlu0 %6161
        %6163 = vset.pattern.permute.xlu0 0
        %6164 = vperm.xlu0 %6163, %v5660
        %v6165 = vpop.permute.xlu0 %6164
        %6166 = vset.pattern.permute.xlu0 0
        %6167 = vperm.xlu0 %6166, %v5662
        %v6168 = vpop.permute.xlu0 %6167
        %6169 = vset.pattern.permute.xlu0 0
        %6170 = vperm.xlu0 %6169, %v5664
        %v6171 = vpop.permute.xlu0 %6170
        %6172 = vset.pattern.permute.xlu0 0
        %6173 = vperm.xlu0 %6172, %v5666
        %v6174 = vpop.permute.xlu0 %6173
        %6175 = vset.pattern.permute.xlu0 0
        %6176 = vperm.xlu0 %6175, %v5668
        %v6177 = vpop.permute.xlu0 %6176
        %6178 = vset.pattern.permute.xlu0 0
        %6179 = vperm.xlu0 %6178, %v5670
        %v6180 = vpop.permute.xlu0 %6179
        %6181 = vset.pattern.permute.xlu0 0
        %6182 = vperm.xlu0 %6181, %v5672
        %v6183 = vpop.permute.xlu0 %6182
        %6184 = vset.pattern.permute.xlu0 0
        %6185 = vperm.xlu0 %6184, %v5674
        %v6186 = vpop.permute.xlu0 %6185
        %v6187 = vlaneseq
        %v6188 = vshrl.u32 %v6187, 7
        %v6189 = vsub.s32 %v3938, %v6188
        %v6190 = vrot.slane %v5805, %v6189
        %v6191 = vlaneseq
        %v6192 = vshrl.u32 %v6191, 7
        %v6193 = vsub.s32 %v3938, %v6192
        %v6194 = vrot.slane %v5808, %v6193
        %v6195 = vlaneseq
        %v6196 = vshrl.u32 %v6195, 7
        %v6197 = vsub.s32 %v3938, %v6196
        %v6198 = vrot.slane %v5811, %v6197
        %v6199 = vlaneseq
        %v6200 = vshrl.u32 %v6199, 7
        %v6201 = vsub.s32 %v3938, %v6200
        %v6202 = vrot.slane %v5814, %v6201
        %v6203 = vlaneseq
        %v6204 = vshrl.u32 %v6203, 7
        %v6205 = vsub.s32 %v3938, %v6204
        %v6206 = vrot.slane %v5817, %v6205
        %v6207 = vlaneseq
        %v6208 = vshrl.u32 %v6207, 7
        %v6209 = vsub.s32 %v3938, %v6208
        %v6210 = vrot.slane %v5820, %v6209
        %v6211 = vlaneseq
        %v6212 = vshrl.u32 %v6211, 7
        %v6213 = vsub.s32 %v3938, %v6212
        %v6214 = vrot.slane %v5823, %v6213
        %v6215 = vlaneseq
        %v6216 = vshrl.u32 %v6215, 7
        %v6217 = vsub.s32 %v3938, %v6216
        %v6218 = vrot.slane %v5826, %v6217
        %v6219 = vlaneseq
        %v6220 = vshrl.u32 %v6219, 7
        %v6221 = vsub.s32 %v3938, %v6220
        %v6222 = vrot.slane %v5829, %v6221
        %v6223 = vlaneseq
        %v6224 = vshrl.u32 %v6223, 7
        %v6225 = vsub.s32 %v3938, %v6224
        %v6226 = vrot.slane %v5832, %v6225
        %v6227 = vlaneseq
        %v6228 = vshrl.u32 %v6227, 7
        %v6229 = vsub.s32 %v3938, %v6228
        %v6230 = vrot.slane %v5835, %v6229
        %v6231 = vlaneseq
        %v6232 = vshrl.u32 %v6231, 7
        %v6233 = vsub.s32 %v3938, %v6232
        %v6234 = vrot.slane %v5838, %v6233
        %v6235 = vlaneseq
        %v6236 = vshrl.u32 %v6235, 7
        %v6237 = vsub.s32 %v3938, %v6236
        %v6238 = vrot.slane %v5841, %v6237
        %v6239 = vlaneseq
        %v6240 = vshrl.u32 %v6239, 7
        %v6241 = vsub.s32 %v3938, %v6240
        %v6242 = vrot.slane %v5844, %v6241
        %v6243 = vlaneseq
        %v6244 = vshrl.u32 %v6243, 7
        %v6245 = vsub.s32 %v3938, %v6244
        %v6246 = vrot.slane %v5847, %v6245
        %v6247 = vlaneseq
        %v6248 = vshrl.u32 %v6247, 7
        %v6249 = vsub.s32 %v3938, %v6248
        %v6250 = vrot.slane %v5850, %v6249
        %v6251 = vlaneseq
        %v6252 = vshrl.u32 %v6251, 7
        %v6253 = vsub.s32 %v3938, %v6252
        %v6254 = vrot.slane %v5853, %v6253
        %v6255 = vlaneseq
        %v6256 = vshrl.u32 %v6255, 7
        %v6257 = vsub.s32 %v3938, %v6256
        %v6258 = vrot.slane %v5856, %v6257
        %v6259 = vlaneseq
        %v6260 = vshrl.u32 %v6259, 7
        %v6261 = vsub.s32 %v3938, %v6260
        %v6262 = vrot.slane %v5859, %v6261
        %v6263 = vlaneseq
        %v6264 = vshrl.u32 %v6263, 7
        %v6265 = vsub.s32 %v3938, %v6264
        %v6266 = vrot.slane %v5862, %v6265
        %v6267 = vlaneseq
        %v6268 = vshrl.u32 %v6267, 7
        %v6269 = vsub.s32 %v3938, %v6268
        %v6270 = vrot.slane %v5865, %v6269
        %v6271 = vlaneseq
        %v6272 = vshrl.u32 %v6271, 7
        %v6273 = vsub.s32 %v3938, %v6272
        %v6274 = vrot.slane %v5868, %v6273
        %v6275 = vlaneseq
        %v6276 = vshrl.u32 %v6275, 7
        %v6277 = vsub.s32 %v3938, %v6276
        %v6278 = vrot.slane %v5871, %v6277
        %v6279 = vlaneseq
        %v6280 = vshrl.u32 %v6279, 7
        %v6281 = vsub.s32 %v3938, %v6280
        %v6282 = vrot.slane %v5874, %v6281
        %v6283 = vlaneseq
        %v6284 = vshrl.u32 %v6283, 7
        %v6285 = vsub.s32 %v3938, %v6284
        %v6286 = vrot.slane %v5877, %v6285
        %v6287 = vlaneseq
        %v6288 = vshrl.u32 %v6287, 7
        %v6289 = vsub.s32 %v3938, %v6288
        %v6290 = vrot.slane %v5880, %v6289
        %v6291 = vlaneseq
        %v6292 = vshrl.u32 %v6291, 7
        %v6293 = vsub.s32 %v3938, %v6292
        %v6294 = vrot.slane %v5883, %v6293
        %v6295 = vlaneseq
        %v6296 = vshrl.u32 %v6295, 7
        %v6297 = vsub.s32 %v3938, %v6296
        %v6298 = vrot.slane %v5886, %v6297
        %v6299 = vlaneseq
        %v6300 = vshrl.u32 %v6299, 7
        %v6301 = vsub.s32 %v3938, %v6300
        %v6302 = vrot.slane %v5889, %v6301
        %v6303 = vlaneseq
        %v6304 = vshrl.u32 %v6303, 7
        %v6305 = vsub.s32 %v3938, %v6304
        %v6306 = vrot.slane %v5892, %v6305
        %v6307 = vlaneseq
        %v6308 = vshrl.u32 %v6307, 7
        %v6309 = vsub.s32 %v3938, %v6308
        %v6310 = vrot.slane %v5895, %v6309
        %v6311 = vlaneseq
        %v6312 = vshrl.u32 %v6311, 7
        %v6313 = vsub.s32 %v3938, %v6312
        %v6314 = vrot.slane %v5898, %v6313
        %v6315 = vlaneseq
        %v6316 = vshrl.u32 %v6315, 7
        %v6317 = vsub.s32 %v3938, %v6316
        %v6318 = vrot.slane %v5901, %v6317
        %v6319 = vlaneseq
        %v6320 = vshrl.u32 %v6319, 7
        %v6321 = vsub.s32 %v3938, %v6320
        %v6322 = vrot.slane %v5904, %v6321
        %v6323 = vlaneseq
        %v6324 = vshrl.u32 %v6323, 7
        %v6325 = vsub.s32 %v3938, %v6324
        %v6326 = vrot.slane %v5907, %v6325
        %v6327 = vlaneseq
        %v6328 = vshrl.u32 %v6327, 7
        %v6329 = vsub.s32 %v3938, %v6328
        %v6330 = vrot.slane %v5910, %v6329
        %v6331 = vlaneseq
        %v6332 = vshrl.u32 %v6331, 7
        %v6333 = vsub.s32 %v3938, %v6332
        %v6334 = vrot.slane %v5913, %v6333
        %v6335 = vlaneseq
        %v6336 = vshrl.u32 %v6335, 7
        %v6337 = vsub.s32 %v3938, %v6336
        %v6338 = vrot.slane %v5916, %v6337
        %v6339 = vlaneseq
        %v6340 = vshrl.u32 %v6339, 7
        %v6341 = vsub.s32 %v3938, %v6340
        %v6342 = vrot.slane %v5919, %v6341
        %v6343 = vlaneseq
        %v6344 = vshrl.u32 %v6343, 7
        %v6345 = vsub.s32 %v3938, %v6344
        %v6346 = vrot.slane %v5922, %v6345
        %v6347 = vlaneseq
        %v6348 = vshrl.u32 %v6347, 7
        %v6349 = vsub.s32 %v3938, %v6348
        %v6350 = vrot.slane %v5925, %v6349
        %v6351 = vlaneseq
        %v6352 = vshrl.u32 %v6351, 7
        %v6353 = vsub.s32 %v3938, %v6352
        %v6354 = vrot.slane %v5928, %v6353
        %v6355 = vlaneseq
        %v6356 = vshrl.u32 %v6355, 7
        %v6357 = vsub.s32 %v3938, %v6356
        %v6358 = vrot.slane %v5931, %v6357
        %v6359 = vlaneseq
        %v6360 = vshrl.u32 %v6359, 7
        %v6361 = vsub.s32 %v3938, %v6360
        %v6362 = vrot.slane %v5934, %v6361
        %v6363 = vlaneseq
        %v6364 = vshrl.u32 %v6363, 7
        %v6365 = vsub.s32 %v3938, %v6364
        %v6366 = vrot.slane %v5937, %v6365
        %v6367 = vlaneseq
        %v6368 = vshrl.u32 %v6367, 7
        %v6369 = vsub.s32 %v3938, %v6368
        %v6370 = vrot.slane %v5940, %v6369
        %v6371 = vlaneseq
        %v6372 = vshrl.u32 %v6371, 7
        %v6373 = vsub.s32 %v3938, %v6372
        %v6374 = vrot.slane %v5943, %v6373
        %v6375 = vlaneseq
        %v6376 = vshrl.u32 %v6375, 7
        %v6377 = vsub.s32 %v3938, %v6376
        %v6378 = vrot.slane %v5946, %v6377
        %v6379 = vlaneseq
        %v6380 = vshrl.u32 %v6379, 7
        %v6381 = vsub.s32 %v3938, %v6380
        %v6382 = vrot.slane %v5949, %v6381
        %v6383 = vlaneseq
        %v6384 = vshrl.u32 %v6383, 7
        %v6385 = vsub.s32 %v3938, %v6384
        %v6386 = vrot.slane %v5952, %v6385
        %v6387 = vlaneseq
        %v6388 = vshrl.u32 %v6387, 7
        %v6389 = vsub.s32 %v3938, %v6388
        %v6390 = vrot.slane %v5955, %v6389
        %v6391 = vlaneseq
        %v6392 = vshrl.u32 %v6391, 7
        %v6393 = vsub.s32 %v3938, %v6392
        %v6394 = vrot.slane %v5958, %v6393
        %v6395 = vlaneseq
        %v6396 = vshrl.u32 %v6395, 7
        %v6397 = vsub.s32 %v3938, %v6396
        %v6398 = vrot.slane %v5961, %v6397
        %v6399 = vlaneseq
        %v6400 = vshrl.u32 %v6399, 7
        %v6401 = vsub.s32 %v3938, %v6400
        %v6402 = vrot.slane %v5964, %v6401
        %v6403 = vlaneseq
        %v6404 = vshrl.u32 %v6403, 7
        %v6405 = vsub.s32 %v3938, %v6404
        %v6406 = vrot.slane %v5967, %v6405
        %v6407 = vlaneseq
        %v6408 = vshrl.u32 %v6407, 7
        %v6409 = vsub.s32 %v3938, %v6408
        %v6410 = vrot.slane %v5970, %v6409
        %v6411 = vlaneseq
        %v6412 = vshrl.u32 %v6411, 7
        %v6413 = vsub.s32 %v3938, %v6412
        %v6414 = vrot.slane %v5973, %v6413
        %v6415 = vlaneseq
        %v6416 = vshrl.u32 %v6415, 7
        %v6417 = vsub.s32 %v3938, %v6416
        %v6418 = vrot.slane %v5976, %v6417
        %v6419 = vlaneseq
        %v6420 = vshrl.u32 %v6419, 7
        %v6421 = vsub.s32 %v3938, %v6420
        %v6422 = vrot.slane %v5979, %v6421
        %v6423 = vlaneseq
        %v6424 = vshrl.u32 %v6423, 7
        %v6425 = vsub.s32 %v3938, %v6424
        %v6426 = vrot.slane %v5982, %v6425
        %v6427 = vlaneseq
        %v6428 = vshrl.u32 %v6427, 7
        %v6429 = vsub.s32 %v3938, %v6428
        %v6430 = vrot.slane %v5985, %v6429
        %v6431 = vlaneseq
        %v6432 = vshrl.u32 %v6431, 7
        %v6433 = vsub.s32 %v3938, %v6432
        %v6434 = vrot.slane %v5988, %v6433
        %v6435 = vlaneseq
        %v6436 = vshrl.u32 %v6435, 7
        %v6437 = vsub.s32 %v3938, %v6436
        %v6438 = vrot.slane %v5991, %v6437
        %v6439 = vlaneseq
        %v6440 = vshrl.u32 %v6439, 7
        %v6441 = vsub.s32 %v3938, %v6440
        %v6442 = vrot.slane %v5994, %v6441
        %v6443 = vlaneseq
        %v6444 = vshrl.u32 %v6443, 7
        %v6445 = vsub.s32 %v3938, %v6444
        %v6446 = vrot.slane %v5997, %v6445
        %v6447 = vlaneseq
        %v6448 = vshrl.u32 %v6447, 7
        %v6449 = vsub.s32 %v3938, %v6448
        %v6450 = vrot.slane %v6000, %v6449
        %v6451 = vlaneseq
        %v6452 = vshrl.u32 %v6451, 7
        %v6453 = vsub.s32 %v3938, %v6452
        %v6454 = vrot.slane %v6003, %v6453
        %v6455 = vlaneseq
        %v6456 = vshrl.u32 %v6455, 7
        %v6457 = vsub.s32 %v3938, %v6456
        %v6458 = vrot.slane %v6006, %v6457
        %v6459 = vlaneseq
        %v6460 = vshrl.u32 %v6459, 7
        %v6461 = vsub.s32 %v3938, %v6460
        %v6462 = vrot.slane %v6009, %v6461
        %v6463 = vlaneseq
        %v6464 = vshrl.u32 %v6463, 7
        %v6465 = vsub.s32 %v3938, %v6464
        %v6466 = vrot.slane %v6012, %v6465
        %v6467 = vlaneseq
        %v6468 = vshrl.u32 %v6467, 7
        %v6469 = vsub.s32 %v3938, %v6468
        %v6470 = vrot.slane %v6015, %v6469
        %v6471 = vlaneseq
        %v6472 = vshrl.u32 %v6471, 7
        %v6473 = vsub.s32 %v3938, %v6472
        %v6474 = vrot.slane %v6018, %v6473
        %v6475 = vlaneseq
        %v6476 = vshrl.u32 %v6475, 7
        %v6477 = vsub.s32 %v3938, %v6476
        %v6478 = vrot.slane %v6021, %v6477
        %v6479 = vlaneseq
        %v6480 = vshrl.u32 %v6479, 7
        %v6481 = vsub.s32 %v3938, %v6480
        %v6482 = vrot.slane %v6024, %v6481
        %v6483 = vlaneseq
        %v6484 = vshrl.u32 %v6483, 7
        %v6485 = vsub.s32 %v3938, %v6484
        %v6486 = vrot.slane %v6027, %v6485
        %v6487 = vlaneseq
        %v6488 = vshrl.u32 %v6487, 7
        %v6489 = vsub.s32 %v3938, %v6488
        %v6490 = vrot.slane %v6030, %v6489
        %v6491 = vlaneseq
        %v6492 = vshrl.u32 %v6491, 7
        %v6493 = vsub.s32 %v3938, %v6492
        %v6494 = vrot.slane %v6033, %v6493
        %v6495 = vlaneseq
        %v6496 = vshrl.u32 %v6495, 7
        %v6497 = vsub.s32 %v3938, %v6496
        %v6498 = vrot.slane %v6036, %v6497
        %v6499 = vlaneseq
        %v6500 = vshrl.u32 %v6499, 7
        %v6501 = vsub.s32 %v3938, %v6500
        %v6502 = vrot.slane %v6039, %v6501
        %v6503 = vlaneseq
        %v6504 = vshrl.u32 %v6503, 7
        %v6505 = vsub.s32 %v3938, %v6504
        %v6506 = vrot.slane %v6042, %v6505
        %v6507 = vlaneseq
        %v6508 = vshrl.u32 %v6507, 7
        %v6509 = vsub.s32 %v3938, %v6508
        %v6510 = vrot.slane %v6045, %v6509
        %v6511 = vlaneseq
        %v6512 = vshrl.u32 %v6511, 7
        %v6513 = vsub.s32 %v3938, %v6512
        %v6514 = vrot.slane %v6048, %v6513
        %v6515 = vlaneseq
        %v6516 = vshrl.u32 %v6515, 7
        %v6517 = vsub.s32 %v3938, %v6516
        %v6518 = vrot.slane %v6051, %v6517
        %v6519 = vlaneseq
        %v6520 = vshrl.u32 %v6519, 7
        %v6521 = vsub.s32 %v3938, %v6520
        %v6522 = vrot.slane %v6054, %v6521
        %v6523 = vlaneseq
        %v6524 = vshrl.u32 %v6523, 7
        %v6525 = vsub.s32 %v3938, %v6524
        %v6526 = vrot.slane %v6057, %v6525
        %v6527 = vlaneseq
        %v6528 = vshrl.u32 %v6527, 7
        %v6529 = vsub.s32 %v3938, %v6528
        %v6530 = vrot.slane %v6060, %v6529
        %v6531 = vlaneseq
        %v6532 = vshrl.u32 %v6531, 7
        %v6533 = vsub.s32 %v3938, %v6532
        %v6534 = vrot.slane %v6063, %v6533
        %v6535 = vlaneseq
        %v6536 = vshrl.u32 %v6535, 7
        %v6537 = vsub.s32 %v3938, %v6536
        %v6538 = vrot.slane %v6066, %v6537
        %v6539 = vlaneseq
        %v6540 = vshrl.u32 %v6539, 7
        %v6541 = vsub.s32 %v3938, %v6540
        %v6542 = vrot.slane %v6069, %v6541
        %v6543 = vlaneseq
        %v6544 = vshrl.u32 %v6543, 7
        %v6545 = vsub.s32 %v3938, %v6544
        %v6546 = vrot.slane %v6072, %v6545
        %v6547 = vlaneseq
        %v6548 = vshrl.u32 %v6547, 7
        %v6549 = vsub.s32 %v3938, %v6548
        %v6550 = vrot.slane %v6075, %v6549
        %v6551 = vlaneseq
        %v6552 = vshrl.u32 %v6551, 7
        %v6553 = vsub.s32 %v3938, %v6552
        %v6554 = vrot.slane %v6078, %v6553
        %v6555 = vlaneseq
        %v6556 = vshrl.u32 %v6555, 7
        %v6557 = vsub.s32 %v3938, %v6556
        %v6558 = vrot.slane %v6081, %v6557
        %v6559 = vlaneseq
        %v6560 = vshrl.u32 %v6559, 7
        %v6561 = vsub.s32 %v3938, %v6560
        %v6562 = vrot.slane %v6084, %v6561
        %v6563 = vlaneseq
        %v6564 = vshrl.u32 %v6563, 7
        %v6565 = vsub.s32 %v3938, %v6564
        %v6566 = vrot.slane %v6087, %v6565
        %v6567 = vlaneseq
        %v6568 = vshrl.u32 %v6567, 7
        %v6569 = vsub.s32 %v3938, %v6568
        %v6570 = vrot.slane %v6090, %v6569
        %v6571 = vlaneseq
        %v6572 = vshrl.u32 %v6571, 7
        %v6573 = vsub.s32 %v3938, %v6572
        %v6574 = vrot.slane %v6093, %v6573
        %v6575 = vlaneseq
        %v6576 = vshrl.u32 %v6575, 7
        %v6577 = vsub.s32 %v3938, %v6576
        %v6578 = vrot.slane %v6096, %v6577
        %v6579 = vlaneseq
        %v6580 = vshrl.u32 %v6579, 7
        %v6581 = vsub.s32 %v3938, %v6580
        %v6582 = vrot.slane %v6099, %v6581
        %v6583 = vlaneseq
        %v6584 = vshrl.u32 %v6583, 7
        %v6585 = vsub.s32 %v3938, %v6584
        %v6586 = vrot.slane %v6102, %v6585
        %v6587 = vlaneseq
        %v6588 = vshrl.u32 %v6587, 7
        %v6589 = vsub.s32 %v3938, %v6588
        %v6590 = vrot.slane %v6105, %v6589
        %v6591 = vlaneseq
        %v6592 = vshrl.u32 %v6591, 7
        %v6593 = vsub.s32 %v3938, %v6592
        %v6594 = vrot.slane %v6108, %v6593
        %v6595 = vlaneseq
        %v6596 = vshrl.u32 %v6595, 7
        %v6597 = vsub.s32 %v3938, %v6596
        %v6598 = vrot.slane %v6111, %v6597
        %v6599 = vlaneseq
        %v6600 = vshrl.u32 %v6599, 7
        %v6601 = vsub.s32 %v3938, %v6600
        %v6602 = vrot.slane %v6114, %v6601
        %v6603 = vlaneseq
        %v6604 = vshrl.u32 %v6603, 7
        %v6605 = vsub.s32 %v3938, %v6604
        %v6606 = vrot.slane %v6117, %v6605
        %v6607 = vlaneseq
        %v6608 = vshrl.u32 %v6607, 7
        %v6609 = vsub.s32 %v3938, %v6608
        %v6610 = vrot.slane %v6120, %v6609
        %v6611 = vlaneseq
        %v6612 = vshrl.u32 %v6611, 7
        %v6613 = vsub.s32 %v3938, %v6612
        %v6614 = vrot.slane %v6123, %v6613
        %v6615 = vlaneseq
        %v6616 = vshrl.u32 %v6615, 7
        %v6617 = vsub.s32 %v3938, %v6616
        %v6618 = vrot.slane %v6126, %v6617
        %v6619 = vlaneseq
        %v6620 = vshrl.u32 %v6619, 7
        %v6621 = vsub.s32 %v3938, %v6620
        %v6622 = vrot.slane %v6129, %v6621
        %v6623 = vlaneseq
        %v6624 = vshrl.u32 %v6623, 7
        %v6625 = vsub.s32 %v3938, %v6624
        %v6626 = vrot.slane %v6132, %v6625
        %v6627 = vlaneseq
        %v6628 = vshrl.u32 %v6627, 7
        %v6629 = vsub.s32 %v3938, %v6628
        %v6630 = vrot.slane %v6135, %v6629
        %v6631 = vlaneseq
        %v6632 = vshrl.u32 %v6631, 7
        %v6633 = vsub.s32 %v3938, %v6632
        %v6634 = vrot.slane %v6138, %v6633
        %v6635 = vlaneseq
        %v6636 = vshrl.u32 %v6635, 7
        %v6637 = vsub.s32 %v3938, %v6636
        %v6638 = vrot.slane %v6141, %v6637
        %v6639 = vlaneseq
        %v6640 = vshrl.u32 %v6639, 7
        %v6641 = vsub.s32 %v3938, %v6640
        %v6642 = vrot.slane %v6144, %v6641
        %v6643 = vlaneseq
        %v6644 = vshrl.u32 %v6643, 7
        %v6645 = vsub.s32 %v3938, %v6644
        %v6646 = vrot.slane %v6147, %v6645
        %v6647 = vlaneseq
        %v6648 = vshrl.u32 %v6647, 7
        %v6649 = vsub.s32 %v3938, %v6648
        %v6650 = vrot.slane %v6150, %v6649
        %v6651 = vlaneseq
        %v6652 = vshrl.u32 %v6651, 7
        %v6653 = vsub.s32 %v3938, %v6652
        %v6654 = vrot.slane %v6153, %v6653
        %v6655 = vlaneseq
        %v6656 = vshrl.u32 %v6655, 7
        %v6657 = vsub.s32 %v3938, %v6656
        %v6658 = vrot.slane %v6156, %v6657
        %v6659 = vlaneseq
        %v6660 = vshrl.u32 %v6659, 7
        %v6661 = vsub.s32 %v3938, %v6660
        %v6662 = vrot.slane %v6159, %v6661
        %v6663 = vlaneseq
        %v6664 = vshrl.u32 %v6663, 7
        %v6665 = vsub.s32 %v3938, %v6664
        %v6666 = vrot.slane %v6162, %v6665
        %v6667 = vlaneseq
        %v6668 = vshrl.u32 %v6667, 7
        %v6669 = vsub.s32 %v3938, %v6668
        %v6670 = vrot.slane %v6165, %v6669
        %v6671 = vlaneseq
        %v6672 = vshrl.u32 %v6671, 7
        %v6673 = vsub.s32 %v3938, %v6672
        %v6674 = vrot.slane %v6168, %v6673
        %v6675 = vlaneseq
        %v6676 = vshrl.u32 %v6675, 7
        %v6677 = vsub.s32 %v3938, %v6676
        %v6678 = vrot.slane %v6171, %v6677
        %v6679 = vlaneseq
        %v6680 = vshrl.u32 %v6679, 7
        %v6681 = vsub.s32 %v3938, %v6680
        %v6682 = vrot.slane %v6174, %v6681
        %v6683 = vlaneseq
        %v6684 = vshrl.u32 %v6683, 7
        %v6685 = vsub.s32 %v3938, %v6684
        %v6686 = vrot.slane %v6177, %v6685
        %v6687 = vlaneseq
        %v6688 = vshrl.u32 %v6687, 7
        %v6689 = vsub.s32 %v3938, %v6688
        %v6690 = vrot.slane %v6180, %v6689
        %v6691 = vlaneseq
        %v6692 = vshrl.u32 %v6691, 7
        %v6693 = vsub.s32 %v3938, %v6692
        %v6694 = vrot.slane %v6183, %v6693
        %v6695 = vlaneseq
        %v6696 = vshrl.u32 %v6695, 7
        %v6697 = vsub.s32 %v3938, %v6696
        %v6698 = vrot.slane %v6186, %v6697
        %v6699 = vsel %vm4451, %v6194, %v6190
        %v6700 = vsel %vm4453, %v6198, %v6699
        %v6701 = vsel %vm4455, %v6202, %v6700
        %v6702 = vsel %vm4457, %v6206, %v6701
        %v6703 = vsel %vm4459, %v6210, %v6702
        %v6704 = vsel %vm4461, %v6214, %v6703
        %v6705 = vsel %vm4463, %v6218, %v6704
        %v6706 = vsel %vm4451, %v6226, %v6222
        %v6707 = vsel %vm4453, %v6230, %v6706
        %v6708 = vsel %vm4455, %v6234, %v6707
        %v6709 = vsel %vm4457, %v6238, %v6708
        %v6710 = vsel %vm4459, %v6242, %v6709
        %v6711 = vsel %vm4461, %v6246, %v6710
        %v6712 = vsel %vm4463, %v6250, %v6711
        %v6713 = vsel %vm4451, %v6258, %v6254
        %v6714 = vsel %vm4453, %v6262, %v6713
        %v6715 = vsel %vm4455, %v6266, %v6714
        %v6716 = vsel %vm4457, %v6270, %v6715
        %v6717 = vsel %vm4459, %v6274, %v6716
        %v6718 = vsel %vm4461, %v6278, %v6717
        %v6719 = vsel %vm4463, %v6282, %v6718
        %v6720 = vsel %vm4451, %v6290, %v6286
        %v6721 = vsel %vm4453, %v6294, %v6720
        %v6722 = vsel %vm4455, %v6298, %v6721
        %v6723 = vsel %vm4457, %v6302, %v6722
        %v6724 = vsel %vm4459, %v6306, %v6723
        %v6725 = vsel %vm4461, %v6310, %v6724
        %v6726 = vsel %vm4463, %v6314, %v6725
        %v6727 = vsel %vm4451, %v6322, %v6318
        %v6728 = vsel %vm4453, %v6326, %v6727
        %v6729 = vsel %vm4455, %v6330, %v6728
        %v6730 = vsel %vm4457, %v6334, %v6729
        %v6731 = vsel %vm4459, %v6338, %v6730
        %v6732 = vsel %vm4461, %v6342, %v6731
        %v6733 = vsel %vm4463, %v6346, %v6732
        %v6734 = vsel %vm4451, %v6354, %v6350
        %v6735 = vsel %vm4453, %v6358, %v6734
        %v6736 = vsel %vm4455, %v6362, %v6735
        %v6737 = vsel %vm4457, %v6366, %v6736
        %v6738 = vsel %vm4459, %v6370, %v6737
        %v6739 = vsel %vm4461, %v6374, %v6738
        %v6740 = vsel %vm4463, %v6378, %v6739
        %v6741 = vsel %vm4451, %v6386, %v6382
        %v6742 = vsel %vm4453, %v6390, %v6741
        %v6743 = vsel %vm4455, %v6394, %v6742
        %v6744 = vsel %vm4457, %v6398, %v6743
        %v6745 = vsel %vm4459, %v6402, %v6744
        %v6746 = vsel %vm4461, %v6406, %v6745
        %v6747 = vsel %vm4463, %v6410, %v6746
        %v6748 = vsel %vm4451, %v6418, %v6414
        %v6749 = vsel %vm4453, %v6422, %v6748
        %v6750 = vsel %vm4455, %v6426, %v6749
        %v6751 = vsel %vm4457, %v6430, %v6750
        %v6752 = vsel %vm4459, %v6434, %v6751
        %v6753 = vsel %vm4461, %v6438, %v6752
        %v6754 = vsel %vm4463, %v6442, %v6753
        %v6755 = vsel %vm4451, %v6450, %v6446
        %v6756 = vsel %vm4453, %v6454, %v6755
        %v6757 = vsel %vm4455, %v6458, %v6756
        %v6758 = vsel %vm4457, %v6462, %v6757
        %v6759 = vsel %vm4459, %v6466, %v6758
        %v6760 = vsel %vm4461, %v6470, %v6759
        %v6761 = vsel %vm4463, %v6474, %v6760
        %v6762 = vsel %vm4451, %v6482, %v6478
        %v6763 = vsel %vm4453, %v6486, %v6762
        %v6764 = vsel %vm4455, %v6490, %v6763
        %v6765 = vsel %vm4457, %v6494, %v6764
        %v6766 = vsel %vm4459, %v6498, %v6765
        %v6767 = vsel %vm4461, %v6502, %v6766
        %v6768 = vsel %vm4463, %v6506, %v6767
        %v6769 = vsel %vm4451, %v6514, %v6510
        %v6770 = vsel %vm4453, %v6518, %v6769
        %v6771 = vsel %vm4455, %v6522, %v6770
        %v6772 = vsel %vm4457, %v6526, %v6771
        %v6773 = vsel %vm4459, %v6530, %v6772
        %v6774 = vsel %vm4461, %v6534, %v6773
        %v6775 = vsel %vm4463, %v6538, %v6774
        %v6776 = vsel %vm4451, %v6546, %v6542
        %v6777 = vsel %vm4453, %v6550, %v6776
        %v6778 = vsel %vm4455, %v6554, %v6777
        %v6779 = vsel %vm4457, %v6558, %v6778
        %v6780 = vsel %vm4459, %v6562, %v6779
        %v6781 = vsel %vm4461, %v6566, %v6780
        %v6782 = vsel %vm4463, %v6570, %v6781
        %v6783 = vsel %vm4451, %v6578, %v6574
        %v6784 = vsel %vm4453, %v6582, %v6783
        %v6785 = vsel %vm4455, %v6586, %v6784
        %v6786 = vsel %vm4457, %v6590, %v6785
        %v6787 = vsel %vm4459, %v6594, %v6786
        %v6788 = vsel %vm4461, %v6598, %v6787
        %v6789 = vsel %vm4463, %v6602, %v6788
        %v6790 = vsel %vm4451, %v6610, %v6606
        %v6791 = vsel %vm4453, %v6614, %v6790
        %v6792 = vsel %vm4455, %v6618, %v6791
        %v6793 = vsel %vm4457, %v6622, %v6792
        %v6794 = vsel %vm4459, %v6626, %v6793
        %v6795 = vsel %vm4461, %v6630, %v6794
        %v6796 = vsel %vm4463, %v6634, %v6795
        %v6797 = vsel %vm4451, %v6642, %v6638
        %v6798 = vsel %vm4453, %v6646, %v6797
        %v6799 = vsel %vm4455, %v6650, %v6798
        %v6800 = vsel %vm4457, %v6654, %v6799
        %v6801 = vsel %vm4459, %v6658, %v6800
        %v6802 = vsel %vm4461, %v6662, %v6801
        %v6803 = vsel %vm4463, %v6666, %v6802
        %v6804 = vsel %vm4451, %v6674, %v6670
        %v6805 = vsel %vm4453, %v6678, %v6804
        %v6806 = vsel %vm4455, %v6682, %v6805
        %v6807 = vsel %vm4457, %v6686, %v6806
        %v6808 = vsel %vm4459, %v6690, %v6807
        %v6809 = vsel %vm4461, %v6694, %v6808
        %v6810 = vsel %vm4463, %v6698, %v6809
        %v6827 = vsel %vm4586, %v6705, 0.0
        %6828 = vadd.xlane.f32.xlu0 %v6827
        %v6829 = vpop.xlane.xlu0 %6828
        %v6830 = vsel %vm4586, %v6712, 0.0
        %6831 = vadd.xlane.f32.xlu0 %v6830
        %v6832 = vpop.xlane.xlu0 %6831
        %v6833 = vsel %vm4586, %v6719, 0.0
        %6834 = vadd.xlane.f32.xlu0 %v6833
        %v6835 = vpop.xlane.xlu0 %6834
        %v6836 = vsel %vm4586, %v6726, 0.0
        %6837 = vadd.xlane.f32.xlu0 %v6836
        %v6838 = vpop.xlane.xlu0 %6837
        %v6839 = vsel %vm4586, %v6733, 0.0
        %6840 = vadd.xlane.f32.xlu0 %v6839
        %v6841 = vpop.xlane.xlu0 %6840
        %v6842 = vsel %vm4586, %v6740, 0.0
        %6843 = vadd.xlane.f32.xlu0 %v6842
        %v6844 = vpop.xlane.xlu0 %6843
        %v6845 = vsel %vm4586, %v6747, 0.0
        %6846 = vadd.xlane.f32.xlu0 %v6845
        %v6847 = vpop.xlane.xlu0 %6846
        %v6848 = vsel %vm4586, %v6754, 0.0
        %6849 = vadd.xlane.f32.xlu0 %v6848
        %v6850 = vpop.xlane.xlu0 %6849
        %v6851 = vsel %vm4586, %v6761, 0.0
        %6852 = vadd.xlane.f32.xlu0 %v6851
        %v6853 = vpop.xlane.xlu0 %6852
        %v6854 = vsel %vm4586, %v6768, 0.0
        %6855 = vadd.xlane.f32.xlu0 %v6854
        %v6856 = vpop.xlane.xlu0 %6855
        %v6857 = vsel %vm4586, %v6775, 0.0
        %6858 = vadd.xlane.f32.xlu0 %v6857
        %v6859 = vpop.xlane.xlu0 %6858
        %v6860 = vsel %vm4586, %v6782, 0.0
        %6861 = vadd.xlane.f32.xlu0 %v6860
        %v6862 = vpop.xlane.xlu0 %6861
        %v6863 = vsel %vm4586, %v6789, 0.0
        %6864 = vadd.xlane.f32.xlu0 %v6863
        %v6865 = vpop.xlane.xlu0 %6864
        %v6866 = vsel %vm4586, %v6796, 0.0
        %6867 = vadd.xlane.f32.xlu0 %v6866
        %v6868 = vpop.xlane.xlu0 %6867
        %v6869 = vsel %vm4586, %v6803, 0.0
        %6870 = vadd.xlane.f32.xlu0 %v6869
        %v6871 = vpop.xlane.xlu0 %6870
        %v6872 = vsel %vm4586, %v6810, 0.0
        %6873 = vadd.xlane.f32.xlu0 %v6872
        %v6874 = vpop.xlane.xlu0 %6873
        %v6875 = vrcp.pop %v6829
        %v6876 = vrcp.pop %v6832
        %v6877 = vrcp.pop %v6835
        %v6878 = vrcp.pop %v6838
        %v6879 = vrcp.pop %v6841
        %v6880 = vrcp.pop %v6844
        %v6881 = vrcp.pop %v6847
        %v6882 = vrcp.pop %v6850
        %v6883 = vrcp.pop %v6853
        %v6884 = vrcp.pop %v6856
        %v6885 = vrcp.pop %v6859
        %v6886 = vrcp.pop %v6862
        %v6887 = vrcp.pop %v6865
        %v6888 = vrcp.pop %v6868
        %v6889 = vrcp.pop %v6871
        %v6890 = vrcp.pop %v6874
        %v6907 = vlaneseq
        %v6908 = vshrl.u32 %v6907, 7
        %v6909 = vsub.s32 0, %v6908
        %v6910 = vrot.slane %v6875, %v6909
        %v6911 = vlaneseq
        %v6912 = vshrl.u32 %v6911, 7
        %v6913 = vsub.s32 1, %v6912
        %v6914 = vrot.slane %v6875, %v6913
        %v6915 = vlaneseq
        %v6916 = vshrl.u32 %v6915, 7
        %v6917 = vsub.s32 2, %v6916
        %v6918 = vrot.slane %v6875, %v6917
        %v6919 = vlaneseq
        %v6920 = vshrl.u32 %v6919, 7
        %v6921 = vsub.s32 3, %v6920
        %v6922 = vrot.slane %v6875, %v6921
        %v6923 = vlaneseq
        %v6924 = vshrl.u32 %v6923, 7
        %v6925 = vsub.s32 4, %v6924
        %v6926 = vrot.slane %v6875, %v6925
        %v6927 = vlaneseq
        %v6928 = vshrl.u32 %v6927, 7
        %v6929 = vsub.s32 5, %v6928
        %v6930 = vrot.slane %v6875, %v6929
        %v6931 = vlaneseq
        %v6932 = vshrl.u32 %v6931, 7
        %v6933 = vsub.s32 6, %v6932
        %v6934 = vrot.slane %v6875, %v6933
        %v6935 = vlaneseq
        %v6936 = vshrl.u32 %v6935, 7
        %v6937 = vsub.s32 7, %v6936
        %v6938 = vrot.slane %v6875, %v6937
        %v6939 = vlaneseq
        %v6940 = vshrl.u32 %v6939, 7
        %v6941 = vsub.s32 0, %v6940
        %v6942 = vrot.slane %v6876, %v6941
        %v6943 = vlaneseq
        %v6944 = vshrl.u32 %v6943, 7
        %v6945 = vsub.s32 1, %v6944
        %v6946 = vrot.slane %v6876, %v6945
        %v6947 = vlaneseq
        %v6948 = vshrl.u32 %v6947, 7
        %v6949 = vsub.s32 2, %v6948
        %v6950 = vrot.slane %v6876, %v6949
        %v6951 = vlaneseq
        %v6952 = vshrl.u32 %v6951, 7
        %v6953 = vsub.s32 3, %v6952
        %v6954 = vrot.slane %v6876, %v6953
        %v6955 = vlaneseq
        %v6956 = vshrl.u32 %v6955, 7
        %v6957 = vsub.s32 4, %v6956
        %v6958 = vrot.slane %v6876, %v6957
        %v6959 = vlaneseq
        %v6960 = vshrl.u32 %v6959, 7
        %v6961 = vsub.s32 5, %v6960
        %v6962 = vrot.slane %v6876, %v6961
        %v6963 = vlaneseq
        %v6964 = vshrl.u32 %v6963, 7
        %v6965 = vsub.s32 6, %v6964
        %v6966 = vrot.slane %v6876, %v6965
        %v6967 = vlaneseq
        %v6968 = vshrl.u32 %v6967, 7
        %v6969 = vsub.s32 7, %v6968
        %v6970 = vrot.slane %v6876, %v6969
        %v6971 = vlaneseq
        %v6972 = vshrl.u32 %v6971, 7
        %v6973 = vsub.s32 0, %v6972
        %v6974 = vrot.slane %v6877, %v6973
        %v6975 = vlaneseq
        %v6976 = vshrl.u32 %v6975, 7
        %v6977 = vsub.s32 1, %v6976
        %v6978 = vrot.slane %v6877, %v6977
        %v6979 = vlaneseq
        %v6980 = vshrl.u32 %v6979, 7
        %v6981 = vsub.s32 2, %v6980
        %v6982 = vrot.slane %v6877, %v6981
        %v6983 = vlaneseq
        %v6984 = vshrl.u32 %v6983, 7
        %v6985 = vsub.s32 3, %v6984
        %v6986 = vrot.slane %v6877, %v6985
        %v6987 = vlaneseq
        %v6988 = vshrl.u32 %v6987, 7
        %v6989 = vsub.s32 4, %v6988
        %v6990 = vrot.slane %v6877, %v6989
        %v6991 = vlaneseq
        %v6992 = vshrl.u32 %v6991, 7
        %v6993 = vsub.s32 5, %v6992
        %v6994 = vrot.slane %v6877, %v6993
        %v6995 = vlaneseq
        %v6996 = vshrl.u32 %v6995, 7
        %v6997 = vsub.s32 6, %v6996
        %v6998 = vrot.slane %v6877, %v6997
        %v6999 = vlaneseq
        %v7000 = vshrl.u32 %v6999, 7
        %v7001 = vsub.s32 7, %v7000
        %v7002 = vrot.slane %v6877, %v7001
        %v7003 = vlaneseq
        %v7004 = vshrl.u32 %v7003, 7
        %v7005 = vsub.s32 0, %v7004
        %v7006 = vrot.slane %v6878, %v7005
        %v7007 = vlaneseq
        %v7008 = vshrl.u32 %v7007, 7
        %v7009 = vsub.s32 1, %v7008
        %v7010 = vrot.slane %v6878, %v7009
        %v7011 = vlaneseq
        %v7012 = vshrl.u32 %v7011, 7
        %v7013 = vsub.s32 2, %v7012
        %v7014 = vrot.slane %v6878, %v7013
        %v7015 = vlaneseq
        %v7016 = vshrl.u32 %v7015, 7
        %v7017 = vsub.s32 3, %v7016
        %v7018 = vrot.slane %v6878, %v7017
        %v7019 = vlaneseq
        %v7020 = vshrl.u32 %v7019, 7
        %v7021 = vsub.s32 4, %v7020
        %v7022 = vrot.slane %v6878, %v7021
        %v7023 = vlaneseq
        %v7024 = vshrl.u32 %v7023, 7
        %v7025 = vsub.s32 5, %v7024
        %v7026 = vrot.slane %v6878, %v7025
        %v7027 = vlaneseq
        %v7028 = vshrl.u32 %v7027, 7
        %v7029 = vsub.s32 6, %v7028
        %v7030 = vrot.slane %v6878, %v7029
        %v7031 = vlaneseq
        %v7032 = vshrl.u32 %v7031, 7
        %v7033 = vsub.s32 7, %v7032
        %v7034 = vrot.slane %v6878, %v7033
        %v7035 = vlaneseq
        %v7036 = vshrl.u32 %v7035, 7
        %v7037 = vsub.s32 0, %v7036
        %v7038 = vrot.slane %v6879, %v7037
        %v7039 = vlaneseq
        %v7040 = vshrl.u32 %v7039, 7
        %v7041 = vsub.s32 1, %v7040
        %v7042 = vrot.slane %v6879, %v7041
        %v7043 = vlaneseq
        %v7044 = vshrl.u32 %v7043, 7
        %v7045 = vsub.s32 2, %v7044
        %v7046 = vrot.slane %v6879, %v7045
        %v7047 = vlaneseq
        %v7048 = vshrl.u32 %v7047, 7
        %v7049 = vsub.s32 3, %v7048
        %v7050 = vrot.slane %v6879, %v7049
        %v7051 = vlaneseq
        %v7052 = vshrl.u32 %v7051, 7
        %v7053 = vsub.s32 4, %v7052
        %v7054 = vrot.slane %v6879, %v7053
        %v7055 = vlaneseq
        %v7056 = vshrl.u32 %v7055, 7
        %v7057 = vsub.s32 5, %v7056
        %v7058 = vrot.slane %v6879, %v7057
        %v7059 = vlaneseq
        %v7060 = vshrl.u32 %v7059, 7
        %v7061 = vsub.s32 6, %v7060
        %v7062 = vrot.slane %v6879, %v7061
        %v7063 = vlaneseq
        %v7064 = vshrl.u32 %v7063, 7
        %v7065 = vsub.s32 7, %v7064
        %v7066 = vrot.slane %v6879, %v7065
        %v7067 = vlaneseq
        %v7068 = vshrl.u32 %v7067, 7
        %v7069 = vsub.s32 0, %v7068
        %v7070 = vrot.slane %v6880, %v7069
        %v7071 = vlaneseq
        %v7072 = vshrl.u32 %v7071, 7
        %v7073 = vsub.s32 1, %v7072
        %v7074 = vrot.slane %v6880, %v7073
        %v7075 = vlaneseq
        %v7076 = vshrl.u32 %v7075, 7
        %v7077 = vsub.s32 2, %v7076
        %v7078 = vrot.slane %v6880, %v7077
        %v7079 = vlaneseq
        %v7080 = vshrl.u32 %v7079, 7
        %v7081 = vsub.s32 3, %v7080
        %v7082 = vrot.slane %v6880, %v7081
        %v7083 = vlaneseq
        %v7084 = vshrl.u32 %v7083, 7
        %v7085 = vsub.s32 4, %v7084
        %v7086 = vrot.slane %v6880, %v7085
        %v7087 = vlaneseq
        %v7088 = vshrl.u32 %v7087, 7
        %v7089 = vsub.s32 5, %v7088
        %v7090 = vrot.slane %v6880, %v7089
        %v7091 = vlaneseq
        %v7092 = vshrl.u32 %v7091, 7
        %v7093 = vsub.s32 6, %v7092
        %v7094 = vrot.slane %v6880, %v7093
        %v7095 = vlaneseq
        %v7096 = vshrl.u32 %v7095, 7
        %v7097 = vsub.s32 7, %v7096
        %v7098 = vrot.slane %v6880, %v7097
        %v7099 = vlaneseq
        %v7100 = vshrl.u32 %v7099, 7
        %v7101 = vsub.s32 0, %v7100
        %v7102 = vrot.slane %v6881, %v7101
        %v7103 = vlaneseq
        %v7104 = vshrl.u32 %v7103, 7
        %v7105 = vsub.s32 1, %v7104
        %v7106 = vrot.slane %v6881, %v7105
        %v7107 = vlaneseq
        %v7108 = vshrl.u32 %v7107, 7
        %v7109 = vsub.s32 2, %v7108
        %v7110 = vrot.slane %v6881, %v7109
        %v7111 = vlaneseq
        %v7112 = vshrl.u32 %v7111, 7
        %v7113 = vsub.s32 3, %v7112
        %v7114 = vrot.slane %v6881, %v7113
        %v7115 = vlaneseq
        %v7116 = vshrl.u32 %v7115, 7
        %v7117 = vsub.s32 4, %v7116
        %v7118 = vrot.slane %v6881, %v7117
        %v7119 = vlaneseq
        %v7120 = vshrl.u32 %v7119, 7
        %v7121 = vsub.s32 5, %v7120
        %v7122 = vrot.slane %v6881, %v7121
        %v7123 = vlaneseq
        %v7124 = vshrl.u32 %v7123, 7
        %v7125 = vsub.s32 6, %v7124
        %v7126 = vrot.slane %v6881, %v7125
        %v7127 = vlaneseq
        %v7128 = vshrl.u32 %v7127, 7
        %v7129 = vsub.s32 7, %v7128
        %v7130 = vrot.slane %v6881, %v7129
        %v7131 = vlaneseq
        %v7132 = vshrl.u32 %v7131, 7
        %v7133 = vsub.s32 0, %v7132
        %v7134 = vrot.slane %v6882, %v7133
        %v7135 = vlaneseq
        %v7136 = vshrl.u32 %v7135, 7
        %v7137 = vsub.s32 1, %v7136
        %v7138 = vrot.slane %v6882, %v7137
        %v7139 = vlaneseq
        %v7140 = vshrl.u32 %v7139, 7
        %v7141 = vsub.s32 2, %v7140
        %v7142 = vrot.slane %v6882, %v7141
        %v7143 = vlaneseq
        %v7144 = vshrl.u32 %v7143, 7
        %v7145 = vsub.s32 3, %v7144
        %v7146 = vrot.slane %v6882, %v7145
        %v7147 = vlaneseq
        %v7148 = vshrl.u32 %v7147, 7
        %v7149 = vsub.s32 4, %v7148
        %v7150 = vrot.slane %v6882, %v7149
        %v7151 = vlaneseq
        %v7152 = vshrl.u32 %v7151, 7
        %v7153 = vsub.s32 5, %v7152
        %v7154 = vrot.slane %v6882, %v7153
        %v7155 = vlaneseq
        %v7156 = vshrl.u32 %v7155, 7
        %v7157 = vsub.s32 6, %v7156
        %v7158 = vrot.slane %v6882, %v7157
        %v7159 = vlaneseq
        %v7160 = vshrl.u32 %v7159, 7
        %v7161 = vsub.s32 7, %v7160
        %v7162 = vrot.slane %v6882, %v7161
        %v7163 = vlaneseq
        %v7164 = vshrl.u32 %v7163, 7
        %v7165 = vsub.s32 0, %v7164
        %v7166 = vrot.slane %v6883, %v7165
        %v7167 = vlaneseq
        %v7168 = vshrl.u32 %v7167, 7
        %v7169 = vsub.s32 1, %v7168
        %v7170 = vrot.slane %v6883, %v7169
        %v7171 = vlaneseq
        %v7172 = vshrl.u32 %v7171, 7
        %v7173 = vsub.s32 2, %v7172
        %v7174 = vrot.slane %v6883, %v7173
        %v7175 = vlaneseq
        %v7176 = vshrl.u32 %v7175, 7
        %v7177 = vsub.s32 3, %v7176
        %v7178 = vrot.slane %v6883, %v7177
        %v7179 = vlaneseq
        %v7180 = vshrl.u32 %v7179, 7
        %v7181 = vsub.s32 4, %v7180
        %v7182 = vrot.slane %v6883, %v7181
        %v7183 = vlaneseq
        %v7184 = vshrl.u32 %v7183, 7
        %v7185 = vsub.s32 5, %v7184
        %v7186 = vrot.slane %v6883, %v7185
        %v7187 = vlaneseq
        %v7188 = vshrl.u32 %v7187, 7
        %v7189 = vsub.s32 6, %v7188
        %v7190 = vrot.slane %v6883, %v7189
        %v7191 = vlaneseq
        %v7192 = vshrl.u32 %v7191, 7
        %v7193 = vsub.s32 7, %v7192
        %v7194 = vrot.slane %v6883, %v7193
        %v7195 = vlaneseq
        %v7196 = vshrl.u32 %v7195, 7
        %v7197 = vsub.s32 0, %v7196
        %v7198 = vrot.slane %v6884, %v7197
        %v7199 = vlaneseq
        %v7200 = vshrl.u32 %v7199, 7
        %v7201 = vsub.s32 1, %v7200
        %v7202 = vrot.slane %v6884, %v7201
        %v7203 = vlaneseq
        %v7204 = vshrl.u32 %v7203, 7
        %v7205 = vsub.s32 2, %v7204
        %v7206 = vrot.slane %v6884, %v7205
        %v7207 = vlaneseq
        %v7208 = vshrl.u32 %v7207, 7
        %v7209 = vsub.s32 3, %v7208
        %v7210 = vrot.slane %v6884, %v7209
        %v7211 = vlaneseq
        %v7212 = vshrl.u32 %v7211, 7
        %v7213 = vsub.s32 4, %v7212
        %v7214 = vrot.slane %v6884, %v7213
        %v7215 = vlaneseq
        %v7216 = vshrl.u32 %v7215, 7
        %v7217 = vsub.s32 5, %v7216
        %v7218 = vrot.slane %v6884, %v7217
        %v7219 = vlaneseq
        %v7220 = vshrl.u32 %v7219, 7
        %v7221 = vsub.s32 6, %v7220
        %v7222 = vrot.slane %v6884, %v7221
        %v7223 = vlaneseq
        %v7224 = vshrl.u32 %v7223, 7
        %v7225 = vsub.s32 7, %v7224
        %v7226 = vrot.slane %v6884, %v7225
        %v7227 = vlaneseq
        %v7228 = vshrl.u32 %v7227, 7
        %v7229 = vsub.s32 0, %v7228
        %v7230 = vrot.slane %v6885, %v7229
        %v7231 = vlaneseq
        %v7232 = vshrl.u32 %v7231, 7
        %v7233 = vsub.s32 1, %v7232
        %v7234 = vrot.slane %v6885, %v7233
        %v7235 = vlaneseq
        %v7236 = vshrl.u32 %v7235, 7
        %v7237 = vsub.s32 2, %v7236
        %v7238 = vrot.slane %v6885, %v7237
        %v7239 = vlaneseq
        %v7240 = vshrl.u32 %v7239, 7
        %v7241 = vsub.s32 3, %v7240
        %v7242 = vrot.slane %v6885, %v7241
        %v7243 = vlaneseq
        %v7244 = vshrl.u32 %v7243, 7
        %v7245 = vsub.s32 4, %v7244
        %v7246 = vrot.slane %v6885, %v7245
        %v7247 = vlaneseq
        %v7248 = vshrl.u32 %v7247, 7
        %v7249 = vsub.s32 5, %v7248
        %v7250 = vrot.slane %v6885, %v7249
        %v7251 = vlaneseq
        %v7252 = vshrl.u32 %v7251, 7
        %v7253 = vsub.s32 6, %v7252
        %v7254 = vrot.slane %v6885, %v7253
        %v7255 = vlaneseq
        %v7256 = vshrl.u32 %v7255, 7
        %v7257 = vsub.s32 7, %v7256
        %v7258 = vrot.slane %v6885, %v7257
        %v7259 = vlaneseq
        %v7260 = vshrl.u32 %v7259, 7
        %v7261 = vsub.s32 0, %v7260
        %v7262 = vrot.slane %v6886, %v7261
        %v7263 = vlaneseq
        %v7264 = vshrl.u32 %v7263, 7
        %v7265 = vsub.s32 1, %v7264
        %v7266 = vrot.slane %v6886, %v7265
        %v7267 = vlaneseq
        %v7268 = vshrl.u32 %v7267, 7
        %v7269 = vsub.s32 2, %v7268
        %v7270 = vrot.slane %v6886, %v7269
        %v7271 = vlaneseq
        %v7272 = vshrl.u32 %v7271, 7
        %v7273 = vsub.s32 3, %v7272
        %v7274 = vrot.slane %v6886, %v7273
        %v7275 = vlaneseq
        %v7276 = vshrl.u32 %v7275, 7
        %v7277 = vsub.s32 4, %v7276
        %v7278 = vrot.slane %v6886, %v7277
        %v7279 = vlaneseq
        %v7280 = vshrl.u32 %v7279, 7
        %v7281 = vsub.s32 5, %v7280
        %v7282 = vrot.slane %v6886, %v7281
        %v7283 = vlaneseq
        %v7284 = vshrl.u32 %v7283, 7
        %v7285 = vsub.s32 6, %v7284
        %v7286 = vrot.slane %v6886, %v7285
        %v7287 = vlaneseq
        %v7288 = vshrl.u32 %v7287, 7
        %v7289 = vsub.s32 7, %v7288
        %v7290 = vrot.slane %v6886, %v7289
        %v7291 = vlaneseq
        %v7292 = vshrl.u32 %v7291, 7
        %v7293 = vsub.s32 0, %v7292
        %v7294 = vrot.slane %v6887, %v7293
        %v7295 = vlaneseq
        %v7296 = vshrl.u32 %v7295, 7
        %v7297 = vsub.s32 1, %v7296
        %v7298 = vrot.slane %v6887, %v7297
        %v7299 = vlaneseq
        %v7300 = vshrl.u32 %v7299, 7
        %v7301 = vsub.s32 2, %v7300
        %v7302 = vrot.slane %v6887, %v7301
        %v7303 = vlaneseq
        %v7304 = vshrl.u32 %v7303, 7
        %v7305 = vsub.s32 3, %v7304
        %v7306 = vrot.slane %v6887, %v7305
        %v7307 = vlaneseq
        %v7308 = vshrl.u32 %v7307, 7
        %v7309 = vsub.s32 4, %v7308
        %v7310 = vrot.slane %v6887, %v7309
        %v7311 = vlaneseq
        %v7312 = vshrl.u32 %v7311, 7
        %v7313 = vsub.s32 5, %v7312
        %v7314 = vrot.slane %v6887, %v7313
        %v7315 = vlaneseq
        %v7316 = vshrl.u32 %v7315, 7
        %v7317 = vsub.s32 6, %v7316
        %v7318 = vrot.slane %v6887, %v7317
        %v7319 = vlaneseq
        %v7320 = vshrl.u32 %v7319, 7
        %v7321 = vsub.s32 7, %v7320
        %v7322 = vrot.slane %v6887, %v7321
        %v7323 = vlaneseq
        %v7324 = vshrl.u32 %v7323, 7
        %v7325 = vsub.s32 0, %v7324
        %v7326 = vrot.slane %v6888, %v7325
        %v7327 = vlaneseq
        %v7328 = vshrl.u32 %v7327, 7
        %v7329 = vsub.s32 1, %v7328
        %v7330 = vrot.slane %v6888, %v7329
        %v7331 = vlaneseq
        %v7332 = vshrl.u32 %v7331, 7
        %v7333 = vsub.s32 2, %v7332
        %v7334 = vrot.slane %v6888, %v7333
        %v7335 = vlaneseq
        %v7336 = vshrl.u32 %v7335, 7
        %v7337 = vsub.s32 3, %v7336
        %v7338 = vrot.slane %v6888, %v7337
        %v7339 = vlaneseq
        %v7340 = vshrl.u32 %v7339, 7
        %v7341 = vsub.s32 4, %v7340
        %v7342 = vrot.slane %v6888, %v7341
        %v7343 = vlaneseq
        %v7344 = vshrl.u32 %v7343, 7
        %v7345 = vsub.s32 5, %v7344
        %v7346 = vrot.slane %v6888, %v7345
        %v7347 = vlaneseq
        %v7348 = vshrl.u32 %v7347, 7
        %v7349 = vsub.s32 6, %v7348
        %v7350 = vrot.slane %v6888, %v7349
        %v7351 = vlaneseq
        %v7352 = vshrl.u32 %v7351, 7
        %v7353 = vsub.s32 7, %v7352
        %v7354 = vrot.slane %v6888, %v7353
        %v7355 = vlaneseq
        %v7356 = vshrl.u32 %v7355, 7
        %v7357 = vsub.s32 0, %v7356
        %v7358 = vrot.slane %v6889, %v7357
        %v7359 = vlaneseq
        %v7360 = vshrl.u32 %v7359, 7
        %v7361 = vsub.s32 1, %v7360
        %v7362 = vrot.slane %v6889, %v7361
        %v7363 = vlaneseq
        %v7364 = vshrl.u32 %v7363, 7
        %v7365 = vsub.s32 2, %v7364
        %v7366 = vrot.slane %v6889, %v7365
        %v7367 = vlaneseq
        %v7368 = vshrl.u32 %v7367, 7
        %v7369 = vsub.s32 3, %v7368
        %v7370 = vrot.slane %v6889, %v7369
        %v7371 = vlaneseq
        %v7372 = vshrl.u32 %v7371, 7
        %v7373 = vsub.s32 4, %v7372
        %v7374 = vrot.slane %v6889, %v7373
        %v7375 = vlaneseq
        %v7376 = vshrl.u32 %v7375, 7
        %v7377 = vsub.s32 5, %v7376
        %v7378 = vrot.slane %v6889, %v7377
        %v7379 = vlaneseq
        %v7380 = vshrl.u32 %v7379, 7
        %v7381 = vsub.s32 6, %v7380
        %v7382 = vrot.slane %v6889, %v7381
        %v7383 = vlaneseq
        %v7384 = vshrl.u32 %v7383, 7
        %v7385 = vsub.s32 7, %v7384
        %v7386 = vrot.slane %v6889, %v7385
        %v7387 = vlaneseq
        %v7388 = vshrl.u32 %v7387, 7
        %v7389 = vsub.s32 0, %v7388
        %v7390 = vrot.slane %v6890, %v7389
        %v7391 = vlaneseq
        %v7392 = vshrl.u32 %v7391, 7
        %v7393 = vsub.s32 1, %v7392
        %v7394 = vrot.slane %v6890, %v7393
        %v7395 = vlaneseq
        %v7396 = vshrl.u32 %v7395, 7
        %v7397 = vsub.s32 2, %v7396
        %v7398 = vrot.slane %v6890, %v7397
        %v7399 = vlaneseq
        %v7400 = vshrl.u32 %v7399, 7
        %v7401 = vsub.s32 3, %v7400
        %v7402 = vrot.slane %v6890, %v7401
        %v7403 = vlaneseq
        %v7404 = vshrl.u32 %v7403, 7
        %v7405 = vsub.s32 4, %v7404
        %v7406 = vrot.slane %v6890, %v7405
        %v7407 = vlaneseq
        %v7408 = vshrl.u32 %v7407, 7
        %v7409 = vsub.s32 5, %v7408
        %v7410 = vrot.slane %v6890, %v7409
        %v7411 = vlaneseq
        %v7412 = vshrl.u32 %v7411, 7
        %v7413 = vsub.s32 6, %v7412
        %v7414 = vrot.slane %v6890, %v7413
        %v7415 = vlaneseq
        %v7416 = vshrl.u32 %v7415, 7
        %v7417 = vsub.s32 7, %v7416
        %v7418 = vrot.slane %v6890, %v7417
        %v7547 = vmul.f32 %v5420, %v6910
        %v7548 = vmul.f32 %v5422, %v6914
        %v7549 = vmul.f32 %v5424, %v6918
        %v7550 = vmul.f32 %v5426, %v6922
        %v7551 = vmul.f32 %v5428, %v6926
        %v7552 = vmul.f32 %v5430, %v6930
        %v7553 = vmul.f32 %v5432, %v6934
        %v7554 = vmul.f32 %v5434, %v6938
        %v7555 = vmul.f32 %v5436, %v6942
        %v7556 = vmul.f32 %v5438, %v6946
        %v7557 = vmul.f32 %v5440, %v6950
        %v7558 = vmul.f32 %v5442, %v6954
        %v7559 = vmul.f32 %v5444, %v6958
        %v7560 = vmul.f32 %v5446, %v6962
        %v7561 = vmul.f32 %v5448, %v6966
        %v7562 = vmul.f32 %v5450, %v6970
        %v7563 = vmul.f32 %v5452, %v6974
        %v7564 = vmul.f32 %v5454, %v6978
        %v7565 = vmul.f32 %v5456, %v6982
        %v7566 = vmul.f32 %v5458, %v6986
        %v7567 = vmul.f32 %v5460, %v6990
        %v7568 = vmul.f32 %v5462, %v6994
        %v7569 = vmul.f32 %v5464, %v6998
        %v7570 = vmul.f32 %v5466, %v7002
        %v7571 = vmul.f32 %v5468, %v7006
        %v7572 = vmul.f32 %v5470, %v7010
        %v7573 = vmul.f32 %v5472, %v7014
        %v7574 = vmul.f32 %v5474, %v7018
        %v7575 = vmul.f32 %v5476, %v7022
        %v7576 = vmul.f32 %v5478, %v7026
        %v7577 = vmul.f32 %v5480, %v7030
        %v7578 = vmul.f32 %v5482, %v7034
        %v7579 = vmul.f32 %v5484, %v7038
        %v7580 = vmul.f32 %v5486, %v7042
        %v7581 = vmul.f32 %v5488, %v7046
        %v7582 = vmul.f32 %v5490, %v7050
        %v7583 = vmul.f32 %v5492, %v7054
        %v7584 = vmul.f32 %v5494, %v7058
        %v7585 = vmul.f32 %v5496, %v7062
        %v7586 = vmul.f32 %v5498, %v7066
        %v7587 = vmul.f32 %v5500, %v7070
        %v7588 = vmul.f32 %v5502, %v7074
        %v7589 = vmul.f32 %v5504, %v7078
        %v7590 = vmul.f32 %v5506, %v7082
        %v7591 = vmul.f32 %v5508, %v7086
        %v7592 = vmul.f32 %v5510, %v7090
        %v7593 = vmul.f32 %v5512, %v7094
        %v7594 = vmul.f32 %v5514, %v7098
        %v7595 = vmul.f32 %v5516, %v7102
        %v7596 = vmul.f32 %v5518, %v7106
        %v7597 = vmul.f32 %v5520, %v7110
        %v7598 = vmul.f32 %v5522, %v7114
        %v7599 = vmul.f32 %v5524, %v7118
        %v7600 = vmul.f32 %v5526, %v7122
        %v7601 = vmul.f32 %v5528, %v7126
        %v7602 = vmul.f32 %v5530, %v7130
        %v7603 = vmul.f32 %v5532, %v7134
        %v7604 = vmul.f32 %v5534, %v7138
        %v7605 = vmul.f32 %v5536, %v7142
        %v7606 = vmul.f32 %v5538, %v7146
        %v7607 = vmul.f32 %v5540, %v7150
        %v7608 = vmul.f32 %v5542, %v7154
        %v7609 = vmul.f32 %v5544, %v7158
        %v7610 = vmul.f32 %v5546, %v7162
        %v7611 = vmul.f32 %v5548, %v7166
        %v7612 = vmul.f32 %v5550, %v7170
        %v7613 = vmul.f32 %v5552, %v7174
        %v7614 = vmul.f32 %v5554, %v7178
        %v7615 = vmul.f32 %v5556, %v7182
        %v7616 = vmul.f32 %v5558, %v7186
        %v7617 = vmul.f32 %v5560, %v7190
        %v7618 = vmul.f32 %v5562, %v7194
        %v7619 = vmul.f32 %v5564, %v7198
        %v7620 = vmul.f32 %v5566, %v7202
        %v7621 = vmul.f32 %v5568, %v7206
        %v7622 = vmul.f32 %v5570, %v7210
        %v7623 = vmul.f32 %v5572, %v7214
        %v7624 = vmul.f32 %v5574, %v7218
        %v7625 = vmul.f32 %v5576, %v7222
        %v7626 = vmul.f32 %v5578, %v7226
        %v7627 = vmul.f32 %v5580, %v7230
        %v7628 = vmul.f32 %v5582, %v7234
        %v7629 = vmul.f32 %v5584, %v7238
        %v7630 = vmul.f32 %v5586, %v7242
        %v7631 = vmul.f32 %v5588, %v7246
        %v7632 = vmul.f32 %v5590, %v7250
        %v7633 = vmul.f32 %v5592, %v7254
        %v7634 = vmul.f32 %v5594, %v7258
        %v7635 = vmul.f32 %v5596, %v7262
        %v7636 = vmul.f32 %v5598, %v7266
        %v7637 = vmul.f32 %v5600, %v7270
        %v7638 = vmul.f32 %v5602, %v7274
        %v7639 = vmul.f32 %v5604, %v7278
        %v7640 = vmul.f32 %v5606, %v7282
        %v7641 = vmul.f32 %v5608, %v7286
        %v7642 = vmul.f32 %v5610, %v7290
        %v7643 = vmul.f32 %v5612, %v7294
        %v7644 = vmul.f32 %v5614, %v7298
        %v7645 = vmul.f32 %v5616, %v7302
        %v7646 = vmul.f32 %v5618, %v7306
        %v7647 = vmul.f32 %v5620, %v7310
        %v7648 = vmul.f32 %v5622, %v7314
        %v7649 = vmul.f32 %v5624, %v7318
        %v7650 = vmul.f32 %v5626, %v7322
        %v7651 = vmul.f32 %v5628, %v7326
        %v7652 = vmul.f32 %v5630, %v7330
        %v7653 = vmul.f32 %v5632, %v7334
        %v7654 = vmul.f32 %v5634, %v7338
        %v7655 = vmul.f32 %v5636, %v7342
        %v7656 = vmul.f32 %v5638, %v7346
        %v7657 = vmul.f32 %v5640, %v7350
        %v7658 = vmul.f32 %v5642, %v7354
        %v7659 = vmul.f32 %v5644, %v7358
        %v7660 = vmul.f32 %v5646, %v7362
        %v7661 = vmul.f32 %v5648, %v7366
        %v7662 = vmul.f32 %v5650, %v7370
        %v7663 = vmul.f32 %v5652, %v7374
        %v7664 = vmul.f32 %v5654, %v7378
        %v7665 = vmul.f32 %v5656, %v7382
        %v7666 = vmul.f32 %v5658, %v7386
        %v7667 = vmul.f32 %v5660, %v7390
        %v7668 = vmul.f32 %v5662, %v7394
        %v7669 = vmul.f32 %v5664, %v7398
        %v7670 = vmul.f32 %v5666, %v7402
        %v7671 = vmul.f32 %v5668, %v7406
        %v7672 = vmul.f32 %v5670, %v7410
        %v7673 = vmul.f32 %v5672, %v7414
        %v7674 = vmul.f32 %v5674, %v7418
        %7676 = vset.pattern.permute.xlu0 0
        %7677 = vperm.xlu0 %7676, %v7547
        %v7678 = vpop.permute.xlu0 %7677
        %7681 = vset.pattern.permute.xlu0 0
        %7682 = vperm.xlu0 %7681, %v7548
        %v7683 = vpop.permute.xlu0 %7682
        %7686 = vset.pattern.permute.xlu0 0
        %7687 = vperm.xlu0 %7686, %v7549
        %v7688 = vpop.permute.xlu0 %7687
        %7691 = vset.pattern.permute.xlu0 0
        %7692 = vperm.xlu0 %7691, %v7550
        %v7693 = vpop.permute.xlu0 %7692
        %7696 = vset.pattern.permute.xlu0 0
        %7697 = vperm.xlu0 %7696, %v7551
        %v7698 = vpop.permute.xlu0 %7697
        %7701 = vset.pattern.permute.xlu0 0
        %7702 = vperm.xlu0 %7701, %v7552
        %v7703 = vpop.permute.xlu0 %7702
        %7706 = vset.pattern.permute.xlu0 0
        %7707 = vperm.xlu0 %7706, %v7553
        %v7708 = vpop.permute.xlu0 %7707
        %7711 = vset.pattern.permute.xlu0 0
        %7712 = vperm.xlu0 %7711, %v7554
        %v7713 = vpop.permute.xlu0 %7712
        %7716 = vset.pattern.permute.xlu0 0
        %7717 = vperm.xlu0 %7716, %v7555
        %v7718 = vpop.permute.xlu0 %7717
        %7721 = vset.pattern.permute.xlu0 0
        %7722 = vperm.xlu0 %7721, %v7556
        %v7723 = vpop.permute.xlu0 %7722
        %7726 = vset.pattern.permute.xlu0 0
        %7727 = vperm.xlu0 %7726, %v7557
        %v7728 = vpop.permute.xlu0 %7727
        %7731 = vset.pattern.permute.xlu0 0
        %7732 = vperm.xlu0 %7731, %v7558
        %v7733 = vpop.permute.xlu0 %7732
        %7736 = vset.pattern.permute.xlu0 0
        %7737 = vperm.xlu0 %7736, %v7559
        %v7738 = vpop.permute.xlu0 %7737
        %7741 = vset.pattern.permute.xlu0 0
        %7742 = vperm.xlu0 %7741, %v7560
        %v7743 = vpop.permute.xlu0 %7742
        %7746 = vset.pattern.permute.xlu0 0
        %7747 = vperm.xlu0 %7746, %v7561
        %v7748 = vpop.permute.xlu0 %7747
        %7751 = vset.pattern.permute.xlu0 0
        %7752 = vperm.xlu0 %7751, %v7562
        %v7753 = vpop.permute.xlu0 %7752
        %7756 = vset.pattern.permute.xlu0 0
        %7757 = vperm.xlu0 %7756, %v7563
        %v7758 = vpop.permute.xlu0 %7757
        %7761 = vset.pattern.permute.xlu0 0
        %7762 = vperm.xlu0 %7761, %v7564
        %v7763 = vpop.permute.xlu0 %7762
        %7766 = vset.pattern.permute.xlu0 0
        %7767 = vperm.xlu0 %7766, %v7565
        %v7768 = vpop.permute.xlu0 %7767
        %7771 = vset.pattern.permute.xlu0 0
        %7772 = vperm.xlu0 %7771, %v7566
        %v7773 = vpop.permute.xlu0 %7772
        %7776 = vset.pattern.permute.xlu0 0
        %7777 = vperm.xlu0 %7776, %v7567
        %v7778 = vpop.permute.xlu0 %7777
        %7781 = vset.pattern.permute.xlu0 0
        %7782 = vperm.xlu0 %7781, %v7568
        %v7783 = vpop.permute.xlu0 %7782
        %7786 = vset.pattern.permute.xlu0 0
        %7787 = vperm.xlu0 %7786, %v7569
        %v7788 = vpop.permute.xlu0 %7787
        %7791 = vset.pattern.permute.xlu0 0
        %7792 = vperm.xlu0 %7791, %v7570
        %v7793 = vpop.permute.xlu0 %7792
        %7796 = vset.pattern.permute.xlu0 0
        %7797 = vperm.xlu0 %7796, %v7571
        %v7798 = vpop.permute.xlu0 %7797
        %7801 = vset.pattern.permute.xlu0 0
        %7802 = vperm.xlu0 %7801, %v7572
        %v7803 = vpop.permute.xlu0 %7802
        %7806 = vset.pattern.permute.xlu0 0
        %7807 = vperm.xlu0 %7806, %v7573
        %v7808 = vpop.permute.xlu0 %7807
        %7811 = vset.pattern.permute.xlu0 0
        %7812 = vperm.xlu0 %7811, %v7574
        %v7813 = vpop.permute.xlu0 %7812
        %7816 = vset.pattern.permute.xlu0 0
        %7817 = vperm.xlu0 %7816, %v7575
        %v7818 = vpop.permute.xlu0 %7817
        %7821 = vset.pattern.permute.xlu0 0
        %7822 = vperm.xlu0 %7821, %v7576
        %v7823 = vpop.permute.xlu0 %7822
        %7826 = vset.pattern.permute.xlu0 0
        %7827 = vperm.xlu0 %7826, %v7577
        %v7828 = vpop.permute.xlu0 %7827
        %7831 = vset.pattern.permute.xlu0 0
        %7832 = vperm.xlu0 %7831, %v7578
        %v7833 = vpop.permute.xlu0 %7832
        %7836 = vset.pattern.permute.xlu0 0
        %7837 = vperm.xlu0 %7836, %v7579
        %v7838 = vpop.permute.xlu0 %7837
        %7841 = vset.pattern.permute.xlu0 0
        %7842 = vperm.xlu0 %7841, %v7580
        %v7843 = vpop.permute.xlu0 %7842
        %7846 = vset.pattern.permute.xlu0 0
        %7847 = vperm.xlu0 %7846, %v7581
        %v7848 = vpop.permute.xlu0 %7847
        %7851 = vset.pattern.permute.xlu0 0
        %7852 = vperm.xlu0 %7851, %v7582
        %v7853 = vpop.permute.xlu0 %7852
        %7856 = vset.pattern.permute.xlu0 0
        %7857 = vperm.xlu0 %7856, %v7583
        %v7858 = vpop.permute.xlu0 %7857
        %7861 = vset.pattern.permute.xlu0 0
        %7862 = vperm.xlu0 %7861, %v7584
        %v7863 = vpop.permute.xlu0 %7862
        %7866 = vset.pattern.permute.xlu0 0
        %7867 = vperm.xlu0 %7866, %v7585
        %v7868 = vpop.permute.xlu0 %7867
        %7871 = vset.pattern.permute.xlu0 0
        %7872 = vperm.xlu0 %7871, %v7586
        %v7873 = vpop.permute.xlu0 %7872
        %7876 = vset.pattern.permute.xlu0 0
        %7877 = vperm.xlu0 %7876, %v7587
        %v7878 = vpop.permute.xlu0 %7877
        %7881 = vset.pattern.permute.xlu0 0
        %7882 = vperm.xlu0 %7881, %v7588
        %v7883 = vpop.permute.xlu0 %7882
        %7886 = vset.pattern.permute.xlu0 0
        %7887 = vperm.xlu0 %7886, %v7589
        %v7888 = vpop.permute.xlu0 %7887
        %7891 = vset.pattern.permute.xlu0 0
        %7892 = vperm.xlu0 %7891, %v7590
        %v7893 = vpop.permute.xlu0 %7892
        %7896 = vset.pattern.permute.xlu0 0
        %7897 = vperm.xlu0 %7896, %v7591
        %v7898 = vpop.permute.xlu0 %7897
        %7901 = vset.pattern.permute.xlu0 0
        %7902 = vperm.xlu0 %7901, %v7592
        %v7903 = vpop.permute.xlu0 %7902
        %7906 = vset.pattern.permute.xlu0 0
        %7907 = vperm.xlu0 %7906, %v7593
        %v7908 = vpop.permute.xlu0 %7907
        %7911 = vset.pattern.permute.xlu0 0
        %7912 = vperm.xlu0 %7911, %v7594
        %v7913 = vpop.permute.xlu0 %7912
        %7916 = vset.pattern.permute.xlu0 0
        %7917 = vperm.xlu0 %7916, %v7595
        %v7918 = vpop.permute.xlu0 %7917
        %7921 = vset.pattern.permute.xlu0 0
        %7922 = vperm.xlu0 %7921, %v7596
        %v7923 = vpop.permute.xlu0 %7922
        %7926 = vset.pattern.permute.xlu0 0
        %7927 = vperm.xlu0 %7926, %v7597
        %v7928 = vpop.permute.xlu0 %7927
        %7931 = vset.pattern.permute.xlu0 0
        %7932 = vperm.xlu0 %7931, %v7598
        %v7933 = vpop.permute.xlu0 %7932
        %7936 = vset.pattern.permute.xlu0 0
        %7937 = vperm.xlu0 %7936, %v7599
        %v7938 = vpop.permute.xlu0 %7937
        %7941 = vset.pattern.permute.xlu0 0
        %7942 = vperm.xlu0 %7941, %v7600
        %v7943 = vpop.permute.xlu0 %7942
        %7946 = vset.pattern.permute.xlu0 0
        %7947 = vperm.xlu0 %7946, %v7601
        %v7948 = vpop.permute.xlu0 %7947
        %7951 = vset.pattern.permute.xlu0 0
        %7952 = vperm.xlu0 %7951, %v7602
        %v7953 = vpop.permute.xlu0 %7952
        %7956 = vset.pattern.permute.xlu0 0
        %7957 = vperm.xlu0 %7956, %v7603
        %v7958 = vpop.permute.xlu0 %7957
        %7961 = vset.pattern.permute.xlu0 0
        %7962 = vperm.xlu0 %7961, %v7604
        %v7963 = vpop.permute.xlu0 %7962
        %7966 = vset.pattern.permute.xlu0 0
        %7967 = vperm.xlu0 %7966, %v7605
        %v7968 = vpop.permute.xlu0 %7967
        %7971 = vset.pattern.permute.xlu0 0
        %7972 = vperm.xlu0 %7971, %v7606
        %v7973 = vpop.permute.xlu0 %7972
        %7976 = vset.pattern.permute.xlu0 0
        %7977 = vperm.xlu0 %7976, %v7607
        %v7978 = vpop.permute.xlu0 %7977
        %7981 = vset.pattern.permute.xlu0 0
        %7982 = vperm.xlu0 %7981, %v7608
        %v7983 = vpop.permute.xlu0 %7982
        %7986 = vset.pattern.permute.xlu0 0
        %7987 = vperm.xlu0 %7986, %v7609
        %v7988 = vpop.permute.xlu0 %7987
        %7991 = vset.pattern.permute.xlu0 0
        %7992 = vperm.xlu0 %7991, %v7610
        %v7993 = vpop.permute.xlu0 %7992
        %7996 = vset.pattern.permute.xlu0 0
        %7997 = vperm.xlu0 %7996, %v7611
        %v7998 = vpop.permute.xlu0 %7997
        %8001 = vset.pattern.permute.xlu0 0
        %8002 = vperm.xlu0 %8001, %v7612
        %v8003 = vpop.permute.xlu0 %8002
        %8006 = vset.pattern.permute.xlu0 0
        %8007 = vperm.xlu0 %8006, %v7613
        %v8008 = vpop.permute.xlu0 %8007
        %8011 = vset.pattern.permute.xlu0 0
        %8012 = vperm.xlu0 %8011, %v7614
        %v8013 = vpop.permute.xlu0 %8012
        %8016 = vset.pattern.permute.xlu0 0
        %8017 = vperm.xlu0 %8016, %v7615
        %v8018 = vpop.permute.xlu0 %8017
        %8021 = vset.pattern.permute.xlu0 0
        %8022 = vperm.xlu0 %8021, %v7616
        %v8023 = vpop.permute.xlu0 %8022
        %8026 = vset.pattern.permute.xlu0 0
        %8027 = vperm.xlu0 %8026, %v7617
        %v8028 = vpop.permute.xlu0 %8027
        %8031 = vset.pattern.permute.xlu0 0
        %8032 = vperm.xlu0 %8031, %v7618
        %v8033 = vpop.permute.xlu0 %8032
        %8036 = vset.pattern.permute.xlu0 0
        %8037 = vperm.xlu0 %8036, %v7619
        %v8038 = vpop.permute.xlu0 %8037
        %8041 = vset.pattern.permute.xlu0 0
        %8042 = vperm.xlu0 %8041, %v7620
        %v8043 = vpop.permute.xlu0 %8042
        %8046 = vset.pattern.permute.xlu0 0
        %8047 = vperm.xlu0 %8046, %v7621
        %v8048 = vpop.permute.xlu0 %8047
        %8051 = vset.pattern.permute.xlu0 0
        %8052 = vperm.xlu0 %8051, %v7622
        %v8053 = vpop.permute.xlu0 %8052
        %8056 = vset.pattern.permute.xlu0 0
        %8057 = vperm.xlu0 %8056, %v7623
        %v8058 = vpop.permute.xlu0 %8057
        %8061 = vset.pattern.permute.xlu0 0
        %8062 = vperm.xlu0 %8061, %v7624
        %v8063 = vpop.permute.xlu0 %8062
        %8066 = vset.pattern.permute.xlu0 0
        %8067 = vperm.xlu0 %8066, %v7625
        %v8068 = vpop.permute.xlu0 %8067
        %8071 = vset.pattern.permute.xlu0 0
        %8072 = vperm.xlu0 %8071, %v7626
        %v8073 = vpop.permute.xlu0 %8072
        %8076 = vset.pattern.permute.xlu0 0
        %8077 = vperm.xlu0 %8076, %v7627
        %v8078 = vpop.permute.xlu0 %8077
        %8081 = vset.pattern.permute.xlu0 0
        %8082 = vperm.xlu0 %8081, %v7628
        %v8083 = vpop.permute.xlu0 %8082
        %8086 = vset.pattern.permute.xlu0 0
        %8087 = vperm.xlu0 %8086, %v7629
        %v8088 = vpop.permute.xlu0 %8087
        %8091 = vset.pattern.permute.xlu0 0
        %8092 = vperm.xlu0 %8091, %v7630
        %v8093 = vpop.permute.xlu0 %8092
        %8096 = vset.pattern.permute.xlu0 0
        %8097 = vperm.xlu0 %8096, %v7631
        %v8098 = vpop.permute.xlu0 %8097
        %8101 = vset.pattern.permute.xlu0 0
        %8102 = vperm.xlu0 %8101, %v7632
        %v8103 = vpop.permute.xlu0 %8102
        %8106 = vset.pattern.permute.xlu0 0
        %8107 = vperm.xlu0 %8106, %v7633
        %v8108 = vpop.permute.xlu0 %8107
        %8111 = vset.pattern.permute.xlu0 0
        %8112 = vperm.xlu0 %8111, %v7634
        %v8113 = vpop.permute.xlu0 %8112
        %8116 = vset.pattern.permute.xlu0 0
        %8117 = vperm.xlu0 %8116, %v7635
        %v8118 = vpop.permute.xlu0 %8117
        %8121 = vset.pattern.permute.xlu0 0
        %8122 = vperm.xlu0 %8121, %v7636
        %v8123 = vpop.permute.xlu0 %8122
        %8126 = vset.pattern.permute.xlu0 0
        %8127 = vperm.xlu0 %8126, %v7637
        %v8128 = vpop.permute.xlu0 %8127
        %8131 = vset.pattern.permute.xlu0 0
        %8132 = vperm.xlu0 %8131, %v7638
        %v8133 = vpop.permute.xlu0 %8132
        %8136 = vset.pattern.permute.xlu0 0
        %8137 = vperm.xlu0 %8136, %v7639
        %v8138 = vpop.permute.xlu0 %8137
        %8141 = vset.pattern.permute.xlu0 0
        %8142 = vperm.xlu0 %8141, %v7640
        %v8143 = vpop.permute.xlu0 %8142
        %8146 = vset.pattern.permute.xlu0 0
        %8147 = vperm.xlu0 %8146, %v7641
        %v8148 = vpop.permute.xlu0 %8147
        %8151 = vset.pattern.permute.xlu0 0
        %8152 = vperm.xlu0 %8151, %v7642
        %v8153 = vpop.permute.xlu0 %8152
        %8156 = vset.pattern.permute.xlu0 0
        %8157 = vperm.xlu0 %8156, %v7643
        %v8158 = vpop.permute.xlu0 %8157
        %8161 = vset.pattern.permute.xlu0 0
        %8162 = vperm.xlu0 %8161, %v7644
        %v8163 = vpop.permute.xlu0 %8162
        %8166 = vset.pattern.permute.xlu0 0
        %8167 = vperm.xlu0 %8166, %v7645
        %v8168 = vpop.permute.xlu0 %8167
        %8171 = vset.pattern.permute.xlu0 0
        %8172 = vperm.xlu0 %8171, %v7646
        %v8173 = vpop.permute.xlu0 %8172
        %8176 = vset.pattern.permute.xlu0 0
        %8177 = vperm.xlu0 %8176, %v7647
        %v8178 = vpop.permute.xlu0 %8177
        %8181 = vset.pattern.permute.xlu0 0
        %8182 = vperm.xlu0 %8181, %v7648
        %v8183 = vpop.permute.xlu0 %8182
        %8186 = vset.pattern.permute.xlu0 0
        %8187 = vperm.xlu0 %8186, %v7649
        %v8188 = vpop.permute.xlu0 %8187
        %8191 = vset.pattern.permute.xlu0 0
        %8192 = vperm.xlu0 %8191, %v7650
        %v8193 = vpop.permute.xlu0 %8192
        %8196 = vset.pattern.permute.xlu0 0
        %8197 = vperm.xlu0 %8196, %v7651
        %v8198 = vpop.permute.xlu0 %8197
        %8201 = vset.pattern.permute.xlu0 0
        %8202 = vperm.xlu0 %8201, %v7652
        %v8203 = vpop.permute.xlu0 %8202
        %8206 = vset.pattern.permute.xlu0 0
        %8207 = vperm.xlu0 %8206, %v7653
        %v8208 = vpop.permute.xlu0 %8207
        %8211 = vset.pattern.permute.xlu0 0
        %8212 = vperm.xlu0 %8211, %v7654
        %v8213 = vpop.permute.xlu0 %8212
        %8216 = vset.pattern.permute.xlu0 0
        %8217 = vperm.xlu0 %8216, %v7655
        %v8218 = vpop.permute.xlu0 %8217
        %8221 = vset.pattern.permute.xlu0 0
        %8222 = vperm.xlu0 %8221, %v7656
        %v8223 = vpop.permute.xlu0 %8222
        %8226 = vset.pattern.permute.xlu0 0
        %8227 = vperm.xlu0 %8226, %v7657
        %v8228 = vpop.permute.xlu0 %8227
        %8231 = vset.pattern.permute.xlu0 0
        %8232 = vperm.xlu0 %8231, %v7658
        %v8233 = vpop.permute.xlu0 %8232
        %8236 = vset.pattern.permute.xlu0 0
        %8237 = vperm.xlu0 %8236, %v7659
        %v8238 = vpop.permute.xlu0 %8237
        %8241 = vset.pattern.permute.xlu0 0
        %8242 = vperm.xlu0 %8241, %v7660
        %v8243 = vpop.permute.xlu0 %8242
        %8246 = vset.pattern.permute.xlu0 0
        %8247 = vperm.xlu0 %8246, %v7661
        %v8248 = vpop.permute.xlu0 %8247
        %8251 = vset.pattern.permute.xlu0 0
        %8252 = vperm.xlu0 %8251, %v7662
        %v8253 = vpop.permute.xlu0 %8252
        %8256 = vset.pattern.permute.xlu0 0
        %8257 = vperm.xlu0 %8256, %v7663
        %v8258 = vpop.permute.xlu0 %8257
        %8261 = vset.pattern.permute.xlu0 0
        %8262 = vperm.xlu0 %8261, %v7664
        %v8263 = vpop.permute.xlu0 %8262
        %8266 = vset.pattern.permute.xlu0 0
        %8267 = vperm.xlu0 %8266, %v7665
        %v8268 = vpop.permute.xlu0 %8267
        %8271 = vset.pattern.permute.xlu0 0
        %8272 = vperm.xlu0 %8271, %v7666
        %v8273 = vpop.permute.xlu0 %8272
        %8276 = vset.pattern.permute.xlu0 0
        %8277 = vperm.xlu0 %8276, %v7667
        %v8278 = vpop.permute.xlu0 %8277
        %8281 = vset.pattern.permute.xlu0 0
        %8282 = vperm.xlu0 %8281, %v7668
        %v8283 = vpop.permute.xlu0 %8282
        %8286 = vset.pattern.permute.xlu0 0
        %8287 = vperm.xlu0 %8286, %v7669
        %v8288 = vpop.permute.xlu0 %8287
        %8291 = vset.pattern.permute.xlu0 0
        %8292 = vperm.xlu0 %8291, %v7670
        %v8293 = vpop.permute.xlu0 %8292
        %8296 = vset.pattern.permute.xlu0 0
        %8297 = vperm.xlu0 %8296, %v7671
        %v8298 = vpop.permute.xlu0 %8297
        %8301 = vset.pattern.permute.xlu0 0
        %8302 = vperm.xlu0 %8301, %v7672
        %v8303 = vpop.permute.xlu0 %8302
        %8306 = vset.pattern.permute.xlu0 0
        %8307 = vperm.xlu0 %8306, %v7673
        %v8308 = vpop.permute.xlu0 %8307
        %8311 = vset.pattern.permute.xlu0 0
        %8312 = vperm.xlu0 %8311, %v7674
        %v8313 = vpop.permute.xlu0 %8312
        %v8315 = vmul.f32 %v7678, %v1141
        %v8316 = vmul.f32 %v7683, %v1146
        %v8317 = vmul.f32 %v7688, %v1151
        %v8318 = vmul.f32 %v7693, %v1156
        %v8319 = vmul.f32 %v7698, %v1161
        %v8320 = vmul.f32 %v7703, %v1166
        %v8321 = vmul.f32 %v7708, %v1171
        %v8322 = vmul.f32 %v7713, %v1176
        %v8323 = vmul.f32 %v7718, %v1181
        %v8324 = vmul.f32 %v7723, %v1186
        %v8325 = vmul.f32 %v7728, %v1191
        %v8326 = vmul.f32 %v7733, %v1196
        %v8327 = vmul.f32 %v7738, %v1201
        %v8328 = vmul.f32 %v7743, %v1206
        %v8329 = vmul.f32 %v7748, %v1211
        %v8330 = vmul.f32 %v7753, %v1216
        %v8331 = vmul.f32 %v7758, %v1221
        %v8332 = vmul.f32 %v7763, %v1226
        %v8333 = vmul.f32 %v7768, %v1231
        %v8334 = vmul.f32 %v7773, %v1236
        %v8335 = vmul.f32 %v7778, %v1241
        %v8336 = vmul.f32 %v7783, %v1246
        %v8337 = vmul.f32 %v7788, %v1251
        %v8338 = vmul.f32 %v7793, %v1256
        %v8339 = vmul.f32 %v7798, %v1261
        %v8340 = vmul.f32 %v7803, %v1266
        %v8341 = vmul.f32 %v7808, %v1271
        %v8342 = vmul.f32 %v7813, %v1276
        %v8343 = vmul.f32 %v7818, %v1281
        %v8344 = vmul.f32 %v7823, %v1286
        %v8345 = vmul.f32 %v7828, %v1291
        %v8346 = vmul.f32 %v7833, %v1296
        %v8347 = vmul.f32 %v7838, %v1301
        %v8348 = vmul.f32 %v7843, %v1306
        %v8349 = vmul.f32 %v7848, %v1311
        %v8350 = vmul.f32 %v7853, %v1316
        %v8351 = vmul.f32 %v7858, %v1321
        %v8352 = vmul.f32 %v7863, %v1326
        %v8353 = vmul.f32 %v7868, %v1331
        %v8354 = vmul.f32 %v7873, %v1336
        %v8355 = vmul.f32 %v7878, %v1341
        %v8356 = vmul.f32 %v7883, %v1346
        %v8357 = vmul.f32 %v7888, %v1351
        %v8358 = vmul.f32 %v7893, %v1356
        %v8359 = vmul.f32 %v7898, %v1361
        %v8360 = vmul.f32 %v7903, %v1366
        %v8361 = vmul.f32 %v7908, %v1371
        %v8362 = vmul.f32 %v7913, %v1376
        %v8363 = vmul.f32 %v7918, %v1381
        %v8364 = vmul.f32 %v7923, %v1386
        %v8365 = vmul.f32 %v7928, %v1391
        %v8366 = vmul.f32 %v7933, %v1396
        %v8367 = vmul.f32 %v7938, %v1401
        %v8368 = vmul.f32 %v7943, %v1406
        %v8369 = vmul.f32 %v7948, %v1411
        %v8370 = vmul.f32 %v7953, %v1416
        %v8371 = vmul.f32 %v7958, %v1421
        %v8372 = vmul.f32 %v7963, %v1426
        %v8373 = vmul.f32 %v7968, %v1431
        %v8374 = vmul.f32 %v7973, %v1436
        %v8375 = vmul.f32 %v7978, %v1441
        %v8376 = vmul.f32 %v7983, %v1446
        %v8377 = vmul.f32 %v7988, %v1451
        %v8378 = vmul.f32 %v7993, %v1456
        %v8379 = vmul.f32 %v7998, %v1461
        %v8380 = vmul.f32 %v8003, %v1466
        %v8381 = vmul.f32 %v8008, %v1471
        %v8382 = vmul.f32 %v8013, %v1476
        %v8383 = vmul.f32 %v8018, %v1481
        %v8384 = vmul.f32 %v8023, %v1486
        %v8385 = vmul.f32 %v8028, %v1491
        %v8386 = vmul.f32 %v8033, %v1496
        %v8387 = vmul.f32 %v8038, %v1501
        %v8388 = vmul.f32 %v8043, %v1506
        %v8389 = vmul.f32 %v8048, %v1511
        %v8390 = vmul.f32 %v8053, %v1516
        %v8391 = vmul.f32 %v8058, %v1521
        %v8392 = vmul.f32 %v8063, %v1526
        %v8393 = vmul.f32 %v8068, %v1531
        %v8394 = vmul.f32 %v8073, %v1536
        %v8395 = vmul.f32 %v8078, %v1541
        %v8396 = vmul.f32 %v8083, %v1546
        %v8397 = vmul.f32 %v8088, %v1551
        %v8398 = vmul.f32 %v8093, %v1556
        %v8399 = vmul.f32 %v8098, %v1561
        %v8400 = vmul.f32 %v8103, %v1566
        %v8401 = vmul.f32 %v8108, %v1571
        %v8402 = vmul.f32 %v8113, %v1576
        %v8403 = vmul.f32 %v8118, %v1581
        %v8404 = vmul.f32 %v8123, %v1586
        %v8405 = vmul.f32 %v8128, %v1591
        %v8406 = vmul.f32 %v8133, %v1596
        %v8407 = vmul.f32 %v8138, %v1601
        %v8408 = vmul.f32 %v8143, %v1606
        %v8409 = vmul.f32 %v8148, %v1611
        %v8410 = vmul.f32 %v8153, %v1616
        %v8411 = vmul.f32 %v8158, %v1621
        %v8412 = vmul.f32 %v8163, %v1626
        %v8413 = vmul.f32 %v8168, %v1631
        %v8414 = vmul.f32 %v8173, %v1636
        %v8415 = vmul.f32 %v8178, %v1641
        %v8416 = vmul.f32 %v8183, %v1646
        %v8417 = vmul.f32 %v8188, %v1651
        %v8418 = vmul.f32 %v8193, %v1656
        %v8419 = vmul.f32 %v8198, %v1661
        %v8420 = vmul.f32 %v8203, %v1666
        %v8421 = vmul.f32 %v8208, %v1671
        %v8422 = vmul.f32 %v8213, %v1676
        %v8423 = vmul.f32 %v8218, %v1681
        %v8424 = vmul.f32 %v8223, %v1686
        %v8425 = vmul.f32 %v8228, %v1691
        %v8426 = vmul.f32 %v8233, %v1696
        %v8427 = vmul.f32 %v8238, %v1701
        %v8428 = vmul.f32 %v8243, %v1706
        %v8429 = vmul.f32 %v8248, %v1711
        %v8430 = vmul.f32 %v8253, %v1716
        %v8431 = vmul.f32 %v8258, %v1721
        %v8432 = vmul.f32 %v8263, %v1726
        %v8433 = vmul.f32 %v8268, %v1731
        %v8434 = vmul.f32 %v8273, %v1736
        %v8435 = vmul.f32 %v8278, %v1741
        %v8436 = vmul.f32 %v8283, %v1746
        %v8437 = vmul.f32 %v8288, %v1751
        %v8438 = vmul.f32 %v8293, %v1756
        %v8439 = vmul.f32 %v8298, %v1761
        %v8440 = vmul.f32 %v8303, %v1766
        %v8441 = vmul.f32 %v8308, %v1771
        %v8442 = vmul.f32 %v8313, %v1776
        %v8443 = vrot.slane %v8315, 4
        %v8444 = vadd.f32 %v8315, %v8443
        %v8445 = vrot.slane %v8444, 2
        %v8446 = vadd.f32 %v8444, %v8445
        %v8447 = vrot.slane %v8446, 1
        %v8448 = vadd.f32 %v8446, %v8447
        %v8449 = vrot.slane %v8316, 4
        %v8450 = vadd.f32 %v8316, %v8449
        %v8451 = vrot.slane %v8450, 2
        %v8452 = vadd.f32 %v8450, %v8451
        %v8453 = vrot.slane %v8452, 1
        %v8454 = vadd.f32 %v8452, %v8453
        %v8455 = vrot.slane %v8317, 4
        %v8456 = vadd.f32 %v8317, %v8455
        %v8457 = vrot.slane %v8456, 2
        %v8458 = vadd.f32 %v8456, %v8457
        %v8459 = vrot.slane %v8458, 1
        %v8460 = vadd.f32 %v8458, %v8459
        %v8461 = vrot.slane %v8318, 4
        %v8462 = vadd.f32 %v8318, %v8461
        %v8463 = vrot.slane %v8462, 2
        %v8464 = vadd.f32 %v8462, %v8463
        %v8465 = vrot.slane %v8464, 1
        %v8466 = vadd.f32 %v8464, %v8465
        %v8467 = vrot.slane %v8319, 4
        %v8468 = vadd.f32 %v8319, %v8467
        %v8469 = vrot.slane %v8468, 2
        %v8470 = vadd.f32 %v8468, %v8469
        %v8471 = vrot.slane %v8470, 1
        %v8472 = vadd.f32 %v8470, %v8471
        %v8473 = vrot.slane %v8320, 4
        %v8474 = vadd.f32 %v8320, %v8473
        %v8475 = vrot.slane %v8474, 2
        %v8476 = vadd.f32 %v8474, %v8475
        %v8477 = vrot.slane %v8476, 1
        %v8478 = vadd.f32 %v8476, %v8477
        %v8479 = vrot.slane %v8321, 4
        %v8480 = vadd.f32 %v8321, %v8479
        %v8481 = vrot.slane %v8480, 2
        %v8482 = vadd.f32 %v8480, %v8481
        %v8483 = vrot.slane %v8482, 1
        %v8484 = vadd.f32 %v8482, %v8483
        %v8485 = vrot.slane %v8322, 4
        %v8486 = vadd.f32 %v8322, %v8485
        %v8487 = vrot.slane %v8486, 2
        %v8488 = vadd.f32 %v8486, %v8487
        %v8489 = vrot.slane %v8488, 1
        %v8490 = vadd.f32 %v8488, %v8489
        %v8491 = vrot.slane %v8323, 4
        %v8492 = vadd.f32 %v8323, %v8491
        %v8493 = vrot.slane %v8492, 2
        %v8494 = vadd.f32 %v8492, %v8493
        %v8495 = vrot.slane %v8494, 1
        %v8496 = vadd.f32 %v8494, %v8495
        %v8497 = vrot.slane %v8324, 4
        %v8498 = vadd.f32 %v8324, %v8497
        %v8499 = vrot.slane %v8498, 2
        %v8500 = vadd.f32 %v8498, %v8499
        %v8501 = vrot.slane %v8500, 1
        %v8502 = vadd.f32 %v8500, %v8501
        %v8503 = vrot.slane %v8325, 4
        %v8504 = vadd.f32 %v8325, %v8503
        %v8505 = vrot.slane %v8504, 2
        %v8506 = vadd.f32 %v8504, %v8505
        %v8507 = vrot.slane %v8506, 1
        %v8508 = vadd.f32 %v8506, %v8507
        %v8509 = vrot.slane %v8326, 4
        %v8510 = vadd.f32 %v8326, %v8509
        %v8511 = vrot.slane %v8510, 2
        %v8512 = vadd.f32 %v8510, %v8511
        %v8513 = vrot.slane %v8512, 1
        %v8514 = vadd.f32 %v8512, %v8513
        %v8515 = vrot.slane %v8327, 4
        %v8516 = vadd.f32 %v8327, %v8515
        %v8517 = vrot.slane %v8516, 2
        %v8518 = vadd.f32 %v8516, %v8517
        %v8519 = vrot.slane %v8518, 1
        %v8520 = vadd.f32 %v8518, %v8519
        %v8521 = vrot.slane %v8328, 4
        %v8522 = vadd.f32 %v8328, %v8521
        %v8523 = vrot.slane %v8522, 2
        %v8524 = vadd.f32 %v8522, %v8523
        %v8525 = vrot.slane %v8524, 1
        %v8526 = vadd.f32 %v8524, %v8525
        %v8527 = vrot.slane %v8329, 4
        %v8528 = vadd.f32 %v8329, %v8527
        %v8529 = vrot.slane %v8528, 2
        %v8530 = vadd.f32 %v8528, %v8529
        %v8531 = vrot.slane %v8530, 1
        %v8532 = vadd.f32 %v8530, %v8531
        %v8533 = vrot.slane %v8330, 4
        %v8534 = vadd.f32 %v8330, %v8533
        %v8535 = vrot.slane %v8534, 2
        %v8536 = vadd.f32 %v8534, %v8535
        %v8537 = vrot.slane %v8536, 1
        %v8538 = vadd.f32 %v8536, %v8537
        %v8539 = vrot.slane %v8331, 4
        %v8540 = vadd.f32 %v8331, %v8539
        %v8541 = vrot.slane %v8540, 2
        %v8542 = vadd.f32 %v8540, %v8541
        %v8543 = vrot.slane %v8542, 1
        %v8544 = vadd.f32 %v8542, %v8543
        %v8545 = vrot.slane %v8332, 4
        %v8546 = vadd.f32 %v8332, %v8545
        %v8547 = vrot.slane %v8546, 2
        %v8548 = vadd.f32 %v8546, %v8547
        %v8549 = vrot.slane %v8548, 1
        %v8550 = vadd.f32 %v8548, %v8549
        %v8551 = vrot.slane %v8333, 4
        %v8552 = vadd.f32 %v8333, %v8551
        %v8553 = vrot.slane %v8552, 2
        %v8554 = vadd.f32 %v8552, %v8553
        %v8555 = vrot.slane %v8554, 1
        %v8556 = vadd.f32 %v8554, %v8555
        %v8557 = vrot.slane %v8334, 4
        %v8558 = vadd.f32 %v8334, %v8557
        %v8559 = vrot.slane %v8558, 2
        %v8560 = vadd.f32 %v8558, %v8559
        %v8561 = vrot.slane %v8560, 1
        %v8562 = vadd.f32 %v8560, %v8561
        %v8563 = vrot.slane %v8335, 4
        %v8564 = vadd.f32 %v8335, %v8563
        %v8565 = vrot.slane %v8564, 2
        %v8566 = vadd.f32 %v8564, %v8565
        %v8567 = vrot.slane %v8566, 1
        %v8568 = vadd.f32 %v8566, %v8567
        %v8569 = vrot.slane %v8336, 4
        %v8570 = vadd.f32 %v8336, %v8569
        %v8571 = vrot.slane %v8570, 2
        %v8572 = vadd.f32 %v8570, %v8571
        %v8573 = vrot.slane %v8572, 1
        %v8574 = vadd.f32 %v8572, %v8573
        %v8575 = vrot.slane %v8337, 4
        %v8576 = vadd.f32 %v8337, %v8575
        %v8577 = vrot.slane %v8576, 2
        %v8578 = vadd.f32 %v8576, %v8577
        %v8579 = vrot.slane %v8578, 1
        %v8580 = vadd.f32 %v8578, %v8579
        %v8581 = vrot.slane %v8338, 4
        %v8582 = vadd.f32 %v8338, %v8581
        %v8583 = vrot.slane %v8582, 2
        %v8584 = vadd.f32 %v8582, %v8583
        %v8585 = vrot.slane %v8584, 1
        %v8586 = vadd.f32 %v8584, %v8585
        %v8587 = vrot.slane %v8339, 4
        %v8588 = vadd.f32 %v8339, %v8587
        %v8589 = vrot.slane %v8588, 2
        %v8590 = vadd.f32 %v8588, %v8589
        %v8591 = vrot.slane %v8590, 1
        %v8592 = vadd.f32 %v8590, %v8591
        %v8593 = vrot.slane %v8340, 4
        %v8594 = vadd.f32 %v8340, %v8593
        %v8595 = vrot.slane %v8594, 2
        %v8596 = vadd.f32 %v8594, %v8595
        %v8597 = vrot.slane %v8596, 1
        %v8598 = vadd.f32 %v8596, %v8597
        %v8599 = vrot.slane %v8341, 4
        %v8600 = vadd.f32 %v8341, %v8599
        %v8601 = vrot.slane %v8600, 2
        %v8602 = vadd.f32 %v8600, %v8601
        %v8603 = vrot.slane %v8602, 1
        %v8604 = vadd.f32 %v8602, %v8603
        %v8605 = vrot.slane %v8342, 4
        %v8606 = vadd.f32 %v8342, %v8605
        %v8607 = vrot.slane %v8606, 2
        %v8608 = vadd.f32 %v8606, %v8607
        %v8609 = vrot.slane %v8608, 1
        %v8610 = vadd.f32 %v8608, %v8609
        %v8611 = vrot.slane %v8343, 4
        %v8612 = vadd.f32 %v8343, %v8611
        %v8613 = vrot.slane %v8612, 2
        %v8614 = vadd.f32 %v8612, %v8613
        %v8615 = vrot.slane %v8614, 1
        %v8616 = vadd.f32 %v8614, %v8615
        %v8617 = vrot.slane %v8344, 4
        %v8618 = vadd.f32 %v8344, %v8617
        %v8619 = vrot.slane %v8618, 2
        %v8620 = vadd.f32 %v8618, %v8619
        %v8621 = vrot.slane %v8620, 1
        %v8622 = vadd.f32 %v8620, %v8621
        %v8623 = vrot.slane %v8345, 4
        %v8624 = vadd.f32 %v8345, %v8623
        %v8625 = vrot.slane %v8624, 2
        %v8626 = vadd.f32 %v8624, %v8625
        %v8627 = vrot.slane %v8626, 1
        %v8628 = vadd.f32 %v8626, %v8627
        %v8629 = vrot.slane %v8346, 4
        %v8630 = vadd.f32 %v8346, %v8629
        %v8631 = vrot.slane %v8630, 2
        %v8632 = vadd.f32 %v8630, %v8631
        %v8633 = vrot.slane %v8632, 1
        %v8634 = vadd.f32 %v8632, %v8633
        %v8635 = vrot.slane %v8347, 4
        %v8636 = vadd.f32 %v8347, %v8635
        %v8637 = vrot.slane %v8636, 2
        %v8638 = vadd.f32 %v8636, %v8637
        %v8639 = vrot.slane %v8638, 1
        %v8640 = vadd.f32 %v8638, %v8639
        %v8641 = vrot.slane %v8348, 4
        %v8642 = vadd.f32 %v8348, %v8641
        %v8643 = vrot.slane %v8642, 2
        %v8644 = vadd.f32 %v8642, %v8643
        %v8645 = vrot.slane %v8644, 1
        %v8646 = vadd.f32 %v8644, %v8645
        %v8647 = vrot.slane %v8349, 4
        %v8648 = vadd.f32 %v8349, %v8647
        %v8649 = vrot.slane %v8648, 2
        %v8650 = vadd.f32 %v8648, %v8649
        %v8651 = vrot.slane %v8650, 1
        %v8652 = vadd.f32 %v8650, %v8651
        %v8653 = vrot.slane %v8350, 4
        %v8654 = vadd.f32 %v8350, %v8653
        %v8655 = vrot.slane %v8654, 2
        %v8656 = vadd.f32 %v8654, %v8655
        %v8657 = vrot.slane %v8656, 1
        %v8658 = vadd.f32 %v8656, %v8657
        %v8659 = vrot.slane %v8351, 4
        %v8660 = vadd.f32 %v8351, %v8659
        %v8661 = vrot.slane %v8660, 2
        %v8662 = vadd.f32 %v8660, %v8661
        %v8663 = vrot.slane %v8662, 1
        %v8664 = vadd.f32 %v8662, %v8663
        %v8665 = vrot.slane %v8352, 4
        %v8666 = vadd.f32 %v8352, %v8665
        %v8667 = vrot.slane %v8666, 2
        %v8668 = vadd.f32 %v8666, %v8667
        %v8669 = vrot.slane %v8668, 1
        %v8670 = vadd.f32 %v8668, %v8669
        %v8671 = vrot.slane %v8353, 4
        %v8672 = vadd.f32 %v8353, %v8671
        %v8673 = vrot.slane %v8672, 2
        %v8674 = vadd.f32 %v8672, %v8673
        %v8675 = vrot.slane %v8674, 1
        %v8676 = vadd.f32 %v8674, %v8675
        %v8677 = vrot.slane %v8354, 4
        %v8678 = vadd.f32 %v8354, %v8677
        %v8679 = vrot.slane %v8678, 2
        %v8680 = vadd.f32 %v8678, %v8679
        %v8681 = vrot.slane %v8680, 1
        %v8682 = vadd.f32 %v8680, %v8681
        %v8683 = vrot.slane %v8355, 4
        %v8684 = vadd.f32 %v8355, %v8683
        %v8685 = vrot.slane %v8684, 2
        %v8686 = vadd.f32 %v8684, %v8685
        %v8687 = vrot.slane %v8686, 1
        %v8688 = vadd.f32 %v8686, %v8687
        %v8689 = vrot.slane %v8356, 4
        %v8690 = vadd.f32 %v8356, %v8689
        %v8691 = vrot.slane %v8690, 2
        %v8692 = vadd.f32 %v8690, %v8691
        %v8693 = vrot.slane %v8692, 1
        %v8694 = vadd.f32 %v8692, %v8693
        %v8695 = vrot.slane %v8357, 4
        %v8696 = vadd.f32 %v8357, %v8695
        %v8697 = vrot.slane %v8696, 2
        %v8698 = vadd.f32 %v8696, %v8697
        %v8699 = vrot.slane %v8698, 1
        %v8700 = vadd.f32 %v8698, %v8699
        %v8701 = vrot.slane %v8358, 4
        %v8702 = vadd.f32 %v8358, %v8701
        %v8703 = vrot.slane %v8702, 2
        %v8704 = vadd.f32 %v8702, %v8703
        %v8705 = vrot.slane %v8704, 1
        %v8706 = vadd.f32 %v8704, %v8705
        %v8707 = vrot.slane %v8359, 4
        %v8708 = vadd.f32 %v8359, %v8707
        %v8709 = vrot.slane %v8708, 2
        %v8710 = vadd.f32 %v8708, %v8709
        %v8711 = vrot.slane %v8710, 1
        %v8712 = vadd.f32 %v8710, %v8711
        %v8713 = vrot.slane %v8360, 4
        %v8714 = vadd.f32 %v8360, %v8713
        %v8715 = vrot.slane %v8714, 2
        %v8716 = vadd.f32 %v8714, %v8715
        %v8717 = vrot.slane %v8716, 1
        %v8718 = vadd.f32 %v8716, %v8717
        %v8719 = vrot.slane %v8361, 4
        %v8720 = vadd.f32 %v8361, %v8719
        %v8721 = vrot.slane %v8720, 2
        %v8722 = vadd.f32 %v8720, %v8721
        %v8723 = vrot.slane %v8722, 1
        %v8724 = vadd.f32 %v8722, %v8723
        %v8725 = vrot.slane %v8362, 4
        %v8726 = vadd.f32 %v8362, %v8725
        %v8727 = vrot.slane %v8726, 2
        %v8728 = vadd.f32 %v8726, %v8727
        %v8729 = vrot.slane %v8728, 1
        %v8730 = vadd.f32 %v8728, %v8729
        %v8731 = vrot.slane %v8363, 4
        %v8732 = vadd.f32 %v8363, %v8731
        %v8733 = vrot.slane %v8732, 2
        %v8734 = vadd.f32 %v8732, %v8733
        %v8735 = vrot.slane %v8734, 1
        %v8736 = vadd.f32 %v8734, %v8735
        %v8737 = vrot.slane %v8364, 4
        %v8738 = vadd.f32 %v8364, %v8737
        %v8739 = vrot.slane %v8738, 2
        %v8740 = vadd.f32 %v8738, %v8739
        %v8741 = vrot.slane %v8740, 1
        %v8742 = vadd.f32 %v8740, %v8741
        %v8743 = vrot.slane %v8365, 4
        %v8744 = vadd.f32 %v8365, %v8743
        %v8745 = vrot.slane %v8744, 2
        %v8746 = vadd.f32 %v8744, %v8745
        %v8747 = vrot.slane %v8746, 1
        %v8748 = vadd.f32 %v8746, %v8747
        %v8749 = vrot.slane %v8366, 4
        %v8750 = vadd.f32 %v8366, %v8749
        %v8751 = vrot.slane %v8750, 2
        %v8752 = vadd.f32 %v8750, %v8751
        %v8753 = vrot.slane %v8752, 1
        %v8754 = vadd.f32 %v8752, %v8753
        %v8755 = vrot.slane %v8367, 4
        %v8756 = vadd.f32 %v8367, %v8755
        %v8757 = vrot.slane %v8756, 2
        %v8758 = vadd.f32 %v8756, %v8757
        %v8759 = vrot.slane %v8758, 1
        %v8760 = vadd.f32 %v8758, %v8759
        %v8761 = vrot.slane %v8368, 4
        %v8762 = vadd.f32 %v8368, %v8761
        %v8763 = vrot.slane %v8762, 2
        %v8764 = vadd.f32 %v8762, %v8763
        %v8765 = vrot.slane %v8764, 1
        %v8766 = vadd.f32 %v8764, %v8765
        %v8767 = vrot.slane %v8369, 4
        %v8768 = vadd.f32 %v8369, %v8767
        %v8769 = vrot.slane %v8768, 2
        %v8770 = vadd.f32 %v8768, %v8769
        %v8771 = vrot.slane %v8770, 1
        %v8772 = vadd.f32 %v8770, %v8771
        %v8773 = vrot.slane %v8370, 4
        %v8774 = vadd.f32 %v8370, %v8773
        %v8775 = vrot.slane %v8774, 2
        %v8776 = vadd.f32 %v8774, %v8775
        %v8777 = vrot.slane %v8776, 1
        %v8778 = vadd.f32 %v8776, %v8777
        %v8779 = vrot.slane %v8371, 4
        %v8780 = vadd.f32 %v8371, %v8779
        %v8781 = vrot.slane %v8780, 2
        %v8782 = vadd.f32 %v8780, %v8781
        %v8783 = vrot.slane %v8782, 1
        %v8784 = vadd.f32 %v8782, %v8783
        %v8785 = vrot.slane %v8372, 4
        %v8786 = vadd.f32 %v8372, %v8785
        %v8787 = vrot.slane %v8786, 2
        %v8788 = vadd.f32 %v8786, %v8787
        %v8789 = vrot.slane %v8788, 1
        %v8790 = vadd.f32 %v8788, %v8789
        %v8791 = vrot.slane %v8373, 4
        %v8792 = vadd.f32 %v8373, %v8791
        %v8793 = vrot.slane %v8792, 2
        %v8794 = vadd.f32 %v8792, %v8793
        %v8795 = vrot.slane %v8794, 1
        %v8796 = vadd.f32 %v8794, %v8795
        %v8797 = vrot.slane %v8374, 4
        %v8798 = vadd.f32 %v8374, %v8797
        %v8799 = vrot.slane %v8798, 2
        %v8800 = vadd.f32 %v8798, %v8799
        %v8801 = vrot.slane %v8800, 1
        %v8802 = vadd.f32 %v8800, %v8801
        %v8803 = vrot.slane %v8375, 4
        %v8804 = vadd.f32 %v8375, %v8803
        %v8805 = vrot.slane %v8804, 2
        %v8806 = vadd.f32 %v8804, %v8805
        %v8807 = vrot.slane %v8806, 1
        %v8808 = vadd.f32 %v8806, %v8807
        %v8809 = vrot.slane %v8376, 4
        %v8810 = vadd.f32 %v8376, %v8809
        %v8811 = vrot.slane %v8810, 2
        %v8812 = vadd.f32 %v8810, %v8811
        %v8813 = vrot.slane %v8812, 1
        %v8814 = vadd.f32 %v8812, %v8813
        %v8815 = vrot.slane %v8377, 4
        %v8816 = vadd.f32 %v8377, %v8815
        %v8817 = vrot.slane %v8816, 2
        %v8818 = vadd.f32 %v8816, %v8817
        %v8819 = vrot.slane %v8818, 1
        %v8820 = vadd.f32 %v8818, %v8819
        %v8821 = vrot.slane %v8378, 4
        %v8822 = vadd.f32 %v8378, %v8821
        %v8823 = vrot.slane %v8822, 2
        %v8824 = vadd.f32 %v8822, %v8823
        %v8825 = vrot.slane %v8824, 1
        %v8826 = vadd.f32 %v8824, %v8825
        %v8827 = vrot.slane %v8379, 4
        %v8828 = vadd.f32 %v8379, %v8827
        %v8829 = vrot.slane %v8828, 2
        %v8830 = vadd.f32 %v8828, %v8829
        %v8831 = vrot.slane %v8830, 1
        %v8832 = vadd.f32 %v8830, %v8831
        %v8833 = vrot.slane %v8380, 4
        %v8834 = vadd.f32 %v8380, %v8833
        %v8835 = vrot.slane %v8834, 2
        %v8836 = vadd.f32 %v8834, %v8835
        %v8837 = vrot.slane %v8836, 1
        %v8838 = vadd.f32 %v8836, %v8837
        %v8839 = vrot.slane %v8381, 4
        %v8840 = vadd.f32 %v8381, %v8839
        %v8841 = vrot.slane %v8840, 2
        %v8842 = vadd.f32 %v8840, %v8841
        %v8843 = vrot.slane %v8842, 1
        %v8844 = vadd.f32 %v8842, %v8843
        %v8845 = vrot.slane %v8382, 4
        %v8846 = vadd.f32 %v8382, %v8845
        %v8847 = vrot.slane %v8846, 2
        %v8848 = vadd.f32 %v8846, %v8847
        %v8849 = vrot.slane %v8848, 1
        %v8850 = vadd.f32 %v8848, %v8849
        %v8851 = vrot.slane %v8383, 4
        %v8852 = vadd.f32 %v8383, %v8851
        %v8853 = vrot.slane %v8852, 2
        %v8854 = vadd.f32 %v8852, %v8853
        %v8855 = vrot.slane %v8854, 1
        %v8856 = vadd.f32 %v8854, %v8855
        %v8857 = vrot.slane %v8384, 4
        %v8858 = vadd.f32 %v8384, %v8857
        %v8859 = vrot.slane %v8858, 2
        %v8860 = vadd.f32 %v8858, %v8859
        %v8861 = vrot.slane %v8860, 1
        %v8862 = vadd.f32 %v8860, %v8861
        %v8863 = vrot.slane %v8385, 4
        %v8864 = vadd.f32 %v8385, %v8863
        %v8865 = vrot.slane %v8864, 2
        %v8866 = vadd.f32 %v8864, %v8865
        %v8867 = vrot.slane %v8866, 1
        %v8868 = vadd.f32 %v8866, %v8867
        %v8869 = vrot.slane %v8386, 4
        %v8870 = vadd.f32 %v8386, %v8869
        %v8871 = vrot.slane %v8870, 2
        %v8872 = vadd.f32 %v8870, %v8871
        %v8873 = vrot.slane %v8872, 1
        %v8874 = vadd.f32 %v8872, %v8873
        %v8875 = vrot.slane %v8387, 4
        %v8876 = vadd.f32 %v8387, %v8875
        %v8877 = vrot.slane %v8876, 2
        %v8878 = vadd.f32 %v8876, %v8877
        %v8879 = vrot.slane %v8878, 1
        %v8880 = vadd.f32 %v8878, %v8879
        %v8881 = vrot.slane %v8388, 4
        %v8882 = vadd.f32 %v8388, %v8881
        %v8883 = vrot.slane %v8882, 2
        %v8884 = vadd.f32 %v8882, %v8883
        %v8885 = vrot.slane %v8884, 1
        %v8886 = vadd.f32 %v8884, %v8885
        %v8887 = vrot.slane %v8389, 4
        %v8888 = vadd.f32 %v8389, %v8887
        %v8889 = vrot.slane %v8888, 2
        %v8890 = vadd.f32 %v8888, %v8889
        %v8891 = vrot.slane %v8890, 1
        %v8892 = vadd.f32 %v8890, %v8891
        %v8893 = vrot.slane %v8390, 4
        %v8894 = vadd.f32 %v8390, %v8893
        %v8895 = vrot.slane %v8894, 2
        %v8896 = vadd.f32 %v8894, %v8895
        %v8897 = vrot.slane %v8896, 1
        %v8898 = vadd.f32 %v8896, %v8897
        %v8899 = vrot.slane %v8391, 4
        %v8900 = vadd.f32 %v8391, %v8899
        %v8901 = vrot.slane %v8900, 2
        %v8902 = vadd.f32 %v8900, %v8901
        %v8903 = vrot.slane %v8902, 1
        %v8904 = vadd.f32 %v8902, %v8903
        %v8905 = vrot.slane %v8392, 4
        %v8906 = vadd.f32 %v8392, %v8905
        %v8907 = vrot.slane %v8906, 2
        %v8908 = vadd.f32 %v8906, %v8907
        %v8909 = vrot.slane %v8908, 1
        %v8910 = vadd.f32 %v8908, %v8909
        %v8911 = vrot.slane %v8393, 4
        %v8912 = vadd.f32 %v8393, %v8911
        %v8913 = vrot.slane %v8912, 2
        %v8914 = vadd.f32 %v8912, %v8913
        %v8915 = vrot.slane %v8914, 1
        %v8916 = vadd.f32 %v8914, %v8915
        %v8917 = vrot.slane %v8394, 4
        %v8918 = vadd.f32 %v8394, %v8917
        %v8919 = vrot.slane %v8918, 2
        %v8920 = vadd.f32 %v8918, %v8919
        %v8921 = vrot.slane %v8920, 1
        %v8922 = vadd.f32 %v8920, %v8921
        %v8923 = vrot.slane %v8395, 4
        %v8924 = vadd.f32 %v8395, %v8923
        %v8925 = vrot.slane %v8924, 2
        %v8926 = vadd.f32 %v8924, %v8925
        %v8927 = vrot.slane %v8926, 1
        %v8928 = vadd.f32 %v8926, %v8927
        %v8929 = vrot.slane %v8396, 4
        %v8930 = vadd.f32 %v8396, %v8929
        %v8931 = vrot.slane %v8930, 2
        %v8932 = vadd.f32 %v8930, %v8931
        %v8933 = vrot.slane %v8932, 1
        %v8934 = vadd.f32 %v8932, %v8933
        %v8935 = vrot.slane %v8397, 4
        %v8936 = vadd.f32 %v8397, %v8935
        %v8937 = vrot.slane %v8936, 2
        %v8938 = vadd.f32 %v8936, %v8937
        %v8939 = vrot.slane %v8938, 1
        %v8940 = vadd.f32 %v8938, %v8939
        %v8941 = vrot.slane %v8398, 4
        %v8942 = vadd.f32 %v8398, %v8941
        %v8943 = vrot.slane %v8942, 2
        %v8944 = vadd.f32 %v8942, %v8943
        %v8945 = vrot.slane %v8944, 1
        %v8946 = vadd.f32 %v8944, %v8945
        %v8947 = vrot.slane %v8399, 4
        %v8948 = vadd.f32 %v8399, %v8947
        %v8949 = vrot.slane %v8948, 2
        %v8950 = vadd.f32 %v8948, %v8949
        %v8951 = vrot.slane %v8950, 1
        %v8952 = vadd.f32 %v8950, %v8951
        %v8953 = vrot.slane %v8400, 4
        %v8954 = vadd.f32 %v8400, %v8953
        %v8955 = vrot.slane %v8954, 2
        %v8956 = vadd.f32 %v8954, %v8955
        %v8957 = vrot.slane %v8956, 1
        %v8958 = vadd.f32 %v8956, %v8957
        %v8959 = vrot.slane %v8401, 4
        %v8960 = vadd.f32 %v8401, %v8959
        %v8961 = vrot.slane %v8960, 2
        %v8962 = vadd.f32 %v8960, %v8961
        %v8963 = vrot.slane %v8962, 1
        %v8964 = vadd.f32 %v8962, %v8963
        %v8965 = vrot.slane %v8402, 4
        %v8966 = vadd.f32 %v8402, %v8965
        %v8967 = vrot.slane %v8966, 2
        %v8968 = vadd.f32 %v8966, %v8967
        %v8969 = vrot.slane %v8968, 1
        %v8970 = vadd.f32 %v8968, %v8969
        %v8971 = vrot.slane %v8403, 4
        %v8972 = vadd.f32 %v8403, %v8971
        %v8973 = vrot.slane %v8972, 2
        %v8974 = vadd.f32 %v8972, %v8973
        %v8975 = vrot.slane %v8974, 1
        %v8976 = vadd.f32 %v8974, %v8975
        %v8977 = vrot.slane %v8404, 4
        %v8978 = vadd.f32 %v8404, %v8977
        %v8979 = vrot.slane %v8978, 2
        %v8980 = vadd.f32 %v8978, %v8979
        %v8981 = vrot.slane %v8980, 1
        %v8982 = vadd.f32 %v8980, %v8981
        %v8983 = vrot.slane %v8405, 4
        %v8984 = vadd.f32 %v8405, %v8983
        %v8985 = vrot.slane %v8984, 2
        %v8986 = vadd.f32 %v8984, %v8985
        %v8987 = vrot.slane %v8986, 1
        %v8988 = vadd.f32 %v8986, %v8987
        %v8989 = vrot.slane %v8406, 4
        %v8990 = vadd.f32 %v8406, %v8989
        %v8991 = vrot.slane %v8990, 2
        %v8992 = vadd.f32 %v8990, %v8991
        %v8993 = vrot.slane %v8992, 1
        %v8994 = vadd.f32 %v8992, %v8993
        %v8995 = vrot.slane %v8407, 4
        %v8996 = vadd.f32 %v8407, %v8995
        %v8997 = vrot.slane %v8996, 2
        %v8998 = vadd.f32 %v8996, %v8997
        %v8999 = vrot.slane %v8998, 1
        %v9000 = vadd.f32 %v8998, %v8999
        %v9001 = vrot.slane %v8408, 4
        %v9002 = vadd.f32 %v8408, %v9001
        %v9003 = vrot.slane %v9002, 2
        %v9004 = vadd.f32 %v9002, %v9003
        %v9005 = vrot.slane %v9004, 1
        %v9006 = vadd.f32 %v9004, %v9005
        %v9007 = vrot.slane %v8409, 4
        %v9008 = vadd.f32 %v8409, %v9007
        %v9009 = vrot.slane %v9008, 2
        %v9010 = vadd.f32 %v9008, %v9009
        %v9011 = vrot.slane %v9010, 1
        %v9012 = vadd.f32 %v9010, %v9011
        %v9013 = vrot.slane %v8410, 4
        %v9014 = vadd.f32 %v8410, %v9013
        %v9015 = vrot.slane %v9014, 2
        %v9016 = vadd.f32 %v9014, %v9015
        %v9017 = vrot.slane %v9016, 1
        %v9018 = vadd.f32 %v9016, %v9017
        %v9019 = vrot.slane %v8411, 4
        %v9020 = vadd.f32 %v8411, %v9019
        %v9021 = vrot.slane %v9020, 2
        %v9022 = vadd.f32 %v9020, %v9021
        %v9023 = vrot.slane %v9022, 1
        %v9024 = vadd.f32 %v9022, %v9023
        %v9025 = vrot.slane %v8412, 4
        %v9026 = vadd.f32 %v8412, %v9025
        %v9027 = vrot.slane %v9026, 2
        %v9028 = vadd.f32 %v9026, %v9027
        %v9029 = vrot.slane %v9028, 1
        %v9030 = vadd.f32 %v9028, %v9029
        %v9031 = vrot.slane %v8413, 4
        %v9032 = vadd.f32 %v8413, %v9031
        %v9033 = vrot.slane %v9032, 2
        %v9034 = vadd.f32 %v9032, %v9033
        %v9035 = vrot.slane %v9034, 1
        %v9036 = vadd.f32 %v9034, %v9035
        %v9037 = vrot.slane %v8414, 4
        %v9038 = vadd.f32 %v8414, %v9037
        %v9039 = vrot.slane %v9038, 2
        %v9040 = vadd.f32 %v9038, %v9039
        %v9041 = vrot.slane %v9040, 1
        %v9042 = vadd.f32 %v9040, %v9041
        %v9043 = vrot.slane %v8415, 4
        %v9044 = vadd.f32 %v8415, %v9043
        %v9045 = vrot.slane %v9044, 2
        %v9046 = vadd.f32 %v9044, %v9045
        %v9047 = vrot.slane %v9046, 1
        %v9048 = vadd.f32 %v9046, %v9047
        %v9049 = vrot.slane %v8416, 4
        %v9050 = vadd.f32 %v8416, %v9049
        %v9051 = vrot.slane %v9050, 2
        %v9052 = vadd.f32 %v9050, %v9051
        %v9053 = vrot.slane %v9052, 1
        %v9054 = vadd.f32 %v9052, %v9053
        %v9055 = vrot.slane %v8417, 4
        %v9056 = vadd.f32 %v8417, %v9055
        %v9057 = vrot.slane %v9056, 2
        %v9058 = vadd.f32 %v9056, %v9057
        %v9059 = vrot.slane %v9058, 1
        %v9060 = vadd.f32 %v9058, %v9059
        %v9061 = vrot.slane %v8418, 4
        %v9062 = vadd.f32 %v8418, %v9061
        %v9063 = vrot.slane %v9062, 2
        %v9064 = vadd.f32 %v9062, %v9063
        %v9065 = vrot.slane %v9064, 1
        %v9066 = vadd.f32 %v9064, %v9065
        %v9067 = vrot.slane %v8419, 4
        %v9068 = vadd.f32 %v8419, %v9067
        %v9069 = vrot.slane %v9068, 2
        %v9070 = vadd.f32 %v9068, %v9069
        %v9071 = vrot.slane %v9070, 1
        %v9072 = vadd.f32 %v9070, %v9071
        %v9073 = vrot.slane %v8420, 4
        %v9074 = vadd.f32 %v8420, %v9073
        %v9075 = vrot.slane %v9074, 2
        %v9076 = vadd.f32 %v9074, %v9075
        %v9077 = vrot.slane %v9076, 1
        %v9078 = vadd.f32 %v9076, %v9077
        %v9079 = vrot.slane %v8421, 4
        %v9080 = vadd.f32 %v8421, %v9079
        %v9081 = vrot.slane %v9080, 2
        %v9082 = vadd.f32 %v9080, %v9081
        %v9083 = vrot.slane %v9082, 1
        %v9084 = vadd.f32 %v9082, %v9083
        %v9085 = vrot.slane %v8422, 4
        %v9086 = vadd.f32 %v8422, %v9085
        %v9087 = vrot.slane %v9086, 2
        %v9088 = vadd.f32 %v9086, %v9087
        %v9089 = vrot.slane %v9088, 1
        %v9090 = vadd.f32 %v9088, %v9089
        %v9091 = vrot.slane %v8423, 4
        %v9092 = vadd.f32 %v8423, %v9091
        %v9093 = vrot.slane %v9092, 2
        %v9094 = vadd.f32 %v9092, %v9093
        %v9095 = vrot.slane %v9094, 1
        %v9096 = vadd.f32 %v9094, %v9095
        %v9097 = vrot.slane %v8424, 4
        %v9098 = vadd.f32 %v8424, %v9097
        %v9099 = vrot.slane %v9098, 2
        %v9100 = vadd.f32 %v9098, %v9099
        %v9101 = vrot.slane %v9100, 1
        %v9102 = vadd.f32 %v9100, %v9101
        %v9103 = vrot.slane %v8425, 4
        %v9104 = vadd.f32 %v8425, %v9103
        %v9105 = vrot.slane %v9104, 2
        %v9106 = vadd.f32 %v9104, %v9105
        %v9107 = vrot.slane %v9106, 1
        %v9108 = vadd.f32 %v9106, %v9107
        %v9109 = vrot.slane %v8426, 4
        %v9110 = vadd.f32 %v8426, %v9109
        %v9111 = vrot.slane %v9110, 2
        %v9112 = vadd.f32 %v9110, %v9111
        %v9113 = vrot.slane %v9112, 1
        %v9114 = vadd.f32 %v9112, %v9113
        %v9115 = vrot.slane %v8427, 4
        %v9116 = vadd.f32 %v8427, %v9115
        %v9117 = vrot.slane %v9116, 2
        %v9118 = vadd.f32 %v9116, %v9117
        %v9119 = vrot.slane %v9118, 1
        %v9120 = vadd.f32 %v9118, %v9119
        %v9121 = vrot.slane %v8428, 4
        %v9122 = vadd.f32 %v8428, %v9121
        %v9123 = vrot.slane %v9122, 2
        %v9124 = vadd.f32 %v9122, %v9123
        %v9125 = vrot.slane %v9124, 1
        %v9126 = vadd.f32 %v9124, %v9125
        %v9127 = vrot.slane %v8429, 4
        %v9128 = vadd.f32 %v8429, %v9127
        %v9129 = vrot.slane %v9128, 2
        %v9130 = vadd.f32 %v9128, %v9129
        %v9131 = vrot.slane %v9130, 1
        %v9132 = vadd.f32 %v9130, %v9131
        %v9133 = vrot.slane %v8430, 4
        %v9134 = vadd.f32 %v8430, %v9133
        %v9135 = vrot.slane %v9134, 2
        %v9136 = vadd.f32 %v9134, %v9135
        %v9137 = vrot.slane %v9136, 1
        %v9138 = vadd.f32 %v9136, %v9137
        %v9139 = vrot.slane %v8431, 4
        %v9140 = vadd.f32 %v8431, %v9139
        %v9141 = vrot.slane %v9140, 2
        %v9142 = vadd.f32 %v9140, %v9141
        %v9143 = vrot.slane %v9142, 1
        %v9144 = vadd.f32 %v9142, %v9143
        %v9145 = vrot.slane %v8432, 4
        %v9146 = vadd.f32 %v8432, %v9145
        %v9147 = vrot.slane %v9146, 2
        %v9148 = vadd.f32 %v9146, %v9147
        %v9149 = vrot.slane %v9148, 1
        %v9150 = vadd.f32 %v9148, %v9149
        %v9151 = vrot.slane %v8433, 4
        %v9152 = vadd.f32 %v8433, %v9151
        %v9153 = vrot.slane %v9152, 2
        %v9154 = vadd.f32 %v9152, %v9153
        %v9155 = vrot.slane %v9154, 1
        %v9156 = vadd.f32 %v9154, %v9155
        %v9157 = vrot.slane %v8434, 4
        %v9158 = vadd.f32 %v8434, %v9157
        %v9159 = vrot.slane %v9158, 2
        %v9160 = vadd.f32 %v9158, %v9159
        %v9161 = vrot.slane %v9160, 1
        %v9162 = vadd.f32 %v9160, %v9161
        %v9163 = vrot.slane %v8435, 4
        %v9164 = vadd.f32 %v8435, %v9163
        %v9165 = vrot.slane %v9164, 2
        %v9166 = vadd.f32 %v9164, %v9165
        %v9167 = vrot.slane %v9166, 1
        %v9168 = vadd.f32 %v9166, %v9167
        %v9169 = vrot.slane %v8436, 4
        %v9170 = vadd.f32 %v8436, %v9169
        %v9171 = vrot.slane %v9170, 2
        %v9172 = vadd.f32 %v9170, %v9171
        %v9173 = vrot.slane %v9172, 1
        %v9174 = vadd.f32 %v9172, %v9173
        %v9175 = vrot.slane %v8437, 4
        %v9176 = vadd.f32 %v8437, %v9175
        %v9177 = vrot.slane %v9176, 2
        %v9178 = vadd.f32 %v9176, %v9177
        %v9179 = vrot.slane %v9178, 1
        %v9180 = vadd.f32 %v9178, %v9179
        %v9181 = vrot.slane %v8438, 4
        %v9182 = vadd.f32 %v8438, %v9181
        %v9183 = vrot.slane %v9182, 2
        %v9184 = vadd.f32 %v9182, %v9183
        %v9185 = vrot.slane %v9184, 1
        %v9186 = vadd.f32 %v9184, %v9185
        %v9187 = vrot.slane %v8439, 4
        %v9188 = vadd.f32 %v8439, %v9187
        %v9189 = vrot.slane %v9188, 2
        %v9190 = vadd.f32 %v9188, %v9189
        %v9191 = vrot.slane %v9190, 1
        %v9192 = vadd.f32 %v9190, %v9191
        %v9193 = vrot.slane %v8440, 4
        %v9194 = vadd.f32 %v8440, %v9193
        %v9195 = vrot.slane %v9194, 2
        %v9196 = vadd.f32 %v9194, %v9195
        %v9197 = vrot.slane %v9196, 1
        %v9198 = vadd.f32 %v9196, %v9197
        %v9199 = vrot.slane %v8441, 4
        %v9200 = vadd.f32 %v8441, %v9199
        %v9201 = vrot.slane %v9200, 2
        %v9202 = vadd.f32 %v9200, %v9201
        %v9203 = vrot.slane %v9202, 1
        %v9204 = vadd.f32 %v9202, %v9203
        %v9205 = vrot.slane %v8442, 4
        %v9206 = vadd.f32 %v8442, %v9205
        %v9207 = vrot.slane %v9206, 2
        %v9208 = vadd.f32 %v9206, %v9207
        %v9209 = vrot.slane %v9208, 1
        %v9210 = vadd.f32 %v9208, %v9209
        %v9339 = vsel %vm4451, %v8454, %v8448
        %v9340 = vsel %vm4453, %v8460, %v9339
        %v9341 = vsel %vm4455, %v8466, %v9340
        %v9342 = vsel %vm4457, %v8472, %v9341
        %v9343 = vsel %vm4459, %v8478, %v9342
        %v9344 = vsel %vm4461, %v8484, %v9343
        %v9345 = vsel %vm4463, %v8490, %v9344
        %v9346 = vsel %vm4451, %v8502, %v8496
        %v9347 = vsel %vm4453, %v8508, %v9346
        %v9348 = vsel %vm4455, %v8514, %v9347
        %v9349 = vsel %vm4457, %v8520, %v9348
        %v9350 = vsel %vm4459, %v8526, %v9349
        %v9351 = vsel %vm4461, %v8532, %v9350
        %v9352 = vsel %vm4463, %v8538, %v9351
        %v9353 = vsel %vm4451, %v8550, %v8544
        %v9354 = vsel %vm4453, %v8556, %v9353
        %v9355 = vsel %vm4455, %v8562, %v9354
        %v9356 = vsel %vm4457, %v8568, %v9355
        %v9357 = vsel %vm4459, %v8574, %v9356
        %v9358 = vsel %vm4461, %v8580, %v9357
        %v9359 = vsel %vm4463, %v8586, %v9358
        %v9360 = vsel %vm4451, %v8598, %v8592
        %v9361 = vsel %vm4453, %v8604, %v9360
        %v9362 = vsel %vm4455, %v8610, %v9361
        %v9363 = vsel %vm4457, %v8616, %v9362
        %v9364 = vsel %vm4459, %v8622, %v9363
        %v9365 = vsel %vm4461, %v8628, %v9364
        %v9366 = vsel %vm4463, %v8634, %v9365
        %v9367 = vsel %vm4451, %v8646, %v8640
        %v9368 = vsel %vm4453, %v8652, %v9367
        %v9369 = vsel %vm4455, %v8658, %v9368
        %v9370 = vsel %vm4457, %v8664, %v9369
        %v9371 = vsel %vm4459, %v8670, %v9370
        %v9372 = vsel %vm4461, %v8676, %v9371
        %v9373 = vsel %vm4463, %v8682, %v9372
        %v9374 = vsel %vm4451, %v8694, %v8688
        %v9375 = vsel %vm4453, %v8700, %v9374
        %v9376 = vsel %vm4455, %v8706, %v9375
        %v9377 = vsel %vm4457, %v8712, %v9376
        %v9378 = vsel %vm4459, %v8718, %v9377
        %v9379 = vsel %vm4461, %v8724, %v9378
        %v9380 = vsel %vm4463, %v8730, %v9379
        %v9381 = vsel %vm4451, %v8742, %v8736
        %v9382 = vsel %vm4453, %v8748, %v9381
        %v9383 = vsel %vm4455, %v8754, %v9382
        %v9384 = vsel %vm4457, %v8760, %v9383
        %v9385 = vsel %vm4459, %v8766, %v9384
        %v9386 = vsel %vm4461, %v8772, %v9385
        %v9387 = vsel %vm4463, %v8778, %v9386
        %v9388 = vsel %vm4451, %v8790, %v8784
        %v9389 = vsel %vm4453, %v8796, %v9388
        %v9390 = vsel %vm4455, %v8802, %v9389
        %v9391 = vsel %vm4457, %v8808, %v9390
        %v9392 = vsel %vm4459, %v8814, %v9391
        %v9393 = vsel %vm4461, %v8820, %v9392
        %v9394 = vsel %vm4463, %v8826, %v9393
        %v9395 = vsel %vm4451, %v8838, %v8832
        %v9396 = vsel %vm4453, %v8844, %v9395
        %v9397 = vsel %vm4455, %v8850, %v9396
        %v9398 = vsel %vm4457, %v8856, %v9397
        %v9399 = vsel %vm4459, %v8862, %v9398
        %v9400 = vsel %vm4461, %v8868, %v9399
        %v9401 = vsel %vm4463, %v8874, %v9400
        %v9402 = vsel %vm4451, %v8886, %v8880
        %v9403 = vsel %vm4453, %v8892, %v9402
        %v9404 = vsel %vm4455, %v8898, %v9403
        %v9405 = vsel %vm4457, %v8904, %v9404
        %v9406 = vsel %vm4459, %v8910, %v9405
        %v9407 = vsel %vm4461, %v8916, %v9406
        %v9408 = vsel %vm4463, %v8922, %v9407
        %v9409 = vsel %vm4451, %v8934, %v8928
        %v9410 = vsel %vm4453, %v8940, %v9409
        %v9411 = vsel %vm4455, %v8946, %v9410
        %v9412 = vsel %vm4457, %v8952, %v9411
        %v9413 = vsel %vm4459, %v8958, %v9412
        %v9414 = vsel %vm4461, %v8964, %v9413
        %v9415 = vsel %vm4463, %v8970, %v9414
        %v9416 = vsel %vm4451, %v8982, %v8976
        %v9417 = vsel %vm4453, %v8988, %v9416
        %v9418 = vsel %vm4455, %v8994, %v9417
        %v9419 = vsel %vm4457, %v9000, %v9418
        %v9420 = vsel %vm4459, %v9006, %v9419
        %v9421 = vsel %vm4461, %v9012, %v9420
        %v9422 = vsel %vm4463, %v9018, %v9421
        %v9423 = vsel %vm4451, %v9030, %v9024
        %v9424 = vsel %vm4453, %v9036, %v9423
        %v9425 = vsel %vm4455, %v9042, %v9424
        %v9426 = vsel %vm4457, %v9048, %v9425
        %v9427 = vsel %vm4459, %v9054, %v9426
        %v9428 = vsel %vm4461, %v9060, %v9427
        %v9429 = vsel %vm4463, %v9066, %v9428
        %v9430 = vsel %vm4451, %v9078, %v9072
        %v9431 = vsel %vm4453, %v9084, %v9430
        %v9432 = vsel %vm4455, %v9090, %v9431
        %v9433 = vsel %vm4457, %v9096, %v9432
        %v9434 = vsel %vm4459, %v9102, %v9433
        %v9435 = vsel %vm4461, %v9108, %v9434
        %v9436 = vsel %vm4463, %v9114, %v9435
        %v9437 = vsel %vm4451, %v9126, %v9120
        %v9438 = vsel %vm4453, %v9132, %v9437
        %v9439 = vsel %vm4455, %v9138, %v9438
        %v9440 = vsel %vm4457, %v9144, %v9439
        %v9441 = vsel %vm4459, %v9150, %v9440
        %v9442 = vsel %vm4461, %v9156, %v9441
        %v9443 = vsel %vm4463, %v9162, %v9442
        %v9444 = vsel %vm4451, %v9174, %v9168
        %v9445 = vsel %vm4453, %v9180, %v9444
        %v9446 = vsel %vm4455, %v9186, %v9445
        %v9447 = vsel %vm4457, %v9192, %v9446
        %v9448 = vsel %vm4459, %v9198, %v9447
        %v9449 = vsel %vm4461, %v9204, %v9448
        %v9450 = vsel %vm4463, %v9210, %v9449
        %9467 = vst [vmem:[%s277] sm:$0xff] %v9345
        %9468 = vst [vmem:[%s277 + $0x8] sm:$0xff] %v9352
        %9469 = vst [vmem:[%s277 + $0x10] sm:$0xff] %v9359
        %9470 = vst [vmem:[%s277 + $0x18] sm:$0xff] %v9366
        %9471 = vst [vmem:[%s277 + $0x20] sm:$0xff] %v9373
        %9472 = vst [vmem:[%s277 + $0x28] sm:$0xff] %v9380
        %9473 = vst [vmem:[%s277 + $0x30] sm:$0xff] %v9387
        %9474 = vst [vmem:[%s277 + $0x38] sm:$0xff] %v9394
        %9475 = vst [vmem:[%s277 + $0x40] sm:$0xff] %v9401
        %9476 = vst [vmem:[%s277 + $0x48] sm:$0xff] %v9408
        %9477 = vst [vmem:[%s277 + $0x50] sm:$0xff] %v9415
        %9478 = vst [vmem:[%s277 + $0x58] sm:$0xff] %v9422
        %9479 = vst [vmem:[%s277 + $0x60] sm:$0xff] %v9429
        %9480 = vst [vmem:[%s277 + $0x68] sm:$0xff] %v9436
        %9481 = vst [vmem:[%s277 + $0x70] sm:$0xff] %v9443
        %9482 = vst [vmem:[%s277 + $0x78] sm:$0xff] %v9450
        %s9483 = sand.u32 %s169, 1
        %s9484 = scalar_lea.sflag [#allocation3], %s9483
        %s9485 = sand.u32 %s169, 1
        %s9486 = smul.addr %s9485, 128
        %s9487 = scalar_lea.vmem [#allocation2], %s9486
        // Predicated region
        $region45: #{tpu_custom_call.1} parent=43 // pred_check
          %p9488 = pneg %p179
        $region46: #{tpu_custom_call.1} parent=43 // pred_check_branch
          %9490 = sbr.rel (%p9488) target = $region48
        $region47: #{tpu_custom_call.1} parent=43 // pred_region
          %s9491 = smul.u32 16, %s20
          %s9493 = ssub.s32 2048, 2048
          %9494 = vsyncadd %s9484, %s9493
          %s9495 = smul.addr %s9491, 128
          %s9496 = scalar_lea.hbm %s6, %s9495
          %s9497 = sshll.u32 %s9487, 4
          %s9498 = int_to_ptr.vmem [resolvable:$true] %s9497
          %9503 = dma.vmem_to_hbm [thread:$0]  %s9498, 2048, %s9496, %s9484, 128, 128, 8
        $region48: #{tpu_custom_call.1} parent=43 // pred_fallthru
          _
      $region44: #{tpu_custom_call.1} parent=5 // pred_fallthru
        _
      %p9504 = scmp.le.s32.totalorder 2, %s15
      // Predicated region
      $region49: #{tpu_custom_call.1} parent=5 // pred_check
        %p9505 = pneg %p9504
      $region50: #{tpu_custom_call.1} parent=5 // pred_check_branch
        %9507 = sbr.rel (%p9505) target = $region52
      $region51: #{tpu_custom_call.1} parent=5 // pred_region
        %s9508 = ssub.s32 %s15, 2
        // Predicated region
        $region53: #{tpu_custom_call.1} parent=51 // pred_check
          %p9509 = pneg %p185
        $region54: #{tpu_custom_call.1} parent=51 // pred_check_branch
          %9511 = sbr.rel (%p9509) target = $region56
        $region55: #{tpu_custom_call.1} parent=51 // pred_region
          %s9512 = sand.u32 %s170, 1
          %s9513 = scalar_lea.sflag [#allocation3], %s9512
          %s9514 = sand.u32 %s170, 1
          %s9515 = smul.addr %s9514, 128
          %s9516 = scalar_lea.vmem [#allocation2], %s9515
          %9517 = dma.done %s9513, 2048
        $region56: #{tpu_custom_call.1} parent=51 // pred_fallthru
          _
      $region52: #{tpu_custom_call.1} parent=5 // pred_fallthru
        _
    $region6: #{tpu_custom_call.1} parent=1 // loop_footer
      %s19 = sadd.s32 1, %s15
    $region7: #{tpu_custom_call.1} parent=1 // loop_footer_branch
      %14 = sbr.rel target = $region3
    $region8: #{tpu_custom_call.1} parent=1 // loop_exit
      _
    %9518 = vsyncpa [#allocation3], 1
    %s9519 = scalar_lea.sflag [#allocation3], 1
    %9520 = vsyncpa %s9519, 1

</llo_original>
